<compile_context>
chip_gen: v7x
topology: tpu7x:2x2x1
jax: 0.10.0
libtpu: 0.0.40
codegen_flags: <defaults>
</compile_context>

<pallas_src>
import jax
import jax.numpy as jnp
from jax import lax
from jax.experimental import pallas as pl
from jax.experimental.pallas import tpu as pltpu


# ----------------------------------------------------------------------------
# Kernel 1: point-wise MLP (conv1..conv3) + online global max-pool.
#   x_ref     : (1, k, TILE_N)  bf16 chunk of points (NCW layout, lane-dense N)
#   wX_ref    : (Cin, Cout)     bf16 BN-folded weights
#   bX_ref    : (1, Cout)       f32 BN-folded biases
#   pooled_ref: (1, 1, 1024)    f32 pooled features for this batch element
#   acc_ref   : (8, 1024)       f32 running max across N tiles (VMEM scratch)
# ----------------------------------------------------------------------------
def conv_pool_kernel(x_ref, w1_ref, b1_ref, w2_ref, b2_ref, w3_ref, b3_ref,
                     pooled_ref, acc_ref):
    nk = pl.program_id(1)

    @pl.when(nk == 0)
    def _init():
        acc_ref[...] = jnp.full_like(acc_ref, -jnp.inf)

    x = x_ref[0]  # (k, TILE_N) bf16

    # conv1: contract over channels k -> (TILE_N, 64)
    h = lax.dot_general(x, w1_ref[...],
                        dimension_numbers=(((0,), (0,)), ((), ())),
                        preferred_element_type=jnp.float32)
    h = jnp.maximum(h + b1_ref[...], 0.0).astype(jnp.bfloat16)

    # conv2: (TILE_N, 64) @ (64, 128)
    h = jnp.maximum(
        jnp.dot(h, w2_ref[...], preferred_element_type=jnp.float32)
        + b2_ref[...], 0.0).astype(jnp.bfloat16)

    # conv3: (TILE_N, 128) @ (128, 1024), f32 accumulation.  Bias + ReLU are
    # hoisted to _finalize (exact by monotonicity of relu(t + b) in t).
    h = jnp.dot(h, w3_ref[...], preferred_element_type=jnp.float32)

    # Fold this tile into the (8, 1024) running max using pure VPU maxes
    # (leading-axis reduce = elementwise maxes across vreg groups, no XLU).
    tn, c = h.shape
    if tn % 8 == 0:
        tile_max = jnp.max(h.reshape(tn // 8, 8, c), axis=0)       # (8, 1024)
        acc_ref[...] = jnp.maximum(acc_ref[...], tile_max)
    else:  # fallback for tile sizes not divisible by 8 (unused in demo)
        acc_ref[0:1, :] = jnp.maximum(acc_ref[0:1, :],
                                      jnp.max(h, axis=0, keepdims=True))

    @pl.when(nk == pl.num_programs(1) - 1)
    def _finalize():
        m = jnp.max(acc_ref[...], axis=0, keepdims=True)            # 8 -> 1 XLU reduce, once
        pooled_ref[0] = jnp.maximum(m + b3_ref[...], 0.0)           # hoisted bias + ReLU


# ----------------------------------------------------------------------------
# Kernel 2: batched FC head (fc1..fc3) + identity add.
#   g_ref   : (TILE_B, 1024) bf16 pooled features
#   wX_ref  : bf16 weights, bX_ref: (1, Cout) f32 biases
#   iden_ref: (1, k*k) f32
#   out_ref : (TILE_B, k*k) f32
# ----------------------------------------------------------------------------
def fc_head_kernel(g_ref, w4_ref, b4_ref, w5_ref, b5_ref, w6_ref, b6_ref,
                   iden_ref, out_ref):
    h = jnp.maximum(
        jnp.dot(g_ref[...], w4_ref[...], preferred_element_type=jnp.float32)
        + b4_ref[...], 0.0).astype(jnp.bfloat16)
    h = jnp.maximum(
        jnp.dot(h, w5_ref[...], preferred_element_type=jnp.float32)
        + b5_ref[...], 0.0).astype(jnp.bfloat16)
    out_ref[...] = (
        jnp.dot(h, w6_ref[...], preferred_element_type=jnp.float32)
        + b6_ref[...] + iden_ref[...])


def _pick_tile_n(N, cap):
    """Largest legal N tile: full N when it fits, else a 128-multiple divisor."""
    if N <= cap:
        return N
    for t in range(min(cap, N), 127, -1):
        if N % t == 0 and t % 128 == 0:
            return t
    return N  # no suitable divisor; fall back to one (large) tile


def _conv_vmem_bytes(k, tile_n):
    """Rough VMEM footprint of one conv+pool grid step (with pipelining)."""
    bf16, f32 = 2, 4
    x_tiles = 2 * 1 * k * tile_n * bf16                      # double-buffered x
    weights = 2 * ((k * 64 + 64 * 128 + 128 * 1024) * bf16
                   + (64 + 128 + 1024) * f32)                # double-buffered consts
    inters = (tile_n * 64 * bf16 + tile_n * 128 * bf16
              + 2 * tile_n * 1024 * f32)                     # conv3 f32 temp (+slack)
    out_tiles = 2 * 1 * 1024 * f32
    acc = 8 * 1024 * f32
    return x_tiles + weights + inters + out_tiles + acc


def stnkd_forward(x_bkn, fused_params, k, tile_n_cap=2048):
    """x_bkn: (B, k, N) float32 (PyTorch NCW layout). Returns (B, k, k)."""
    B, k_in, N = x_bkn.shape
    assert k_in == k
    tile_n = _pick_tile_n(N, tile_n_cap)
    assert N % tile_n == 0, "N must be divisible by the chosen tile_n"
    n_tiles = N // tile_n

    (w1, b1, w2, b2, w3, b3, w4, b4, w5, b5, w6, b6, iden) = fused_params

    x = x_bkn.astype(jnp.bfloat16)  # keep NCW layout; lane axis = N (dense)

    def const_spec(arr):
        nd = arr.ndim
        return pl.BlockSpec(arr.shape, lambda b, nk, _nd=nd: (0,) * _nd)

    conv_flops = 2 * B * N * (k * 64 + 64 * 128 + 128 * 1024)
    conv_bytes = (x.size * 2 + B * 1024 * 4
                  + sum(int(w.size) * 2 for w in (w1, w2, w3))
                  + sum(int(b.size) * 4 for b in (b1, b2, b3)))
    vmem_limit = min(int(_conv_vmem_bytes(k, tile_n) * 1.5) + (2 << 20), 32 << 20)

    pooled = pl.pallas_call(
        conv_pool_kernel,
        out_shape=jax.ShapeDtypeStruct((B, 1, 1024), jnp.float32),
        grid_spec=pltpu.PrefetchScalarGridSpec(
            num_scalar_prefetch=0,
            grid=(B, n_tiles),
            in_specs=[pl.BlockSpec((1, k, tile_n), lambda b, nk: (b, 0, nk))]
                     + [const_spec(p) for p in (w1, b1, w2, b2, w3, b3)],
            out_specs=pl.BlockSpec((1, 1, 1024), lambda b, nk: (b, 0, 0)),
            scratch_shapes=[pltpu.VMEM((8, 1024), jnp.float32)],
        ),
        compiler_params=pltpu.CompilerParams(
            dimension_semantics=("parallel", "arbitrary"),
            vmem_limit_bytes=vmem_limit),
        cost_estimate=pl.CostEstimate(
            flops=int(conv_flops), transcendentals=0,
            bytes_accessed=int(conv_bytes)),
    )(x, w1, b1, w2, b2, w3, b3)

    g = pooled.reshape(B, 1024).astype(jnp.bfloat16)

    # FC head: batched across B; tiled over B for large batches.
    if B > 128 and B % 128 == 0:
        tile_b, grid_b = 128, B // 128
    else:
        tile_b, grid_b = B, 1

    kk = k * k
    fc_flops = 2 * B * (1024 * 512 + 512 * 256 + 256 * kk)
    fc_bytes = (B * 1024 * 2 + B * kk * 4
                + (1024 * 512 + 512 * 256 + 256 * kk) * 2
                + (512 + 256 + kk) * 4 + kk * 4)

    def full_spec(arr):
        nd = arr.ndim
        return pl.BlockSpec(arr.shape, lambda i, _nd=nd: (0,) * _nd)

    out = pl.pallas_call(
        fc_head_kernel,
        out_shape=jax.ShapeDtypeStruct((B, kk), jnp.float32),
        grid=(grid_b,),
        in_specs=[pl.BlockSpec((tile_b, 1024), lambda i: (i, 0))]
                 + [full_spec(p) for p in (w4, b4, w5, b5, w6, b6, iden)],
        out_specs=pl.BlockSpec((tile_b, kk), lambda i: (i, 0)),
        compiler_params=pltpu.CompilerParams(
            dimension_semantics=("parallel",)),
        cost_estimate=pl.CostEstimate(
            flops=int(fc_flops), transcendentals=0,
            bytes_accessed=int(fc_bytes)),
    )(g, w4, b4, w5, b5, w6, b6, iden)

    return out.reshape(B, k, k)


# ----------------------------------------------------------------------------
# Deterministic synthetic parameters (shapes follow STNkd.__init__), with
# eval-mode BatchNorm folded into the adjacent conv / linear layer.
# Weights stored bf16 (MXU-native), biases / identity f32.
# ----------------------------------------------------------------------------
def make_fused_params(key, k):
    eps = 1e-5
    dims = [(k, 64), (64, 128), (128, 1024),    # conv1..conv3
            (1024, 512), (512, 256)]            # fc1, fc2 (all BN-fused)
    params = []
    keys = jax.random.split(key, 6 * len(dims) + 2)
    ki = 0
    for (cin, cout) in dims:
        w = 0.05 * jax.random.normal(keys[ki], (cout, cin), jnp.float32); ki += 1
        b = 0.05 * jax.random.normal(keys[ki], (cout,), jnp.float32);      ki += 1
        gamma = 1.0 + 0.1 * jax.random.normal(keys[ki], (cout,), jnp.float32); ki += 1
        beta = 0.1 * jax.random.normal(keys[ki], (cout,), jnp.float32);        ki += 1
        mean = 0.1 * jax.random.normal(keys[ki], (cout,), jnp.float32);        ki += 1
        var = jnp.abs(jax.random.normal(keys[ki], (cout,), jnp.float32)) + 0.5; ki += 1
        scale = gamma / jnp.sqrt(var + eps)
        w_eff = (w * scale[:, None]).T.astype(jnp.bfloat16)   # (cin, cout) bf16
        b_eff = ((b - mean) * scale + beta)[None]              # (1, cout) f32
        params += [w_eff, b_eff]

    # fc3: 256 -> k*k, no BN.
    w6 = 0.05 * jax.random.normal(keys[ki], (k * k, 256), jnp.float32); ki += 1
    b6 = 0.05 * jax.random.normal(keys[ki], (k * k,), jnp.float32);     ki += 1
    params += [w6.T.astype(jnp.bfloat16), b6[None]]

    iden = jnp.eye(k, dtype=jnp.float32).reshape(1, k * k)
    params.append(iden)
    return tuple(params)


def stnkd_reference(x_bkn, fused_params, k):
    """Plain-JAX reference with identical fused/bf16 math (correctness check)."""
    (w1, b1, w2, b2, w3, b3, w4, b4, w5, b5, w6, b6, iden) = fused_params

    def mm(a, w):
        return jnp.dot(a, w, preferred_element_type=jnp.float32)

    x = jnp.transpose(x_bkn.astype(jnp.bfloat16), (0, 2, 1))   # (B, N, k)
    h = jax.nn.relu(mm(x, w1) + b1).astype(jnp.bfloat16)
    h = jax.nn.relu(mm(h, w2) + b2).astype(jnp.bfloat16)
    h = jax.nn.relu(mm(h, w3) + b3)                             # (B, N, 1024) f32
    g = jnp.max(h, axis=1).astype(jnp.bfloat16)                 # (B, 1024)
    g2 = jax.nn.relu(mm(g, w4) + b4).astype(jnp.bfloat16)
    g2 = jax.nn.relu(mm(g2, w5) + b5).astype(jnp.bfloat16)
    out = mm(g2, w6) + b6 + iden
    return out.reshape(-1, k, k)


if __name__ == "__main__":
    key = jax.random.PRNGKey(0)
    k = 16            # STNkd's "k" (input channel dim / output transform size)
    B, N = 4, 1024    # small batch, typical point count

    k_x, k_p = jax.random.split(key)
    x = jax.random.normal(k_x, (B, k, N), jnp.float32)   # PyTorch NCW layout
    fused_params = make_fused_params(k_p, k)

    ref = jax.block_until_ready(stnkd_reference(x, fused_params, k))

    # Primary path: single large N tile (per-step overhead amortized away).
    out = jax.block_until_ready(stnkd_forward(x, fused_params, k))
    assert out.shape == (B, k, k)
    assert jnp.allclose(out, ref, rtol=2e-2, atol=2e-2), "mismatch (single tile)"

    # Also exercise the multi-tile online-max accumulator path.
    out_mt = jax.block_until_ready(stnkd_forward(x, fused_params, k,
                                                 tile_n_cap=256))
    assert jnp.allclose(out_mt, ref, rtol=2e-2, atol=2e-2), "mismatch (multi tile)"

    print("KERNEL_OK")
</pallas_src>

<mosaic_0001>
module attributes {stable_mosaic.version = 11 : i64} {
  func.func @conv_pool_kernel(%arg0: i32, %arg1: i32, %arg2: memref<1x16x1024xbf16, #tpu.memory_space<vmem>>, %arg3: memref<16x64xbf16, #tpu.memory_space<vmem>>, %arg4: memref<1x64xf32, #tpu.memory_space<vmem>>, %arg5: memref<64x128xbf16, #tpu.memory_space<vmem>>, %arg6: memref<1x128xf32, #tpu.memory_space<vmem>>, %arg7: memref<128x1024xbf16, #tpu.memory_space<vmem>>, %arg8: memref<1x1024xf32, #tpu.memory_space<vmem>>, %arg9: memref<1x1x1024xf32, #tpu.memory_space<vmem>>, %arg10: memref<8x1024xf32, #tpu.memory_space<vmem>>) attributes {dimension_semantics = [#tpu.dimension_semantics<parallel>, #tpu.dimension_semantics<arbitrary>], iteration_bounds = array<i64: 4, 1>, scalar_prefetch = 0 : i64, scratch_operands = 1 : i64, tpu.core_type = #tpu.core_type<tc>, window_params = [{transform_indices = @transform_0, window_bounds = array<i64: 1, 16, 1024>}, {pipeline_mode = #tpu.pipeline_mode<synchronous>, transform_indices = @transform_1, window_bounds = array<i64: 16, 64>}, {pipeline_mode = #tpu.pipeline_mode<synchronous>, transform_indices = @transform_2, window_bounds = array<i64: 1, 64>}, {pipeline_mode = #tpu.pipeline_mode<synchronous>, transform_indices = @transform_3, window_bounds = array<i64: 64, 128>}, {pipeline_mode = #tpu.pipeline_mode<synchronous>, transform_indices = @transform_4, window_bounds = array<i64: 1, 128>}, {pipeline_mode = #tpu.pipeline_mode<synchronous>, transform_indices = @transform_5, window_bounds = array<i64: 128, 1024>}, {pipeline_mode = #tpu.pipeline_mode<synchronous>, transform_indices = @transform_6, window_bounds = array<i64: 1, 1024>}, {transform_indices = @transform_7, window_bounds = array<i64: 1, 1, 1024>}]} {
    %c0_i32 = arith.constant 0 : i32
    %0 = arith.cmpi eq, %arg1, %c0_i32 : i32
    %1 = arith.extui %0 : i1 to i32
    %c0_i32_0 = arith.constant 0 : i32
    %2 = arith.cmpi ne, %1, %c0_i32_0 : i32
    scf.if %2 {
      %cst_24 = arith.constant 0xFF800000 : f32
      %31 = vector.broadcast %cst_24 : f32 to vector<8x1024xf32>
      %c0_25 = arith.constant 0 : index
      %c0_26 = arith.constant 0 : index
      %32 = vector.load %arg10[%c0_25, %c0_26] : memref<8x1024xf32, #tpu.memory_space<vmem>>, vector<8x1024xf32>
      tpu.vector_store %arg10[%c0_25, %c0_26], %31 {strides = array<i32>} : memref<8x1024xf32, #tpu.memory_space<vmem>>, vector<8x1024xf32>,
    } else {
    }
    %c0 = arith.constant 0 : index
    %c0_1 = arith.constant 0 : index
    %c0_2 = arith.constant 0 : index
    %3 = vector.load %arg2[%c0, %c0_1, %c0_2] : memref<1x16x1024xbf16, #tpu.memory_space<vmem>>, vector<1x16x1024xbf16>
    %4 = vector.shape_cast %3 : vector<1x16x1024xbf16> to vector<16x1024xbf16>
    %c0_3 = arith.constant 0 : index
    %c0_4 = arith.constant 0 : index
    %5 = vector.load %arg3[%c0_3, %c0_4] : memref<16x64xbf16, #tpu.memory_space<vmem>>, vector<16x64xbf16>
    %cst = arith.constant dense<0.000000e+00> : vector<1024x64xf32>
    %6 = tpu.matmul %4, %5, %cst {dimension_numbers = #tpu.dot_dimension_numbers<[0], [0], [1], [1], [0, 1, 1, 1], [], []>} : vector<16x1024xbf16>, vector<16x64xbf16>, vector<1024x64xf32> -> vector<1024x64xf32>
    %c0_5 = arith.constant 0 : index
    %c0_6 = arith.constant 0 : index
    %7 = vector.load %arg4[%c0_5, %c0_6] : memref<1x64xf32, #tpu.memory_space<vmem>>, vector<1x64xf32>
    %8 = vector.broadcast %7 : vector<1x64xf32> to vector<1024x64xf32>
    %9 = arith.addf %6, %8 : vector<1024x64xf32>
    %cst_7 = arith.constant 0.000000e+00 : f32
    %10 = vector.broadcast %cst_7 : f32 to vector<1024x64xf32>
    %11 = arith.maximumf %9, %10 : vector<1024x64xf32>
    %12 = arith.truncf %11 : vector<1024x64xf32> to vector<1024x64xbf16>
    %c0_8 = arith.constant 0 : index
    %c0_9 = arith.constant 0 : index
    %13 = vector.load %arg5[%c0_8, %c0_9] : memref<64x128xbf16, #tpu.memory_space<vmem>>, vector<64x128xbf16>
    %cst_10 = arith.constant dense<0.000000e+00> : vector<1024x128xf32>
    %14 = tpu.matmul %12, %13, %cst_10 {dimension_numbers = #tpu.dot_dimension_numbers<[1], [0], [0], [1], [0, 0, 1, 1], [], []>} : vector<1024x64xbf16>, vector<64x128xbf16>, vector<1024x128xf32> -> vector<1024x128xf32>
    %c0_11 = arith.constant 0 : index
    %c0_12 = arith.constant 0 : index
    %15 = vector.load %arg6[%c0_11, %c0_12] : memref<1x128xf32, #tpu.memory_space<vmem>>, vector<1x128xf32>
    %16 = vector.broadcast %15 : vector<1x128xf32> to vector<1024x128xf32>
    %17 = arith.addf %14, %16 : vector<1024x128xf32>
    %cst_13 = arith.constant 0.000000e+00 : f32
    %18 = vector.broadcast %cst_13 : f32 to vector<1024x128xf32>
    %19 = arith.maximumf %17, %18 : vector<1024x128xf32>
    %20 = arith.truncf %19 : vector<1024x128xf32> to vector<1024x128xbf16>
    %c0_14 = arith.constant 0 : index
    %c0_15 = arith.constant 0 : index
    %21 = vector.load %arg7[%c0_14, %c0_15] : memref<128x1024xbf16, #tpu.memory_space<vmem>>, vector<128x1024xbf16>
    %cst_16 = arith.constant dense<0.000000e+00> : vector<1024x1024xf32>
    %22 = tpu.matmul %20, %21, %cst_16 {dimension_numbers = #tpu.dot_dimension_numbers<[1], [0], [0], [1], [0, 0, 1, 1], [], []>} : vector<1024x128xbf16>, vector<128x1024xbf16>, vector<1024x1024xf32> -> vector<1024x1024xf32>
    %23 = vector.shape_cast %22 : vector<1024x1024xf32> to vector<128x8x1024xf32>
    %cst_17 = arith.constant dense<0xFF800000> : vector<8x1024xf32>
    %24 = vector.multi_reduction <maximumf>, %23, %cst_17 [0] : vector<128x8x1024xf32> to vector<8x1024xf32>
    %c0_18 = arith.constant 0 : index
    %c0_19 = arith.constant 0 : index
    %25 = vector.load %arg10[%c0_18, %c0_19] : memref<8x1024xf32, #tpu.memory_space<vmem>>, vector<8x1024xf32>
    %26 = arith.maximumf %25, %24 : vector<8x1024xf32>
    %c0_20 = arith.constant 0 : index
    %c0_21 = arith.constant 0 : index
    %27 = vector.load %arg10[%c0_20, %c0_21] : memref<8x1024xf32, #tpu.memory_space<vmem>>, vector<8x1024xf32>
    tpu.vector_store %arg10[%c0_20, %c0_21], %26 {strides = array<i32>} : memref<8x1024xf32, #tpu.memory_space<vmem>>, vector<8x1024xf32>,
    %c0_i32_22 = arith.constant 0 : i32
    %28 = arith.cmpi eq, %arg1, %c0_i32_22 : i32
    %29 = arith.extui %28 : i1 to i32
    %c0_i32_23 = arith.constant 0 : i32
    %30 = arith.cmpi ne, %29, %c0_i32_23 : i32
    scf.if %30 {
      %c0_24 = arith.constant 0 : index
      %c0_25 = arith.constant 0 : index
      %31 = vector.load %arg10[%c0_24, %c0_25] : memref<8x1024xf32, #tpu.memory_space<vmem>>, vector<8x1024xf32>
      %cst_26 = arith.constant dense<0xFF800000> : vector<1024xf32>
      %32 = vector.multi_reduction <maximumf>, %31, %cst_26 [0] : vector<8x1024xf32> to vector<1024xf32>
      %33 = vector.shape_cast %32 : vector<1024xf32> to vector<1x1024xf32>
      %c0_27 = arith.constant 0 : index
      %c0_28 = arith.constant 0 : index
      %34 = vector.load %arg8[%c0_27, %c0_28] : memref<1x1024xf32, #tpu.memory_space<vmem>>, vector<1x1024xf32>
      %35 = arith.addf %33, %34 : vector<1x1024xf32>
      %cst_29 = arith.constant 0.000000e+00 : f32
      %36 = vector.broadcast %cst_29 : f32 to vector<1x1024xf32>
      %37 = arith.maximumf %35, %36 : vector<1x1024xf32>
      %c0_30 = arith.constant 0 : index
      %c0_31 = arith.constant 0 : index
      %c0_32 = arith.constant 0 : index
      %38 = vector.load %arg9[%c0_30, %c0_31, %c0_32] : memref<1x1x1024xf32, #tpu.memory_space<vmem>>, vector<1x1x1024xf32>
      %39 = vector.shape_cast %38 : vector<1x1x1024xf32> to vector<1x1024xf32>
      %40 = vector.shape_cast %37 : vector<1x1024xf32> to vector<1x1x1024xf32>
      tpu.vector_store %arg9[%c0_30, %c0_31, %c0_32], %40 {strides = array<i32>} : memref<1x1x1024xf32, #tpu.memory_space<vmem>>, vector<1x1x1024xf32>,
    } else {
    }
    return
  }
  func.func @transform_0(%arg0: i32, %arg1: i32) -> (i32, i32, i32) {
    %c0_i32 = arith.constant 0 : i32
    %c0_i32_0 = arith.constant 0 : i32
    return %arg0, %c0_i32, %arg1 : i32, i32, i32
  }
  func.func @transform_1(%arg0: i32, %arg1: i32) -> (i32, i32) {
    %c0_i32 = arith.constant 0 : i32
    %c0_i32_0 = arith.constant 0 : i32
    %c0_i32_1 = arith.constant 0 : i32
    return %c0_i32, %c0_i32_0 : i32, i32
  }
  func.func @transform_2(%arg0: i32, %arg1: i32) -> (i32, i32) {
    %c0_i32 = arith.constant 0 : i32
    %c0_i32_0 = arith.constant 0 : i32
    %c0_i32_1 = arith.constant 0 : i32
    return %c0_i32, %c0_i32_0 : i32, i32
  }
  func.func @transform_3(%arg0: i32, %arg1: i32) -> (i32, i32) {
    %c0_i32 = arith.constant 0 : i32
    %c0_i32_0 = arith.constant 0 : i32
    %c0_i32_1 = arith.constant 0 : i32
    return %c0_i32, %c0_i32_0 : i32, i32
  }
  func.func @transform_4(%arg0: i32, %arg1: i32) -> (i32, i32) {
    %c0_i32 = arith.constant 0 : i32
    %c0_i32_0 = arith.constant 0 : i32
    %c0_i32_1 = arith.constant 0 : i32
    return %c0_i32, %c0_i32_0 : i32, i32
  }
  func.func @transform_5(%arg0: i32, %arg1: i32) -> (i32, i32) {
    %c0_i32 = arith.constant 0 : i32
    %c0_i32_0 = arith.constant 0 : i32
    %c0_i32_1 = arith.constant 0 : i32
    return %c0_i32, %c0_i32_0 : i32, i32
  }
  func.func @transform_6(%arg0: i32, %arg1: i32) -> (i32, i32) {
    %c0_i32 = arith.constant 0 : i32
    %c0_i32_0 = arith.constant 0 : i32
    %c0_i32_1 = arith.constant 0 : i32
    return %c0_i32, %c0_i32_0 : i32, i32
  }
  func.func @transform_7(%arg0: i32, %arg1: i32) -> (i32, i32, i32) {
    %c0_i32 = arith.constant 0 : i32
    %c0_i32_0 = arith.constant 0 : i32
    %c0_i32_1 = arith.constant 0 : i32
    return %arg0, %c0_i32, %c0_i32_0 : i32, i32, i32
  }
}

</mosaic_0001>

<llo_original>
// kernel: tpu_custom_call.1
$region0: #{tpu_custom_call.1}
  #allocation0 [shape = 'u32[]', space=smem, size = 0x4, offset = 0x4, fixed_abs, tag = 'smem constant byte address 0x4 - core index']
  #allocation1 [shape = 'u32[144,128]{1,0:T(1,128)}', space=vmem, size = 0x12000, scoped, tag = 'internal scratch']
  #allocation2 [shape = 'f32[8,1024]{1,0:T(8,128)}', space=vmem, size = 0x8000, scoped, tag = 'scratch operand']
  %s0 = inlined_call_operand.hbm [shape: bf16[4,16,1024], index: 0, kind: input, shape index: {}]
  %s1 = inlined_call_operand.hbm [shape: bf16[16,64], index: 1, kind: input, shape index: {}]
  %s2 = inlined_call_operand.vmem [shape: f32[1,64], index: 2, kind: input, shape index: {}]
  %s3 = inlined_call_operand.hbm [shape: bf16[64,128], index: 3, kind: input, shape index: {}]
  %s4 = inlined_call_operand.vmem [shape: f32[1,128], index: 4, kind: input, shape index: {}]
  %s5 = inlined_call_operand.hbm [shape: bf16[128,1024], index: 5, kind: input, shape index: {}]
  %s6 = inlined_call_operand.vmem [shape: f32[1,1024], index: 6, kind: input, shape index: {}]
  %s7 = inlined_call_operand.hbm [shape: f32[4,1,1024], index: 7, kind: output, shape index: {}]
  %s8 = sld [smem:[#allocation0]]
  $region85: #{tpu_custom_call.1} parent=0
    _
  %s10 = ssub.s32 1, %s8
  %s11 = scalar_select 0, %s10, %s8
  $region1: #{tpu_custom_call.1} parent=0
    #allocation3 [shape = 'u8[65536]{0}', space=vmem, size = 0x10000, scoped, tag = 'input window, operand 0']
    #allocation4 [shape = 's32[2]{0}', space=sflag, size = 0x8, scoped, tag = 'scoped memory for tpu_custom_call.1']
    #allocation5 [shape = 's32[2]{0}', space=sflag, size = 0x8, scoped, tag = 'scoped memory for tpu_custom_call.1']
    #allocation6 [shape = 'u8[4096]{0}', space=vmem, size = 0x1000, scoped, tag = 'input window, operand 1, single buffered']
    #allocation7 [shape = 's32[1]{0}', space=sflag, size = 0x4, scoped, tag = 'scoped memory for tpu_custom_call.1']
    #allocation8 [shape = 'u8[16384]{0}', space=vmem, size = 0x4000, scoped, tag = 'input window, operand 3, single buffered']
    #allocation9 [shape = 'u8[262144]{0}', space=vmem, size = 0x40000, scoped, tag = 'input window, operand 5, single buffered']
    #allocation10 [shape = 's32[1]{0}', space=sflag, size = 0x4, scoped, tag = 'scoped memory for tpu_custom_call.1']
    #allocation11 [shape = 'u8[8192]{0}', space=vmem, size = 0x2000, scoped, tag = 'output window, operand 0']
    %12 = vsyncpa [#allocation4], 0
    %s13 = scalar_lea.sflag [#allocation4], 1
    %14 = vsyncpa %s13, 0
    %15 = vsyncpa [#allocation7], 0
    %16 = vsyncpa [#allocation10], 0
    %17 = vsyncpa [#allocation5], 0
    %s18 = scalar_lea.sflag [#allocation5], 1
    %19 = vsyncpa %s18, 0
    loop: start=0, step=1, limit=6
    $region2: #{tpu_custom_call.1} parent=1 // loop_pre_header
      _
    $region3: #{tpu_custom_call.1} parent=1 // loop_header
      %s21 = sphi 0, %s25
      %p22 = scmp.ge.s32.totalorder %s21, 6
      %s28 = sphi 0, %s40
      %s29 = sphi 0, %s36
      %s30 = sphi 0, %s28
      %s31 = sphi 0, %s29
      %s32 = sphi 0, %s30
      %s33 = sphi 0, %s31
      %s45 = sphi 0, %s47
      %s48 = sphi 0, %s45
      %s49 = sphi 0, %s48
      %s65 = sphi 0, %s49
      %s69 = sphi 0, %s69
      %s71 = sphi 0, %s69
      %s72 = sphi 0, %s71
      %s86 = sphi 0, %s72
      %s90 = sphi 0, %s90
      %s92 = sphi 0, %s90
      %s93 = sphi 0, %s92
      %s107 = sphi 0, %s93
      %s111 = sphi 0, %s111
      %s113 = sphi 0, %s111
      %s114 = sphi 0, %s113
      %s128 = sphi 0, %s114
      %s132 = sphi 0, %s132
      %s134 = sphi 0, %s132
      %s135 = sphi 0, %s134
      %s149 = sphi 0, %s135
      %s153 = sphi 0, %s153
      %s155 = sphi 0, %s153
      %s156 = sphi 0, %s155
      %s170 = sphi 0, %s156
      %s174 = sphi 0, %s174
      %s176 = sphi 0, %s174
      %s177 = sphi 0, %s176
      %s191 = sphi 0, %s177
      %s197 = sphi 0, %s199
      %s200 = sphi 0, %s197
      %s201 = sphi 0, %s200
      %s217 = sphi 0, %s201
    $region4: #{tpu_custom_call.1} parent=1 // loop_header_branch
      %24 = sbr.rel (%p22) target = $region8
    $region5: #{tpu_custom_call.1} parent=1 // loop_body
      %s26 = ssub.s32 %s21, 1
      %s27 = ssub.s32 %s21, 2
      %s34 = sadd.s32 1, %s29
      %p35 = scmp.ge.s32.totalorder %s34, 1
      %s36 = scalar_select %p35, 0, %s34
      %s37 = sadd.s32 1, %s28
      %s38 = scalar_select %p35, %s37, %s28
      %p39 = scmp.ge.s32.totalorder %s38, 4
      %s40 = scalar_select %p39, 0, %s38
      %s41 = ssub.s32 %s28, %s40
      %s42 = ssub.s32 %s29, %s36
      %s43 = sor.u32 %s41, %s42
      %p44 = scmp.eq.s32.totalorder %s43, 0
      %s46 = sadd.s32 %s45, 1
      %s47 = scalar_select %p44, %s45, %s46
      %p50 = pneg %p44
      %p51 = scmp.eq.s32.totalorder %s21, 3
      %p52 = por %p50, %p51
      %p53 = scmp.ne.s32.totalorder %s45, %s48
      %p54 = scmp.eq.s32.totalorder %s21, 0
      %p55 = por %p53, %p54
      %p56 = scmp.ne.s32.totalorder %s45, %s48
      %p57 = scmp.eq.s32.totalorder %s26, 3
      %p58 = por %p56, %p57
      %p59 = scmp.ne.s32.totalorder %s48, %s49
      %p60 = scmp.eq.s32.totalorder %s26, 0
      %p61 = por %p59, %p60
      %p62 = scmp.ne.s32.totalorder %s48, %s49
      %p63 = scmp.eq.s32.totalorder %s27, 3
      %p64 = por %p62, %p63
      %p66 = scmp.ne.s32.totalorder %s49, %s65
      %p67 = scmp.eq.s32.totalorder %s27, 0
      %p68 = por %p66, %p67
      %s70 = sadd.s32 %s69, 1
      %p73 = scmp.eq.s32.totalorder %s21, 3
      %p74 = scmp.ne.s32.totalorder %s69, %s71
      %p75 = scmp.eq.s32.totalorder %s21, 0
      %p76 = por %p74, %p75
      %p77 = scmp.ne.s32.totalorder %s69, %s71
      %p78 = scmp.eq.s32.totalorder %s26, 3
      %p79 = por %p77, %p78
      %p80 = scmp.ne.s32.totalorder %s71, %s72
      %p81 = scmp.eq.s32.totalorder %s26, 0
      %p82 = por %p80, %p81
      %p83 = scmp.ne.s32.totalorder %s71, %s72
      %p84 = scmp.eq.s32.totalorder %s27, 3
      %p85 = por %p83, %p84
      %p87 = scmp.ne.s32.totalorder %s72, %s86
      %p88 = scmp.eq.s32.totalorder %s27, 0
      %p89 = por %p87, %p88
      %s91 = sadd.s32 %s90, 1
      %p94 = scmp.eq.s32.totalorder %s21, 3
      %p95 = scmp.ne.s32.totalorder %s90, %s92
      %p96 = scmp.eq.s32.totalorder %s21, 0
      %p97 = por %p95, %p96
      %p98 = scmp.ne.s32.totalorder %s90, %s92
      %p99 = scmp.eq.s32.totalorder %s26, 3
      %p100 = por %p98, %p99
      %p101 = scmp.ne.s32.totalorder %s92, %s93
      %p102 = scmp.eq.s32.totalorder %s26, 0
      %p103 = por %p101, %p102
      %p104 = scmp.ne.s32.totalorder %s92, %s93
      %p105 = scmp.eq.s32.totalorder %s27, 3
      %p106 = por %p104, %p105
      %p108 = scmp.ne.s32.totalorder %s93, %s107
      %p109 = scmp.eq.s32.totalorder %s27, 0
      %p110 = por %p108, %p109
      %s112 = sadd.s32 %s111, 1
      %p115 = scmp.eq.s32.totalorder %s21, 3
      %p116 = scmp.ne.s32.totalorder %s111, %s113
      %p117 = scmp.eq.s32.totalorder %s21, 0
      %p118 = por %p116, %p117
      %p119 = scmp.ne.s32.totalorder %s111, %s113
      %p120 = scmp.eq.s32.totalorder %s26, 3
      %p121 = por %p119, %p120
      %p122 = scmp.ne.s32.totalorder %s113, %s114
      %p123 = scmp.eq.s32.totalorder %s26, 0
      %p124 = por %p122, %p123
      %p125 = scmp.ne.s32.totalorder %s113, %s114
      %p126 = scmp.eq.s32.totalorder %s27, 3
      %p127 = por %p125, %p126
      %p129 = scmp.ne.s32.totalorder %s114, %s128
      %p130 = scmp.eq.s32.totalorder %s27, 0
      %p131 = por %p129, %p130
      %s133 = sadd.s32 %s132, 1
      %p136 = scmp.eq.s32.totalorder %s21, 3
      %p137 = scmp.ne.s32.totalorder %s132, %s134
      %p138 = scmp.eq.s32.totalorder %s21, 0
      %p139 = por %p137, %p138
      %p140 = scmp.ne.s32.totalorder %s132, %s134
      %p141 = scmp.eq.s32.totalorder %s26, 3
      %p142 = por %p140, %p141
      %p143 = scmp.ne.s32.totalorder %s134, %s135
      %p144 = scmp.eq.s32.totalorder %s26, 0
      %p145 = por %p143, %p144
      %p146 = scmp.ne.s32.totalorder %s134, %s135
      %p147 = scmp.eq.s32.totalorder %s27, 3
      %p148 = por %p146, %p147
      %p150 = scmp.ne.s32.totalorder %s135, %s149
      %p151 = scmp.eq.s32.totalorder %s27, 0
      %p152 = por %p150, %p151
      %s154 = sadd.s32 %s153, 1
      %p157 = scmp.eq.s32.totalorder %s21, 3
      %p158 = scmp.ne.s32.totalorder %s153, %s155
      %p159 = scmp.eq.s32.totalorder %s21, 0
      %p160 = por %p158, %p159
      %p161 = scmp.ne.s32.totalorder %s153, %s155
      %p162 = scmp.eq.s32.totalorder %s26, 3
      %p163 = por %p161, %p162
      %p164 = scmp.ne.s32.totalorder %s155, %s156
      %p165 = scmp.eq.s32.totalorder %s26, 0
      %p166 = por %p164, %p165
      %p167 = scmp.ne.s32.totalorder %s155, %s156
      %p168 = scmp.eq.s32.totalorder %s27, 3
      %p169 = por %p167, %p168
      %p171 = scmp.ne.s32.totalorder %s156, %s170
      %p172 = scmp.eq.s32.totalorder %s27, 0
      %p173 = por %p171, %p172
      %s175 = sadd.s32 %s174, 1
      %p178 = scmp.eq.s32.totalorder %s21, 3
      %p179 = scmp.ne.s32.totalorder %s174, %s176
      %p180 = scmp.eq.s32.totalorder %s21, 0
      %p181 = por %p179, %p180
      %p182 = scmp.ne.s32.totalorder %s174, %s176
      %p183 = scmp.eq.s32.totalorder %s26, 3
      %p184 = por %p182, %p183
      %p185 = scmp.ne.s32.totalorder %s176, %s177
      %p186 = scmp.eq.s32.totalorder %s26, 0
      %p187 = por %p185, %p186
      %p188 = scmp.ne.s32.totalorder %s176, %s177
      %p189 = scmp.eq.s32.totalorder %s27, 3
      %p190 = por %p188, %p189
      %p192 = scmp.ne.s32.totalorder %s177, %s191
      %p193 = scmp.eq.s32.totalorder %s27, 0
      %p194 = por %p192, %p193
      %s195 = ssub.s32 %s28, %s40
      %p196 = scmp.eq.s32.totalorder %s195, 0
      %s198 = sadd.s32 %s197, 1
      %s199 = scalar_select %p196, %s197, %s198
      %p202 = pneg %p196
      %p203 = scmp.eq.s32.totalorder %s21, 3
      %p204 = por %p202, %p203
      %p205 = scmp.ne.s32.totalorder %s197, %s200
      %p206 = scmp.eq.s32.totalorder %s21, 0
      %p207 = por %p205, %p206
      %p208 = scmp.ne.s32.totalorder %s197, %s200
      %p209 = scmp.eq.s32.totalorder %s26, 3
      %p210 = por %p208, %p209
      %p211 = scmp.ne.s32.totalorder %s200, %s201
      %p212 = scmp.eq.s32.totalorder %s26, 0
      %p213 = por %p211, %p212
      %p214 = scmp.ne.s32.totalorder %s200, %s201
      %p215 = scmp.eq.s32.totalorder %s27, 3
      %p216 = por %p214, %p215
      %p218 = scmp.ne.s32.totalorder %s201, %s217
      %p219 = scmp.eq.s32.totalorder %s27, 0
      %p220 = por %p218, %p219
      %p221 = scmp.le.s32.totalorder 1, %s21
      %p222 = scmp.lt.s32.totalorder %s21, 5
      %p223 = pnand %p221, %p222
      %p224 = pneg %p223
      // Predicated region
      $region9: #{tpu_custom_call.1} parent=5 // pred_check
        _
      $region10: #{tpu_custom_call.1} parent=5 // pred_check_branch
        %226 = sbr.rel (%p223) target = $region12
      $region11: #{tpu_custom_call.1} parent=5 // pred_region
        %s227 = ssub.s32 %s21, 1
        // Predicated region
        $region13: #{tpu_custom_call.1} parent=11 // pred_check
          %p228 = pneg %p82
        $region14: #{tpu_custom_call.1} parent=11 // pred_check_branch
          %230 = sbr.rel (%p228) target = $region16
        $region15: #{tpu_custom_call.1} parent=11 // pred_region
          %s232 = ssub.s32 128, 128
          %233 = vsyncadd [#allocation7], %s232
          %s234 = sshll.u32 [#allocation6], 4
          %s235 = int_to_ptr.vmem [resolvable:$true] %s234
          %240 = dma.hbm_to_vmem [thread:$0]  %s1, 128, %s235, [#allocation7], 64, 64, 4
        $region16: #{tpu_custom_call.1} parent=11 // pred_fallthru
          _
        // Predicated region
        $region17: #{tpu_custom_call.1} parent=11 // pred_check
          %p241 = pneg %p103
        $region18: #{tpu_custom_call.1} parent=11 // pred_check_branch
          %243 = sbr.rel (%p241) target = $region20
        $region19: #{tpu_custom_call.1} parent=11 // pred_region
          _
        $region20: #{tpu_custom_call.1} parent=11 // pred_fallthru
          _
        // Predicated region
        $region21: #{tpu_custom_call.1} parent=11 // pred_check
          %p244 = pneg %p124
        $region22: #{tpu_custom_call.1} parent=11 // pred_check_branch
          %246 = sbr.rel (%p244) target = $region24
        $region23: #{tpu_custom_call.1} parent=11 // pred_region
          %s248 = ssub.s32 512, 512
          %249 = vsyncadd [#allocation7], %s248
          %s250 = sshll.u32 [#allocation8], 4
          %s251 = int_to_ptr.vmem [resolvable:$true] %s250
          %256 = dma.hbm_to_vmem [thread:$0]  %s3, 512, %s251, [#allocation7], 64, 64, 4
        $region24: #{tpu_custom_call.1} parent=11 // pred_fallthru
          _
        // Predicated region
        $region25: #{tpu_custom_call.1} parent=11 // pred_check
          %p257 = pneg %p145
        $region26: #{tpu_custom_call.1} parent=11 // pred_check_branch
          %259 = sbr.rel (%p257) target = $region28
        $region27: #{tpu_custom_call.1} parent=11 // pred_region
          _
        $region28: #{tpu_custom_call.1} parent=11 // pred_fallthru
          _
        // Predicated region
        $region29: #{tpu_custom_call.1} parent=11 // pred_check
          %p260 = pneg %p166
        $region30: #{tpu_custom_call.1} parent=11 // pred_check_branch
          %262 = sbr.rel (%p260) target = $region32
        $region31: #{tpu_custom_call.1} parent=11 // pred_region
          %s264 = ssub.s32 8192, 8192
          %265 = vsyncadd [#allocation10], %s264
          %s266 = sshll.u32 [#allocation9], 4
          %s267 = int_to_ptr.vmem [resolvable:$true] %s266
          %272 = dma.hbm_to_vmem [thread:$0]  %s5, 8192, %s267, [#allocation10], 512, 512, 32
        $region32: #{tpu_custom_call.1} parent=11 // pred_fallthru
          _
        // Predicated region
        $region33: #{tpu_custom_call.1} parent=11 // pred_check
          %p273 = pneg %p187
        $region34: #{tpu_custom_call.1} parent=11 // pred_check_branch
          %275 = sbr.rel (%p273) target = $region36
        $region35: #{tpu_custom_call.1} parent=11 // pred_region
          _
        $region36: #{tpu_custom_call.1} parent=11 // pred_fallthru
          _
      $region12: #{tpu_custom_call.1} parent=5 // pred_fallthru
        _
      %p276 = scmp.lt.s32.totalorder %s21, 4
      // Predicated region
      $region37: #{tpu_custom_call.1} parent=5 // pred_check
        %p277 = pneg %p276
      $region38: #{tpu_custom_call.1} parent=5 // pred_check_branch
        %279 = sbr.rel (%p277) target = $region40
      $region39: #{tpu_custom_call.1} parent=5 // pred_region
        // Predicated region
        $region41: #{tpu_custom_call.1} parent=39 // pred_check
          %p280 = pneg %p55
        $region42: #{tpu_custom_call.1} parent=39 // pred_check_branch
          %282 = sbr.rel (%p280) target = $region44
        $region43: #{tpu_custom_call.1} parent=39 // pred_region
          %s283 = sand.u32 %s45, 1
          %s284 = scalar_lea.sflag [#allocation4], %s283
          %s285 = sand.u32 %s45, 1
          %s286 = smul.addr %s285, 64
          %s287 = scalar_lea.vmem [#allocation3], %s286
          %s288 = smul.u32 8, %s29
          %s290 = ssub.s32 1024, 1024
          %291 = vsyncadd %s284, %s290
          %s292 = smul.addr %s28, 16
          %s293 = sadd.s32 %s288, %s292
          %s294 = smul.addr %s293, 64
          %s295 = scalar_lea.hbm %s0, %s294
          %s296 = sshll.u32 %s287, 4
          %s297 = int_to_ptr.vmem [resolvable:$true] %s296
          %302 = dma.hbm_to_vmem [thread:$0]  %s295, 1024, %s297, %s284, 512, 512, 32
        $region44: #{tpu_custom_call.1} parent=39 // pred_fallthru
          _
      $region40: #{tpu_custom_call.1} parent=5 // pred_fallthru
        _
      %p303 = scmp.le.s32.totalorder 1, %s21
      %p304 = scmp.lt.s32.totalorder %s21, 5
      %p305 = pnand %p303, %p304
      %p306 = pneg %p305
      // Predicated region
      $region45: #{tpu_custom_call.1} parent=5 // pred_check
        _
      $region46: #{tpu_custom_call.1} parent=5 // pred_check_branch
        %308 = sbr.rel (%p305) target = $region48
      $region47: #{tpu_custom_call.1} parent=5 // pred_region
        %s309 = ssub.s32 %s21, 1
        %s310 = sand.u32 %s48, 1
        %s311 = scalar_lea.sflag [#allocation4], %s310
        %s312 = sand.u32 %s48, 1
        %s313 = smul.addr %s312, 64
        %s314 = scalar_lea.vmem [#allocation3], %s313
        // Predicated region
        $region49: #{tpu_custom_call.1} parent=47 // pred_check
          %p315 = pneg %p61
        $region50: #{tpu_custom_call.1} parent=47 // pred_check_branch
          %317 = sbr.rel (%p315) target = $region52
        $region51: #{tpu_custom_call.1} parent=47 // pred_region
          %318 = dma.done %s311, 1024
        $region52: #{tpu_custom_call.1} parent=47 // pred_fallthru
          _
        // Predicated region
        $region53: #{tpu_custom_call.1} parent=47 // pred_check
          %p319 = pneg %p82
        $region54: #{tpu_custom_call.1} parent=47 // pred_check_branch
          %321 = sbr.rel (%p319) target = $region56
        $region55: #{tpu_custom_call.1} parent=47 // pred_region
          %322 = dma.done [#allocation7], 128
        $region56: #{tpu_custom_call.1} parent=47 // pred_fallthru
          _
        // Predicated region
        $region57: #{tpu_custom_call.1} parent=47 // pred_check
          %p323 = pneg %p124
        $region58: #{tpu_custom_call.1} parent=47 // pred_check_branch
          %325 = sbr.rel (%p323) target = $region60
        $region59: #{tpu_custom_call.1} parent=47 // pred_region
          %326 = dma.done [#allocation7], 512
        $region60: #{tpu_custom_call.1} parent=47 // pred_fallthru
          _
        // Predicated region
        $region61: #{tpu_custom_call.1} parent=47 // pred_check
          %p327 = pneg %p166
        $region62: #{tpu_custom_call.1} parent=47 // pred_check_branch
          %329 = sbr.rel (%p327) target = $region64
        $region63: #{tpu_custom_call.1} parent=47 // pred_region
          %330 = dma.done [#allocation10], 8192
        $region64: #{tpu_custom_call.1} parent=47 // pred_fallthru
          _
        %s331 = sand.u32 %s48, 1
        %s332 = scalar_lea.sflag [#allocation4], %s331
        %s333 = sand.u32 %s48, 1
        %s334 = smul.addr %s333, 64
        %s335 = scalar_lea.vmem [#allocation3], %s334
        %p336 = pneg %p61
        %p337 = pneg %p58
        %p338 = pneg %p82
        %p339 = pneg %p79
        %p340 = pneg %p103
        %p341 = pneg %p100
        %p342 = pneg %p124
        %p343 = pneg %p121
        %p344 = pneg %p145
        %p345 = pneg %p142
        %p346 = pneg %p166
        %p347 = pneg %p163
        %p348 = pneg %p187
        %p349 = pneg %p184
        %p350 = pneg %p213
        %p351 = pneg %p210
        %s352 = sand.u32 %s200, 1
        %s353 = scalar_lea.sflag [#allocation5], %s352
        %s354 = sand.u32 %s200, 1
        %s355 = smul.addr %s354, 8
        %s356 = scalar_lea.vmem [#allocation11], %s355
        %s357 = smul.u32 8, %s31
        %p359 = scmp.eq.s32.totalorder %s31, 0
        // Predicated region
        $region65: #{tpu_custom_call.1} parent=47 // pred_check
          %p360 = pneg %p359
        $region66: #{tpu_custom_call.1} parent=47 // pred_check_branch
          %362 = sbr.rel (%p360) target = $region68
        $region67: #{tpu_custom_call.1} parent=47 // pred_region
          %363 = vst [vmem:[#allocation2] sm:$0xff] -inf
          %364 = vst [vmem:[#allocation2 + $0x8] sm:$0xff] -inf
          %365 = vst [vmem:[#allocation2 + $0x10] sm:$0xff] -inf
          %366 = vst [vmem:[#allocation2 + $0x18] sm:$0xff] -inf
          %367 = vst [vmem:[#allocation2 + $0x20] sm:$0xff] -inf
          %368 = vst [vmem:[#allocation2 + $0x28] sm:$0xff] -inf
          %369 = vst [vmem:[#allocation2 + $0x30] sm:$0xff] -inf
          %370 = vst [vmem:[#allocation2 + $0x38] sm:$0xff] -inf
        $region68: #{tpu_custom_call.1} parent=47 // pred_fallthru
          _
        %v371 = vld [vmem:[%s314] sm:$0xff]
        %v372 = vld [vmem:[%s314 + $0x8] sm:$0xff]
        %v373 = vld [vmem:[%s314 + $0x10] sm:$0xff]
        %v374 = vld [vmem:[%s314 + $0x18] sm:$0xff]
        %v375 = vld [vmem:[%s314 + $0x20] sm:$0xff]
        %v376 = vld [vmem:[%s314 + $0x28] sm:$0xff]
        %v377 = vld [vmem:[%s314 + $0x30] sm:$0xff]
        %v378 = vld [vmem:[%s314 + $0x38] sm:$0xff]
        %v379 = vld [vmem:[#allocation6] sm:$0xf]
        %v380 = vld [vmem:[#allocation6 + $0x4] sm:$0xf]
        %v381 = vld [vmem:[%s2] sm:$0x1]
        %v383 = vlaneseq
        %v384 = vshrl.u32 %v383, 7
        %v385 = vsub.s32 0, %v384
        %v386 = vrot.slane %v381, %v385
        %v396 = vunpack.c.l.b16 %v371
        %v397 = vunpack.c.h.b16 %v371
        %v398 = vunpack.c.l.b16 %v372
        %v399 = vunpack.c.h.b16 %v372
        %v400 = vunpack.c.l.b16 %v373
        %v401 = vunpack.c.h.b16 %v373
        %v402 = vunpack.c.l.b16 %v374
        %v403 = vunpack.c.h.b16 %v374
        %v404 = vunpack.c.l.b16 %v375
        %v405 = vunpack.c.h.b16 %v375
        %v406 = vunpack.c.l.b16 %v376
        %v407 = vunpack.c.h.b16 %v376
        %v408 = vunpack.c.l.b16 %v377
        %v409 = vunpack.c.h.b16 %v377
        %v410 = vunpack.c.l.b16 %v378
        %v411 = vunpack.c.h.b16 %v378
        %v412 = vpack.c.b16 %v404, %v396
        %v413 = vpack.c.b16 %v405, %v397
        %v414 = vpack.c.b16 %v406, %v398
        %v415 = vpack.c.b16 %v407, %v399
        %v416 = vpack.c.b16 %v408, %v400
        %v417 = vpack.c.b16 %v409, %v401
        %v418 = vpack.c.b16 %v410, %v402
        %v419 = vpack.c.b16 %v411, %v403
        %428 = vxpose.xlu0.c.b16.start [1/8] %v412, 128
        %429 = vxpose.xlu0.c.b16.cont [2/8] 0, 128
        %430 = vxpose.xlu0.c.b16.cont [3/8] 0, 128
        %431 = vxpose.xlu0.c.b16.cont [4/8] 0, 128
        %432 = vxpose.xlu0.c.b16.cont [5/8] 0, 128
        %433 = vxpose.xlu0.c.b16.cont [6/8] 0, 128
        %434 = vxpose.xlu0.c.b16.cont [7/8] 0, 128
        %435 = vxpose.xlu0.c.b16.end [8/8] 0, 128
        %v436 = vpop.trf.xlu0
        %v437 = vpop.trf.xlu0
        %v438 = vpop.trf.xlu0
        %v439 = vpop.trf.xlu0
        %v440 = vpop.trf.xlu0
        %v441 = vpop.trf.xlu0
        %v442 = vpop.trf.xlu0
        %v443 = vpop.trf.xlu0
        %444 = vxpose.xlu0.c.b16.start [1/8] %v413, 128
        %445 = vxpose.xlu0.c.b16.cont [2/8] 0, 128
        %446 = vxpose.xlu0.c.b16.cont [3/8] 0, 128
        %447 = vxpose.xlu0.c.b16.cont [4/8] 0, 128
        %448 = vxpose.xlu0.c.b16.cont [5/8] 0, 128
        %449 = vxpose.xlu0.c.b16.cont [6/8] 0, 128
        %450 = vxpose.xlu0.c.b16.cont [7/8] 0, 128
        %451 = vxpose.xlu0.c.b16.end [8/8] 0, 128
        %v452 = vpop.trf.xlu0
        %v453 = vpop.trf.xlu0
        %v454 = vpop.trf.xlu0
        %v455 = vpop.trf.xlu0
        %v456 = vpop.trf.xlu0
        %v457 = vpop.trf.xlu0
        %v458 = vpop.trf.xlu0
        %v459 = vpop.trf.xlu0
        %460 = vxpose.xlu0.c.b16.start [1/8] %v414, 128
        %461 = vxpose.xlu0.c.b16.cont [2/8] 0, 128
        %462 = vxpose.xlu0.c.b16.cont [3/8] 0, 128
        %463 = vxpose.xlu0.c.b16.cont [4/8] 0, 128
        %464 = vxpose.xlu0.c.b16.cont [5/8] 0, 128
        %465 = vxpose.xlu0.c.b16.cont [6/8] 0, 128
        %466 = vxpose.xlu0.c.b16.cont [7/8] 0, 128
        %467 = vxpose.xlu0.c.b16.end [8/8] 0, 128
        %v468 = vpop.trf.xlu0
        %v469 = vpop.trf.xlu0
        %v470 = vpop.trf.xlu0
        %v471 = vpop.trf.xlu0
        %v472 = vpop.trf.xlu0
        %v473 = vpop.trf.xlu0
        %v474 = vpop.trf.xlu0
        %v475 = vpop.trf.xlu0
        %476 = vxpose.xlu0.c.b16.start [1/8] %v415, 128
        %477 = vxpose.xlu0.c.b16.cont [2/8] 0, 128
        %478 = vxpose.xlu0.c.b16.cont [3/8] 0, 128
        %479 = vxpose.xlu0.c.b16.cont [4/8] 0, 128
        %480 = vxpose.xlu0.c.b16.cont [5/8] 0, 128
        %481 = vxpose.xlu0.c.b16.cont [6/8] 0, 128
        %482 = vxpose.xlu0.c.b16.cont [7/8] 0, 128
        %483 = vxpose.xlu0.c.b16.end [8/8] 0, 128
        %v484 = vpop.trf.xlu0
        %v485 = vpop.trf.xlu0
        %v486 = vpop.trf.xlu0
        %v487 = vpop.trf.xlu0
        %v488 = vpop.trf.xlu0
        %v489 = vpop.trf.xlu0
        %v490 = vpop.trf.xlu0
        %v491 = vpop.trf.xlu0
        %492 = vxpose.xlu0.c.b16.start [1/8] %v416, 128
        %493 = vxpose.xlu0.c.b16.cont [2/8] 0, 128
        %494 = vxpose.xlu0.c.b16.cont [3/8] 0, 128
        %495 = vxpose.xlu0.c.b16.cont [4/8] 0, 128
        %496 = vxpose.xlu0.c.b16.cont [5/8] 0, 128
        %497 = vxpose.xlu0.c.b16.cont [6/8] 0, 128
        %498 = vxpose.xlu0.c.b16.cont [7/8] 0, 128
        %499 = vxpose.xlu0.c.b16.end [8/8] 0, 128
        %v500 = vpop.trf.xlu0
        %v501 = vpop.trf.xlu0
        %v502 = vpop.trf.xlu0
        %v503 = vpop.trf.xlu0
        %v504 = vpop.trf.xlu0
        %v505 = vpop.trf.xlu0
        %v506 = vpop.trf.xlu0
        %v507 = vpop.trf.xlu0
        %508 = vxpose.xlu0.c.b16.start [1/8] %v417, 128
        %509 = vxpose.xlu0.c.b16.cont [2/8] 0, 128
        %510 = vxpose.xlu0.c.b16.cont [3/8] 0, 128
        %511 = vxpose.xlu0.c.b16.cont [4/8] 0, 128
        %512 = vxpose.xlu0.c.b16.cont [5/8] 0, 128
        %513 = vxpose.xlu0.c.b16.cont [6/8] 0, 128
        %514 = vxpose.xlu0.c.b16.cont [7/8] 0, 128
        %515 = vxpose.xlu0.c.b16.end [8/8] 0, 128
        %v516 = vpop.trf.xlu0
        %v517 = vpop.trf.xlu0
        %v518 = vpop.trf.xlu0
        %v519 = vpop.trf.xlu0
        %v520 = vpop.trf.xlu0
        %v521 = vpop.trf.xlu0
        %v522 = vpop.trf.xlu0
        %v523 = vpop.trf.xlu0
        %524 = vxpose.xlu0.c.b16.start [1/8] %v418, 128
        %525 = vxpose.xlu0.c.b16.cont [2/8] 0, 128
        %526 = vxpose.xlu0.c.b16.cont [3/8] 0, 128
        %527 = vxpose.xlu0.c.b16.cont [4/8] 0, 128
        %528 = vxpose.xlu0.c.b16.cont [5/8] 0, 128
        %529 = vxpose.xlu0.c.b16.cont [6/8] 0, 128
        %530 = vxpose.xlu0.c.b16.cont [7/8] 0, 128
        %531 = vxpose.xlu0.c.b16.end [8/8] 0, 128
        %v532 = vpop.trf.xlu0
        %v533 = vpop.trf.xlu0
        %v534 = vpop.trf.xlu0
        %v535 = vpop.trf.xlu0
        %v536 = vpop.trf.xlu0
        %v537 = vpop.trf.xlu0
        %v538 = vpop.trf.xlu0
        %v539 = vpop.trf.xlu0
        %540 = vxpose.xlu0.c.b16.start [1/8] %v419, 128
        %541 = vxpose.xlu0.c.b16.cont [2/8] 0, 128
        %542 = vxpose.xlu0.c.b16.cont [3/8] 0, 128
        %543 = vxpose.xlu0.c.b16.cont [4/8] 0, 128
        %544 = vxpose.xlu0.c.b16.cont [5/8] 0, 128
        %545 = vxpose.xlu0.c.b16.cont [6/8] 0, 128
        %546 = vxpose.xlu0.c.b16.cont [7/8] 0, 128
        %547 = vxpose.xlu0.c.b16.end [8/8] 0, 128
        %v548 = vpop.trf.xlu0
        %v549 = vpop.trf.xlu0
        %v550 = vpop.trf.xlu0
        %v551 = vpop.trf.xlu0
        %v552 = vpop.trf.xlu0
        %v553 = vpop.trf.xlu0
        %v554 = vpop.trf.xlu0
        %v555 = vpop.trf.xlu0
        %v558 = vunpack.c.l.b16 %v379
        %v559 = vunpack.c.l.b16 %v380
        %v560 = vpack.c.b16 %v559, %v558
        %vm562 = vcmask 130048
        %v564 = vsel %vm562, %v436, 0
        %v567 = vsel %vm562, %v437, 0
        %v570 = vsel %vm562, %v438, 0
        %v573 = vsel %vm562, %v439, 0
        %v576 = vsel %vm562, %v440, 0
        %v579 = vsel %vm562, %v441, 0
        %v582 = vsel %vm562, %v442, 0
        %v585 = vsel %vm562, %v443, 0
        %v588 = vsel %vm562, %v452, 0
        %v591 = vsel %vm562, %v453, 0
        %v594 = vsel %vm562, %v454, 0
        %v597 = vsel %vm562, %v455, 0
        %v600 = vsel %vm562, %v456, 0
        %v603 = vsel %vm562, %v457, 0
        %v606 = vsel %vm562, %v458, 0
        %v609 = vsel %vm562, %v459, 0
        %v612 = vsel %vm562, %v468, 0
        %v615 = vsel %vm562, %v469, 0
        %v618 = vsel %vm562, %v470, 0
        %v621 = vsel %vm562, %v471, 0
        %v624 = vsel %vm562, %v472, 0
        %v627 = vsel %vm562, %v473, 0
        %v630 = vsel %vm562, %v474, 0
        %v633 = vsel %vm562, %v475, 0
        %v636 = vsel %vm562, %v484, 0
        %v639 = vsel %vm562, %v485, 0
        %v642 = vsel %vm562, %v486, 0
        %v645 = vsel %vm562, %v487, 0
        %v648 = vsel %vm562, %v488, 0
        %v651 = vsel %vm562, %v489, 0
        %v654 = vsel %vm562, %v490, 0
        %v657 = vsel %vm562, %v491, 0
        %v660 = vsel %vm562, %v500, 0
        %v663 = vsel %vm562, %v501, 0
        %v666 = vsel %vm562, %v502, 0
        %v669 = vsel %vm562, %v503, 0
        %v672 = vsel %vm562, %v504, 0
        %v675 = vsel %vm562, %v505, 0
        %v678 = vsel %vm562, %v506, 0
        %v681 = vsel %vm562, %v507, 0
        %v684 = vsel %vm562, %v516, 0
        %v687 = vsel %vm562, %v517, 0
        %v690 = vsel %vm562, %v518, 0
        %v693 = vsel %vm562, %v519, 0
        %v696 = vsel %vm562, %v520, 0
        %v699 = vsel %vm562, %v521, 0
        %v702 = vsel %vm562, %v522, 0
        %v705 = vsel %vm562, %v523, 0
        %v708 = vsel %vm562, %v532, 0
        %v711 = vsel %vm562, %v533, 0
        %v714 = vsel %vm562, %v534, 0
        %v717 = vsel %vm562, %v535, 0
        %v720 = vsel %vm562, %v536, 0
        %v723 = vsel %vm562, %v537, 0
        %v726 = vsel %vm562, %v538, 0
        %v729 = vsel %vm562, %v539, 0
        %v732 = vsel %vm562, %v548, 0
        %v735 = vsel %vm562, %v549, 0
        %v738 = vsel %vm562, %v550, 0
        %v741 = vsel %vm562, %v551, 0
        %v744 = vsel %vm562, %v552, 0
        %v747 = vsel %vm562, %v553, 0
        %v750 = vsel %vm562, %v554, 0
        %v753 = vsel %vm562, %v555, 0
        %755 = vmatprep.subr.bf16.mxu0 0
        %756 = vmatpush1.bf16.msra.mxu0 %v560
        %757 = vmatprep.subr.bf16.mxu0 0
        %758 = vmatpush1.bf16.msra.mxu0 0
        %759 = vmatprep.subr.bf16.mxu0 0
        %760 = vmatpush1.bf16.msra.mxu0 0
        %761 = vmatprep.subr.bf16.mxu0 0
        %762 = vmatpush1.bf16.msra.mxu0 0
        %763 = vmatprep.subr.bf16.mxu0 0
        %764 = vmatpush1.bf16.msra.mxu0 0
        %765 = vmatprep.subr.bf16.mxu0 0
        %766 = vmatpush1.bf16.msra.mxu0 0
        %767 = vmatprep.subr.bf16.mxu0 0
        %768 = vmatpush1.bf16.msra.mxu0 0
        %769 = vmatprep.subr.bf16.mxu0 0
        %770 = vmatpush1.bf16.msra.mxu0 0
        %771 = vmatprep.subr.bf16.mxu0 0
        %772 = vmatpush1.bf16.msra.mxu0 0
        %773 = vmatprep.subr.bf16.mxu0 0
        %774 = vmatpush1.bf16.msra.mxu0 0
        %775 = vmatprep.subr.bf16.mxu0 0
        %776 = vmatpush1.bf16.msra.mxu0 0
        %777 = vmatprep.subr.bf16.mxu0 0
        %778 = vmatpush1.bf16.msra.mxu0 0
        %779 = vmatprep.subr.bf16.mxu0 0
        %780 = vmatpush1.bf16.msra.mxu0 0
        %781 = vmatprep.subr.bf16.mxu0 0
        %782 = vmatpush1.bf16.msra.mxu0 0
        %783 = vmatprep.subr.bf16.mxu0 0
        %784 = vmatpush1.bf16.msra.mxu0 0
        %785 = vmatprep.subr.bf16.mxu0 0
        %786 = vmatpush1.bf16.msra.mxu0 0
        %787 = vmatprep.mubr.bf16.mxu0 0
        %788 = vmatmul.mubr.bf16.gmra.mrb[0].mxu0 %v564
        %v789 = vpop.f32.mrb[0].mxu0
        %v790 = vadd.f32 %v386, %v789
        %v791 = vpop.f32.mrb[0].mxu0
        %v792 = vpop.f32.mrb[0].mxu0
        %v793 = vadd.f32 %v386, %v792
        %v794 = vpop.f32.mrb[0].mxu0
        %795 = vmatprep.mubr.bf16.mxu0 0
        %796 = vmatmul.mubr.bf16.gmra.mrb[0].mxu0 %v567
        %v797 = vpop.f32.mrb[0].mxu0
        %v798 = vadd.f32 %v386, %v797
        %v799 = vpop.f32.mrb[0].mxu0
        %v800 = vpop.f32.mrb[0].mxu0
        %v801 = vadd.f32 %v386, %v800
        %v802 = vpop.f32.mrb[0].mxu0
        %803 = vmatprep.mubr.bf16.mxu0 0
        %804 = vmatmul.mubr.bf16.gmra.mrb[0].mxu0 %v570
        %v805 = vpop.f32.mrb[0].mxu0
        %v806 = vadd.f32 %v386, %v805
        %v807 = vpop.f32.mrb[0].mxu0
        %v808 = vpop.f32.mrb[0].mxu0
        %v809 = vadd.f32 %v386, %v808
        %v810 = vpop.f32.mrb[0].mxu0
        %811 = vmatprep.mubr.bf16.mxu0 0
        %812 = vmatmul.mubr.bf16.gmra.mrb[0].mxu0 %v573
        %v813 = vpop.f32.mrb[0].mxu0
        %v814 = vadd.f32 %v386, %v813
        %v815 = vpop.f32.mrb[0].mxu0
        %v816 = vpop.f32.mrb[0].mxu0
        %v817 = vadd.f32 %v386, %v816
        %v818 = vpop.f32.mrb[0].mxu0
        %819 = vmatprep.mubr.bf16.mxu0 0
        %820 = vmatmul.mubr.bf16.gmra.mrb[0].mxu0 %v576
        %v821 = vpop.f32.mrb[0].mxu0
        %v822 = vadd.f32 %v386, %v821
        %v823 = vpop.f32.mrb[0].mxu0
        %v824 = vpop.f32.mrb[0].mxu0
        %v825 = vadd.f32 %v386, %v824
        %v826 = vpop.f32.mrb[0].mxu0
        %827 = vmatprep.mubr.bf16.mxu0 0
        %828 = vmatmul.mubr.bf16.gmra.mrb[0].mxu0 %v579
        %v829 = vpop.f32.mrb[0].mxu0
        %v830 = vadd.f32 %v386, %v829
        %v831 = vpop.f32.mrb[0].mxu0
        %v832 = vpop.f32.mrb[0].mxu0
        %v833 = vadd.f32 %v386, %v832
        %v834 = vpop.f32.mrb[0].mxu0
        %835 = vmatprep.mubr.bf16.mxu0 0
        %836 = vmatmul.mubr.bf16.gmra.mrb[0].mxu0 %v582
        %v837 = vpop.f32.mrb[0].mxu0
        %v838 = vadd.f32 %v386, %v837
        %v839 = vpop.f32.mrb[0].mxu0
        %v840 = vpop.f32.mrb[0].mxu0
        %v841 = vadd.f32 %v386, %v840
        %v842 = vpop.f32.mrb[0].mxu0
        %843 = vmatprep.mubr.bf16.mxu0 0
        %844 = vmatmul.mubr.bf16.gmra.mrb[0].mxu0 %v585
        %v845 = vpop.f32.mrb[0].mxu0
        %v846 = vadd.f32 %v386, %v845
        %v847 = vpop.f32.mrb[0].mxu0
        %v848 = vpop.f32.mrb[0].mxu0
        %v849 = vadd.f32 %v386, %v848
        %v850 = vpop.f32.mrb[0].mxu0
        %851 = vmatprep.mubr.bf16.mxu0 0
        %852 = vmatmul.mubr.bf16.gmra.mrb[0].mxu0 %v588
        %v853 = vpop.f32.mrb[0].mxu0
        %v854 = vadd.f32 %v386, %v853
        %v855 = vpop.f32.mrb[0].mxu0
        %v856 = vpop.f32.mrb[0].mxu0
        %v857 = vadd.f32 %v386, %v856
        %v858 = vpop.f32.mrb[0].mxu0
        %859 = vmatprep.mubr.bf16.mxu0 0
        %860 = vmatmul.mubr.bf16.gmra.mrb[0].mxu0 %v591
        %v861 = vpop.f32.mrb[0].mxu0
        %v862 = vadd.f32 %v386, %v861
        %v863 = vpop.f32.mrb[0].mxu0
        %v864 = vpop.f32.mrb[0].mxu0
        %v865 = vadd.f32 %v386, %v864
        %v866 = vpop.f32.mrb[0].mxu0
        %867 = vmatprep.mubr.bf16.mxu0 0
        %868 = vmatmul.mubr.bf16.gmra.mrb[0].mxu0 %v594
        %v869 = vpop.f32.mrb[0].mxu0
        %v870 = vadd.f32 %v386, %v869
        %v871 = vpop.f32.mrb[0].mxu0
        %v872 = vpop.f32.mrb[0].mxu0
        %v873 = vadd.f32 %v386, %v872
        %v874 = vpop.f32.mrb[0].mxu0
        %875 = vmatprep.mubr.bf16.mxu0 0
        %876 = vmatmul.mubr.bf16.gmra.mrb[0].mxu0 %v597
        %v877 = vpop.f32.mrb[0].mxu0
        %v878 = vadd.f32 %v386, %v877
        %v879 = vpop.f32.mrb[0].mxu0
        %v880 = vpop.f32.mrb[0].mxu0
        %v881 = vadd.f32 %v386, %v880
        %v882 = vpop.f32.mrb[0].mxu0
        %883 = vmatprep.mubr.bf16.mxu0 0
        %884 = vmatmul.mubr.bf16.gmra.mrb[0].mxu0 %v600
        %v885 = vpop.f32.mrb[0].mxu0
        %v886 = vadd.f32 %v386, %v885
        %v887 = vpop.f32.mrb[0].mxu0
        %v888 = vpop.f32.mrb[0].mxu0
        %v889 = vadd.f32 %v386, %v888
        %v890 = vpop.f32.mrb[0].mxu0
        %891 = vmatprep.mubr.bf16.mxu0 0
        %892 = vmatmul.mubr.bf16.gmra.mrb[0].mxu0 %v603
        %v893 = vpop.f32.mrb[0].mxu0
        %v894 = vadd.f32 %v386, %v893
        %v895 = vpop.f32.mrb[0].mxu0
        %v896 = vpop.f32.mrb[0].mxu0
        %v897 = vadd.f32 %v386, %v896
        %v898 = vpop.f32.mrb[0].mxu0
        %899 = vmatprep.mubr.bf16.mxu0 0
        %900 = vmatmul.mubr.bf16.gmra.mrb[0].mxu0 %v606
        %v901 = vpop.f32.mrb[0].mxu0
        %v902 = vadd.f32 %v386, %v901
        %v903 = vpop.f32.mrb[0].mxu0
        %v904 = vpop.f32.mrb[0].mxu0
        %v905 = vadd.f32 %v386, %v904
        %v906 = vpop.f32.mrb[0].mxu0
        %907 = vmatprep.mubr.bf16.mxu0 0
        %908 = vmatmul.mubr.bf16.gmra.mrb[0].mxu0 %v609
        %v909 = vpop.f32.mrb[0].mxu0
        %v910 = vadd.f32 %v386, %v909
        %v911 = vpop.f32.mrb[0].mxu0
        %v912 = vpop.f32.mrb[0].mxu0
        %v913 = vadd.f32 %v386, %v912
        %v914 = vpop.f32.mrb[0].mxu0
        %915 = vmatprep.mubr.bf16.mxu0 0
        %916 = vmatmul.mubr.bf16.gmra.mrb[0].mxu0 %v612
        %v917 = vpop.f32.mrb[0].mxu0
        %v918 = vadd.f32 %v386, %v917
        %v919 = vpop.f32.mrb[0].mxu0
        %v920 = vpop.f32.mrb[0].mxu0
        %v921 = vadd.f32 %v386, %v920
        %v922 = vpop.f32.mrb[0].mxu0
        %923 = vmatprep.mubr.bf16.mxu0 0
        %924 = vmatmul.mubr.bf16.gmra.mrb[0].mxu0 %v615
        %v925 = vpop.f32.mrb[0].mxu0
        %v926 = vadd.f32 %v386, %v925
        %v927 = vpop.f32.mrb[0].mxu0
        %v928 = vpop.f32.mrb[0].mxu0
        %v929 = vadd.f32 %v386, %v928
        %v930 = vpop.f32.mrb[0].mxu0
        %931 = vmatprep.mubr.bf16.mxu0 0
        %932 = vmatmul.mubr.bf16.gmra.mrb[0].mxu0 %v618
        %v933 = vpop.f32.mrb[0].mxu0
        %v934 = vadd.f32 %v386, %v933
        %v935 = vpop.f32.mrb[0].mxu0
        %v936 = vpop.f32.mrb[0].mxu0
        %v937 = vadd.f32 %v386, %v936
        %v938 = vpop.f32.mrb[0].mxu0
        %939 = vmatprep.mubr.bf16.mxu0 0
        %940 = vmatmul.mubr.bf16.gmra.mrb[0].mxu0 %v621
        %v941 = vpop.f32.mrb[0].mxu0
        %v942 = vadd.f32 %v386, %v941
        %v943 = vpop.f32.mrb[0].mxu0
        %v944 = vpop.f32.mrb[0].mxu0
        %v945 = vadd.f32 %v386, %v944
        %v946 = vpop.f32.mrb[0].mxu0
        %947 = vmatprep.mubr.bf16.mxu0 0
        %948 = vmatmul.mubr.bf16.gmra.mrb[0].mxu0 %v624
        %v949 = vpop.f32.mrb[0].mxu0
        %v950 = vadd.f32 %v386, %v949
        %v951 = vpop.f32.mrb[0].mxu0
        %v952 = vpop.f32.mrb[0].mxu0
        %v953 = vadd.f32 %v386, %v952
        %v954 = vpop.f32.mrb[0].mxu0
        %955 = vmatprep.mubr.bf16.mxu0 0
        %956 = vmatmul.mubr.bf16.gmra.mrb[0].mxu0 %v627
        %v957 = vpop.f32.mrb[0].mxu0
        %v958 = vadd.f32 %v386, %v957
        %v959 = vpop.f32.mrb[0].mxu0
        %v960 = vpop.f32.mrb[0].mxu0
        %v961 = vadd.f32 %v386, %v960
        %v962 = vpop.f32.mrb[0].mxu0
        %963 = vmatprep.mubr.bf16.mxu0 0
        %964 = vmatmul.mubr.bf16.gmra.mrb[0].mxu0 %v630
        %v965 = vpop.f32.mrb[0].mxu0
        %v966 = vadd.f32 %v386, %v965
        %v967 = vpop.f32.mrb[0].mxu0
        %v968 = vpop.f32.mrb[0].mxu0
        %v969 = vadd.f32 %v386, %v968
        %v970 = vpop.f32.mrb[0].mxu0
        %971 = vmatprep.mubr.bf16.mxu0 0
        %972 = vmatmul.mubr.bf16.gmra.mrb[0].mxu0 %v633
        %v973 = vpop.f32.mrb[0].mxu0
        %v974 = vadd.f32 %v386, %v973
        %v975 = vpop.f32.mrb[0].mxu0
        %v976 = vpop.f32.mrb[0].mxu0
        %v977 = vadd.f32 %v386, %v976
        %v978 = vpop.f32.mrb[0].mxu0
        %979 = vmatprep.mubr.bf16.mxu0 0
        %980 = vmatmul.mubr.bf16.gmra.mrb[0].mxu0 %v636
        %v981 = vpop.f32.mrb[0].mxu0
        %v982 = vadd.f32 %v386, %v981
        %v983 = vpop.f32.mrb[0].mxu0
        %v984 = vpop.f32.mrb[0].mxu0
        %v985 = vadd.f32 %v386, %v984
        %v986 = vpop.f32.mrb[0].mxu0
        %987 = vmatprep.mubr.bf16.mxu0 0
        %988 = vmatmul.mubr.bf16.gmra.mrb[0].mxu0 %v639
        %v989 = vpop.f32.mrb[0].mxu0
        %v990 = vadd.f32 %v386, %v989
        %v991 = vpop.f32.mrb[0].mxu0
        %v992 = vpop.f32.mrb[0].mxu0
        %v993 = vadd.f32 %v386, %v992
        %v994 = vpop.f32.mrb[0].mxu0
        %995 = vmatprep.mubr.bf16.mxu0 0
        %996 = vmatmul.mubr.bf16.gmra.mrb[0].mxu0 %v642
        %v997 = vpop.f32.mrb[0].mxu0
        %v998 = vadd.f32 %v386, %v997
        %v999 = vpop.f32.mrb[0].mxu0
        %v1000 = vpop.f32.mrb[0].mxu0
        %v1001 = vadd.f32 %v386, %v1000
        %v1002 = vpop.f32.mrb[0].mxu0
        %1003 = vmatprep.mubr.bf16.mxu0 0
        %1004 = vmatmul.mubr.bf16.gmra.mrb[0].mxu0 %v645
        %v1005 = vpop.f32.mrb[0].mxu0
        %v1006 = vadd.f32 %v386, %v1005
        %v1007 = vpop.f32.mrb[0].mxu0
        %v1008 = vpop.f32.mrb[0].mxu0
        %v1009 = vadd.f32 %v386, %v1008
        %v1010 = vpop.f32.mrb[0].mxu0
        %1011 = vmatprep.mubr.bf16.mxu0 0
        %1012 = vmatmul.mubr.bf16.gmra.mrb[0].mxu0 %v648
        %v1013 = vpop.f32.mrb[0].mxu0
        %v1014 = vadd.f32 %v386, %v1013
        %v1015 = vpop.f32.mrb[0].mxu0
        %v1016 = vpop.f32.mrb[0].mxu0
        %v1017 = vadd.f32 %v386, %v1016
        %v1018 = vpop.f32.mrb[0].mxu0
        %1019 = vmatprep.mubr.bf16.mxu0 0
        %1020 = vmatmul.mubr.bf16.gmra.mrb[0].mxu0 %v651
        %v1021 = vpop.f32.mrb[0].mxu0
        %v1022 = vadd.f32 %v386, %v1021
        %v1023 = vpop.f32.mrb[0].mxu0
        %v1024 = vpop.f32.mrb[0].mxu0
        %v1025 = vadd.f32 %v386, %v1024
        %v1026 = vpop.f32.mrb[0].mxu0
        %1027 = vmatprep.mubr.bf16.mxu0 0
        %1028 = vmatmul.mubr.bf16.gmra.mrb[0].mxu0 %v654
        %v1029 = vpop.f32.mrb[0].mxu0
        %v1030 = vadd.f32 %v386, %v1029
        %v1031 = vpop.f32.mrb[0].mxu0
        %v1032 = vpop.f32.mrb[0].mxu0
        %v1033 = vadd.f32 %v386, %v1032
        %v1034 = vpop.f32.mrb[0].mxu0
        %1035 = vmatprep.mubr.bf16.mxu0 0
        %1036 = vmatmul.mubr.bf16.gmra.mrb[0].mxu0 %v657
        %v1037 = vpop.f32.mrb[0].mxu0
        %v1038 = vadd.f32 %v386, %v1037
        %v1039 = vpop.f32.mrb[0].mxu0
        %v1040 = vpop.f32.mrb[0].mxu0
        %v1041 = vadd.f32 %v386, %v1040
        %v1042 = vpop.f32.mrb[0].mxu0
        %1043 = vmatprep.mubr.bf16.mxu0 0
        %1044 = vmatmul.mubr.bf16.gmra.mrb[0].mxu0 %v660
        %v1045 = vpop.f32.mrb[0].mxu0
        %v1046 = vadd.f32 %v386, %v1045
        %v1047 = vpop.f32.mrb[0].mxu0
        %v1048 = vpop.f32.mrb[0].mxu0
        %v1049 = vadd.f32 %v386, %v1048
        %v1050 = vpop.f32.mrb[0].mxu0
        %1051 = vmatprep.mubr.bf16.mxu0 0
        %1052 = vmatmul.mubr.bf16.gmra.mrb[0].mxu0 %v663
        %v1053 = vpop.f32.mrb[0].mxu0
        %v1054 = vadd.f32 %v386, %v1053
        %v1055 = vpop.f32.mrb[0].mxu0
        %v1056 = vpop.f32.mrb[0].mxu0
        %v1057 = vadd.f32 %v386, %v1056
        %v1058 = vpop.f32.mrb[0].mxu0
        %1059 = vmatprep.mubr.bf16.mxu0 0
        %1060 = vmatmul.mubr.bf16.gmra.mrb[0].mxu0 %v666
        %v1061 = vpop.f32.mrb[0].mxu0
        %v1062 = vadd.f32 %v386, %v1061
        %v1063 = vpop.f32.mrb[0].mxu0
        %v1064 = vpop.f32.mrb[0].mxu0
        %v1065 = vadd.f32 %v386, %v1064
        %v1066 = vpop.f32.mrb[0].mxu0
        %1067 = vmatprep.mubr.bf16.mxu0 0
        %1068 = vmatmul.mubr.bf16.gmra.mrb[0].mxu0 %v669
        %v1069 = vpop.f32.mrb[0].mxu0
        %v1070 = vadd.f32 %v386, %v1069
        %v1071 = vpop.f32.mrb[0].mxu0
        %v1072 = vpop.f32.mrb[0].mxu0
        %v1073 = vadd.f32 %v386, %v1072
        %v1074 = vpop.f32.mrb[0].mxu0
        %1075 = vmatprep.mubr.bf16.mxu0 0
        %1076 = vmatmul.mubr.bf16.gmra.mrb[0].mxu0 %v672
        %v1077 = vpop.f32.mrb[0].mxu0
        %v1078 = vadd.f32 %v386, %v1077
        %v1079 = vpop.f32.mrb[0].mxu0
        %v1080 = vpop.f32.mrb[0].mxu0
        %v1081 = vadd.f32 %v386, %v1080
        %v1082 = vpop.f32.mrb[0].mxu0
        %1083 = vmatprep.mubr.bf16.mxu0 0
        %1084 = vmatmul.mubr.bf16.gmra.mrb[0].mxu0 %v675
        %v1085 = vpop.f32.mrb[0].mxu0
        %v1086 = vadd.f32 %v386, %v1085
        %v1087 = vpop.f32.mrb[0].mxu0
        %v1088 = vpop.f32.mrb[0].mxu0
        %v1089 = vadd.f32 %v386, %v1088
        %v1090 = vpop.f32.mrb[0].mxu0
        %1091 = vmatprep.mubr.bf16.mxu0 0
        %1092 = vmatmul.mubr.bf16.gmra.mrb[0].mxu0 %v678
        %v1093 = vpop.f32.mrb[0].mxu0
        %v1094 = vadd.f32 %v386, %v1093
        %v1095 = vpop.f32.mrb[0].mxu0
        %v1096 = vpop.f32.mrb[0].mxu0
        %v1097 = vadd.f32 %v386, %v1096
        %v1098 = vpop.f32.mrb[0].mxu0
        %1099 = vmatprep.mubr.bf16.mxu0 0
        %1100 = vmatmul.mubr.bf16.gmra.mrb[0].mxu0 %v681
        %v1101 = vpop.f32.mrb[0].mxu0
        %v1102 = vadd.f32 %v386, %v1101
        %v1103 = vpop.f32.mrb[0].mxu0
        %v1104 = vpop.f32.mrb[0].mxu0
        %v1105 = vadd.f32 %v386, %v1104
        %v1106 = vpop.f32.mrb[0].mxu0
        %1107 = vmatprep.mubr.bf16.mxu0 0
        %1108 = vmatmul.mubr.bf16.gmra.mrb[0].mxu0 %v684
        %v1109 = vpop.f32.mrb[0].mxu0
        %v1110 = vadd.f32 %v386, %v1109
        %v1111 = vpop.f32.mrb[0].mxu0
        %v1112 = vpop.f32.mrb[0].mxu0
        %v1113 = vadd.f32 %v386, %v1112
        %v1114 = vpop.f32.mrb[0].mxu0
        %1115 = vmatprep.mubr.bf16.mxu0 0
        %1116 = vmatmul.mubr.bf16.gmra.mrb[0].mxu0 %v687
        %v1117 = vpop.f32.mrb[0].mxu0
        %v1118 = vadd.f32 %v386, %v1117
        %v1119 = vpop.f32.mrb[0].mxu0
        %v1120 = vpop.f32.mrb[0].mxu0
        %v1121 = vadd.f32 %v386, %v1120
        %v1122 = vpop.f32.mrb[0].mxu0
        %1123 = vmatprep.mubr.bf16.mxu0 0
        %1124 = vmatmul.mubr.bf16.gmra.mrb[0].mxu0 %v690
        %v1125 = vpop.f32.mrb[0].mxu0
        %v1126 = vadd.f32 %v386, %v1125
        %v1127 = vpop.f32.mrb[0].mxu0
        %v1128 = vpop.f32.mrb[0].mxu0
        %v1129 = vadd.f32 %v386, %v1128
        %v1130 = vpop.f32.mrb[0].mxu0
        %1131 = vmatprep.mubr.bf16.mxu0 0
        %1132 = vmatmul.mubr.bf16.gmra.mrb[0].mxu0 %v693
        %v1133 = vpop.f32.mrb[0].mxu0
        %v1134 = vadd.f32 %v386, %v1133
        %v1135 = vpop.f32.mrb[0].mxu0
        %v1136 = vpop.f32.mrb[0].mxu0
        %v1137 = vadd.f32 %v386, %v1136
        %v1138 = vpop.f32.mrb[0].mxu0
        %1139 = vmatprep.mubr.bf16.mxu0 0
        %1140 = vmatmul.mubr.bf16.gmra.mrb[0].mxu0 %v696
        %v1141 = vpop.f32.mrb[0].mxu0
        %v1142 = vadd.f32 %v386, %v1141
        %v1143 = vpop.f32.mrb[0].mxu0
        %v1144 = vpop.f32.mrb[0].mxu0
        %v1145 = vadd.f32 %v386, %v1144
        %v1146 = vpop.f32.mrb[0].mxu0
        %1147 = vmatprep.mubr.bf16.mxu0 0
        %1148 = vmatmul.mubr.bf16.gmra.mrb[0].mxu0 %v699
        %v1149 = vpop.f32.mrb[0].mxu0
        %v1150 = vadd.f32 %v386, %v1149
        %v1151 = vpop.f32.mrb[0].mxu0
        %v1152 = vpop.f32.mrb[0].mxu0
        %v1153 = vadd.f32 %v386, %v1152
        %v1154 = vpop.f32.mrb[0].mxu0
        %1155 = vmatprep.mubr.bf16.mxu0 0
        %1156 = vmatmul.mubr.bf16.gmra.mrb[0].mxu0 %v702
        %v1157 = vpop.f32.mrb[0].mxu0
        %v1158 = vadd.f32 %v386, %v1157
        %v1159 = vpop.f32.mrb[0].mxu0
        %v1160 = vpop.f32.mrb[0].mxu0
        %v1161 = vadd.f32 %v386, %v1160
        %v1162 = vpop.f32.mrb[0].mxu0
        %1163 = vmatprep.mubr.bf16.mxu0 0
        %1164 = vmatmul.mubr.bf16.gmra.mrb[0].mxu0 %v705
        %v1165 = vpop.f32.mrb[0].mxu0
        %v1166 = vadd.f32 %v386, %v1165
        %v1167 = vpop.f32.mrb[0].mxu0
        %v1168 = vpop.f32.mrb[0].mxu0
        %v1169 = vadd.f32 %v386, %v1168
        %v1170 = vpop.f32.mrb[0].mxu0
        %1171 = vmatprep.mubr.bf16.mxu0 0
        %1172 = vmatmul.mubr.bf16.gmra.mrb[0].mxu0 %v708
        %v1173 = vpop.f32.mrb[0].mxu0
        %v1174 = vadd.f32 %v386, %v1173
        %v1175 = vpop.f32.mrb[0].mxu0
        %v1176 = vpop.f32.mrb[0].mxu0
        %v1177 = vadd.f32 %v386, %v1176
        %v1178 = vpop.f32.mrb[0].mxu0
        %1179 = vmatprep.mubr.bf16.mxu0 0
        %1180 = vmatmul.mubr.bf16.gmra.mrb[0].mxu0 %v711
        %v1181 = vpop.f32.mrb[0].mxu0
        %v1182 = vadd.f32 %v386, %v1181
        %v1183 = vpop.f32.mrb[0].mxu0
        %v1184 = vpop.f32.mrb[0].mxu0
        %v1185 = vadd.f32 %v386, %v1184
        %v1186 = vpop.f32.mrb[0].mxu0
        %1187 = vmatprep.mubr.bf16.mxu0 0
        %1188 = vmatmul.mubr.bf16.gmra.mrb[0].mxu0 %v714
        %v1189 = vpop.f32.mrb[0].mxu0
        %v1190 = vadd.f32 %v386, %v1189
        %v1191 = vpop.f32.mrb[0].mxu0
        %v1192 = vpop.f32.mrb[0].mxu0
        %v1193 = vadd.f32 %v386, %v1192
        %v1194 = vpop.f32.mrb[0].mxu0
        %1195 = vmatprep.mubr.bf16.mxu0 0
        %1196 = vmatmul.mubr.bf16.gmra.mrb[0].mxu0 %v717
        %v1197 = vpop.f32.mrb[0].mxu0
        %v1198 = vadd.f32 %v386, %v1197
        %v1199 = vpop.f32.mrb[0].mxu0
        %v1200 = vpop.f32.mrb[0].mxu0
        %v1201 = vadd.f32 %v386, %v1200
        %v1202 = vpop.f32.mrb[0].mxu0
        %1203 = vmatprep.mubr.bf16.mxu0 0
        %1204 = vmatmul.mubr.bf16.gmra.mrb[0].mxu0 %v720
        %v1205 = vpop.f32.mrb[0].mxu0
        %v1206 = vadd.f32 %v386, %v1205
        %v1207 = vpop.f32.mrb[0].mxu0
        %v1208 = vpop.f32.mrb[0].mxu0
        %v1209 = vadd.f32 %v386, %v1208
        %v1210 = vpop.f32.mrb[0].mxu0
        %1211 = vmatprep.mubr.bf16.mxu0 0
        %1212 = vmatmul.mubr.bf16.gmra.mrb[0].mxu0 %v723
        %v1213 = vpop.f32.mrb[0].mxu0
        %v1214 = vadd.f32 %v386, %v1213
        %v1215 = vpop.f32.mrb[0].mxu0
        %v1216 = vpop.f32.mrb[0].mxu0
        %v1217 = vadd.f32 %v386, %v1216
        %v1218 = vpop.f32.mrb[0].mxu0
        %1219 = vmatprep.mubr.bf16.mxu0 0
        %1220 = vmatmul.mubr.bf16.gmra.mrb[0].mxu0 %v726
        %v1221 = vpop.f32.mrb[0].mxu0
        %v1222 = vadd.f32 %v386, %v1221
        %v1223 = vpop.f32.mrb[0].mxu0
        %v1224 = vpop.f32.mrb[0].mxu0
        %v1225 = vadd.f32 %v386, %v1224
        %v1226 = vpop.f32.mrb[0].mxu0
        %1227 = vmatprep.mubr.bf16.mxu0 0
        %1228 = vmatmul.mubr.bf16.gmra.mrb[0].mxu0 %v729
        %v1229 = vpop.f32.mrb[0].mxu0
        %v1230 = vadd.f32 %v386, %v1229
        %v1231 = vpop.f32.mrb[0].mxu0
        %v1232 = vpop.f32.mrb[0].mxu0
        %v1233 = vadd.f32 %v386, %v1232
        %v1234 = vpop.f32.mrb[0].mxu0
        %1235 = vmatprep.mubr.bf16.mxu0 0
        %1236 = vmatmul.mubr.bf16.gmra.mrb[0].mxu0 %v732
        %v1237 = vpop.f32.mrb[0].mxu0
        %v1238 = vadd.f32 %v386, %v1237
        %v1239 = vpop.f32.mrb[0].mxu0
        %v1240 = vpop.f32.mrb[0].mxu0
        %v1241 = vadd.f32 %v386, %v1240
        %v1242 = vpop.f32.mrb[0].mxu0
        %1243 = vmatprep.mubr.bf16.mxu0 0
        %1244 = vmatmul.mubr.bf16.gmra.mrb[0].mxu0 %v735
        %v1245 = vpop.f32.mrb[0].mxu0
        %v1246 = vadd.f32 %v386, %v1245
        %v1247 = vpop.f32.mrb[0].mxu0
        %v1248 = vpop.f32.mrb[0].mxu0
        %v1249 = vadd.f32 %v386, %v1248
        %v1250 = vpop.f32.mrb[0].mxu0
        %1251 = vmatprep.mubr.bf16.mxu0 0
        %1252 = vmatmul.mubr.bf16.gmra.mrb[0].mxu0 %v738
        %v1253 = vpop.f32.mrb[0].mxu0
        %v1254 = vadd.f32 %v386, %v1253
        %v1255 = vpop.f32.mrb[0].mxu0
        %v1256 = vpop.f32.mrb[0].mxu0
        %v1257 = vadd.f32 %v386, %v1256
        %v1258 = vpop.f32.mrb[0].mxu0
        %1259 = vmatprep.mubr.bf16.mxu0 0
        %1260 = vmatmul.mubr.bf16.gmra.mrb[0].mxu0 %v741
        %v1261 = vpop.f32.mrb[0].mxu0
        %v1262 = vadd.f32 %v386, %v1261
        %v1263 = vpop.f32.mrb[0].mxu0
        %v1264 = vpop.f32.mrb[0].mxu0
        %v1265 = vadd.f32 %v386, %v1264
        %v1266 = vpop.f32.mrb[0].mxu0
        %1267 = vmatprep.mubr.bf16.mxu0 0
        %1268 = vmatmul.mubr.bf16.gmra.mrb[0].mxu0 %v744
        %v1269 = vpop.f32.mrb[0].mxu0
        %v1270 = vadd.f32 %v386, %v1269
        %v1271 = vpop.f32.mrb[0].mxu0
        %v1272 = vpop.f32.mrb[0].mxu0
        %v1273 = vadd.f32 %v386, %v1272
        %v1274 = vpop.f32.mrb[0].mxu0
        %1275 = vmatprep.mubr.bf16.mxu0 0
        %1276 = vmatmul.mubr.bf16.gmra.mrb[0].mxu0 %v747
        %v1277 = vpop.f32.mrb[0].mxu0
        %v1278 = vadd.f32 %v386, %v1277
        %v1279 = vpop.f32.mrb[0].mxu0
        %v1280 = vpop.f32.mrb[0].mxu0
        %v1281 = vadd.f32 %v386, %v1280
        %v1282 = vpop.f32.mrb[0].mxu0
        %1283 = vmatprep.mubr.bf16.mxu0 0
        %1284 = vmatmul.mubr.bf16.gmra.mrb[0].mxu0 %v750
        %v1285 = vpop.f32.mrb[0].mxu0
        %v1286 = vadd.f32 %v386, %v1285
        %v1287 = vpop.f32.mrb[0].mxu0
        %v1288 = vpop.f32.mrb[0].mxu0
        %v1289 = vadd.f32 %v386, %v1288
        %v1290 = vpop.f32.mrb[0].mxu0
        %1291 = vmatprep.mubr.bf16.mxu0 0
        %1292 = vmatmul.mubr.bf16.gmra.mrb[0].mxu0 %v753
        %v1293 = vpop.f32.mrb[0].mxu0
        %v1294 = vadd.f32 %v386, %v1293
        %v1295 = vpop.f32.mrb[0].mxu0
        %v1296 = vpop.f32.mrb[0].mxu0
        %v1297 = vadd.f32 %v386, %v1296
        %v1298 = vpop.f32.mrb[0].mxu0
        %1299 = vdwg.mxu0
        %v1300 = vmax.f32 %v790, 0.0
        %v1301 = vmax.f32 %v793, 0.0
        %v1302 = vmax.f32 %v798, 0.0
        %v1303 = vmax.f32 %v801, 0.0
        %v1304 = vmax.f32 %v806, 0.0
        %v1305 = vmax.f32 %v809, 0.0
        %v1306 = vmax.f32 %v814, 0.0
        %v1307 = vmax.f32 %v817, 0.0
        %v1308 = vmax.f32 %v822, 0.0
        %v1309 = vmax.f32 %v825, 0.0
        %v1310 = vmax.f32 %v830, 0.0
        %v1311 = vmax.f32 %v833, 0.0
        %v1312 = vmax.f32 %v838, 0.0
        %v1313 = vmax.f32 %v841, 0.0
        %v1314 = vmax.f32 %v846, 0.0
        %v1315 = vmax.f32 %v849, 0.0
        %v1316 = vmax.f32 %v854, 0.0
        %v1317 = vmax.f32 %v857, 0.0
        %v1318 = vmax.f32 %v862, 0.0
        %v1319 = vmax.f32 %v865, 0.0
        %v1320 = vmax.f32 %v870, 0.0
        %v1321 = vmax.f32 %v873, 0.0
        %v1322 = vmax.f32 %v878, 0.0
        %v1323 = vmax.f32 %v881, 0.0
        %v1324 = vmax.f32 %v886, 0.0
        %v1325 = vmax.f32 %v889, 0.0
        %v1326 = vmax.f32 %v894, 0.0
        %v1327 = vmax.f32 %v897, 0.0
        %v1328 = vmax.f32 %v902, 0.0
        %v1329 = vmax.f32 %v905, 0.0
        %v1330 = vmax.f32 %v910, 0.0
        %v1331 = vmax.f32 %v913, 0.0
        %v1332 = vmax.f32 %v918, 0.0
        %v1333 = vmax.f32 %v921, 0.0
        %v1334 = vmax.f32 %v926, 0.0
        %v1335 = vmax.f32 %v929, 0.0
        %v1336 = vmax.f32 %v934, 0.0
        %v1337 = vmax.f32 %v937, 0.0
        %v1338 = vmax.f32 %v942, 0.0
        %v1339 = vmax.f32 %v945, 0.0
        %v1340 = vmax.f32 %v950, 0.0
        %v1341 = vmax.f32 %v953, 0.0
        %v1342 = vmax.f32 %v958, 0.0
        %v1343 = vmax.f32 %v961, 0.0
        %v1344 = vmax.f32 %v966, 0.0
        %v1345 = vmax.f32 %v969, 0.0
        %v1346 = vmax.f32 %v974, 0.0
        %v1347 = vmax.f32 %v977, 0.0
        %v1348 = vmax.f32 %v982, 0.0
        %v1349 = vmax.f32 %v985, 0.0
        %v1350 = vmax.f32 %v990, 0.0
        %v1351 = vmax.f32 %v993, 0.0
        %v1352 = vmax.f32 %v998, 0.0
        %v1353 = vmax.f32 %v1001, 0.0
        %v1354 = vmax.f32 %v1006, 0.0
        %v1355 = vmax.f32 %v1009, 0.0
        %v1356 = vmax.f32 %v1014, 0.0
        %v1357 = vmax.f32 %v1017, 0.0
        %v1358 = vmax.f32 %v1022, 0.0
        %v1359 = vmax.f32 %v1025, 0.0
        %v1360 = vmax.f32 %v1030, 0.0
        %v1361 = vmax.f32 %v1033, 0.0
        %v1362 = vmax.f32 %v1038, 0.0
        %v1363 = vmax.f32 %v1041, 0.0
        %v1364 = vmax.f32 %v1046, 0.0
        %v1365 = vmax.f32 %v1049, 0.0
        %v1366 = vmax.f32 %v1054, 0.0
        %v1367 = vmax.f32 %v1057, 0.0
        %v1368 = vmax.f32 %v1062, 0.0
        %v1369 = vmax.f32 %v1065, 0.0
        %v1370 = vmax.f32 %v1070, 0.0
        %v1371 = vmax.f32 %v1073, 0.0
        %v1372 = vmax.f32 %v1078, 0.0
        %v1373 = vmax.f32 %v1081, 0.0
        %v1374 = vmax.f32 %v1086, 0.0
        %v1375 = vmax.f32 %v1089, 0.0
        %v1376 = vmax.f32 %v1094, 0.0
        %v1377 = vmax.f32 %v1097, 0.0
        %v1378 = vmax.f32 %v1102, 0.0
        %v1379 = vmax.f32 %v1105, 0.0
        %v1380 = vmax.f32 %v1110, 0.0
        %v1381 = vmax.f32 %v1113, 0.0
        %v1382 = vmax.f32 %v1118, 0.0
        %v1383 = vmax.f32 %v1121, 0.0
        %v1384 = vmax.f32 %v1126, 0.0
        %v1385 = vmax.f32 %v1129, 0.0
        %v1386 = vmax.f32 %v1134, 0.0
        %v1387 = vmax.f32 %v1137, 0.0
        %v1388 = vmax.f32 %v1142, 0.0
        %v1389 = vmax.f32 %v1145, 0.0
        %v1390 = vmax.f32 %v1150, 0.0
        %v1391 = vmax.f32 %v1153, 0.0
        %v1392 = vmax.f32 %v1158, 0.0
        %v1393 = vmax.f32 %v1161, 0.0
        %v1394 = vmax.f32 %v1166, 0.0
        %v1395 = vmax.f32 %v1169, 0.0
        %v1396 = vmax.f32 %v1174, 0.0
        %v1397 = vmax.f32 %v1177, 0.0
        %v1398 = vmax.f32 %v1182, 0.0
        %v1399 = vmax.f32 %v1185, 0.0
        %v1400 = vmax.f32 %v1190, 0.0
        %v1401 = vmax.f32 %v1193, 0.0
        %v1402 = vmax.f32 %v1198, 0.0
        %v1403 = vmax.f32 %v1201, 0.0
        %v1404 = vmax.f32 %v1206, 0.0
        %v1405 = vmax.f32 %v1209, 0.0
        %v1406 = vmax.f32 %v1214, 0.0
        %v1407 = vmax.f32 %v1217, 0.0
        %v1408 = vmax.f32 %v1222, 0.0
        %v1409 = vmax.f32 %v1225, 0.0
        %v1410 = vmax.f32 %v1230, 0.0
        %v1411 = vmax.f32 %v1233, 0.0
        %v1412 = vmax.f32 %v1238, 0.0
        %v1413 = vmax.f32 %v1241, 0.0
        %v1414 = vmax.f32 %v1246, 0.0
        %v1415 = vmax.f32 %v1249, 0.0
        %v1416 = vmax.f32 %v1254, 0.0
        %v1417 = vmax.f32 %v1257, 0.0
        %v1418 = vmax.f32 %v1262, 0.0
        %v1419 = vmax.f32 %v1265, 0.0
        %v1420 = vmax.f32 %v1270, 0.0
        %v1421 = vmax.f32 %v1273, 0.0
        %v1422 = vmax.f32 %v1278, 0.0
        %v1423 = vmax.f32 %v1281, 0.0
        %v1424 = vmax.f32 %v1286, 0.0
        %v1425 = vmax.f32 %v1289, 0.0
        %v1426 = vmax.f32 %v1294, 0.0
        %v1427 = vmax.f32 %v1297, 0.0
        %v1428 = vpack.c.bf16 %v1301, %v1300
        %v1429 = vpack.c.bf16 %v1303, %v1302
        %v1430 = vpack.c.bf16 %v1305, %v1304
        %v1431 = vpack.c.bf16 %v1307, %v1306
        %v1432 = vpack.c.bf16 %v1309, %v1308
        %v1433 = vpack.c.bf16 %v1311, %v1310
        %v1434 = vpack.c.bf16 %v1313, %v1312
        %v1435 = vpack.c.bf16 %v1315, %v1314
        %v1436 = vpack.c.bf16 %v1317, %v1316
        %v1437 = vpack.c.bf16 %v1319, %v1318
        %v1438 = vpack.c.bf16 %v1321, %v1320
        %v1439 = vpack.c.bf16 %v1323, %v1322
        %v1440 = vpack.c.bf16 %v1325, %v1324
        %v1441 = vpack.c.bf16 %v1327, %v1326
        %v1442 = vpack.c.bf16 %v1329, %v1328
        %v1443 = vpack.c.bf16 %v1331, %v1330
        %v1444 = vpack.c.bf16 %v1333, %v1332
        %v1445 = vpack.c.bf16 %v1335, %v1334
        %v1446 = vpack.c.bf16 %v1337, %v1336
        %v1447 = vpack.c.bf16 %v1339, %v1338
        %v1448 = vpack.c.bf16 %v1341, %v1340
        %v1449 = vpack.c.bf16 %v1343, %v1342
        %v1450 = vpack.c.bf16 %v1345, %v1344
        %v1451 = vpack.c.bf16 %v1347, %v1346
        %v1452 = vpack.c.bf16 %v1349, %v1348
        %v1453 = vpack.c.bf16 %v1351, %v1350
        %v1454 = vpack.c.bf16 %v1353, %v1352
        %v1455 = vpack.c.bf16 %v1355, %v1354
        %v1456 = vpack.c.bf16 %v1357, %v1356
        %v1457 = vpack.c.bf16 %v1359, %v1358
        %v1458 = vpack.c.bf16 %v1361, %v1360
        %v1459 = vpack.c.bf16 %v1363, %v1362
        %v1460 = vpack.c.bf16 %v1365, %v1364
        %v1461 = vpack.c.bf16 %v1367, %v1366
        %v1462 = vpack.c.bf16 %v1369, %v1368
        %v1463 = vpack.c.bf16 %v1371, %v1370
        %v1464 = vpack.c.bf16 %v1373, %v1372
        %v1465 = vpack.c.bf16 %v1375, %v1374
        %v1466 = vpack.c.bf16 %v1377, %v1376
        %v1467 = vpack.c.bf16 %v1379, %v1378
        %v1468 = vpack.c.bf16 %v1381, %v1380
        %v1469 = vpack.c.bf16 %v1383, %v1382
        %v1470 = vpack.c.bf16 %v1385, %v1384
        %v1471 = vpack.c.bf16 %v1387, %v1386
        %v1472 = vpack.c.bf16 %v1389, %v1388
        %v1473 = vpack.c.bf16 %v1391, %v1390
        %v1474 = vpack.c.bf16 %v1393, %v1392
        %v1475 = vpack.c.bf16 %v1395, %v1394
        %v1476 = vpack.c.bf16 %v1397, %v1396
        %v1477 = vpack.c.bf16 %v1399, %v1398
        %v1478 = vpack.c.bf16 %v1401, %v1400
        %v1479 = vpack.c.bf16 %v1403, %v1402
        %v1480 = vpack.c.bf16 %v1405, %v1404
        %v1481 = vpack.c.bf16 %v1407, %v1406
        %v1482 = vpack.c.bf16 %v1409, %v1408
        %v1483 = vpack.c.bf16 %v1411, %v1410
        %v1484 = vpack.c.bf16 %v1413, %v1412
        %v1485 = vpack.c.bf16 %v1415, %v1414
        %v1486 = vpack.c.bf16 %v1417, %v1416
        %v1487 = vpack.c.bf16 %v1419, %v1418
        %v1488 = vpack.c.bf16 %v1421, %v1420
        %v1489 = vpack.c.bf16 %v1423, %v1422
        %v1490 = vpack.c.bf16 %v1425, %v1424
        %v1491 = vpack.c.bf16 %v1427, %v1426
        %v1492 = vld [vmem:[#allocation8] sm:$0xf]
        %v1493 = vld [vmem:[#allocation8 + $0x4] sm:$0xf]
        %v1494 = vld [vmem:[#allocation8 + $0x8] sm:$0xf]
        %v1495 = vld [vmem:[#allocation8 + $0xc] sm:$0xf]
        %v1496 = vld [vmem:[#allocation8 + $0x10] sm:$0xf]
        %v1497 = vld [vmem:[#allocation8 + $0x14] sm:$0xf]
        %v1498 = vld [vmem:[#allocation8 + $0x18] sm:$0xf]
        %v1499 = vld [vmem:[#allocation8 + $0x1c] sm:$0xf]
        %v1500 = vld [vmem:[%s4] sm:$0x1]
        %v1502 = vlaneseq
        %v1503 = vshrl.u32 %v1502, 7
        %v1504 = vsub.s32 0, %v1503
        %v1505 = vrot.slane %v1500, %v1504
        %v1515 = vunpack.c.l.b16 %v1492
        %v1516 = vunpack.c.l.b16 %v1493
        %v1517 = vunpack.c.l.b16 %v1494
        %v1518 = vunpack.c.l.b16 %v1495
        %v1519 = vunpack.c.l.b16 %v1496
        %v1520 = vunpack.c.l.b16 %v1497
        %v1521 = vunpack.c.l.b16 %v1498
        %v1522 = vunpack.c.l.b16 %v1499
        %v1523 = vpack.c.b16 %v1516, %v1515
        %v1524 = vpack.c.b16 %v1518, %v1517
        %v1525 = vpack.c.b16 %v1520, %v1519
        %v1526 = vpack.c.b16 %v1522, %v1521
        %vm1531 = vcmask 523264
        %v1533 = vsel %vm1531, %v1428, 0
        %v1536 = vsel %vm1531, %v1429, 0
        %v1539 = vsel %vm1531, %v1430, 0
        %v1542 = vsel %vm1531, %v1431, 0
        %v1545 = vsel %vm1531, %v1432, 0
        %v1548 = vsel %vm1531, %v1433, 0
        %v1551 = vsel %vm1531, %v1434, 0
        %v1554 = vsel %vm1531, %v1435, 0
        %v1557 = vsel %vm1531, %v1436, 0
        %v1560 = vsel %vm1531, %v1437, 0
        %v1563 = vsel %vm1531, %v1438, 0
        %v1566 = vsel %vm1531, %v1439, 0
        %v1569 = vsel %vm1531, %v1440, 0
        %v1572 = vsel %vm1531, %v1441, 0
        %v1575 = vsel %vm1531, %v1442, 0
        %v1578 = vsel %vm1531, %v1443, 0
        %v1581 = vsel %vm1531, %v1444, 0
        %v1584 = vsel %vm1531, %v1445, 0
        %v1587 = vsel %vm1531, %v1446, 0
        %v1590 = vsel %vm1531, %v1447, 0
        %v1593 = vsel %vm1531, %v1448, 0
        %v1596 = vsel %vm1531, %v1449, 0
        %v1599 = vsel %vm1531, %v1450, 0
        %v1602 = vsel %vm1531, %v1451, 0
        %v1605 = vsel %vm1531, %v1452, 0
        %v1608 = vsel %vm1531, %v1453, 0
        %v1611 = vsel %vm1531, %v1454, 0
        %v1614 = vsel %vm1531, %v1455, 0
        %v1617 = vsel %vm1531, %v1456, 0
        %v1620 = vsel %vm1531, %v1457, 0
        %v1623 = vsel %vm1531, %v1458, 0
        %v1626 = vsel %vm1531, %v1459, 0
        %v1629 = vsel %vm1531, %v1460, 0
        %v1632 = vsel %vm1531, %v1461, 0
        %v1635 = vsel %vm1531, %v1462, 0
        %v1638 = vsel %vm1531, %v1463, 0
        %v1641 = vsel %vm1531, %v1464, 0
        %v1644 = vsel %vm1531, %v1465, 0
        %v1647 = vsel %vm1531, %v1466, 0
        %v1650 = vsel %vm1531, %v1467, 0
        %v1653 = vsel %vm1531, %v1468, 0
        %v1656 = vsel %vm1531, %v1469, 0
        %v1659 = vsel %vm1531, %v1470, 0
        %v1662 = vsel %vm1531, %v1471, 0
        %v1665 = vsel %vm1531, %v1472, 0
        %v1668 = vsel %vm1531, %v1473, 0
        %v1671 = vsel %vm1531, %v1474, 0
        %v1674 = vsel %vm1531, %v1475, 0
        %v1677 = vsel %vm1531, %v1476, 0
        %v1680 = vsel %vm1531, %v1477, 0
        %v1683 = vsel %vm1531, %v1478, 0
        %v1686 = vsel %vm1531, %v1479, 0
        %v1689 = vsel %vm1531, %v1480, 0
        %v1692 = vsel %vm1531, %v1481, 0
        %v1695 = vsel %vm1531, %v1482, 0
        %v1698 = vsel %vm1531, %v1483, 0
        %v1701 = vsel %vm1531, %v1484, 0
        %v1704 = vsel %vm1531, %v1485, 0
        %v1707 = vsel %vm1531, %v1486, 0
        %v1710 = vsel %vm1531, %v1487, 0
        %v1713 = vsel %vm1531, %v1488, 0
        %v1716 = vsel %vm1531, %v1489, 0
        %v1719 = vsel %vm1531, %v1490, 0
        %v1722 = vsel %vm1531, %v1491, 0
        %1724 = vmatprep.subr.bf16.mxu0 0
        %1725 = vmatpush1.bf16.msra.mxu0 %v1523
        %1726 = vmatprep.subr.bf16.mxu0 0
        %1727 = vmatpush1.bf16.msra.mxu0 %v1524
        %1728 = vmatprep.subr.bf16.mxu0 0
        %1729 = vmatpush1.bf16.msra.mxu0 %v1525
        %1730 = vmatprep.subr.bf16.mxu0 0
        %1731 = vmatpush1.bf16.msra.mxu0 %v1526
        %1732 = vmatprep.subr.bf16.mxu0 0
        %1733 = vmatpush1.bf16.msra.mxu0 0
        %1734 = vmatprep.subr.bf16.mxu0 0
        %1735 = vmatpush1.bf16.msra.mxu0 0
        %1736 = vmatprep.subr.bf16.mxu0 0
        %1737 = vmatpush1.bf16.msra.mxu0 0
        %1738 = vmatprep.subr.bf16.mxu0 0
        %1739 = vmatpush1.bf16.msra.mxu0 0
        %1740 = vmatprep.subr.bf16.mxu0 0
        %1741 = vmatpush1.bf16.msra.mxu0 0
        %1742 = vmatprep.subr.bf16.mxu0 0
        %1743 = vmatpush1.bf16.msra.mxu0 0
        %1744 = vmatprep.subr.bf16.mxu0 0
        %1745 = vmatpush1.bf16.msra.mxu0 0
        %1746 = vmatprep.subr.bf16.mxu0 0
        %1747 = vmatpush1.bf16.msra.mxu0 0
        %1748 = vmatprep.subr.bf16.mxu0 0
        %1749 = vmatpush1.bf16.msra.mxu0 0
        %1750 = vmatprep.subr.bf16.mxu0 0
        %1751 = vmatpush1.bf16.msra.mxu0 0
        %1752 = vmatprep.subr.bf16.mxu0 0
        %1753 = vmatpush1.bf16.msra.mxu0 0
        %1754 = vmatprep.subr.bf16.mxu0 0
        %1755 = vmatpush1.bf16.msra.mxu0 0
        %1756 = vmatprep.mubr.bf16.mxu0 0
        %1757 = vmatmul.mubr.bf16.gmra.mrb[0].mxu0 %v1533
        %v1758 = vpop.f32.mrb[0].mxu0
        %v1759 = vadd.f32 %v1505, %v1758
        %v1760 = vpop.f32.mrb[0].mxu0
        %v1761 = vpop.f32.mrb[0].mxu0
        %v1762 = vadd.f32 %v1505, %v1761
        %v1763 = vpop.f32.mrb[0].mxu0
        %1764 = vmatprep.mubr.bf16.mxu0 0
        %1765 = vmatmul.mubr.bf16.gmra.mrb[0].mxu0 %v1536
        %v1766 = vpop.f32.mrb[0].mxu0
        %v1767 = vadd.f32 %v1505, %v1766
        %v1768 = vpop.f32.mrb[0].mxu0
        %v1769 = vpop.f32.mrb[0].mxu0
        %v1770 = vadd.f32 %v1505, %v1769
        %v1771 = vpop.f32.mrb[0].mxu0
        %1772 = vmatprep.mubr.bf16.mxu0 0
        %1773 = vmatmul.mubr.bf16.gmra.mrb[0].mxu0 %v1539
        %v1774 = vpop.f32.mrb[0].mxu0
        %v1775 = vadd.f32 %v1505, %v1774
        %v1776 = vpop.f32.mrb[0].mxu0
        %v1777 = vpop.f32.mrb[0].mxu0
        %v1778 = vadd.f32 %v1505, %v1777
        %v1779 = vpop.f32.mrb[0].mxu0
        %1780 = vmatprep.mubr.bf16.mxu0 0
        %1781 = vmatmul.mubr.bf16.gmra.mrb[0].mxu0 %v1542
        %v1782 = vpop.f32.mrb[0].mxu0
        %v1783 = vadd.f32 %v1505, %v1782
        %v1784 = vpop.f32.mrb[0].mxu0
        %v1785 = vpop.f32.mrb[0].mxu0
        %v1786 = vadd.f32 %v1505, %v1785
        %v1787 = vpop.f32.mrb[0].mxu0
        %1788 = vmatprep.mubr.bf16.mxu0 0
        %1789 = vmatmul.mubr.bf16.gmra.mrb[0].mxu0 %v1545
        %v1790 = vpop.f32.mrb[0].mxu0
        %v1791 = vadd.f32 %v1505, %v1790
        %v1792 = vpop.f32.mrb[0].mxu0
        %v1793 = vpop.f32.mrb[0].mxu0
        %v1794 = vadd.f32 %v1505, %v1793
        %v1795 = vpop.f32.mrb[0].mxu0
        %1796 = vmatprep.mubr.bf16.mxu0 0
        %1797 = vmatmul.mubr.bf16.gmra.mrb[0].mxu0 %v1548
        %v1798 = vpop.f32.mrb[0].mxu0
        %v1799 = vadd.f32 %v1505, %v1798
        %v1800 = vpop.f32.mrb[0].mxu0
        %v1801 = vpop.f32.mrb[0].mxu0
        %v1802 = vadd.f32 %v1505, %v1801
        %v1803 = vpop.f32.mrb[0].mxu0
        %1804 = vmatprep.mubr.bf16.mxu0 0
        %1805 = vmatmul.mubr.bf16.gmra.mrb[0].mxu0 %v1551
        %v1806 = vpop.f32.mrb[0].mxu0
        %v1807 = vadd.f32 %v1505, %v1806
        %v1808 = vpop.f32.mrb[0].mxu0
        %v1809 = vpop.f32.mrb[0].mxu0
        %v1810 = vadd.f32 %v1505, %v1809
        %v1811 = vpop.f32.mrb[0].mxu0
        %1812 = vmatprep.mubr.bf16.mxu0 0
        %1813 = vmatmul.mubr.bf16.gmra.mrb[0].mxu0 %v1554
        %v1814 = vpop.f32.mrb[0].mxu0
        %v1815 = vadd.f32 %v1505, %v1814
        %v1816 = vpop.f32.mrb[0].mxu0
        %v1817 = vpop.f32.mrb[0].mxu0
        %v1818 = vadd.f32 %v1505, %v1817
        %v1819 = vpop.f32.mrb[0].mxu0
        %1820 = vmatprep.mubr.bf16.mxu0 0
        %1821 = vmatmul.mubr.bf16.gmra.mrb[0].mxu0 %v1557
        %v1822 = vpop.f32.mrb[0].mxu0
        %v1823 = vadd.f32 %v1505, %v1822
        %v1824 = vpop.f32.mrb[0].mxu0
        %v1825 = vpop.f32.mrb[0].mxu0
        %v1826 = vadd.f32 %v1505, %v1825
        %v1827 = vpop.f32.mrb[0].mxu0
        %1828 = vmatprep.mubr.bf16.mxu0 0
        %1829 = vmatmul.mubr.bf16.gmra.mrb[0].mxu0 %v1560
        %v1830 = vpop.f32.mrb[0].mxu0
        %v1831 = vadd.f32 %v1505, %v1830
        %v1832 = vpop.f32.mrb[0].mxu0
        %v1833 = vpop.f32.mrb[0].mxu0
        %v1834 = vadd.f32 %v1505, %v1833
        %v1835 = vpop.f32.mrb[0].mxu0
        %1836 = vmatprep.mubr.bf16.mxu0 0
        %1837 = vmatmul.mubr.bf16.gmra.mrb[0].mxu0 %v1563
        %v1838 = vpop.f32.mrb[0].mxu0
        %v1839 = vadd.f32 %v1505, %v1838
        %v1840 = vpop.f32.mrb[0].mxu0
        %v1841 = vpop.f32.mrb[0].mxu0
        %v1842 = vadd.f32 %v1505, %v1841
        %v1843 = vpop.f32.mrb[0].mxu0
        %1844 = vmatprep.mubr.bf16.mxu0 0
        %1845 = vmatmul.mubr.bf16.gmra.mrb[0].mxu0 %v1566
        %v1846 = vpop.f32.mrb[0].mxu0
        %v1847 = vadd.f32 %v1505, %v1846
        %v1848 = vpop.f32.mrb[0].mxu0
        %v1849 = vpop.f32.mrb[0].mxu0
        %v1850 = vadd.f32 %v1505, %v1849
        %v1851 = vpop.f32.mrb[0].mxu0
        %1852 = vmatprep.mubr.bf16.mxu0 0
        %1853 = vmatmul.mubr.bf16.gmra.mrb[0].mxu0 %v1569
        %v1854 = vpop.f32.mrb[0].mxu0
        %v1855 = vadd.f32 %v1505, %v1854
        %v1856 = vpop.f32.mrb[0].mxu0
        %v1857 = vpop.f32.mrb[0].mxu0
        %v1858 = vadd.f32 %v1505, %v1857
        %v1859 = vpop.f32.mrb[0].mxu0
        %1860 = vmatprep.mubr.bf16.mxu0 0
        %1861 = vmatmul.mubr.bf16.gmra.mrb[0].mxu0 %v1572
        %v1862 = vpop.f32.mrb[0].mxu0
        %v1863 = vadd.f32 %v1505, %v1862
        %v1864 = vpop.f32.mrb[0].mxu0
        %v1865 = vpop.f32.mrb[0].mxu0
        %v1866 = vadd.f32 %v1505, %v1865
        %v1867 = vpop.f32.mrb[0].mxu0
        %1868 = vmatprep.mubr.bf16.mxu0 0
        %1869 = vmatmul.mubr.bf16.gmra.mrb[0].mxu0 %v1575
        %v1870 = vpop.f32.mrb[0].mxu0
        %v1871 = vadd.f32 %v1505, %v1870
        %v1872 = vpop.f32.mrb[0].mxu0
        %v1873 = vpop.f32.mrb[0].mxu0
        %v1874 = vadd.f32 %v1505, %v1873
        %v1875 = vpop.f32.mrb[0].mxu0
        %1876 = vmatprep.mubr.bf16.mxu0 0
        %1877 = vmatmul.mubr.bf16.gmra.mrb[0].mxu0 %v1578
        %v1878 = vpop.f32.mrb[0].mxu0
        %v1879 = vadd.f32 %v1505, %v1878
        %v1880 = vpop.f32.mrb[0].mxu0
        %v1881 = vpop.f32.mrb[0].mxu0
        %v1882 = vadd.f32 %v1505, %v1881
        %v1883 = vpop.f32.mrb[0].mxu0
        %1884 = vmatprep.mubr.bf16.mxu0 0
        %1885 = vmatmul.mubr.bf16.gmra.mrb[0].mxu0 %v1581
        %v1886 = vpop.f32.mrb[0].mxu0
        %v1887 = vadd.f32 %v1505, %v1886
        %v1888 = vpop.f32.mrb[0].mxu0
        %v1889 = vpop.f32.mrb[0].mxu0
        %v1890 = vadd.f32 %v1505, %v1889
        %v1891 = vpop.f32.mrb[0].mxu0
        %1892 = vmatprep.mubr.bf16.mxu0 0
        %1893 = vmatmul.mubr.bf16.gmra.mrb[0].mxu0 %v1584
        %v1894 = vpop.f32.mrb[0].mxu0
        %v1895 = vadd.f32 %v1505, %v1894
        %v1896 = vpop.f32.mrb[0].mxu0
        %v1897 = vpop.f32.mrb[0].mxu0
        %v1898 = vadd.f32 %v1505, %v1897
        %v1899 = vpop.f32.mrb[0].mxu0
        %1900 = vmatprep.mubr.bf16.mxu0 0
        %1901 = vmatmul.mubr.bf16.gmra.mrb[0].mxu0 %v1587
        %v1902 = vpop.f32.mrb[0].mxu0
        %v1903 = vadd.f32 %v1505, %v1902
        %v1904 = vpop.f32.mrb[0].mxu0
        %v1905 = vpop.f32.mrb[0].mxu0
        %v1906 = vadd.f32 %v1505, %v1905
        %v1907 = vpop.f32.mrb[0].mxu0
        %1908 = vmatprep.mubr.bf16.mxu0 0
        %1909 = vmatmul.mubr.bf16.gmra.mrb[0].mxu0 %v1590
        %v1910 = vpop.f32.mrb[0].mxu0
        %v1911 = vadd.f32 %v1505, %v1910
        %v1912 = vpop.f32.mrb[0].mxu0
        %v1913 = vpop.f32.mrb[0].mxu0
        %v1914 = vadd.f32 %v1505, %v1913
        %v1915 = vpop.f32.mrb[0].mxu0
        %1916 = vmatprep.mubr.bf16.mxu0 0
        %1917 = vmatmul.mubr.bf16.gmra.mrb[0].mxu0 %v1593
        %v1918 = vpop.f32.mrb[0].mxu0
        %v1919 = vadd.f32 %v1505, %v1918
        %v1920 = vpop.f32.mrb[0].mxu0
        %v1921 = vpop.f32.mrb[0].mxu0
        %v1922 = vadd.f32 %v1505, %v1921
        %v1923 = vpop.f32.mrb[0].mxu0
        %1924 = vmatprep.mubr.bf16.mxu0 0
        %1925 = vmatmul.mubr.bf16.gmra.mrb[0].mxu0 %v1596
        %v1926 = vpop.f32.mrb[0].mxu0
        %v1927 = vadd.f32 %v1505, %v1926
        %v1928 = vpop.f32.mrb[0].mxu0
        %v1929 = vpop.f32.mrb[0].mxu0
        %v1930 = vadd.f32 %v1505, %v1929
        %v1931 = vpop.f32.mrb[0].mxu0
        %1932 = vmatprep.mubr.bf16.mxu0 0
        %1933 = vmatmul.mubr.bf16.gmra.mrb[0].mxu0 %v1599
        %v1934 = vpop.f32.mrb[0].mxu0
        %v1935 = vadd.f32 %v1505, %v1934
        %v1936 = vpop.f32.mrb[0].mxu0
        %v1937 = vpop.f32.mrb[0].mxu0
        %v1938 = vadd.f32 %v1505, %v1937
        %v1939 = vpop.f32.mrb[0].mxu0
        %1940 = vmatprep.mubr.bf16.mxu0 0
        %1941 = vmatmul.mubr.bf16.gmra.mrb[0].mxu0 %v1602
        %v1942 = vpop.f32.mrb[0].mxu0
        %v1943 = vadd.f32 %v1505, %v1942
        %v1944 = vpop.f32.mrb[0].mxu0
        %v1945 = vpop.f32.mrb[0].mxu0
        %v1946 = vadd.f32 %v1505, %v1945
        %v1947 = vpop.f32.mrb[0].mxu0
        %1948 = vmatprep.mubr.bf16.mxu0 0
        %1949 = vmatmul.mubr.bf16.gmra.mrb[0].mxu0 %v1605
        %v1950 = vpop.f32.mrb[0].mxu0
        %v1951 = vadd.f32 %v1505, %v1950
        %v1952 = vpop.f32.mrb[0].mxu0
        %v1953 = vpop.f32.mrb[0].mxu0
        %v1954 = vadd.f32 %v1505, %v1953
        %v1955 = vpop.f32.mrb[0].mxu0
        %1956 = vmatprep.mubr.bf16.mxu0 0
        %1957 = vmatmul.mubr.bf16.gmra.mrb[0].mxu0 %v1608
        %v1958 = vpop.f32.mrb[0].mxu0
        %v1959 = vadd.f32 %v1505, %v1958
        %v1960 = vpop.f32.mrb[0].mxu0
        %v1961 = vpop.f32.mrb[0].mxu0
        %v1962 = vadd.f32 %v1505, %v1961
        %v1963 = vpop.f32.mrb[0].mxu0
        %1964 = vmatprep.mubr.bf16.mxu0 0
        %1965 = vmatmul.mubr.bf16.gmra.mrb[0].mxu0 %v1611
        %v1966 = vpop.f32.mrb[0].mxu0
        %v1967 = vadd.f32 %v1505, %v1966
        %v1968 = vpop.f32.mrb[0].mxu0
        %v1969 = vpop.f32.mrb[0].mxu0
        %v1970 = vadd.f32 %v1505, %v1969
        %v1971 = vpop.f32.mrb[0].mxu0
        %1972 = vmatprep.mubr.bf16.mxu0 0
        %1973 = vmatmul.mubr.bf16.gmra.mrb[0].mxu0 %v1614
        %v1974 = vpop.f32.mrb[0].mxu0
        %v1975 = vadd.f32 %v1505, %v1974
        %v1976 = vpop.f32.mrb[0].mxu0
        %v1977 = vpop.f32.mrb[0].mxu0
        %v1978 = vadd.f32 %v1505, %v1977
        %v1979 = vpop.f32.mrb[0].mxu0
        %1980 = vmatprep.mubr.bf16.mxu0 0
        %1981 = vmatmul.mubr.bf16.gmra.mrb[0].mxu0 %v1617
        %v1982 = vpop.f32.mrb[0].mxu0
        %v1983 = vadd.f32 %v1505, %v1982
        %v1984 = vpop.f32.mrb[0].mxu0
        %v1985 = vpop.f32.mrb[0].mxu0
        %v1986 = vadd.f32 %v1505, %v1985
        %v1987 = vpop.f32.mrb[0].mxu0
        %1988 = vmatprep.mubr.bf16.mxu0 0
        %1989 = vmatmul.mubr.bf16.gmra.mrb[0].mxu0 %v1620
        %v1990 = vpop.f32.mrb[0].mxu0
        %v1991 = vadd.f32 %v1505, %v1990
        %v1992 = vpop.f32.mrb[0].mxu0
        %v1993 = vpop.f32.mrb[0].mxu0
        %v1994 = vadd.f32 %v1505, %v1993
        %v1995 = vpop.f32.mrb[0].mxu0
        %1996 = vmatprep.mubr.bf16.mxu0 0
        %1997 = vmatmul.mubr.bf16.gmra.mrb[0].mxu0 %v1623
        %v1998 = vpop.f32.mrb[0].mxu0
        %v1999 = vadd.f32 %v1505, %v1998
        %v2000 = vpop.f32.mrb[0].mxu0
        %v2001 = vpop.f32.mrb[0].mxu0
        %v2002 = vadd.f32 %v1505, %v2001
        %v2003 = vpop.f32.mrb[0].mxu0
        %2004 = vmatprep.mubr.bf16.mxu0 0
        %2005 = vmatmul.mubr.bf16.gmra.mrb[0].mxu0 %v1626
        %v2006 = vpop.f32.mrb[0].mxu0
        %v2007 = vadd.f32 %v1505, %v2006
        %v2008 = vpop.f32.mrb[0].mxu0
        %v2009 = vpop.f32.mrb[0].mxu0
        %v2010 = vadd.f32 %v1505, %v2009
        %v2011 = vpop.f32.mrb[0].mxu0
        %2012 = vmatprep.mubr.bf16.mxu0 0
        %2013 = vmatmul.mubr.bf16.gmra.mrb[0].mxu0 %v1629
        %v2014 = vpop.f32.mrb[0].mxu0
        %v2015 = vadd.f32 %v1505, %v2014
        %v2016 = vpop.f32.mrb[0].mxu0
        %v2017 = vpop.f32.mrb[0].mxu0
        %v2018 = vadd.f32 %v1505, %v2017
        %v2019 = vpop.f32.mrb[0].mxu0
        %2020 = vmatprep.mubr.bf16.mxu0 0
        %2021 = vmatmul.mubr.bf16.gmra.mrb[0].mxu0 %v1632
        %v2022 = vpop.f32.mrb[0].mxu0
        %v2023 = vadd.f32 %v1505, %v2022
        %v2024 = vpop.f32.mrb[0].mxu0
        %v2025 = vpop.f32.mrb[0].mxu0
        %v2026 = vadd.f32 %v1505, %v2025
        %v2027 = vpop.f32.mrb[0].mxu0
        %2028 = vmatprep.mubr.bf16.mxu0 0
        %2029 = vmatmul.mubr.bf16.gmra.mrb[0].mxu0 %v1635
        %v2030 = vpop.f32.mrb[0].mxu0
        %v2031 = vadd.f32 %v1505, %v2030
        %v2032 = vpop.f32.mrb[0].mxu0
        %v2033 = vpop.f32.mrb[0].mxu0
        %v2034 = vadd.f32 %v1505, %v2033
        %v2035 = vpop.f32.mrb[0].mxu0
        %2036 = vmatprep.mubr.bf16.mxu0 0
        %2037 = vmatmul.mubr.bf16.gmra.mrb[0].mxu0 %v1638
        %v2038 = vpop.f32.mrb[0].mxu0
        %v2039 = vadd.f32 %v1505, %v2038
        %v2040 = vpop.f32.mrb[0].mxu0
        %v2041 = vpop.f32.mrb[0].mxu0
        %v2042 = vadd.f32 %v1505, %v2041
        %v2043 = vpop.f32.mrb[0].mxu0
        %2044 = vmatprep.mubr.bf16.mxu0 0
        %2045 = vmatmul.mubr.bf16.gmra.mrb[0].mxu0 %v1641
        %v2046 = vpop.f32.mrb[0].mxu0
        %v2047 = vadd.f32 %v1505, %v2046
        %v2048 = vpop.f32.mrb[0].mxu0
        %v2049 = vpop.f32.mrb[0].mxu0
        %v2050 = vadd.f32 %v1505, %v2049
        %v2051 = vpop.f32.mrb[0].mxu0
        %2052 = vmatprep.mubr.bf16.mxu0 0
        %2053 = vmatmul.mubr.bf16.gmra.mrb[0].mxu0 %v1644
        %v2054 = vpop.f32.mrb[0].mxu0
        %v2055 = vadd.f32 %v1505, %v2054
        %v2056 = vpop.f32.mrb[0].mxu0
        %v2057 = vpop.f32.mrb[0].mxu0
        %v2058 = vadd.f32 %v1505, %v2057
        %v2059 = vpop.f32.mrb[0].mxu0
        %2060 = vmatprep.mubr.bf16.mxu0 0
        %2061 = vmatmul.mubr.bf16.gmra.mrb[0].mxu0 %v1647
        %v2062 = vpop.f32.mrb[0].mxu0
        %v2063 = vadd.f32 %v1505, %v2062
        %v2064 = vpop.f32.mrb[0].mxu0
        %v2065 = vpop.f32.mrb[0].mxu0
        %v2066 = vadd.f32 %v1505, %v2065
        %v2067 = vpop.f32.mrb[0].mxu0
        %2068 = vmatprep.mubr.bf16.mxu0 0
        %2069 = vmatmul.mubr.bf16.gmra.mrb[0].mxu0 %v1650
        %v2070 = vpop.f32.mrb[0].mxu0
        %v2071 = vadd.f32 %v1505, %v2070
        %v2072 = vpop.f32.mrb[0].mxu0
        %v2073 = vpop.f32.mrb[0].mxu0
        %v2074 = vadd.f32 %v1505, %v2073
        %v2075 = vpop.f32.mrb[0].mxu0
        %2076 = vmatprep.mubr.bf16.mxu0 0
        %2077 = vmatmul.mubr.bf16.gmra.mrb[0].mxu0 %v1653
        %v2078 = vpop.f32.mrb[0].mxu0
        %v2079 = vadd.f32 %v1505, %v2078
        %v2080 = vpop.f32.mrb[0].mxu0
        %v2081 = vpop.f32.mrb[0].mxu0
        %v2082 = vadd.f32 %v1505, %v2081
        %v2083 = vpop.f32.mrb[0].mxu0
        %2084 = vmatprep.mubr.bf16.mxu0 0
        %2085 = vmatmul.mubr.bf16.gmra.mrb[0].mxu0 %v1656
        %v2086 = vpop.f32.mrb[0].mxu0
        %v2087 = vadd.f32 %v1505, %v2086
        %v2088 = vpop.f32.mrb[0].mxu0
        %v2089 = vpop.f32.mrb[0].mxu0
        %v2090 = vadd.f32 %v1505, %v2089
        %v2091 = vpop.f32.mrb[0].mxu0
        %2092 = vmatprep.mubr.bf16.mxu0 0
        %2093 = vmatmul.mubr.bf16.gmra.mrb[0].mxu0 %v1659
        %v2094 = vpop.f32.mrb[0].mxu0
        %v2095 = vadd.f32 %v1505, %v2094
        %v2096 = vpop.f32.mrb[0].mxu0
        %v2097 = vpop.f32.mrb[0].mxu0
        %v2098 = vadd.f32 %v1505, %v2097
        %v2099 = vpop.f32.mrb[0].mxu0
        %2100 = vmatprep.mubr.bf16.mxu0 0
        %2101 = vmatmul.mubr.bf16.gmra.mrb[0].mxu0 %v1662
        %v2102 = vpop.f32.mrb[0].mxu0
        %v2103 = vadd.f32 %v1505, %v2102
        %v2104 = vpop.f32.mrb[0].mxu0
        %v2105 = vpop.f32.mrb[0].mxu0
        %v2106 = vadd.f32 %v1505, %v2105
        %v2107 = vpop.f32.mrb[0].mxu0
        %2108 = vmatprep.mubr.bf16.mxu0 0
        %2109 = vmatmul.mubr.bf16.gmra.mrb[0].mxu0 %v1665
        %v2110 = vpop.f32.mrb[0].mxu0
        %v2111 = vadd.f32 %v1505, %v2110
        %v2112 = vpop.f32.mrb[0].mxu0
        %v2113 = vpop.f32.mrb[0].mxu0
        %v2114 = vadd.f32 %v1505, %v2113
        %v2115 = vpop.f32.mrb[0].mxu0
        %2116 = vmatprep.mubr.bf16.mxu0 0
        %2117 = vmatmul.mubr.bf16.gmra.mrb[0].mxu0 %v1668
        %v2118 = vpop.f32.mrb[0].mxu0
        %v2119 = vadd.f32 %v1505, %v2118
        %v2120 = vpop.f32.mrb[0].mxu0
        %v2121 = vpop.f32.mrb[0].mxu0
        %v2122 = vadd.f32 %v1505, %v2121
        %v2123 = vpop.f32.mrb[0].mxu0
        %2124 = vmatprep.mubr.bf16.mxu0 0
        %2125 = vmatmul.mubr.bf16.gmra.mrb[0].mxu0 %v1671
        %v2126 = vpop.f32.mrb[0].mxu0
        %v2127 = vadd.f32 %v1505, %v2126
        %v2128 = vpop.f32.mrb[0].mxu0
        %v2129 = vpop.f32.mrb[0].mxu0
        %v2130 = vadd.f32 %v1505, %v2129
        %v2131 = vpop.f32.mrb[0].mxu0
        %2132 = vmatprep.mubr.bf16.mxu0 0
        %2133 = vmatmul.mubr.bf16.gmra.mrb[0].mxu0 %v1674
        %v2134 = vpop.f32.mrb[0].mxu0
        %v2135 = vadd.f32 %v1505, %v2134
        %v2136 = vpop.f32.mrb[0].mxu0
        %v2137 = vpop.f32.mrb[0].mxu0
        %v2138 = vadd.f32 %v1505, %v2137
        %v2139 = vpop.f32.mrb[0].mxu0
        %2140 = vmatprep.mubr.bf16.mxu0 0
        %2141 = vmatmul.mubr.bf16.gmra.mrb[0].mxu0 %v1677
        %v2142 = vpop.f32.mrb[0].mxu0
        %v2143 = vadd.f32 %v1505, %v2142
        %v2144 = vpop.f32.mrb[0].mxu0
        %v2145 = vpop.f32.mrb[0].mxu0
        %v2146 = vadd.f32 %v1505, %v2145
        %v2147 = vpop.f32.mrb[0].mxu0
        %2148 = vmatprep.mubr.bf16.mxu0 0
        %2149 = vmatmul.mubr.bf16.gmra.mrb[0].mxu0 %v1680
        %v2150 = vpop.f32.mrb[0].mxu0
        %v2151 = vadd.f32 %v1505, %v2150
        %v2152 = vpop.f32.mrb[0].mxu0
        %v2153 = vpop.f32.mrb[0].mxu0
        %v2154 = vadd.f32 %v1505, %v2153
        %v2155 = vpop.f32.mrb[0].mxu0
        %2156 = vmatprep.mubr.bf16.mxu0 0
        %2157 = vmatmul.mubr.bf16.gmra.mrb[0].mxu0 %v1683
        %v2158 = vpop.f32.mrb[0].mxu0
        %v2159 = vadd.f32 %v1505, %v2158
        %v2160 = vpop.f32.mrb[0].mxu0
        %v2161 = vpop.f32.mrb[0].mxu0
        %v2162 = vadd.f32 %v1505, %v2161
        %v2163 = vpop.f32.mrb[0].mxu0
        %2164 = vmatprep.mubr.bf16.mxu0 0
        %2165 = vmatmul.mubr.bf16.gmra.mrb[0].mxu0 %v1686
        %v2166 = vpop.f32.mrb[0].mxu0
        %v2167 = vadd.f32 %v1505, %v2166
        %v2168 = vpop.f32.mrb[0].mxu0
        %v2169 = vpop.f32.mrb[0].mxu0
        %v2170 = vadd.f32 %v1505, %v2169
        %v2171 = vpop.f32.mrb[0].mxu0
        %2172 = vmatprep.mubr.bf16.mxu0 0
        %2173 = vmatmul.mubr.bf16.gmra.mrb[0].mxu0 %v1689
        %v2174 = vpop.f32.mrb[0].mxu0
        %v2175 = vadd.f32 %v1505, %v2174
        %v2176 = vpop.f32.mrb[0].mxu0
        %v2177 = vpop.f32.mrb[0].mxu0
        %v2178 = vadd.f32 %v1505, %v2177
        %v2179 = vpop.f32.mrb[0].mxu0
        %2180 = vmatprep.mubr.bf16.mxu0 0
        %2181 = vmatmul.mubr.bf16.gmra.mrb[0].mxu0 %v1692
        %v2182 = vpop.f32.mrb[0].mxu0
        %v2183 = vadd.f32 %v1505, %v2182
        %v2184 = vpop.f32.mrb[0].mxu0
        %v2185 = vpop.f32.mrb[0].mxu0
        %v2186 = vadd.f32 %v1505, %v2185
        %v2187 = vpop.f32.mrb[0].mxu0
        %2188 = vmatprep.mubr.bf16.mxu0 0
        %2189 = vmatmul.mubr.bf16.gmra.mrb[0].mxu0 %v1695
        %v2190 = vpop.f32.mrb[0].mxu0
        %v2191 = vadd.f32 %v1505, %v2190
        %v2192 = vpop.f32.mrb[0].mxu0
        %v2193 = vpop.f32.mrb[0].mxu0
        %v2194 = vadd.f32 %v1505, %v2193
        %v2195 = vpop.f32.mrb[0].mxu0
        %2196 = vmatprep.mubr.bf16.mxu0 0
        %2197 = vmatmul.mubr.bf16.gmra.mrb[0].mxu0 %v1698
        %v2198 = vpop.f32.mrb[0].mxu0
        %v2199 = vadd.f32 %v1505, %v2198
        %v2200 = vpop.f32.mrb[0].mxu0
        %v2201 = vpop.f32.mrb[0].mxu0
        %v2202 = vadd.f32 %v1505, %v2201
        %v2203 = vpop.f32.mrb[0].mxu0
        %2204 = vmatprep.mubr.bf16.mxu0 0
        %2205 = vmatmul.mubr.bf16.gmra.mrb[0].mxu0 %v1701
        %v2206 = vpop.f32.mrb[0].mxu0
        %v2207 = vadd.f32 %v1505, %v2206
        %v2208 = vpop.f32.mrb[0].mxu0
        %v2209 = vpop.f32.mrb[0].mxu0
        %v2210 = vadd.f32 %v1505, %v2209
        %v2211 = vpop.f32.mrb[0].mxu0
        %2212 = vmatprep.mubr.bf16.mxu0 0
        %2213 = vmatmul.mubr.bf16.gmra.mrb[0].mxu0 %v1704
        %v2214 = vpop.f32.mrb[0].mxu0
        %v2215 = vadd.f32 %v1505, %v2214
        %v2216 = vpop.f32.mrb[0].mxu0
        %v2217 = vpop.f32.mrb[0].mxu0
        %v2218 = vadd.f32 %v1505, %v2217
        %v2219 = vpop.f32.mrb[0].mxu0
        %2220 = vmatprep.mubr.bf16.mxu0 0
        %2221 = vmatmul.mubr.bf16.gmra.mrb[0].mxu0 %v1707
        %v2222 = vpop.f32.mrb[0].mxu0
        %v2223 = vadd.f32 %v1505, %v2222
        %v2224 = vpop.f32.mrb[0].mxu0
        %v2225 = vpop.f32.mrb[0].mxu0
        %v2226 = vadd.f32 %v1505, %v2225
        %v2227 = vpop.f32.mrb[0].mxu0
        %2228 = vmatprep.mubr.bf16.mxu0 0
        %2229 = vmatmul.mubr.bf16.gmra.mrb[0].mxu0 %v1710
        %v2230 = vpop.f32.mrb[0].mxu0
        %v2231 = vadd.f32 %v1505, %v2230
        %v2232 = vpop.f32.mrb[0].mxu0
        %v2233 = vpop.f32.mrb[0].mxu0
        %v2234 = vadd.f32 %v1505, %v2233
        %v2235 = vpop.f32.mrb[0].mxu0
        %2236 = vmatprep.mubr.bf16.mxu0 0
        %2237 = vmatmul.mubr.bf16.gmra.mrb[0].mxu0 %v1713
        %v2238 = vpop.f32.mrb[0].mxu0
        %v2239 = vadd.f32 %v1505, %v2238
        %v2240 = vpop.f32.mrb[0].mxu0
        %v2241 = vpop.f32.mrb[0].mxu0
        %v2242 = vadd.f32 %v1505, %v2241
        %v2243 = vpop.f32.mrb[0].mxu0
        %2244 = vmatprep.mubr.bf16.mxu0 0
        %2245 = vmatmul.mubr.bf16.gmra.mrb[0].mxu0 %v1716
        %v2246 = vpop.f32.mrb[0].mxu0
        %v2247 = vadd.f32 %v1505, %v2246
        %v2248 = vpop.f32.mrb[0].mxu0
        %v2249 = vpop.f32.mrb[0].mxu0
        %v2250 = vadd.f32 %v1505, %v2249
        %v2251 = vpop.f32.mrb[0].mxu0
        %2252 = vmatprep.mubr.bf16.mxu0 0
        %2253 = vmatmul.mubr.bf16.gmra.mrb[0].mxu0 %v1719
        %v2254 = vpop.f32.mrb[0].mxu0
        %v2255 = vadd.f32 %v1505, %v2254
        %v2256 = vpop.f32.mrb[0].mxu0
        %v2257 = vpop.f32.mrb[0].mxu0
        %v2258 = vadd.f32 %v1505, %v2257
        %v2259 = vpop.f32.mrb[0].mxu0
        %2260 = vmatprep.mubr.bf16.mxu0 0
        %2261 = vmatmul.mubr.bf16.gmra.mrb[0].mxu0 %v1722
        %v2262 = vpop.f32.mrb[0].mxu0
        %v2263 = vadd.f32 %v1505, %v2262
        %v2264 = vpop.f32.mrb[0].mxu0
        %v2265 = vpop.f32.mrb[0].mxu0
        %v2266 = vadd.f32 %v1505, %v2265
        %v2267 = vpop.f32.mrb[0].mxu0
        %2268 = vdwg.mxu0
        %v2269 = vmax.f32 %v1759, 0.0
        %v2270 = vmax.f32 %v1762, 0.0
        %v2271 = vmax.f32 %v1767, 0.0
        %v2272 = vmax.f32 %v1770, 0.0
        %v2273 = vmax.f32 %v1775, 0.0
        %v2274 = vmax.f32 %v1778, 0.0
        %v2275 = vmax.f32 %v1783, 0.0
        %v2276 = vmax.f32 %v1786, 0.0
        %v2277 = vmax.f32 %v1791, 0.0
        %v2278 = vmax.f32 %v1794, 0.0
        %v2279 = vmax.f32 %v1799, 0.0
        %v2280 = vmax.f32 %v1802, 0.0
        %v2281 = vmax.f32 %v1807, 0.0
        %v2282 = vmax.f32 %v1810, 0.0
        %v2283 = vmax.f32 %v1815, 0.0
        %v2284 = vmax.f32 %v1818, 0.0
        %v2285 = vmax.f32 %v1823, 0.0
        %v2286 = vmax.f32 %v1826, 0.0
        %v2287 = vmax.f32 %v1831, 0.0
        %v2288 = vmax.f32 %v1834, 0.0
        %v2289 = vmax.f32 %v1839, 0.0
        %v2290 = vmax.f32 %v1842, 0.0
        %v2291 = vmax.f32 %v1847, 0.0
        %v2292 = vmax.f32 %v1850, 0.0
        %v2293 = vmax.f32 %v1855, 0.0
        %v2294 = vmax.f32 %v1858, 0.0
        %v2295 = vmax.f32 %v1863, 0.0
        %v2296 = vmax.f32 %v1866, 0.0
        %v2297 = vmax.f32 %v1871, 0.0
        %v2298 = vmax.f32 %v1874, 0.0
        %v2299 = vmax.f32 %v1879, 0.0
        %v2300 = vmax.f32 %v1882, 0.0
        %v2301 = vmax.f32 %v1887, 0.0
        %v2302 = vmax.f32 %v1890, 0.0
        %v2303 = vmax.f32 %v1895, 0.0
        %v2304 = vmax.f32 %v1898, 0.0
        %v2305 = vmax.f32 %v1903, 0.0
        %v2306 = vmax.f32 %v1906, 0.0
        %v2307 = vmax.f32 %v1911, 0.0
        %v2308 = vmax.f32 %v1914, 0.0
        %v2309 = vmax.f32 %v1919, 0.0
        %v2310 = vmax.f32 %v1922, 0.0
        %v2311 = vmax.f32 %v1927, 0.0
        %v2312 = vmax.f32 %v1930, 0.0
        %v2313 = vmax.f32 %v1935, 0.0
        %v2314 = vmax.f32 %v1938, 0.0
        %v2315 = vmax.f32 %v1943, 0.0
        %v2316 = vmax.f32 %v1946, 0.0
        %v2317 = vmax.f32 %v1951, 0.0
        %v2318 = vmax.f32 %v1954, 0.0
        %v2319 = vmax.f32 %v1959, 0.0
        %v2320 = vmax.f32 %v1962, 0.0
        %v2321 = vmax.f32 %v1967, 0.0
        %v2322 = vmax.f32 %v1970, 0.0
        %v2323 = vmax.f32 %v1975, 0.0
        %v2324 = vmax.f32 %v1978, 0.0
        %v2325 = vmax.f32 %v1983, 0.0
        %v2326 = vmax.f32 %v1986, 0.0
        %v2327 = vmax.f32 %v1991, 0.0
        %v2328 = vmax.f32 %v1994, 0.0
        %v2329 = vmax.f32 %v1999, 0.0
        %v2330 = vmax.f32 %v2002, 0.0
        %v2331 = vmax.f32 %v2007, 0.0
        %v2332 = vmax.f32 %v2010, 0.0
        %v2333 = vmax.f32 %v2015, 0.0
        %v2334 = vmax.f32 %v2018, 0.0
        %v2335 = vmax.f32 %v2023, 0.0
        %v2336 = vmax.f32 %v2026, 0.0
        %v2337 = vmax.f32 %v2031, 0.0
        %v2338 = vmax.f32 %v2034, 0.0
        %v2339 = vmax.f32 %v2039, 0.0
        %v2340 = vmax.f32 %v2042, 0.0
        %v2341 = vmax.f32 %v2047, 0.0
        %v2342 = vmax.f32 %v2050, 0.0
        %v2343 = vmax.f32 %v2055, 0.0
        %v2344 = vmax.f32 %v2058, 0.0
        %v2345 = vmax.f32 %v2063, 0.0
        %v2346 = vmax.f32 %v2066, 0.0
        %v2347 = vmax.f32 %v2071, 0.0
        %v2348 = vmax.f32 %v2074, 0.0
        %v2349 = vmax.f32 %v2079, 0.0
        %v2350 = vmax.f32 %v2082, 0.0
        %v2351 = vmax.f32 %v2087, 0.0
        %v2352 = vmax.f32 %v2090, 0.0
        %v2353 = vmax.f32 %v2095, 0.0
        %v2354 = vmax.f32 %v2098, 0.0
        %v2355 = vmax.f32 %v2103, 0.0
        %v2356 = vmax.f32 %v2106, 0.0
        %v2357 = vmax.f32 %v2111, 0.0
        %v2358 = vmax.f32 %v2114, 0.0
        %v2359 = vmax.f32 %v2119, 0.0
        %v2360 = vmax.f32 %v2122, 0.0
        %v2361 = vmax.f32 %v2127, 0.0
        %v2362 = vmax.f32 %v2130, 0.0
        %v2363 = vmax.f32 %v2135, 0.0
        %v2364 = vmax.f32 %v2138, 0.0
        %v2365 = vmax.f32 %v2143, 0.0
        %v2366 = vmax.f32 %v2146, 0.0
        %v2367 = vmax.f32 %v2151, 0.0
        %v2368 = vmax.f32 %v2154, 0.0
        %v2369 = vmax.f32 %v2159, 0.0
        %v2370 = vmax.f32 %v2162, 0.0
        %v2371 = vmax.f32 %v2167, 0.0
        %v2372 = vmax.f32 %v2170, 0.0
        %v2373 = vmax.f32 %v2175, 0.0
        %v2374 = vmax.f32 %v2178, 0.0
        %v2375 = vmax.f32 %v2183, 0.0
        %v2376 = vmax.f32 %v2186, 0.0
        %v2377 = vmax.f32 %v2191, 0.0
        %v2378 = vmax.f32 %v2194, 0.0
        %v2379 = vmax.f32 %v2199, 0.0
        %v2380 = vmax.f32 %v2202, 0.0
        %v2381 = vmax.f32 %v2207, 0.0
        %v2382 = vmax.f32 %v2210, 0.0
        %v2383 = vmax.f32 %v2215, 0.0
        %v2384 = vmax.f32 %v2218, 0.0
        %v2385 = vmax.f32 %v2223, 0.0
        %v2386 = vmax.f32 %v2226, 0.0
        %v2387 = vmax.f32 %v2231, 0.0
        %v2388 = vmax.f32 %v2234, 0.0
        %v2389 = vmax.f32 %v2239, 0.0
        %v2390 = vmax.f32 %v2242, 0.0
        %v2391 = vmax.f32 %v2247, 0.0
        %v2392 = vmax.f32 %v2250, 0.0
        %v2393 = vmax.f32 %v2255, 0.0
        %v2394 = vmax.f32 %v2258, 0.0
        %v2395 = vmax.f32 %v2263, 0.0
        %v2396 = vmax.f32 %v2266, 0.0
        %v2397 = vpack.c.bf16 %v2270, %v2269
        %v2398 = vpack.c.bf16 %v2272, %v2271
        %v2399 = vpack.c.bf16 %v2274, %v2273
        %v2400 = vpack.c.bf16 %v2276, %v2275
        %v2401 = vpack.c.bf16 %v2278, %v2277
        %v2402 = vpack.c.bf16 %v2280, %v2279
        %v2403 = vpack.c.bf16 %v2282, %v2281
        %v2404 = vpack.c.bf16 %v2284, %v2283
        %v2405 = vpack.c.bf16 %v2286, %v2285
        %v2406 = vpack.c.bf16 %v2288, %v2287
        %v2407 = vpack.c.bf16 %v2290, %v2289
        %v2408 = vpack.c.bf16 %v2292, %v2291
        %v2409 = vpack.c.bf16 %v2294, %v2293
        %v2410 = vpack.c.bf16 %v2296, %v2295
        %v2411 = vpack.c.bf16 %v2298, %v2297
        %v2412 = vpack.c.bf16 %v2300, %v2299
        %v2413 = vpack.c.bf16 %v2302, %v2301
        %v2414 = vpack.c.bf16 %v2304, %v2303
        %v2415 = vpack.c.bf16 %v2306, %v2305
        %v2416 = vpack.c.bf16 %v2308, %v2307
        %v2417 = vpack.c.bf16 %v2310, %v2309
        %v2418 = vpack.c.bf16 %v2312, %v2311
        %v2419 = vpack.c.bf16 %v2314, %v2313
        %v2420 = vpack.c.bf16 %v2316, %v2315
        %v2421 = vpack.c.bf16 %v2318, %v2317
        %v2422 = vpack.c.bf16 %v2320, %v2319
        %v2423 = vpack.c.bf16 %v2322, %v2321
        %v2424 = vpack.c.bf16 %v2324, %v2323
        %v2425 = vpack.c.bf16 %v2326, %v2325
        %v2426 = vpack.c.bf16 %v2328, %v2327
        %v2427 = vpack.c.bf16 %v2330, %v2329
        %v2428 = vpack.c.bf16 %v2332, %v2331
        %v2429 = vpack.c.bf16 %v2334, %v2333
        %v2430 = vpack.c.bf16 %v2336, %v2335
        %v2431 = vpack.c.bf16 %v2338, %v2337
        %v2432 = vpack.c.bf16 %v2340, %v2339
        %v2433 = vpack.c.bf16 %v2342, %v2341
        %v2434 = vpack.c.bf16 %v2344, %v2343
        %v2435 = vpack.c.bf16 %v2346, %v2345
        %v2436 = vpack.c.bf16 %v2348, %v2347
        %v2437 = vpack.c.bf16 %v2350, %v2349
        %v2438 = vpack.c.bf16 %v2352, %v2351
        %v2439 = vpack.c.bf16 %v2354, %v2353
        %v2440 = vpack.c.bf16 %v2356, %v2355
        %v2441 = vpack.c.bf16 %v2358, %v2357
        %v2442 = vpack.c.bf16 %v2360, %v2359
        %v2443 = vpack.c.bf16 %v2362, %v2361
        %v2444 = vpack.c.bf16 %v2364, %v2363
        %v2445 = vpack.c.bf16 %v2366, %v2365
        %v2446 = vpack.c.bf16 %v2368, %v2367
        %v2447 = vpack.c.bf16 %v2370, %v2369
        %v2448 = vpack.c.bf16 %v2372, %v2371
        %v2449 = vpack.c.bf16 %v2374, %v2373
        %v2450 = vpack.c.bf16 %v2376, %v2375
        %v2451 = vpack.c.bf16 %v2378, %v2377
        %v2452 = vpack.c.bf16 %v2380, %v2379
        %v2453 = vpack.c.bf16 %v2382, %v2381
        %v2454 = vpack.c.bf16 %v2384, %v2383
        %v2455 = vpack.c.bf16 %v2386, %v2385
        %v2456 = vpack.c.bf16 %v2388, %v2387
        %v2457 = vpack.c.bf16 %v2390, %v2389
        %v2458 = vpack.c.bf16 %v2392, %v2391
        %v2459 = vpack.c.bf16 %v2394, %v2393
        %v2460 = vpack.c.bf16 %v2396, %v2395
        %v2461 = vld [vmem:[#allocation9] sm:$0xff]
        %v2462 = vld [vmem:[#allocation9 + $0x8] sm:$0xff]
        %v2463 = vld [vmem:[#allocation9 + $0x10] sm:$0xff]
        %v2464 = vld [vmem:[#allocation9 + $0x18] sm:$0xff]
        %v2465 = vld [vmem:[#allocation9 + $0x20] sm:$0xff]
        %v2466 = vld [vmem:[#allocation9 + $0x28] sm:$0xff]
        %v2467 = vld [vmem:[#allocation9 + $0x30] sm:$0xff]
        %v2468 = vld [vmem:[#allocation9 + $0x38] sm:$0xff]
        %v2469 = vld [vmem:[#allocation9 + $0x40] sm:$0xff]
        %v2470 = vld [vmem:[#allocation9 + $0x48] sm:$0xff]
        %v2471 = vld [vmem:[#allocation9 + $0x50] sm:$0xff]
        %v2472 = vld [vmem:[#allocation9 + $0x58] sm:$0xff]
        %v2473 = vld [vmem:[#allocation9 + $0x60] sm:$0xff]
        %v2474 = vld [vmem:[#allocation9 + $0x68] sm:$0xff]
        %v2475 = vld [vmem:[#allocation9 + $0x70] sm:$0xff]
        %v2476 = vld [vmem:[#allocation9 + $0x78] sm:$0xff]
        %v2477 = vld [vmem:[#allocation9 + $0x80] sm:$0xff]
        %v2478 = vld [vmem:[#allocation9 + $0x88] sm:$0xff]
        %v2479 = vld [vmem:[#allocation9 + $0x90] sm:$0xff]
        %v2480 = vld [vmem:[#allocation9 + $0x98] sm:$0xff]
        %v2481 = vld [vmem:[#allocation9 + $0xa0] sm:$0xff]
        %v2482 = vld [vmem:[#allocation9 + $0xa8] sm:$0xff]
        %v2483 = vld [vmem:[#allocation9 + $0xb0] sm:$0xff]
        %v2484 = vld [vmem:[#allocation9 + $0xb8] sm:$0xff]
        %v2485 = vld [vmem:[#allocation9 + $0xc0] sm:$0xff]
        %v2486 = vld [vmem:[#allocation9 + $0xc8] sm:$0xff]
        %v2487 = vld [vmem:[#allocation9 + $0xd0] sm:$0xff]
        %v2488 = vld [vmem:[#allocation9 + $0xd8] sm:$0xff]
        %v2489 = vld [vmem:[#allocation9 + $0xe0] sm:$0xff]
        %v2490 = vld [vmem:[#allocation9 + $0xe8] sm:$0xff]
        %v2491 = vld [vmem:[#allocation9 + $0xf0] sm:$0xff]
        %v2492 = vld [vmem:[#allocation9 + $0xf8] sm:$0xff]
        %v2493 = vld [vmem:[#allocation9 + $0x100] sm:$0xff]
        %v2494 = vld [vmem:[#allocation9 + $0x108] sm:$0xff]
        %v2495 = vld [vmem:[#allocation9 + $0x110] sm:$0xff]
        %v2496 = vld [vmem:[#allocation9 + $0x118] sm:$0xff]
        %v2497 = vld [vmem:[#allocation9 + $0x120] sm:$0xff]
        %v2498 = vld [vmem:[#allocation9 + $0x128] sm:$0xff]
        %v2499 = vld [vmem:[#allocation9 + $0x130] sm:$0xff]
        %v2500 = vld [vmem:[#allocation9 + $0x138] sm:$0xff]
        %v2501 = vld [vmem:[#allocation9 + $0x140] sm:$0xff]
        %v2502 = vld [vmem:[#allocation9 + $0x148] sm:$0xff]
        %v2503 = vld [vmem:[#allocation9 + $0x150] sm:$0xff]
        %v2504 = vld [vmem:[#allocation9 + $0x158] sm:$0xff]
        %v2505 = vld [vmem:[#allocation9 + $0x160] sm:$0xff]
        %v2506 = vld [vmem:[#allocation9 + $0x168] sm:$0xff]
        %v2507 = vld [vmem:[#allocation9 + $0x170] sm:$0xff]
        %v2508 = vld [vmem:[#allocation9 + $0x178] sm:$0xff]
        %v2509 = vld [vmem:[#allocation9 + $0x180] sm:$0xff]
        %v2510 = vld [vmem:[#allocation9 + $0x188] sm:$0xff]
        %v2511 = vld [vmem:[#allocation9 + $0x190] sm:$0xff]
        %v2512 = vld [vmem:[#allocation9 + $0x198] sm:$0xff]
        %v2513 = vld [vmem:[#allocation9 + $0x1a0] sm:$0xff]
        %v2514 = vld [vmem:[#allocation9 + $0x1a8] sm:$0xff]
        %v2515 = vld [vmem:[#allocation9 + $0x1b0] sm:$0xff]
        %v2516 = vld [vmem:[#allocation9 + $0x1b8] sm:$0xff]
        %v2517 = vld [vmem:[#allocation9 + $0x1c0] sm:$0xff]
        %v2518 = vld [vmem:[#allocation9 + $0x1c8] sm:$0xff]
        %v2519 = vld [vmem:[#allocation9 + $0x1d0] sm:$0xff]
        %v2520 = vld [vmem:[#allocation9 + $0x1d8] sm:$0xff]
        %v2521 = vld [vmem:[#allocation9 + $0x1e0] sm:$0xff]
        %v2522 = vld [vmem:[#allocation9 + $0x1e8] sm:$0xff]
        %v2523 = vld [vmem:[#allocation9 + $0x1f0] sm:$0xff]
        %v2524 = vld [vmem:[#allocation9 + $0x1f8] sm:$0xff]
        %v2589 = vunpack.c.l.b16 %v2461
        %v2590 = vunpack.c.h.b16 %v2461
        %v2591 = vunpack.c.l.b16 %v2462
        %v2592 = vunpack.c.h.b16 %v2462
        %v2593 = vunpack.c.l.b16 %v2463
        %v2594 = vunpack.c.h.b16 %v2463
        %v2595 = vunpack.c.l.b16 %v2464
        %v2596 = vunpack.c.h.b16 %v2464
        %v2597 = vunpack.c.l.b16 %v2465
        %v2598 = vunpack.c.h.b16 %v2465
        %v2599 = vunpack.c.l.b16 %v2466
        %v2600 = vunpack.c.h.b16 %v2466
        %v2601 = vunpack.c.l.b16 %v2467
        %v2602 = vunpack.c.h.b16 %v2467
        %v2603 = vunpack.c.l.b16 %v2468
        %v2604 = vunpack.c.h.b16 %v2468
        %v2605 = vunpack.c.l.b16 %v2469
        %v2606 = vunpack.c.h.b16 %v2469
        %v2607 = vunpack.c.l.b16 %v2470
        %v2608 = vunpack.c.h.b16 %v2470
        %v2609 = vunpack.c.l.b16 %v2471
        %v2610 = vunpack.c.h.b16 %v2471
        %v2611 = vunpack.c.l.b16 %v2472
        %v2612 = vunpack.c.h.b16 %v2472
        %v2613 = vunpack.c.l.b16 %v2473
        %v2614 = vunpack.c.h.b16 %v2473
        %v2615 = vunpack.c.l.b16 %v2474
        %v2616 = vunpack.c.h.b16 %v2474
        %v2617 = vunpack.c.l.b16 %v2475
        %v2618 = vunpack.c.h.b16 %v2475
        %v2619 = vunpack.c.l.b16 %v2476
        %v2620 = vunpack.c.h.b16 %v2476
        %v2621 = vunpack.c.l.b16 %v2477
        %v2622 = vunpack.c.h.b16 %v2477
        %v2623 = vunpack.c.l.b16 %v2478
        %v2624 = vunpack.c.h.b16 %v2478
        %v2625 = vunpack.c.l.b16 %v2479
        %v2626 = vunpack.c.h.b16 %v2479
        %v2627 = vunpack.c.l.b16 %v2480
        %v2628 = vunpack.c.h.b16 %v2480
        %v2629 = vunpack.c.l.b16 %v2481
        %v2630 = vunpack.c.h.b16 %v2481
        %v2631 = vunpack.c.l.b16 %v2482
        %v2632 = vunpack.c.h.b16 %v2482
        %v2633 = vunpack.c.l.b16 %v2483
        %v2634 = vunpack.c.h.b16 %v2483
        %v2635 = vunpack.c.l.b16 %v2484
        %v2636 = vunpack.c.h.b16 %v2484
        %v2637 = vunpack.c.l.b16 %v2485
        %v2638 = vunpack.c.h.b16 %v2485
        %v2639 = vunpack.c.l.b16 %v2486
        %v2640 = vunpack.c.h.b16 %v2486
        %v2641 = vunpack.c.l.b16 %v2487
        %v2642 = vunpack.c.h.b16 %v2487
        %v2643 = vunpack.c.l.b16 %v2488
        %v2644 = vunpack.c.h.b16 %v2488
        %v2645 = vunpack.c.l.b16 %v2489
        %v2646 = vunpack.c.h.b16 %v2489
        %v2647 = vunpack.c.l.b16 %v2490
        %v2648 = vunpack.c.h.b16 %v2490
        %v2649 = vunpack.c.l.b16 %v2491
        %v2650 = vunpack.c.h.b16 %v2491
        %v2651 = vunpack.c.l.b16 %v2492
        %v2652 = vunpack.c.h.b16 %v2492
        %v2653 = vunpack.c.l.b16 %v2493
        %v2654 = vunpack.c.h.b16 %v2493
        %v2655 = vunpack.c.l.b16 %v2494
        %v2656 = vunpack.c.h.b16 %v2494
        %v2657 = vunpack.c.l.b16 %v2495
        %v2658 = vunpack.c.h.b16 %v2495
        %v2659 = vunpack.c.l.b16 %v2496
        %v2660 = vunpack.c.h.b16 %v2496
        %v2661 = vunpack.c.l.b16 %v2497
        %v2662 = vunpack.c.h.b16 %v2497
        %v2663 = vunpack.c.l.b16 %v2498
        %v2664 = vunpack.c.h.b16 %v2498
        %v2665 = vunpack.c.l.b16 %v2499
        %v2666 = vunpack.c.h.b16 %v2499
        %v2667 = vunpack.c.l.b16 %v2500
        %v2668 = vunpack.c.h.b16 %v2500
        %v2669 = vunpack.c.l.b16 %v2501
        %v2670 = vunpack.c.h.b16 %v2501
        %v2671 = vunpack.c.l.b16 %v2502
        %v2672 = vunpack.c.h.b16 %v2502
        %v2673 = vunpack.c.l.b16 %v2503
        %v2674 = vunpack.c.h.b16 %v2503
        %v2675 = vunpack.c.l.b16 %v2504
        %v2676 = vunpack.c.h.b16 %v2504
        %v2677 = vunpack.c.l.b16 %v2505
        %v2678 = vunpack.c.h.b16 %v2505
        %v2679 = vunpack.c.l.b16 %v2506
        %v2680 = vunpack.c.h.b16 %v2506
        %v2681 = vunpack.c.l.b16 %v2507
        %v2682 = vunpack.c.h.b16 %v2507
        %v2683 = vunpack.c.l.b16 %v2508
        %v2684 = vunpack.c.h.b16 %v2508
        %v2685 = vunpack.c.l.b16 %v2509
        %v2686 = vunpack.c.h.b16 %v2509
        %v2687 = vunpack.c.l.b16 %v2510
        %v2688 = vunpack.c.h.b16 %v2510
        %v2689 = vunpack.c.l.b16 %v2511
        %v2690 = vunpack.c.h.b16 %v2511
        %v2691 = vunpack.c.l.b16 %v2512
        %v2692 = vunpack.c.h.b16 %v2512
        %v2693 = vunpack.c.l.b16 %v2513
        %v2694 = vunpack.c.h.b16 %v2513
        %v2695 = vunpack.c.l.b16 %v2514
        %v2696 = vunpack.c.h.b16 %v2514
        %v2697 = vunpack.c.l.b16 %v2515
        %v2698 = vunpack.c.h.b16 %v2515
        %v2699 = vunpack.c.l.b16 %v2516
        %v2700 = vunpack.c.h.b16 %v2516
        %v2701 = vunpack.c.l.b16 %v2517
        %v2702 = vunpack.c.h.b16 %v2517
        %v2703 = vunpack.c.l.b16 %v2518
        %v2704 = vunpack.c.h.b16 %v2518
        %v2705 = vunpack.c.l.b16 %v2519
        %v2706 = vunpack.c.h.b16 %v2519
        %v2707 = vunpack.c.l.b16 %v2520
        %v2708 = vunpack.c.h.b16 %v2520
        %v2709 = vunpack.c.l.b16 %v2521
        %v2710 = vunpack.c.h.b16 %v2521
        %v2711 = vunpack.c.l.b16 %v2522
        %v2712 = vunpack.c.h.b16 %v2522
        %v2713 = vunpack.c.l.b16 %v2523
        %v2714 = vunpack.c.h.b16 %v2523
        %v2715 = vunpack.c.l.b16 %v2524
        %v2716 = vunpack.c.h.b16 %v2524
        %v2717 = vpack.c.b16 %v2597, %v2589
        %v2718 = vpack.c.b16 %v2598, %v2590
        %v2719 = vpack.c.b16 %v2599, %v2591
        %v2720 = vpack.c.b16 %v2600, %v2592
        %v2721 = vpack.c.b16 %v2601, %v2593
        %v2722 = vpack.c.b16 %v2602, %v2594
        %v2723 = vpack.c.b16 %v2603, %v2595
        %v2724 = vpack.c.b16 %v2604, %v2596
        %v2725 = vpack.c.b16 %v2613, %v2605
        %v2726 = vpack.c.b16 %v2614, %v2606
        %v2727 = vpack.c.b16 %v2615, %v2607
        %v2728 = vpack.c.b16 %v2616, %v2608
        %v2729 = vpack.c.b16 %v2617, %v2609
        %v2730 = vpack.c.b16 %v2618, %v2610
        %v2731 = vpack.c.b16 %v2619, %v2611
        %v2732 = vpack.c.b16 %v2620, %v2612
        %v2733 = vpack.c.b16 %v2629, %v2621
        %v2734 = vpack.c.b16 %v2630, %v2622
        %v2735 = vpack.c.b16 %v2631, %v2623
        %v2736 = vpack.c.b16 %v2632, %v2624
        %v2737 = vpack.c.b16 %v2633, %v2625
        %v2738 = vpack.c.b16 %v2634, %v2626
        %v2739 = vpack.c.b16 %v2635, %v2627
        %v2740 = vpack.c.b16 %v2636, %v2628
        %v2741 = vpack.c.b16 %v2645, %v2637
        %v2742 = vpack.c.b16 %v2646, %v2638
        %v2743 = vpack.c.b16 %v2647, %v2639
        %v2744 = vpack.c.b16 %v2648, %v2640
        %v2745 = vpack.c.b16 %v2649, %v2641
        %v2746 = vpack.c.b16 %v2650, %v2642
        %v2747 = vpack.c.b16 %v2651, %v2643
        %v2748 = vpack.c.b16 %v2652, %v2644
        %v2749 = vpack.c.b16 %v2661, %v2653
        %v2750 = vpack.c.b16 %v2662, %v2654
        %v2751 = vpack.c.b16 %v2663, %v2655
        %v2752 = vpack.c.b16 %v2664, %v2656
        %v2753 = vpack.c.b16 %v2665, %v2657
        %v2754 = vpack.c.b16 %v2666, %v2658
        %v2755 = vpack.c.b16 %v2667, %v2659
        %v2756 = vpack.c.b16 %v2668, %v2660
        %v2757 = vpack.c.b16 %v2677, %v2669
        %v2758 = vpack.c.b16 %v2678, %v2670
        %v2759 = vpack.c.b16 %v2679, %v2671
        %v2760 = vpack.c.b16 %v2680, %v2672
        %v2761 = vpack.c.b16 %v2681, %v2673
        %v2762 = vpack.c.b16 %v2682, %v2674
        %v2763 = vpack.c.b16 %v2683, %v2675
        %v2764 = vpack.c.b16 %v2684, %v2676
        %v2765 = vpack.c.b16 %v2693, %v2685
        %v2766 = vpack.c.b16 %v2694, %v2686
        %v2767 = vpack.c.b16 %v2695, %v2687
        %v2768 = vpack.c.b16 %v2696, %v2688
        %v2769 = vpack.c.b16 %v2697, %v2689
        %v2770 = vpack.c.b16 %v2698, %v2690
        %v2771 = vpack.c.b16 %v2699, %v2691
        %v2772 = vpack.c.b16 %v2700, %v2692
        %v2773 = vpack.c.b16 %v2709, %v2701
        %v2774 = vpack.c.b16 %v2710, %v2702
        %v2775 = vpack.c.b16 %v2711, %v2703
        %v2776 = vpack.c.b16 %v2712, %v2704
        %v2777 = vpack.c.b16 %v2713, %v2705
        %v2778 = vpack.c.b16 %v2714, %v2706
        %v2779 = vpack.c.b16 %v2715, %v2707
        %v2780 = vpack.c.b16 %v2716, %v2708
        %2845 = vmatprep.subr.bf16.mxu0 %v2718
        %2846 = vmatpush1.bf16.msra.mxu0 %v2717
        %2847 = vmatprep.subr.bf16.mxu0 %v2726
        %2848 = vmatpush1.bf16.msra.mxu0 %v2725
        %2849 = vmatprep.subr.bf16.mxu0 %v2734
        %2850 = vmatpush1.bf16.msra.mxu0 %v2733
        %2851 = vmatprep.subr.bf16.mxu0 %v2742
        %2852 = vmatpush1.bf16.msra.mxu0 %v2741
        %2853 = vmatprep.subr.bf16.mxu0 %v2750
        %2854 = vmatpush1.bf16.msra.mxu0 %v2749
        %2855 = vmatprep.subr.bf16.mxu0 %v2758
        %2856 = vmatpush1.bf16.msra.mxu0 %v2757
        %2857 = vmatprep.subr.bf16.mxu0 %v2766
        %2858 = vmatpush1.bf16.msra.mxu0 %v2765
        %2859 = vmatprep.subr.bf16.mxu0 %v2774
        %2860 = vmatpush1.bf16.msra.mxu0 %v2773
        %2861 = vmatprep.subr.bf16.mxu0 0
        %2862 = vmatpush1.bf16.msra.mxu0 0
        %2863 = vmatprep.subr.bf16.mxu0 0
        %2864 = vmatpush1.bf16.msra.mxu0 0
        %2865 = vmatprep.subr.bf16.mxu0 0
        %2866 = vmatpush1.bf16.msra.mxu0 0
        %2867 = vmatprep.subr.bf16.mxu0 0
        %2868 = vmatpush1.bf16.msra.mxu0 0
        %2869 = vmatprep.subr.bf16.mxu0 0
        %2870 = vmatpush1.bf16.msra.mxu0 0
        %2871 = vmatprep.subr.bf16.mxu0 0
        %2872 = vmatpush1.bf16.msra.mxu0 0
        %2873 = vmatprep.subr.bf16.mxu0 0
        %2874 = vmatpush1.bf16.msra.mxu0 0
        %2875 = vmatprep.subr.bf16.mxu0 0
        %2876 = vmatpush1.bf16.msra.mxu0 0
        %2877 = vmatprep.mubr.bf16.mxu0 0
        %2878 = vmatmul.mubr.bf16.gmra.mrb[0].mxu0 %v2397
        %v2879 = vpop.f32.mrb[0].mxu0
        %v2880 = vadd.f32 0.0, %v2879
        %v2881 = vpop.f32.mrb[0].mxu0
        %v2882 = vadd.f32 0.0, %v2881
        %v2883 = vpop.f32.mrb[0].mxu0
        %v2884 = vadd.f32 0.0, %v2883
        %v2885 = vpop.f32.mrb[0].mxu0
        %v2886 = vadd.f32 0.0, %v2885
        %2887 = vmatprep.mubr.bf16.mxu0 0
        %2888 = vmatmul.mubr.bf16.gmra.mrb[0].mxu0 %v2398
        %v2889 = vpop.f32.mrb[0].mxu0
        %v2890 = vadd.f32 0.0, %v2889
        %v2891 = vpop.f32.mrb[0].mxu0
        %v2892 = vadd.f32 0.0, %v2891
        %v2893 = vpop.f32.mrb[0].mxu0
        %v2894 = vadd.f32 0.0, %v2893
        %v2895 = vpop.f32.mrb[0].mxu0
        %v2896 = vadd.f32 0.0, %v2895
        %2897 = vmatprep.mubr.bf16.mxu0 0
        %2898 = vmatmul.mubr.bf16.gmra.mrb[0].mxu0 %v2399
        %v2899 = vpop.f32.mrb[0].mxu0
        %v2900 = vadd.f32 0.0, %v2899
        %v2901 = vpop.f32.mrb[0].mxu0
        %v2902 = vadd.f32 0.0, %v2901
        %v2903 = vpop.f32.mrb[0].mxu0
        %v2904 = vadd.f32 0.0, %v2903
        %v2905 = vpop.f32.mrb[0].mxu0
        %v2906 = vadd.f32 0.0, %v2905
        %2907 = vmatprep.mubr.bf16.mxu0 0
        %2908 = vmatmul.mubr.bf16.gmra.mrb[0].mxu0 %v2400
        %v2909 = vpop.f32.mrb[0].mxu0
        %v2910 = vadd.f32 0.0, %v2909
        %v2911 = vpop.f32.mrb[0].mxu0
        %v2912 = vadd.f32 0.0, %v2911
        %v2913 = vpop.f32.mrb[0].mxu0
        %v2914 = vadd.f32 0.0, %v2913
        %v2915 = vpop.f32.mrb[0].mxu0
        %v2916 = vadd.f32 0.0, %v2915
        %2917 = vmatprep.mubr.bf16.mxu0 0
        %2918 = vmatmul.mubr.bf16.gmra.mrb[0].mxu0 %v2401
        %v2919 = vpop.f32.mrb[0].mxu0
        %v2920 = vadd.f32 0.0, %v2919
        %v2921 = vpop.f32.mrb[0].mxu0
        %v2922 = vadd.f32 0.0, %v2921
        %v2923 = vpop.f32.mrb[0].mxu0
        %v2924 = vadd.f32 0.0, %v2923
        %v2925 = vpop.f32.mrb[0].mxu0
        %v2926 = vadd.f32 0.0, %v2925
        %2927 = vmatprep.mubr.bf16.mxu0 0
        %2928 = vmatmul.mubr.bf16.gmra.mrb[0].mxu0 %v2402
        %v2929 = vpop.f32.mrb[0].mxu0
        %v2930 = vadd.f32 0.0, %v2929
        %v2931 = vpop.f32.mrb[0].mxu0
        %v2932 = vadd.f32 0.0, %v2931
        %v2933 = vpop.f32.mrb[0].mxu0
        %v2934 = vadd.f32 0.0, %v2933
        %v2935 = vpop.f32.mrb[0].mxu0
        %v2936 = vadd.f32 0.0, %v2935
        %2937 = vmatprep.mubr.bf16.mxu0 0
        %2938 = vmatmul.mubr.bf16.gmra.mrb[0].mxu0 %v2403
        %v2939 = vpop.f32.mrb[0].mxu0
        %v2940 = vadd.f32 0.0, %v2939
        %v2941 = vpop.f32.mrb[0].mxu0
        %v2942 = vadd.f32 0.0, %v2941
        %v2943 = vpop.f32.mrb[0].mxu0
        %v2944 = vadd.f32 0.0, %v2943
        %v2945 = vpop.f32.mrb[0].mxu0
        %v2946 = vadd.f32 0.0, %v2945
        %2947 = vmatprep.mubr.bf16.mxu0 0
        %2948 = vmatmul.mubr.bf16.gmra.mrb[0].mxu0 %v2404
        %v2949 = vpop.f32.mrb[0].mxu0
        %v2950 = vadd.f32 0.0, %v2949
        %v2951 = vpop.f32.mrb[0].mxu0
        %v2952 = vadd.f32 0.0, %v2951
        %v2953 = vpop.f32.mrb[0].mxu0
        %v2954 = vadd.f32 0.0, %v2953
        %v2955 = vpop.f32.mrb[0].mxu0
        %v2956 = vadd.f32 0.0, %v2955
        %2957 = vmatprep.mubr.bf16.mxu0 0
        %2958 = vmatmul.mubr.bf16.gmra.mrb[0].mxu0 %v2405
        %v2959 = vpop.f32.mrb[0].mxu0
        %v2960 = vadd.f32 0.0, %v2959
        %v2961 = vpop.f32.mrb[0].mxu0
        %v2962 = vadd.f32 0.0, %v2961
        %v2963 = vpop.f32.mrb[0].mxu0
        %v2964 = vadd.f32 0.0, %v2963
        %v2965 = vpop.f32.mrb[0].mxu0
        %v2966 = vadd.f32 0.0, %v2965
        %2967 = vmatprep.mubr.bf16.mxu0 0
        %2968 = vmatmul.mubr.bf16.gmra.mrb[0].mxu0 %v2406
        %v2969 = vpop.f32.mrb[0].mxu0
        %v2970 = vadd.f32 0.0, %v2969
        %v2971 = vpop.f32.mrb[0].mxu0
        %v2972 = vadd.f32 0.0, %v2971
        %v2973 = vpop.f32.mrb[0].mxu0
        %v2974 = vadd.f32 0.0, %v2973
        %v2975 = vpop.f32.mrb[0].mxu0
        %v2976 = vadd.f32 0.0, %v2975
        %2977 = vmatprep.mubr.bf16.mxu0 0
        %2978 = vmatmul.mubr.bf16.gmra.mrb[0].mxu0 %v2407
        %v2979 = vpop.f32.mrb[0].mxu0
        %v2980 = vadd.f32 0.0, %v2979
        %v2981 = vpop.f32.mrb[0].mxu0
        %v2982 = vadd.f32 0.0, %v2981
        %v2983 = vpop.f32.mrb[0].mxu0
        %v2984 = vadd.f32 0.0, %v2983
        %v2985 = vpop.f32.mrb[0].mxu0
        %v2986 = vadd.f32 0.0, %v2985
        %2987 = vmatprep.mubr.bf16.mxu0 0
        %2988 = vmatmul.mubr.bf16.gmra.mrb[0].mxu0 %v2408
        %v2989 = vpop.f32.mrb[0].mxu0
        %v2990 = vadd.f32 0.0, %v2989
        %v2991 = vpop.f32.mrb[0].mxu0
        %v2992 = vadd.f32 0.0, %v2991
        %v2993 = vpop.f32.mrb[0].mxu0
        %v2994 = vadd.f32 0.0, %v2993
        %v2995 = vpop.f32.mrb[0].mxu0
        %v2996 = vadd.f32 0.0, %v2995
        %2997 = vmatprep.mubr.bf16.mxu0 0
        %2998 = vmatmul.mubr.bf16.gmra.mrb[0].mxu0 %v2409
        %v2999 = vpop.f32.mrb[0].mxu0
        %v3000 = vadd.f32 0.0, %v2999
        %v3001 = vpop.f32.mrb[0].mxu0
        %v3002 = vadd.f32 0.0, %v3001
        %v3003 = vpop.f32.mrb[0].mxu0
        %v3004 = vadd.f32 0.0, %v3003
        %v3005 = vpop.f32.mrb[0].mxu0
        %v3006 = vadd.f32 0.0, %v3005
        %3007 = vmatprep.mubr.bf16.mxu0 0
        %3008 = vmatmul.mubr.bf16.gmra.mrb[0].mxu0 %v2410
        %v3009 = vpop.f32.mrb[0].mxu0
        %v3010 = vadd.f32 0.0, %v3009
        %v3011 = vpop.f32.mrb[0].mxu0
        %v3012 = vadd.f32 0.0, %v3011
        %v3013 = vpop.f32.mrb[0].mxu0
        %v3014 = vadd.f32 0.0, %v3013
        %v3015 = vpop.f32.mrb[0].mxu0
        %v3016 = vadd.f32 0.0, %v3015
        %3017 = vmatprep.mubr.bf16.mxu0 0
        %3018 = vmatmul.mubr.bf16.gmra.mrb[0].mxu0 %v2411
        %v3019 = vpop.f32.mrb[0].mxu0
        %v3020 = vadd.f32 0.0, %v3019
        %v3021 = vpop.f32.mrb[0].mxu0
        %v3022 = vadd.f32 0.0, %v3021
        %v3023 = vpop.f32.mrb[0].mxu0
        %v3024 = vadd.f32 0.0, %v3023
        %v3025 = vpop.f32.mrb[0].mxu0
        %v3026 = vadd.f32 0.0, %v3025
        %3027 = vmatprep.mubr.bf16.mxu0 0
        %3028 = vmatmul.mubr.bf16.gmra.mrb[0].mxu0 %v2412
        %v3029 = vpop.f32.mrb[0].mxu0
        %v3030 = vadd.f32 0.0, %v3029
        %v3031 = vpop.f32.mrb[0].mxu0
        %v3032 = vadd.f32 0.0, %v3031
        %v3033 = vpop.f32.mrb[0].mxu0
        %v3034 = vadd.f32 0.0, %v3033
        %v3035 = vpop.f32.mrb[0].mxu0
        %v3036 = vadd.f32 0.0, %v3035
        %3037 = vmatprep.mubr.bf16.mxu0 0
        %3038 = vmatmul.mubr.bf16.gmra.mrb[0].mxu0 %v2413
        %v3039 = vpop.f32.mrb[0].mxu0
        %v3040 = vadd.f32 0.0, %v3039
        %v3041 = vpop.f32.mrb[0].mxu0
        %v3042 = vadd.f32 0.0, %v3041
        %v3043 = vpop.f32.mrb[0].mxu0
        %v3044 = vadd.f32 0.0, %v3043
        %v3045 = vpop.f32.mrb[0].mxu0
        %v3046 = vadd.f32 0.0, %v3045
        %3047 = vmatprep.mubr.bf16.mxu0 0
        %3048 = vmatmul.mubr.bf16.gmra.mrb[0].mxu0 %v2414
        %v3049 = vpop.f32.mrb[0].mxu0
        %v3050 = vadd.f32 0.0, %v3049
        %v3051 = vpop.f32.mrb[0].mxu0
        %v3052 = vadd.f32 0.0, %v3051
        %v3053 = vpop.f32.mrb[0].mxu0
        %v3054 = vadd.f32 0.0, %v3053
        %v3055 = vpop.f32.mrb[0].mxu0
        %v3056 = vadd.f32 0.0, %v3055
        %3057 = vmatprep.mubr.bf16.mxu0 0
        %3058 = vmatmul.mubr.bf16.gmra.mrb[0].mxu0 %v2415
        %v3059 = vpop.f32.mrb[0].mxu0
        %v3060 = vadd.f32 0.0, %v3059
        %v3061 = vpop.f32.mrb[0].mxu0
        %v3062 = vadd.f32 0.0, %v3061
        %v3063 = vpop.f32.mrb[0].mxu0
        %v3064 = vadd.f32 0.0, %v3063
        %v3065 = vpop.f32.mrb[0].mxu0
        %v3066 = vadd.f32 0.0, %v3065
        %3067 = vmatprep.mubr.bf16.mxu0 0
        %3068 = vmatmul.mubr.bf16.gmra.mrb[0].mxu0 %v2416
        %v3069 = vpop.f32.mrb[0].mxu0
        %v3070 = vadd.f32 0.0, %v3069
        %v3071 = vpop.f32.mrb[0].mxu0
        %v3072 = vadd.f32 0.0, %v3071
        %v3073 = vpop.f32.mrb[0].mxu0
        %v3074 = vadd.f32 0.0, %v3073
        %v3075 = vpop.f32.mrb[0].mxu0
        %v3076 = vadd.f32 0.0, %v3075
        %3077 = vmatprep.mubr.bf16.mxu0 0
        %3078 = vmatmul.mubr.bf16.gmra.mrb[0].mxu0 %v2417
        %v3079 = vpop.f32.mrb[0].mxu0
        %v3080 = vadd.f32 0.0, %v3079
        %v3081 = vpop.f32.mrb[0].mxu0
        %v3082 = vadd.f32 0.0, %v3081
        %v3083 = vpop.f32.mrb[0].mxu0
        %v3084 = vadd.f32 0.0, %v3083
        %v3085 = vpop.f32.mrb[0].mxu0
        %v3086 = vadd.f32 0.0, %v3085
        %3087 = vmatprep.mubr.bf16.mxu0 0
        %3088 = vmatmul.mubr.bf16.gmra.mrb[0].mxu0 %v2418
        %v3089 = vpop.f32.mrb[0].mxu0
        %v3090 = vadd.f32 0.0, %v3089
        %v3091 = vpop.f32.mrb[0].mxu0
        %v3092 = vadd.f32 0.0, %v3091
        %v3093 = vpop.f32.mrb[0].mxu0
        %v3094 = vadd.f32 0.0, %v3093
        %v3095 = vpop.f32.mrb[0].mxu0
        %v3096 = vadd.f32 0.0, %v3095
        %3097 = vmatprep.mubr.bf16.mxu0 0
        %3098 = vmatmul.mubr.bf16.gmra.mrb[0].mxu0 %v2419
        %v3099 = vpop.f32.mrb[0].mxu0
        %v3100 = vadd.f32 0.0, %v3099
        %v3101 = vpop.f32.mrb[0].mxu0
        %v3102 = vadd.f32 0.0, %v3101
        %v3103 = vpop.f32.mrb[0].mxu0
        %v3104 = vadd.f32 0.0, %v3103
        %v3105 = vpop.f32.mrb[0].mxu0
        %v3106 = vadd.f32 0.0, %v3105
        %3107 = vmatprep.mubr.bf16.mxu0 0
        %3108 = vmatmul.mubr.bf16.gmra.mrb[0].mxu0 %v2420
        %v3109 = vpop.f32.mrb[0].mxu0
        %v3110 = vadd.f32 0.0, %v3109
        %v3111 = vpop.f32.mrb[0].mxu0
        %v3112 = vadd.f32 0.0, %v3111
        %v3113 = vpop.f32.mrb[0].mxu0
        %v3114 = vadd.f32 0.0, %v3113
        %v3115 = vpop.f32.mrb[0].mxu0
        %v3116 = vadd.f32 0.0, %v3115
        %3117 = vmatprep.mubr.bf16.mxu0 0
        %3118 = vmatmul.mubr.bf16.gmra.mrb[0].mxu0 %v2421
        %v3119 = vpop.f32.mrb[0].mxu0
        %v3120 = vadd.f32 0.0, %v3119
        %v3121 = vpop.f32.mrb[0].mxu0
        %v3122 = vadd.f32 0.0, %v3121
        %v3123 = vpop.f32.mrb[0].mxu0
        %v3124 = vadd.f32 0.0, %v3123
        %v3125 = vpop.f32.mrb[0].mxu0
        %v3126 = vadd.f32 0.0, %v3125
        %3127 = vmatprep.mubr.bf16.mxu0 0
        %3128 = vmatmul.mubr.bf16.gmra.mrb[0].mxu0 %v2422
        %v3129 = vpop.f32.mrb[0].mxu0
        %v3130 = vadd.f32 0.0, %v3129
        %v3131 = vpop.f32.mrb[0].mxu0
        %v3132 = vadd.f32 0.0, %v3131
        %v3133 = vpop.f32.mrb[0].mxu0
        %v3134 = vadd.f32 0.0, %v3133
        %v3135 = vpop.f32.mrb[0].mxu0
        %v3136 = vadd.f32 0.0, %v3135
        %3137 = vmatprep.mubr.bf16.mxu0 0
        %3138 = vmatmul.mubr.bf16.gmra.mrb[0].mxu0 %v2423
        %v3139 = vpop.f32.mrb[0].mxu0
        %v3140 = vadd.f32 0.0, %v3139
        %v3141 = vpop.f32.mrb[0].mxu0
        %v3142 = vadd.f32 0.0, %v3141
        %v3143 = vpop.f32.mrb[0].mxu0
        %v3144 = vadd.f32 0.0, %v3143
        %v3145 = vpop.f32.mrb[0].mxu0
        %v3146 = vadd.f32 0.0, %v3145
        %3147 = vmatprep.mubr.bf16.mxu0 0
        %3148 = vmatmul.mubr.bf16.gmra.mrb[0].mxu0 %v2424
        %v3149 = vpop.f32.mrb[0].mxu0
        %v3150 = vadd.f32 0.0, %v3149
        %v3151 = vpop.f32.mrb[0].mxu0
        %v3152 = vadd.f32 0.0, %v3151
        %v3153 = vpop.f32.mrb[0].mxu0
        %v3154 = vadd.f32 0.0, %v3153
        %v3155 = vpop.f32.mrb[0].mxu0
        %v3156 = vadd.f32 0.0, %v3155
        %3157 = vmatprep.mubr.bf16.mxu0 0
        %3158 = vmatmul.mubr.bf16.gmra.mrb[0].mxu0 %v2425
        %v3159 = vpop.f32.mrb[0].mxu0
        %v3160 = vadd.f32 0.0, %v3159
        %v3161 = vpop.f32.mrb[0].mxu0
        %v3162 = vadd.f32 0.0, %v3161
        %v3163 = vpop.f32.mrb[0].mxu0
        %v3164 = vadd.f32 0.0, %v3163
        %v3165 = vpop.f32.mrb[0].mxu0
        %v3166 = vadd.f32 0.0, %v3165
        %3167 = vmatprep.mubr.bf16.mxu0 0
        %3168 = vmatmul.mubr.bf16.gmra.mrb[0].mxu0 %v2426
        %v3169 = vpop.f32.mrb[0].mxu0
        %v3170 = vadd.f32 0.0, %v3169
        %v3171 = vpop.f32.mrb[0].mxu0
        %v3172 = vadd.f32 0.0, %v3171
        %v3173 = vpop.f32.mrb[0].mxu0
        %v3174 = vadd.f32 0.0, %v3173
        %v3175 = vpop.f32.mrb[0].mxu0
        %v3176 = vadd.f32 0.0, %v3175
        %3177 = vmatprep.mubr.bf16.mxu0 0
        %3178 = vmatmul.mubr.bf16.gmra.mrb[0].mxu0 %v2427
        %v3179 = vpop.f32.mrb[0].mxu0
        %v3180 = vadd.f32 0.0, %v3179
        %v3181 = vpop.f32.mrb[0].mxu0
        %v3182 = vadd.f32 0.0, %v3181
        %v3183 = vpop.f32.mrb[0].mxu0
        %v3184 = vadd.f32 0.0, %v3183
        %v3185 = vpop.f32.mrb[0].mxu0
        %v3186 = vadd.f32 0.0, %v3185
        %3187 = vmatprep.mubr.bf16.mxu0 0
        %3188 = vmatmul.mubr.bf16.gmra.mrb[0].mxu0 %v2428
        %v3189 = vpop.f32.mrb[0].mxu0
        %v3190 = vadd.f32 0.0, %v3189
        %v3191 = vpop.f32.mrb[0].mxu0
        %v3192 = vadd.f32 0.0, %v3191
        %v3193 = vpop.f32.mrb[0].mxu0
        %v3194 = vadd.f32 0.0, %v3193
        %v3195 = vpop.f32.mrb[0].mxu0
        %v3196 = vadd.f32 0.0, %v3195
        %3197 = vmatprep.mubr.bf16.mxu0 0
        %3198 = vmatmul.mubr.bf16.gmra.mrb[0].mxu0 %v2429
        %v3199 = vpop.f32.mrb[0].mxu0
        %v3200 = vadd.f32 0.0, %v3199
        %v3201 = vpop.f32.mrb[0].mxu0
        %v3202 = vadd.f32 0.0, %v3201
        %v3203 = vpop.f32.mrb[0].mxu0
        %v3204 = vadd.f32 0.0, %v3203
        %v3205 = vpop.f32.mrb[0].mxu0
        %v3206 = vadd.f32 0.0, %v3205
        %3207 = vmatprep.mubr.bf16.mxu0 0
        %3208 = vmatmul.mubr.bf16.gmra.mrb[0].mxu0 %v2430
        %v3209 = vpop.f32.mrb[0].mxu0
        %v3210 = vadd.f32 0.0, %v3209
        %v3211 = vpop.f32.mrb[0].mxu0
        %v3212 = vadd.f32 0.0, %v3211
        %v3213 = vpop.f32.mrb[0].mxu0
        %v3214 = vadd.f32 0.0, %v3213
        %v3215 = vpop.f32.mrb[0].mxu0
        %v3216 = vadd.f32 0.0, %v3215
        %3217 = vmatprep.mubr.bf16.mxu0 0
        %3218 = vmatmul.mubr.bf16.gmra.mrb[0].mxu0 %v2431
        %v3219 = vpop.f32.mrb[0].mxu0
        %v3220 = vadd.f32 0.0, %v3219
        %v3221 = vpop.f32.mrb[0].mxu0
        %v3222 = vadd.f32 0.0, %v3221
        %v3223 = vpop.f32.mrb[0].mxu0
        %v3224 = vadd.f32 0.0, %v3223
        %v3225 = vpop.f32.mrb[0].mxu0
        %v3226 = vadd.f32 0.0, %v3225
        %3227 = vmatprep.mubr.bf16.mxu0 0
        %3228 = vmatmul.mubr.bf16.gmra.mrb[0].mxu0 %v2432
        %v3229 = vpop.f32.mrb[0].mxu0
        %v3230 = vadd.f32 0.0, %v3229
        %v3231 = vpop.f32.mrb[0].mxu0
        %v3232 = vadd.f32 0.0, %v3231
        %v3233 = vpop.f32.mrb[0].mxu0
        %v3234 = vadd.f32 0.0, %v3233
        %v3235 = vpop.f32.mrb[0].mxu0
        %v3236 = vadd.f32 0.0, %v3235
        %3237 = vmatprep.mubr.bf16.mxu0 0
        %3238 = vmatmul.mubr.bf16.gmra.mrb[0].mxu0 %v2433
        %v3239 = vpop.f32.mrb[0].mxu0
        %v3240 = vadd.f32 0.0, %v3239
        %v3241 = vpop.f32.mrb[0].mxu0
        %v3242 = vadd.f32 0.0, %v3241
        %v3243 = vpop.f32.mrb[0].mxu0
        %v3244 = vadd.f32 0.0, %v3243
        %v3245 = vpop.f32.mrb[0].mxu0
        %v3246 = vadd.f32 0.0, %v3245
        %3247 = vmatprep.mubr.bf16.mxu0 0
        %3248 = vmatmul.mubr.bf16.gmra.mrb[0].mxu0 %v2434
        %v3249 = vpop.f32.mrb[0].mxu0
        %v3250 = vadd.f32 0.0, %v3249
        %v3251 = vpop.f32.mrb[0].mxu0
        %v3252 = vadd.f32 0.0, %v3251
        %v3253 = vpop.f32.mrb[0].mxu0
        %v3254 = vadd.f32 0.0, %v3253
        %v3255 = vpop.f32.mrb[0].mxu0
        %v3256 = vadd.f32 0.0, %v3255
        %3257 = vmatprep.mubr.bf16.mxu0 0
        %3258 = vmatmul.mubr.bf16.gmra.mrb[0].mxu0 %v2435
        %v3259 = vpop.f32.mrb[0].mxu0
        %v3260 = vadd.f32 0.0, %v3259
        %v3261 = vpop.f32.mrb[0].mxu0
        %v3262 = vadd.f32 0.0, %v3261
        %v3263 = vpop.f32.mrb[0].mxu0
        %v3264 = vadd.f32 0.0, %v3263
        %v3265 = vpop.f32.mrb[0].mxu0
        %v3266 = vadd.f32 0.0, %v3265
        %3267 = vmatprep.mubr.bf16.mxu0 0
        %3268 = vmatmul.mubr.bf16.gmra.mrb[0].mxu0 %v2436
        %v3269 = vpop.f32.mrb[0].mxu0
        %v3270 = vadd.f32 0.0, %v3269
        %v3271 = vpop.f32.mrb[0].mxu0
        %v3272 = vadd.f32 0.0, %v3271
        %v3273 = vpop.f32.mrb[0].mxu0
        %v3274 = vadd.f32 0.0, %v3273
        %v3275 = vpop.f32.mrb[0].mxu0
        %v3276 = vadd.f32 0.0, %v3275
        %3277 = vmatprep.mubr.bf16.mxu0 0
        %3278 = vmatmul.mubr.bf16.gmra.mrb[0].mxu0 %v2437
        %v3279 = vpop.f32.mrb[0].mxu0
        %v3280 = vadd.f32 0.0, %v3279
        %v3281 = vpop.f32.mrb[0].mxu0
        %v3282 = vadd.f32 0.0, %v3281
        %v3283 = vpop.f32.mrb[0].mxu0
        %v3284 = vadd.f32 0.0, %v3283
        %v3285 = vpop.f32.mrb[0].mxu0
        %v3286 = vadd.f32 0.0, %v3285
        %3287 = vmatprep.mubr.bf16.mxu0 0
        %3288 = vmatmul.mubr.bf16.gmra.mrb[0].mxu0 %v2438
        %v3289 = vpop.f32.mrb[0].mxu0
        %v3290 = vadd.f32 0.0, %v3289
        %v3291 = vpop.f32.mrb[0].mxu0
        %v3292 = vadd.f32 0.0, %v3291
        %v3293 = vpop.f32.mrb[0].mxu0
        %v3294 = vadd.f32 0.0, %v3293
        %v3295 = vpop.f32.mrb[0].mxu0
        %v3296 = vadd.f32 0.0, %v3295
        %3297 = vmatprep.mubr.bf16.mxu0 0
        %3298 = vmatmul.mubr.bf16.gmra.mrb[0].mxu0 %v2439
        %v3299 = vpop.f32.mrb[0].mxu0
        %v3300 = vadd.f32 0.0, %v3299
        %v3301 = vpop.f32.mrb[0].mxu0
        %v3302 = vadd.f32 0.0, %v3301
        %v3303 = vpop.f32.mrb[0].mxu0
        %v3304 = vadd.f32 0.0, %v3303
        %v3305 = vpop.f32.mrb[0].mxu0
        %v3306 = vadd.f32 0.0, %v3305
        %3307 = vmatprep.mubr.bf16.mxu0 0
        %3308 = vmatmul.mubr.bf16.gmra.mrb[0].mxu0 %v2440
        %v3309 = vpop.f32.mrb[0].mxu0
        %v3310 = vadd.f32 0.0, %v3309
        %v3311 = vpop.f32.mrb[0].mxu0
        %v3312 = vadd.f32 0.0, %v3311
        %v3313 = vpop.f32.mrb[0].mxu0
        %v3314 = vadd.f32 0.0, %v3313
        %v3315 = vpop.f32.mrb[0].mxu0
        %v3316 = vadd.f32 0.0, %v3315
        %3317 = vmatprep.mubr.bf16.mxu0 0
        %3318 = vmatmul.mubr.bf16.gmra.mrb[0].mxu0 %v2441
        %v3319 = vpop.f32.mrb[0].mxu0
        %v3320 = vadd.f32 0.0, %v3319
        %v3321 = vpop.f32.mrb[0].mxu0
        %v3322 = vadd.f32 0.0, %v3321
        %v3323 = vpop.f32.mrb[0].mxu0
        %v3324 = vadd.f32 0.0, %v3323
        %v3325 = vpop.f32.mrb[0].mxu0
        %v3326 = vadd.f32 0.0, %v3325
        %3327 = vmatprep.mubr.bf16.mxu0 0
        %3328 = vmatmul.mubr.bf16.gmra.mrb[0].mxu0 %v2442
        %v3329 = vpop.f32.mrb[0].mxu0
        %v3330 = vadd.f32 0.0, %v3329
        %v3331 = vpop.f32.mrb[0].mxu0
        %v3332 = vadd.f32 0.0, %v3331
        %v3333 = vpop.f32.mrb[0].mxu0
        %v3334 = vadd.f32 0.0, %v3333
        %v3335 = vpop.f32.mrb[0].mxu0
        %v3336 = vadd.f32 0.0, %v3335
        %3337 = vmatprep.mubr.bf16.mxu0 0
        %3338 = vmatmul.mubr.bf16.gmra.mrb[0].mxu0 %v2443
        %v3339 = vpop.f32.mrb[0].mxu0
        %v3340 = vadd.f32 0.0, %v3339
        %v3341 = vpop.f32.mrb[0].mxu0
        %v3342 = vadd.f32 0.0, %v3341
        %v3343 = vpop.f32.mrb[0].mxu0
        %v3344 = vadd.f32 0.0, %v3343
        %v3345 = vpop.f32.mrb[0].mxu0
        %v3346 = vadd.f32 0.0, %v3345
        %3347 = vmatprep.mubr.bf16.mxu0 0
        %3348 = vmatmul.mubr.bf16.gmra.mrb[0].mxu0 %v2444
        %v3349 = vpop.f32.mrb[0].mxu0
        %v3350 = vadd.f32 0.0, %v3349
        %v3351 = vpop.f32.mrb[0].mxu0
        %v3352 = vadd.f32 0.0, %v3351
        %v3353 = vpop.f32.mrb[0].mxu0
        %v3354 = vadd.f32 0.0, %v3353
        %v3355 = vpop.f32.mrb[0].mxu0
        %v3356 = vadd.f32 0.0, %v3355
        %3357 = vmatprep.mubr.bf16.mxu0 0
        %3358 = vmatmul.mubr.bf16.gmra.mrb[0].mxu0 %v2445
        %v3359 = vpop.f32.mrb[0].mxu0
        %v3360 = vadd.f32 0.0, %v3359
        %v3361 = vpop.f32.mrb[0].mxu0
        %v3362 = vadd.f32 0.0, %v3361
        %v3363 = vpop.f32.mrb[0].mxu0
        %v3364 = vadd.f32 0.0, %v3363
        %v3365 = vpop.f32.mrb[0].mxu0
        %v3366 = vadd.f32 0.0, %v3365
        %3367 = vmatprep.mubr.bf16.mxu0 0
        %3368 = vmatmul.mubr.bf16.gmra.mrb[0].mxu0 %v2446
        %v3369 = vpop.f32.mrb[0].mxu0
        %v3370 = vadd.f32 0.0, %v3369
        %v3371 = vpop.f32.mrb[0].mxu0
        %v3372 = vadd.f32 0.0, %v3371
        %v3373 = vpop.f32.mrb[0].mxu0
        %v3374 = vadd.f32 0.0, %v3373
        %v3375 = vpop.f32.mrb[0].mxu0
        %v3376 = vadd.f32 0.0, %v3375
        %3377 = vmatprep.mubr.bf16.mxu0 0
        %3378 = vmatmul.mubr.bf16.gmra.mrb[0].mxu0 %v2447
        %v3379 = vpop.f32.mrb[0].mxu0
        %v3380 = vadd.f32 0.0, %v3379
        %v3381 = vpop.f32.mrb[0].mxu0
        %v3382 = vadd.f32 0.0, %v3381
        %v3383 = vpop.f32.mrb[0].mxu0
        %v3384 = vadd.f32 0.0, %v3383
        %v3385 = vpop.f32.mrb[0].mxu0
        %v3386 = vadd.f32 0.0, %v3385
        %3387 = vmatprep.mubr.bf16.mxu0 0
        %3388 = vmatmul.mubr.bf16.gmra.mrb[0].mxu0 %v2448
        %v3389 = vpop.f32.mrb[0].mxu0
        %v3390 = vadd.f32 0.0, %v3389
        %v3391 = vpop.f32.mrb[0].mxu0
        %v3392 = vadd.f32 0.0, %v3391
        %v3393 = vpop.f32.mrb[0].mxu0
        %v3394 = vadd.f32 0.0, %v3393
        %v3395 = vpop.f32.mrb[0].mxu0
        %v3396 = vadd.f32 0.0, %v3395
        %3397 = vmatprep.mubr.bf16.mxu0 0
        %3398 = vmatmul.mubr.bf16.gmra.mrb[0].mxu0 %v2449
        %v3399 = vpop.f32.mrb[0].mxu0
        %v3400 = vadd.f32 0.0, %v3399
        %v3401 = vpop.f32.mrb[0].mxu0
        %v3402 = vadd.f32 0.0, %v3401
        %v3403 = vpop.f32.mrb[0].mxu0
        %v3404 = vadd.f32 0.0, %v3403
        %v3405 = vpop.f32.mrb[0].mxu0
        %v3406 = vadd.f32 0.0, %v3405
        %3407 = vmatprep.mubr.bf16.mxu0 0
        %3408 = vmatmul.mubr.bf16.gmra.mrb[0].mxu0 %v2450
        %v3409 = vpop.f32.mrb[0].mxu0
        %v3410 = vadd.f32 0.0, %v3409
        %v3411 = vpop.f32.mrb[0].mxu0
        %v3412 = vadd.f32 0.0, %v3411
        %v3413 = vpop.f32.mrb[0].mxu0
        %v3414 = vadd.f32 0.0, %v3413
        %v3415 = vpop.f32.mrb[0].mxu0
        %v3416 = vadd.f32 0.0, %v3415
        %3417 = vmatprep.mubr.bf16.mxu0 0
        %3418 = vmatmul.mubr.bf16.gmra.mrb[0].mxu0 %v2451
        %v3419 = vpop.f32.mrb[0].mxu0
        %v3420 = vadd.f32 0.0, %v3419
        %v3421 = vpop.f32.mrb[0].mxu0
        %v3422 = vadd.f32 0.0, %v3421
        %v3423 = vpop.f32.mrb[0].mxu0
        %v3424 = vadd.f32 0.0, %v3423
        %v3425 = vpop.f32.mrb[0].mxu0
        %v3426 = vadd.f32 0.0, %v3425
        %3427 = vmatprep.mubr.bf16.mxu0 0
        %3428 = vmatmul.mubr.bf16.gmra.mrb[0].mxu0 %v2452
        %v3429 = vpop.f32.mrb[0].mxu0
        %v3430 = vadd.f32 0.0, %v3429
        %v3431 = vpop.f32.mrb[0].mxu0
        %v3432 = vadd.f32 0.0, %v3431
        %v3433 = vpop.f32.mrb[0].mxu0
        %v3434 = vadd.f32 0.0, %v3433
        %v3435 = vpop.f32.mrb[0].mxu0
        %v3436 = vadd.f32 0.0, %v3435
        %3437 = vmatprep.mubr.bf16.mxu0 0
        %3438 = vmatmul.mubr.bf16.gmra.mrb[0].mxu0 %v2453
        %v3439 = vpop.f32.mrb[0].mxu0
        %v3440 = vadd.f32 0.0, %v3439
        %v3441 = vpop.f32.mrb[0].mxu0
        %v3442 = vadd.f32 0.0, %v3441
        %v3443 = vpop.f32.mrb[0].mxu0
        %v3444 = vadd.f32 0.0, %v3443
        %v3445 = vpop.f32.mrb[0].mxu0
        %v3446 = vadd.f32 0.0, %v3445
        %3447 = vmatprep.mubr.bf16.mxu0 0
        %3448 = vmatmul.mubr.bf16.gmra.mrb[0].mxu0 %v2454
        %v3449 = vpop.f32.mrb[0].mxu0
        %v3450 = vadd.f32 0.0, %v3449
        %v3451 = vpop.f32.mrb[0].mxu0
        %v3452 = vadd.f32 0.0, %v3451
        %v3453 = vpop.f32.mrb[0].mxu0
        %v3454 = vadd.f32 0.0, %v3453
        %v3455 = vpop.f32.mrb[0].mxu0
        %v3456 = vadd.f32 0.0, %v3455
        %3457 = vmatprep.mubr.bf16.mxu0 0
        %3458 = vmatmul.mubr.bf16.gmra.mrb[0].mxu0 %v2455
        %v3459 = vpop.f32.mrb[0].mxu0
        %v3460 = vadd.f32 0.0, %v3459
        %v3461 = vpop.f32.mrb[0].mxu0
        %v3462 = vadd.f32 0.0, %v3461
        %v3463 = vpop.f32.mrb[0].mxu0
        %v3464 = vadd.f32 0.0, %v3463
        %v3465 = vpop.f32.mrb[0].mxu0
        %v3466 = vadd.f32 0.0, %v3465
        %3467 = vmatprep.mubr.bf16.mxu0 0
        %3468 = vmatmul.mubr.bf16.gmra.mrb[0].mxu0 %v2456
        %v3469 = vpop.f32.mrb[0].mxu0
        %v3470 = vadd.f32 0.0, %v3469
        %v3471 = vpop.f32.mrb[0].mxu0
        %v3472 = vadd.f32 0.0, %v3471
        %v3473 = vpop.f32.mrb[0].mxu0
        %v3474 = vadd.f32 0.0, %v3473
        %v3475 = vpop.f32.mrb[0].mxu0
        %v3476 = vadd.f32 0.0, %v3475
        %3477 = vmatprep.mubr.bf16.mxu0 0
        %3478 = vmatmul.mubr.bf16.gmra.mrb[0].mxu0 %v2457
        %v3479 = vpop.f32.mrb[0].mxu0
        %v3480 = vadd.f32 0.0, %v3479
        %v3481 = vpop.f32.mrb[0].mxu0
        %v3482 = vadd.f32 0.0, %v3481
        %v3483 = vpop.f32.mrb[0].mxu0
        %v3484 = vadd.f32 0.0, %v3483
        %v3485 = vpop.f32.mrb[0].mxu0
        %v3486 = vadd.f32 0.0, %v3485
        %3487 = vmatprep.mubr.bf16.mxu0 0
        %3488 = vmatmul.mubr.bf16.gmra.mrb[0].mxu0 %v2458
        %v3489 = vpop.f32.mrb[0].mxu0
        %v3490 = vadd.f32 0.0, %v3489
        %v3491 = vpop.f32.mrb[0].mxu0
        %v3492 = vadd.f32 0.0, %v3491
        %v3493 = vpop.f32.mrb[0].mxu0
        %v3494 = vadd.f32 0.0, %v3493
        %v3495 = vpop.f32.mrb[0].mxu0
        %v3496 = vadd.f32 0.0, %v3495
        %3497 = vmatprep.mubr.bf16.mxu0 0
        %3498 = vmatmul.mubr.bf16.gmra.mrb[0].mxu0 %v2459
        %v3499 = vpop.f32.mrb[0].mxu0
        %v3500 = vadd.f32 0.0, %v3499
        %v3501 = vpop.f32.mrb[0].mxu0
        %v3502 = vadd.f32 0.0, %v3501
        %v3503 = vpop.f32.mrb[0].mxu0
        %v3504 = vadd.f32 0.0, %v3503
        %v3505 = vpop.f32.mrb[0].mxu0
        %v3506 = vadd.f32 0.0, %v3505
        %3507 = vmatprep.mubr.bf16.mxu0 0
        %3508 = vmatmul.mubr.bf16.gmra.mrb[0].mxu0 %v2460
        %v3509 = vpop.f32.mrb[0].mxu0
        %v3510 = vadd.f32 0.0, %v3509
        %v3511 = vpop.f32.mrb[0].mxu0
        %v3512 = vadd.f32 0.0, %v3511
        %v3513 = vpop.f32.mrb[0].mxu0
        %v3514 = vadd.f32 0.0, %v3513
        %v3515 = vpop.f32.mrb[0].mxu0
        %v3516 = vadd.f32 0.0, %v3515
        %3517 = vdwg.mxu0
        %3518 = vmatprep.subr.bf16.mxu0 %v2720
        %3519 = vmatpush1.bf16.msra.mxu0 %v2719
        %3520 = vmatprep.subr.bf16.mxu0 %v2728
        %3521 = vmatpush1.bf16.msra.mxu0 %v2727
        %3522 = vmatprep.subr.bf16.mxu0 %v2736
        %3523 = vmatpush1.bf16.msra.mxu0 %v2735
        %3524 = vmatprep.subr.bf16.mxu0 %v2744
        %3525 = vmatpush1.bf16.msra.mxu0 %v2743
        %3526 = vmatprep.subr.bf16.mxu0 %v2752
        %3527 = vmatpush1.bf16.msra.mxu0 %v2751
        %3528 = vmatprep.subr.bf16.mxu0 %v2760
        %3529 = vmatpush1.bf16.msra.mxu0 %v2759
        %3530 = vmatprep.subr.bf16.mxu0 %v2768
        %3531 = vmatpush1.bf16.msra.mxu0 %v2767
        %3532 = vmatprep.subr.bf16.mxu0 %v2776
        %3533 = vmatpush1.bf16.msra.mxu0 %v2775
        %3534 = vmatprep.subr.bf16.mxu0 0
        %3535 = vmatpush1.bf16.msra.mxu0 0
        %3536 = vmatprep.subr.bf16.mxu0 0
        %3537 = vmatpush1.bf16.msra.mxu0 0
        %3538 = vmatprep.subr.bf16.mxu0 0
        %3539 = vmatpush1.bf16.msra.mxu0 0
        %3540 = vmatprep.subr.bf16.mxu0 0
        %3541 = vmatpush1.bf16.msra.mxu0 0
        %3542 = vmatprep.subr.bf16.mxu0 0
        %3543 = vmatpush1.bf16.msra.mxu0 0
        %3544 = vmatprep.subr.bf16.mxu0 0
        %3545 = vmatpush1.bf16.msra.mxu0 0
        %3546 = vmatprep.subr.bf16.mxu0 0
        %3547 = vmatpush1.bf16.msra.mxu0 0
        %3548 = vmatprep.subr.bf16.mxu0 0
        %3549 = vmatpush1.bf16.msra.mxu0 0
        %3550 = vmatprep.mubr.bf16.mxu0 0
        %3551 = vmatmul.mubr.bf16.gmra.mrb[0].mxu0 %v2397
        %v3552 = vpop.f32.mrb[0].mxu0
        %v3553 = vadd.f32 0.0, %v3552
        %v3554 = vpop.f32.mrb[0].mxu0
        %v3555 = vadd.f32 0.0, %v3554
        %v3556 = vpop.f32.mrb[0].mxu0
        %v3557 = vadd.f32 0.0, %v3556
        %v3558 = vpop.f32.mrb[0].mxu0
        %v3559 = vadd.f32 0.0, %v3558
        %3560 = vmatprep.mubr.bf16.mxu0 0
        %3561 = vmatmul.mubr.bf16.gmra.mrb[0].mxu0 %v2398
        %v3562 = vpop.f32.mrb[0].mxu0
        %v3563 = vadd.f32 0.0, %v3562
        %v3564 = vpop.f32.mrb[0].mxu0
        %v3565 = vadd.f32 0.0, %v3564
        %v3566 = vpop.f32.mrb[0].mxu0
        %v3567 = vadd.f32 0.0, %v3566
        %v3568 = vpop.f32.mrb[0].mxu0
        %v3569 = vadd.f32 0.0, %v3568
        %3570 = vmatprep.mubr.bf16.mxu0 0
        %3571 = vmatmul.mubr.bf16.gmra.mrb[0].mxu0 %v2399
        %v3572 = vpop.f32.mrb[0].mxu0
        %v3573 = vadd.f32 0.0, %v3572
        %v3574 = vpop.f32.mrb[0].mxu0
        %v3575 = vadd.f32 0.0, %v3574
        %v3576 = vpop.f32.mrb[0].mxu0
        %v3577 = vadd.f32 0.0, %v3576
        %v3578 = vpop.f32.mrb[0].mxu0
        %v3579 = vadd.f32 0.0, %v3578
        %3580 = vmatprep.mubr.bf16.mxu0 0
        %3581 = vmatmul.mubr.bf16.gmra.mrb[0].mxu0 %v2400
        %v3582 = vpop.f32.mrb[0].mxu0
        %v3583 = vadd.f32 0.0, %v3582
        %v3584 = vpop.f32.mrb[0].mxu0
        %v3585 = vadd.f32 0.0, %v3584
        %v3586 = vpop.f32.mrb[0].mxu0
        %v3587 = vadd.f32 0.0, %v3586
        %v3588 = vpop.f32.mrb[0].mxu0
        %v3589 = vadd.f32 0.0, %v3588
        %3590 = vmatprep.mubr.bf16.mxu0 0
        %3591 = vmatmul.mubr.bf16.gmra.mrb[0].mxu0 %v2401
        %v3592 = vpop.f32.mrb[0].mxu0
        %v3593 = vadd.f32 0.0, %v3592
        %v3594 = vpop.f32.mrb[0].mxu0
        %v3595 = vadd.f32 0.0, %v3594
        %v3596 = vpop.f32.mrb[0].mxu0
        %v3597 = vadd.f32 0.0, %v3596
        %v3598 = vpop.f32.mrb[0].mxu0
        %v3599 = vadd.f32 0.0, %v3598
        %3600 = vmatprep.mubr.bf16.mxu0 0
        %3601 = vmatmul.mubr.bf16.gmra.mrb[0].mxu0 %v2402
        %v3602 = vpop.f32.mrb[0].mxu0
        %v3603 = vadd.f32 0.0, %v3602
        %v3604 = vpop.f32.mrb[0].mxu0
        %v3605 = vadd.f32 0.0, %v3604
        %v3606 = vpop.f32.mrb[0].mxu0
        %v3607 = vadd.f32 0.0, %v3606
        %v3608 = vpop.f32.mrb[0].mxu0
        %v3609 = vadd.f32 0.0, %v3608
        %3610 = vmatprep.mubr.bf16.mxu0 0
        %3611 = vmatmul.mubr.bf16.gmra.mrb[0].mxu0 %v2403
        %v3612 = vpop.f32.mrb[0].mxu0
        %v3613 = vadd.f32 0.0, %v3612
        %v3614 = vpop.f32.mrb[0].mxu0
        %v3615 = vadd.f32 0.0, %v3614
        %v3616 = vpop.f32.mrb[0].mxu0
        %v3617 = vadd.f32 0.0, %v3616
        %v3618 = vpop.f32.mrb[0].mxu0
        %v3619 = vadd.f32 0.0, %v3618
        %3620 = vmatprep.mubr.bf16.mxu0 0
        %3621 = vmatmul.mubr.bf16.gmra.mrb[0].mxu0 %v2404
        %v3622 = vpop.f32.mrb[0].mxu0
        %v3623 = vadd.f32 0.0, %v3622
        %v3624 = vpop.f32.mrb[0].mxu0
        %v3625 = vadd.f32 0.0, %v3624
        %v3626 = vpop.f32.mrb[0].mxu0
        %v3627 = vadd.f32 0.0, %v3626
        %v3628 = vpop.f32.mrb[0].mxu0
        %v3629 = vadd.f32 0.0, %v3628
        %3630 = vmatprep.mubr.bf16.mxu0 0
        %3631 = vmatmul.mubr.bf16.gmra.mrb[0].mxu0 %v2405
        %v3632 = vpop.f32.mrb[0].mxu0
        %v3633 = vadd.f32 0.0, %v3632
        %v3634 = vpop.f32.mrb[0].mxu0
        %v3635 = vadd.f32 0.0, %v3634
        %v3636 = vpop.f32.mrb[0].mxu0
        %v3637 = vadd.f32 0.0, %v3636
        %v3638 = vpop.f32.mrb[0].mxu0
        %v3639 = vadd.f32 0.0, %v3638
        %3640 = vmatprep.mubr.bf16.mxu0 0
        %3641 = vmatmul.mubr.bf16.gmra.mrb[0].mxu0 %v2406
        %v3642 = vpop.f32.mrb[0].mxu0
        %v3643 = vadd.f32 0.0, %v3642
        %v3644 = vpop.f32.mrb[0].mxu0
        %v3645 = vadd.f32 0.0, %v3644
        %v3646 = vpop.f32.mrb[0].mxu0
        %v3647 = vadd.f32 0.0, %v3646
        %v3648 = vpop.f32.mrb[0].mxu0
        %v3649 = vadd.f32 0.0, %v3648
        %3650 = vmatprep.mubr.bf16.mxu0 0
        %3651 = vmatmul.mubr.bf16.gmra.mrb[0].mxu0 %v2407
        %v3652 = vpop.f32.mrb[0].mxu0
        %v3653 = vadd.f32 0.0, %v3652
        %v3654 = vpop.f32.mrb[0].mxu0
        %v3655 = vadd.f32 0.0, %v3654
        %v3656 = vpop.f32.mrb[0].mxu0
        %v3657 = vadd.f32 0.0, %v3656
        %v3658 = vpop.f32.mrb[0].mxu0
        %v3659 = vadd.f32 0.0, %v3658
        %3660 = vmatprep.mubr.bf16.mxu0 0
        %3661 = vmatmul.mubr.bf16.gmra.mrb[0].mxu0 %v2408
        %v3662 = vpop.f32.mrb[0].mxu0
        %v3663 = vadd.f32 0.0, %v3662
        %v3664 = vpop.f32.mrb[0].mxu0
        %v3665 = vadd.f32 0.0, %v3664
        %v3666 = vpop.f32.mrb[0].mxu0
        %v3667 = vadd.f32 0.0, %v3666
        %v3668 = vpop.f32.mrb[0].mxu0
        %v3669 = vadd.f32 0.0, %v3668
        %3670 = vmatprep.mubr.bf16.mxu0 0
        %3671 = vmatmul.mubr.bf16.gmra.mrb[0].mxu0 %v2409
        %v3672 = vpop.f32.mrb[0].mxu0
        %v3673 = vadd.f32 0.0, %v3672
        %v3674 = vpop.f32.mrb[0].mxu0
        %v3675 = vadd.f32 0.0, %v3674
        %v3676 = vpop.f32.mrb[0].mxu0
        %v3677 = vadd.f32 0.0, %v3676
        %v3678 = vpop.f32.mrb[0].mxu0
        %v3679 = vadd.f32 0.0, %v3678
        %3680 = vmatprep.mubr.bf16.mxu0 0
        %3681 = vmatmul.mubr.bf16.gmra.mrb[0].mxu0 %v2410
        %v3682 = vpop.f32.mrb[0].mxu0
        %v3683 = vadd.f32 0.0, %v3682
        %v3684 = vpop.f32.mrb[0].mxu0
        %v3685 = vadd.f32 0.0, %v3684
        %v3686 = vpop.f32.mrb[0].mxu0
        %v3687 = vadd.f32 0.0, %v3686
        %v3688 = vpop.f32.mrb[0].mxu0
        %v3689 = vadd.f32 0.0, %v3688
        %3690 = vmatprep.mubr.bf16.mxu0 0
        %3691 = vmatmul.mubr.bf16.gmra.mrb[0].mxu0 %v2411
        %v3692 = vpop.f32.mrb[0].mxu0
        %v3693 = vadd.f32 0.0, %v3692
        %v3694 = vpop.f32.mrb[0].mxu0
        %v3695 = vadd.f32 0.0, %v3694
        %v3696 = vpop.f32.mrb[0].mxu0
        %v3697 = vadd.f32 0.0, %v3696
        %v3698 = vpop.f32.mrb[0].mxu0
        %v3699 = vadd.f32 0.0, %v3698
        %3700 = vmatprep.mubr.bf16.mxu0 0
        %3701 = vmatmul.mubr.bf16.gmra.mrb[0].mxu0 %v2412
        %v3702 = vpop.f32.mrb[0].mxu0
        %v3703 = vadd.f32 0.0, %v3702
        %v3704 = vpop.f32.mrb[0].mxu0
        %v3705 = vadd.f32 0.0, %v3704
        %v3706 = vpop.f32.mrb[0].mxu0
        %v3707 = vadd.f32 0.0, %v3706
        %v3708 = vpop.f32.mrb[0].mxu0
        %v3709 = vadd.f32 0.0, %v3708
        %3710 = vmatprep.mubr.bf16.mxu0 0
        %3711 = vmatmul.mubr.bf16.gmra.mrb[0].mxu0 %v2413
        %v3712 = vpop.f32.mrb[0].mxu0
        %v3713 = vadd.f32 0.0, %v3712
        %v3714 = vpop.f32.mrb[0].mxu0
        %v3715 = vadd.f32 0.0, %v3714
        %v3716 = vpop.f32.mrb[0].mxu0
        %v3717 = vadd.f32 0.0, %v3716
        %v3718 = vpop.f32.mrb[0].mxu0
        %v3719 = vadd.f32 0.0, %v3718
        %3720 = vmatprep.mubr.bf16.mxu0 0
        %3721 = vmatmul.mubr.bf16.gmra.mrb[0].mxu0 %v2414
        %v3722 = vpop.f32.mrb[0].mxu0
        %v3723 = vadd.f32 0.0, %v3722
        %v3724 = vpop.f32.mrb[0].mxu0
        %v3725 = vadd.f32 0.0, %v3724
        %v3726 = vpop.f32.mrb[0].mxu0
        %v3727 = vadd.f32 0.0, %v3726
        %v3728 = vpop.f32.mrb[0].mxu0
        %v3729 = vadd.f32 0.0, %v3728
        %3730 = vmatprep.mubr.bf16.mxu0 0
        %3731 = vmatmul.mubr.bf16.gmra.mrb[0].mxu0 %v2415
        %v3732 = vpop.f32.mrb[0].mxu0
        %v3733 = vadd.f32 0.0, %v3732
        %v3734 = vpop.f32.mrb[0].mxu0
        %v3735 = vadd.f32 0.0, %v3734
        %v3736 = vpop.f32.mrb[0].mxu0
        %v3737 = vadd.f32 0.0, %v3736
        %v3738 = vpop.f32.mrb[0].mxu0
        %v3739 = vadd.f32 0.0, %v3738
        %3740 = vmatprep.mubr.bf16.mxu0 0
        %3741 = vmatmul.mubr.bf16.gmra.mrb[0].mxu0 %v2416
        %v3742 = vpop.f32.mrb[0].mxu0
        %v3743 = vadd.f32 0.0, %v3742
        %v3744 = vpop.f32.mrb[0].mxu0
        %v3745 = vadd.f32 0.0, %v3744
        %v3746 = vpop.f32.mrb[0].mxu0
        %v3747 = vadd.f32 0.0, %v3746
        %v3748 = vpop.f32.mrb[0].mxu0
        %v3749 = vadd.f32 0.0, %v3748
        %3750 = vmatprep.mubr.bf16.mxu0 0
        %3751 = vmatmul.mubr.bf16.gmra.mrb[0].mxu0 %v2417
        %v3752 = vpop.f32.mrb[0].mxu0
        %v3753 = vadd.f32 0.0, %v3752
        %v3754 = vpop.f32.mrb[0].mxu0
        %v3755 = vadd.f32 0.0, %v3754
        %v3756 = vpop.f32.mrb[0].mxu0
        %v3757 = vadd.f32 0.0, %v3756
        %v3758 = vpop.f32.mrb[0].mxu0
        %v3759 = vadd.f32 0.0, %v3758
        %3760 = vmatprep.mubr.bf16.mxu0 0
        %3761 = vmatmul.mubr.bf16.gmra.mrb[0].mxu0 %v2418
        %v3762 = vpop.f32.mrb[0].mxu0
        %v3763 = vadd.f32 0.0, %v3762
        %v3764 = vpop.f32.mrb[0].mxu0
        %v3765 = vadd.f32 0.0, %v3764
        %v3766 = vpop.f32.mrb[0].mxu0
        %v3767 = vadd.f32 0.0, %v3766
        %v3768 = vpop.f32.mrb[0].mxu0
        %v3769 = vadd.f32 0.0, %v3768
        %3770 = vmatprep.mubr.bf16.mxu0 0
        %3771 = vmatmul.mubr.bf16.gmra.mrb[0].mxu0 %v2419
        %v3772 = vpop.f32.mrb[0].mxu0
        %v3773 = vadd.f32 0.0, %v3772
        %v3774 = vpop.f32.mrb[0].mxu0
        %v3775 = vadd.f32 0.0, %v3774
        %v3776 = vpop.f32.mrb[0].mxu0
        %v3777 = vadd.f32 0.0, %v3776
        %v3778 = vpop.f32.mrb[0].mxu0
        %v3779 = vadd.f32 0.0, %v3778
        %3780 = vmatprep.mubr.bf16.mxu0 0
        %3781 = vmatmul.mubr.bf16.gmra.mrb[0].mxu0 %v2420
        %v3782 = vpop.f32.mrb[0].mxu0
        %v3783 = vadd.f32 0.0, %v3782
        %v3784 = vpop.f32.mrb[0].mxu0
        %v3785 = vadd.f32 0.0, %v3784
        %v3786 = vpop.f32.mrb[0].mxu0
        %v3787 = vadd.f32 0.0, %v3786
        %v3788 = vpop.f32.mrb[0].mxu0
        %v3789 = vadd.f32 0.0, %v3788
        %3790 = vmatprep.mubr.bf16.mxu0 0
        %3791 = vmatmul.mubr.bf16.gmra.mrb[0].mxu0 %v2421
        %v3792 = vpop.f32.mrb[0].mxu0
        %v3793 = vadd.f32 0.0, %v3792
        %v3794 = vpop.f32.mrb[0].mxu0
        %v3795 = vadd.f32 0.0, %v3794
        %v3796 = vpop.f32.mrb[0].mxu0
        %v3797 = vadd.f32 0.0, %v3796
        %v3798 = vpop.f32.mrb[0].mxu0
        %v3799 = vadd.f32 0.0, %v3798
        %3800 = vmatprep.mubr.bf16.mxu0 0
        %3801 = vmatmul.mubr.bf16.gmra.mrb[0].mxu0 %v2422
        %v3802 = vpop.f32.mrb[0].mxu0
        %v3803 = vadd.f32 0.0, %v3802
        %v3804 = vpop.f32.mrb[0].mxu0
        %v3805 = vadd.f32 0.0, %v3804
        %v3806 = vpop.f32.mrb[0].mxu0
        %v3807 = vadd.f32 0.0, %v3806
        %v3808 = vpop.f32.mrb[0].mxu0
        %v3809 = vadd.f32 0.0, %v3808
        %3810 = vmatprep.mubr.bf16.mxu0 0
        %3811 = vmatmul.mubr.bf16.gmra.mrb[0].mxu0 %v2423
        %v3812 = vpop.f32.mrb[0].mxu0
        %v3813 = vadd.f32 0.0, %v3812
        %v3814 = vpop.f32.mrb[0].mxu0
        %v3815 = vadd.f32 0.0, %v3814
        %v3816 = vpop.f32.mrb[0].mxu0
        %v3817 = vadd.f32 0.0, %v3816
        %v3818 = vpop.f32.mrb[0].mxu0
        %v3819 = vadd.f32 0.0, %v3818
        %3820 = vmatprep.mubr.bf16.mxu0 0
        %3821 = vmatmul.mubr.bf16.gmra.mrb[0].mxu0 %v2424
        %v3822 = vpop.f32.mrb[0].mxu0
        %v3823 = vadd.f32 0.0, %v3822
        %v3824 = vpop.f32.mrb[0].mxu0
        %v3825 = vadd.f32 0.0, %v3824
        %v3826 = vpop.f32.mrb[0].mxu0
        %v3827 = vadd.f32 0.0, %v3826
        %v3828 = vpop.f32.mrb[0].mxu0
        %v3829 = vadd.f32 0.0, %v3828
        %3830 = vmatprep.mubr.bf16.mxu0 0
        %3831 = vmatmul.mubr.bf16.gmra.mrb[0].mxu0 %v2425
        %v3832 = vpop.f32.mrb[0].mxu0
        %v3833 = vadd.f32 0.0, %v3832
        %v3834 = vpop.f32.mrb[0].mxu0
        %v3835 = vadd.f32 0.0, %v3834
        %v3836 = vpop.f32.mrb[0].mxu0
        %v3837 = vadd.f32 0.0, %v3836
        %v3838 = vpop.f32.mrb[0].mxu0
        %v3839 = vadd.f32 0.0, %v3838
        %3840 = vmatprep.mubr.bf16.mxu0 0
        %3841 = vmatmul.mubr.bf16.gmra.mrb[0].mxu0 %v2426
        %v3842 = vpop.f32.mrb[0].mxu0
        %v3843 = vadd.f32 0.0, %v3842
        %v3844 = vpop.f32.mrb[0].mxu0
        %v3845 = vadd.f32 0.0, %v3844
        %v3846 = vpop.f32.mrb[0].mxu0
        %v3847 = vadd.f32 0.0, %v3846
        %v3848 = vpop.f32.mrb[0].mxu0
        %v3849 = vadd.f32 0.0, %v3848
        %3850 = vmatprep.mubr.bf16.mxu0 0
        %3851 = vmatmul.mubr.bf16.gmra.mrb[0].mxu0 %v2427
        %v3852 = vpop.f32.mrb[0].mxu0
        %v3853 = vadd.f32 0.0, %v3852
        %v3854 = vpop.f32.mrb[0].mxu0
        %v3855 = vadd.f32 0.0, %v3854
        %v3856 = vpop.f32.mrb[0].mxu0
        %v3857 = vadd.f32 0.0, %v3856
        %v3858 = vpop.f32.mrb[0].mxu0
        %v3859 = vadd.f32 0.0, %v3858
        %3860 = vmatprep.mubr.bf16.mxu0 0
        %3861 = vmatmul.mubr.bf16.gmra.mrb[0].mxu0 %v2428
        %v3862 = vpop.f32.mrb[0].mxu0
        %v3863 = vadd.f32 0.0, %v3862
        %v3864 = vpop.f32.mrb[0].mxu0
        %v3865 = vadd.f32 0.0, %v3864
        %v3866 = vpop.f32.mrb[0].mxu0
        %v3867 = vadd.f32 0.0, %v3866
        %v3868 = vpop.f32.mrb[0].mxu0
        %v3869 = vadd.f32 0.0, %v3868
        %3870 = vmatprep.mubr.bf16.mxu0 0
        %3871 = vmatmul.mubr.bf16.gmra.mrb[0].mxu0 %v2429
        %v3872 = vpop.f32.mrb[0].mxu0
        %v3873 = vadd.f32 0.0, %v3872
        %v3874 = vpop.f32.mrb[0].mxu0
        %v3875 = vadd.f32 0.0, %v3874
        %v3876 = vpop.f32.mrb[0].mxu0
        %v3877 = vadd.f32 0.0, %v3876
        %v3878 = vpop.f32.mrb[0].mxu0
        %v3879 = vadd.f32 0.0, %v3878
        %3880 = vmatprep.mubr.bf16.mxu0 0
        %3881 = vmatmul.mubr.bf16.gmra.mrb[0].mxu0 %v2430
        %v3882 = vpop.f32.mrb[0].mxu0
        %v3883 = vadd.f32 0.0, %v3882
        %v3884 = vpop.f32.mrb[0].mxu0
        %v3885 = vadd.f32 0.0, %v3884
        %v3886 = vpop.f32.mrb[0].mxu0
        %v3887 = vadd.f32 0.0, %v3886
        %v3888 = vpop.f32.mrb[0].mxu0
        %v3889 = vadd.f32 0.0, %v3888
        %3890 = vmatprep.mubr.bf16.mxu0 0
        %3891 = vmatmul.mubr.bf16.gmra.mrb[0].mxu0 %v2431
        %v3892 = vpop.f32.mrb[0].mxu0
        %v3893 = vadd.f32 0.0, %v3892
        %v3894 = vpop.f32.mrb[0].mxu0
        %v3895 = vadd.f32 0.0, %v3894
        %v3896 = vpop.f32.mrb[0].mxu0
        %v3897 = vadd.f32 0.0, %v3896
        %v3898 = vpop.f32.mrb[0].mxu0
        %v3899 = vadd.f32 0.0, %v3898
        %3900 = vmatprep.mubr.bf16.mxu0 0
        %3901 = vmatmul.mubr.bf16.gmra.mrb[0].mxu0 %v2432
        %v3902 = vpop.f32.mrb[0].mxu0
        %v3903 = vadd.f32 0.0, %v3902
        %v3904 = vpop.f32.mrb[0].mxu0
        %v3905 = vadd.f32 0.0, %v3904
        %v3906 = vpop.f32.mrb[0].mxu0
        %v3907 = vadd.f32 0.0, %v3906
        %v3908 = vpop.f32.mrb[0].mxu0
        %v3909 = vadd.f32 0.0, %v3908
        %3910 = vmatprep.mubr.bf16.mxu0 0
        %3911 = vmatmul.mubr.bf16.gmra.mrb[0].mxu0 %v2433
        %v3912 = vpop.f32.mrb[0].mxu0
        %v3913 = vadd.f32 0.0, %v3912
        %v3914 = vpop.f32.mrb[0].mxu0
        %v3915 = vadd.f32 0.0, %v3914
        %v3916 = vpop.f32.mrb[0].mxu0
        %v3917 = vadd.f32 0.0, %v3916
        %v3918 = vpop.f32.mrb[0].mxu0
        %v3919 = vadd.f32 0.0, %v3918
        %3920 = vmatprep.mubr.bf16.mxu0 0
        %3921 = vmatmul.mubr.bf16.gmra.mrb[0].mxu0 %v2434
        %v3922 = vpop.f32.mrb[0].mxu0
        %v3923 = vadd.f32 0.0, %v3922
        %v3924 = vpop.f32.mrb[0].mxu0
        %v3925 = vadd.f32 0.0, %v3924
        %v3926 = vpop.f32.mrb[0].mxu0
        %v3927 = vadd.f32 0.0, %v3926
        %v3928 = vpop.f32.mrb[0].mxu0
        %v3929 = vadd.f32 0.0, %v3928
        %3930 = vmatprep.mubr.bf16.mxu0 0
        %3931 = vmatmul.mubr.bf16.gmra.mrb[0].mxu0 %v2435
        %v3932 = vpop.f32.mrb[0].mxu0
        %v3933 = vadd.f32 0.0, %v3932
        %v3934 = vpop.f32.mrb[0].mxu0
        %v3935 = vadd.f32 0.0, %v3934
        %v3936 = vpop.f32.mrb[0].mxu0
        %v3937 = vadd.f32 0.0, %v3936
        %v3938 = vpop.f32.mrb[0].mxu0
        %v3939 = vadd.f32 0.0, %v3938
        %3940 = vmatprep.mubr.bf16.mxu0 0
        %3941 = vmatmul.mubr.bf16.gmra.mrb[0].mxu0 %v2436
        %v3942 = vpop.f32.mrb[0].mxu0
        %v3943 = vadd.f32 0.0, %v3942
        %v3944 = vpop.f32.mrb[0].mxu0
        %v3945 = vadd.f32 0.0, %v3944
        %v3946 = vpop.f32.mrb[0].mxu0
        %v3947 = vadd.f32 0.0, %v3946
        %v3948 = vpop.f32.mrb[0].mxu0
        %v3949 = vadd.f32 0.0, %v3948
        %3950 = vmatprep.mubr.bf16.mxu0 0
        %3951 = vmatmul.mubr.bf16.gmra.mrb[0].mxu0 %v2437
        %v3952 = vpop.f32.mrb[0].mxu0
        %v3953 = vadd.f32 0.0, %v3952
        %v3954 = vpop.f32.mrb[0].mxu0
        %v3955 = vadd.f32 0.0, %v3954
        %v3956 = vpop.f32.mrb[0].mxu0
        %v3957 = vadd.f32 0.0, %v3956
        %v3958 = vpop.f32.mrb[0].mxu0
        %v3959 = vadd.f32 0.0, %v3958
        %3960 = vmatprep.mubr.bf16.mxu0 0
        %3961 = vmatmul.mubr.bf16.gmra.mrb[0].mxu0 %v2438
        %v3962 = vpop.f32.mrb[0].mxu0
        %v3963 = vadd.f32 0.0, %v3962
        %v3964 = vpop.f32.mrb[0].mxu0
        %v3965 = vadd.f32 0.0, %v3964
        %v3966 = vpop.f32.mrb[0].mxu0
        %v3967 = vadd.f32 0.0, %v3966
        %v3968 = vpop.f32.mrb[0].mxu0
        %v3969 = vadd.f32 0.0, %v3968
        %3970 = vmatprep.mubr.bf16.mxu0 0
        %3971 = vmatmul.mubr.bf16.gmra.mrb[0].mxu0 %v2439
        %v3972 = vpop.f32.mrb[0].mxu0
        %v3973 = vadd.f32 0.0, %v3972
        %v3974 = vpop.f32.mrb[0].mxu0
        %v3975 = vadd.f32 0.0, %v3974
        %v3976 = vpop.f32.mrb[0].mxu0
        %v3977 = vadd.f32 0.0, %v3976
        %v3978 = vpop.f32.mrb[0].mxu0
        %v3979 = vadd.f32 0.0, %v3978
        %3980 = vmatprep.mubr.bf16.mxu0 0
        %3981 = vmatmul.mubr.bf16.gmra.mrb[0].mxu0 %v2440
        %v3982 = vpop.f32.mrb[0].mxu0
        %v3983 = vadd.f32 0.0, %v3982
        %v3984 = vpop.f32.mrb[0].mxu0
        %v3985 = vadd.f32 0.0, %v3984
        %v3986 = vpop.f32.mrb[0].mxu0
        %v3987 = vadd.f32 0.0, %v3986
        %v3988 = vpop.f32.mrb[0].mxu0
        %v3989 = vadd.f32 0.0, %v3988
        %3990 = vmatprep.mubr.bf16.mxu0 0
        %3991 = vmatmul.mubr.bf16.gmra.mrb[0].mxu0 %v2441
        %v3992 = vpop.f32.mrb[0].mxu0
        %v3993 = vadd.f32 0.0, %v3992
        %v3994 = vpop.f32.mrb[0].mxu0
        %v3995 = vadd.f32 0.0, %v3994
        %v3996 = vpop.f32.mrb[0].mxu0
        %v3997 = vadd.f32 0.0, %v3996
        %v3998 = vpop.f32.mrb[0].mxu0
        %v3999 = vadd.f32 0.0, %v3998
        %4000 = vmatprep.mubr.bf16.mxu0 0
        %4001 = vmatmul.mubr.bf16.gmra.mrb[0].mxu0 %v2442
        %v4002 = vpop.f32.mrb[0].mxu0
        %v4003 = vadd.f32 0.0, %v4002
        %v4004 = vpop.f32.mrb[0].mxu0
        %v4005 = vadd.f32 0.0, %v4004
        %v4006 = vpop.f32.mrb[0].mxu0
        %v4007 = vadd.f32 0.0, %v4006
        %v4008 = vpop.f32.mrb[0].mxu0
        %v4009 = vadd.f32 0.0, %v4008
        %4010 = vmatprep.mubr.bf16.mxu0 0
        %4011 = vmatmul.mubr.bf16.gmra.mrb[0].mxu0 %v2443
        %v4012 = vpop.f32.mrb[0].mxu0
        %v4013 = vadd.f32 0.0, %v4012
        %v4014 = vpop.f32.mrb[0].mxu0
        %v4015 = vadd.f32 0.0, %v4014
        %v4016 = vpop.f32.mrb[0].mxu0
        %v4017 = vadd.f32 0.0, %v4016
        %v4018 = vpop.f32.mrb[0].mxu0
        %v4019 = vadd.f32 0.0, %v4018
        %4020 = vmatprep.mubr.bf16.mxu0 0
        %4021 = vmatmul.mubr.bf16.gmra.mrb[0].mxu0 %v2444
        %v4022 = vpop.f32.mrb[0].mxu0
        %v4023 = vadd.f32 0.0, %v4022
        %v4024 = vpop.f32.mrb[0].mxu0
        %v4025 = vadd.f32 0.0, %v4024
        %v4026 = vpop.f32.mrb[0].mxu0
        %v4027 = vadd.f32 0.0, %v4026
        %v4028 = vpop.f32.mrb[0].mxu0
        %v4029 = vadd.f32 0.0, %v4028
        %4030 = vmatprep.mubr.bf16.mxu0 0
        %4031 = vmatmul.mubr.bf16.gmra.mrb[0].mxu0 %v2445
        %v4032 = vpop.f32.mrb[0].mxu0
        %v4033 = vadd.f32 0.0, %v4032
        %v4034 = vpop.f32.mrb[0].mxu0
        %v4035 = vadd.f32 0.0, %v4034
        %v4036 = vpop.f32.mrb[0].mxu0
        %v4037 = vadd.f32 0.0, %v4036
        %v4038 = vpop.f32.mrb[0].mxu0
        %v4039 = vadd.f32 0.0, %v4038
        %4040 = vmatprep.mubr.bf16.mxu0 0
        %4041 = vmatmul.mubr.bf16.gmra.mrb[0].mxu0 %v2446
        %v4042 = vpop.f32.mrb[0].mxu0
        %v4043 = vadd.f32 0.0, %v4042
        %v4044 = vpop.f32.mrb[0].mxu0
        %v4045 = vadd.f32 0.0, %v4044
        %v4046 = vpop.f32.mrb[0].mxu0
        %v4047 = vadd.f32 0.0, %v4046
        %v4048 = vpop.f32.mrb[0].mxu0
        %v4049 = vadd.f32 0.0, %v4048
        %4050 = vmatprep.mubr.bf16.mxu0 0
        %4051 = vmatmul.mubr.bf16.gmra.mrb[0].mxu0 %v2447
        %v4052 = vpop.f32.mrb[0].mxu0
        %v4053 = vadd.f32 0.0, %v4052
        %v4054 = vpop.f32.mrb[0].mxu0
        %v4055 = vadd.f32 0.0, %v4054
        %v4056 = vpop.f32.mrb[0].mxu0
        %v4057 = vadd.f32 0.0, %v4056
        %v4058 = vpop.f32.mrb[0].mxu0
        %v4059 = vadd.f32 0.0, %v4058
        %4060 = vmatprep.mubr.bf16.mxu0 0
        %4061 = vmatmul.mubr.bf16.gmra.mrb[0].mxu0 %v2448
        %v4062 = vpop.f32.mrb[0].mxu0
        %v4063 = vadd.f32 0.0, %v4062
        %v4064 = vpop.f32.mrb[0].mxu0
        %v4065 = vadd.f32 0.0, %v4064
        %v4066 = vpop.f32.mrb[0].mxu0
        %v4067 = vadd.f32 0.0, %v4066
        %v4068 = vpop.f32.mrb[0].mxu0
        %v4069 = vadd.f32 0.0, %v4068
        %4070 = vmatprep.mubr.bf16.mxu0 0
        %4071 = vmatmul.mubr.bf16.gmra.mrb[0].mxu0 %v2449
        %v4072 = vpop.f32.mrb[0].mxu0
        %v4073 = vadd.f32 0.0, %v4072
        %v4074 = vpop.f32.mrb[0].mxu0
        %v4075 = vadd.f32 0.0, %v4074
        %v4076 = vpop.f32.mrb[0].mxu0
        %v4077 = vadd.f32 0.0, %v4076
        %v4078 = vpop.f32.mrb[0].mxu0
        %v4079 = vadd.f32 0.0, %v4078
        %4080 = vmatprep.mubr.bf16.mxu0 0
        %4081 = vmatmul.mubr.bf16.gmra.mrb[0].mxu0 %v2450
        %v4082 = vpop.f32.mrb[0].mxu0
        %v4083 = vadd.f32 0.0, %v4082
        %v4084 = vpop.f32.mrb[0].mxu0
        %v4085 = vadd.f32 0.0, %v4084
        %v4086 = vpop.f32.mrb[0].mxu0
        %v4087 = vadd.f32 0.0, %v4086
        %v4088 = vpop.f32.mrb[0].mxu0
        %v4089 = vadd.f32 0.0, %v4088
        %4090 = vmatprep.mubr.bf16.mxu0 0
        %4091 = vmatmul.mubr.bf16.gmra.mrb[0].mxu0 %v2451
        %v4092 = vpop.f32.mrb[0].mxu0
        %v4093 = vadd.f32 0.0, %v4092
        %v4094 = vpop.f32.mrb[0].mxu0
        %v4095 = vadd.f32 0.0, %v4094
        %v4096 = vpop.f32.mrb[0].mxu0
        %v4097 = vadd.f32 0.0, %v4096
        %v4098 = vpop.f32.mrb[0].mxu0
        %v4099 = vadd.f32 0.0, %v4098
        %4100 = vmatprep.mubr.bf16.mxu0 0
        %4101 = vmatmul.mubr.bf16.gmra.mrb[0].mxu0 %v2452
        %v4102 = vpop.f32.mrb[0].mxu0
        %v4103 = vadd.f32 0.0, %v4102
        %v4104 = vpop.f32.mrb[0].mxu0
        %v4105 = vadd.f32 0.0, %v4104
        %v4106 = vpop.f32.mrb[0].mxu0
        %v4107 = vadd.f32 0.0, %v4106
        %v4108 = vpop.f32.mrb[0].mxu0
        %v4109 = vadd.f32 0.0, %v4108
        %4110 = vmatprep.mubr.bf16.mxu0 0
        %4111 = vmatmul.mubr.bf16.gmra.mrb[0].mxu0 %v2453
        %v4112 = vpop.f32.mrb[0].mxu0
        %v4113 = vadd.f32 0.0, %v4112
        %v4114 = vpop.f32.mrb[0].mxu0
        %v4115 = vadd.f32 0.0, %v4114
        %v4116 = vpop.f32.mrb[0].mxu0
        %v4117 = vadd.f32 0.0, %v4116
        %v4118 = vpop.f32.mrb[0].mxu0
        %v4119 = vadd.f32 0.0, %v4118
        %4120 = vmatprep.mubr.bf16.mxu0 0
        %4121 = vmatmul.mubr.bf16.gmra.mrb[0].mxu0 %v2454
        %v4122 = vpop.f32.mrb[0].mxu0
        %v4123 = vadd.f32 0.0, %v4122
        %v4124 = vpop.f32.mrb[0].mxu0
        %v4125 = vadd.f32 0.0, %v4124
        %v4126 = vpop.f32.mrb[0].mxu0
        %v4127 = vadd.f32 0.0, %v4126
        %v4128 = vpop.f32.mrb[0].mxu0
        %v4129 = vadd.f32 0.0, %v4128
        %4130 = vmatprep.mubr.bf16.mxu0 0
        %4131 = vmatmul.mubr.bf16.gmra.mrb[0].mxu0 %v2455
        %v4132 = vpop.f32.mrb[0].mxu0
        %v4133 = vadd.f32 0.0, %v4132
        %v4134 = vpop.f32.mrb[0].mxu0
        %v4135 = vadd.f32 0.0, %v4134
        %v4136 = vpop.f32.mrb[0].mxu0
        %v4137 = vadd.f32 0.0, %v4136
        %v4138 = vpop.f32.mrb[0].mxu0
        %v4139 = vadd.f32 0.0, %v4138
        %4140 = vmatprep.mubr.bf16.mxu0 0
        %4141 = vmatmul.mubr.bf16.gmra.mrb[0].mxu0 %v2456
        %v4142 = vpop.f32.mrb[0].mxu0
        %v4143 = vadd.f32 0.0, %v4142
        %v4144 = vpop.f32.mrb[0].mxu0
        %v4145 = vadd.f32 0.0, %v4144
        %v4146 = vpop.f32.mrb[0].mxu0
        %v4147 = vadd.f32 0.0, %v4146
        %v4148 = vpop.f32.mrb[0].mxu0
        %v4149 = vadd.f32 0.0, %v4148
        %4150 = vmatprep.mubr.bf16.mxu0 0
        %4151 = vmatmul.mubr.bf16.gmra.mrb[0].mxu0 %v2457
        %v4152 = vpop.f32.mrb[0].mxu0
        %v4153 = vadd.f32 0.0, %v4152
        %v4154 = vpop.f32.mrb[0].mxu0
        %v4155 = vadd.f32 0.0, %v4154
        %v4156 = vpop.f32.mrb[0].mxu0
        %v4157 = vadd.f32 0.0, %v4156
        %v4158 = vpop.f32.mrb[0].mxu0
        %v4159 = vadd.f32 0.0, %v4158
        %4160 = vmatprep.mubr.bf16.mxu0 0
        %4161 = vmatmul.mubr.bf16.gmra.mrb[0].mxu0 %v2458
        %v4162 = vpop.f32.mrb[0].mxu0
        %v4163 = vadd.f32 0.0, %v4162
        %v4164 = vpop.f32.mrb[0].mxu0
        %v4165 = vadd.f32 0.0, %v4164
        %v4166 = vpop.f32.mrb[0].mxu0
        %v4167 = vadd.f32 0.0, %v4166
        %v4168 = vpop.f32.mrb[0].mxu0
        %v4169 = vadd.f32 0.0, %v4168
        %4170 = vmatprep.mubr.bf16.mxu0 0
        %4171 = vmatmul.mubr.bf16.gmra.mrb[0].mxu0 %v2459
        %v4172 = vpop.f32.mrb[0].mxu0
        %v4173 = vadd.f32 0.0, %v4172
        %v4174 = vpop.f32.mrb[0].mxu0
        %v4175 = vadd.f32 0.0, %v4174
        %v4176 = vpop.f32.mrb[0].mxu0
        %v4177 = vadd.f32 0.0, %v4176
        %v4178 = vpop.f32.mrb[0].mxu0
        %v4179 = vadd.f32 0.0, %v4178
        %4180 = vmatprep.mubr.bf16.mxu0 0
        %4181 = vmatmul.mubr.bf16.gmra.mrb[0].mxu0 %v2460
        %v4182 = vpop.f32.mrb[0].mxu0
        %v4183 = vadd.f32 0.0, %v4182
        %v4184 = vpop.f32.mrb[0].mxu0
        %v4185 = vadd.f32 0.0, %v4184
        %v4186 = vpop.f32.mrb[0].mxu0
        %v4187 = vadd.f32 0.0, %v4186
        %v4188 = vpop.f32.mrb[0].mxu0
        %v4189 = vadd.f32 0.0, %v4188
        %4190 = vdwg.mxu0
        %4191 = vmatprep.subr.bf16.mxu0 %v2722
        %4192 = vmatpush1.bf16.msra.mxu0 %v2721
        %4193 = vmatprep.subr.bf16.mxu0 %v2730
        %4194 = vmatpush1.bf16.msra.mxu0 %v2729
        %4195 = vmatprep.subr.bf16.mxu0 %v2738
        %4196 = vmatpush1.bf16.msra.mxu0 %v2737
        %4197 = vmatprep.subr.bf16.mxu0 %v2746
        %4198 = vmatpush1.bf16.msra.mxu0 %v2745
        %4199 = vmatprep.subr.bf16.mxu0 %v2754
        %4200 = vmatpush1.bf16.msra.mxu0 %v2753
        %4201 = vmatprep.subr.bf16.mxu0 %v2762
        %4202 = vmatpush1.bf16.msra.mxu0 %v2761
        %4203 = vmatprep.subr.bf16.mxu0 %v2770
        %4204 = vmatpush1.bf16.msra.mxu0 %v2769
        %4205 = vmatprep.subr.bf16.mxu0 %v2778
        %4206 = vmatpush1.bf16.msra.mxu0 %v2777
        %4207 = vmatprep.subr.bf16.mxu0 0
        %4208 = vmatpush1.bf16.msra.mxu0 0
        %4209 = vmatprep.subr.bf16.mxu0 0
        %4210 = vmatpush1.bf16.msra.mxu0 0
        %4211 = vmatprep.subr.bf16.mxu0 0
        %4212 = vmatpush1.bf16.msra.mxu0 0
        %4213 = vmatprep.subr.bf16.mxu0 0
        %4214 = vmatpush1.bf16.msra.mxu0 0
        %4215 = vmatprep.subr.bf16.mxu0 0
        %4216 = vmatpush1.bf16.msra.mxu0 0
        %4217 = vmatprep.subr.bf16.mxu0 0
        %4218 = vmatpush1.bf16.msra.mxu0 0
        %4219 = vmatprep.subr.bf16.mxu0 0
        %4220 = vmatpush1.bf16.msra.mxu0 0
        %4221 = vmatprep.subr.bf16.mxu0 0
        %4222 = vmatpush1.bf16.msra.mxu0 0
        %4223 = vmatprep.mubr.bf16.mxu0 0
        %4224 = vmatmul.mubr.bf16.gmra.mrb[0].mxu0 %v2397
        %v4225 = vpop.f32.mrb[0].mxu0
        %v4226 = vadd.f32 0.0, %v4225
        %v4227 = vpop.f32.mrb[0].mxu0
        %v4228 = vadd.f32 0.0, %v4227
        %v4229 = vpop.f32.mrb[0].mxu0
        %v4230 = vadd.f32 0.0, %v4229
        %v4231 = vpop.f32.mrb[0].mxu0
        %v4232 = vadd.f32 0.0, %v4231
        %4233 = vmatprep.mubr.bf16.mxu0 0
        %4234 = vmatmul.mubr.bf16.gmra.mrb[0].mxu0 %v2398
        %v4235 = vpop.f32.mrb[0].mxu0
        %v4236 = vadd.f32 0.0, %v4235
        %v4237 = vpop.f32.mrb[0].mxu0
        %v4238 = vadd.f32 0.0, %v4237
        %v4239 = vpop.f32.mrb[0].mxu0
        %v4240 = vadd.f32 0.0, %v4239
        %v4241 = vpop.f32.mrb[0].mxu0
        %v4242 = vadd.f32 0.0, %v4241
        %4243 = vmatprep.mubr.bf16.mxu0 0
        %4244 = vmatmul.mubr.bf16.gmra.mrb[0].mxu0 %v2399
        %v4245 = vpop.f32.mrb[0].mxu0
        %v4246 = vadd.f32 0.0, %v4245
        %v4247 = vpop.f32.mrb[0].mxu0
        %v4248 = vadd.f32 0.0, %v4247
        %v4249 = vpop.f32.mrb[0].mxu0
        %v4250 = vadd.f32 0.0, %v4249
        %v4251 = vpop.f32.mrb[0].mxu0
        %v4252 = vadd.f32 0.0, %v4251
        %4253 = vmatprep.mubr.bf16.mxu0 0
        %4254 = vmatmul.mubr.bf16.gmra.mrb[0].mxu0 %v2400
        %v4255 = vpop.f32.mrb[0].mxu0
        %v4256 = vadd.f32 0.0, %v4255
        %v4257 = vpop.f32.mrb[0].mxu0
        %v4258 = vadd.f32 0.0, %v4257
        %v4259 = vpop.f32.mrb[0].mxu0
        %v4260 = vadd.f32 0.0, %v4259
        %v4261 = vpop.f32.mrb[0].mxu0
        %v4262 = vadd.f32 0.0, %v4261
        %4263 = vmatprep.mubr.bf16.mxu0 0
        %4264 = vmatmul.mubr.bf16.gmra.mrb[0].mxu0 %v2401
        %v4265 = vpop.f32.mrb[0].mxu0
        %v4266 = vadd.f32 0.0, %v4265
        %v4267 = vpop.f32.mrb[0].mxu0
        %v4268 = vadd.f32 0.0, %v4267
        %v4269 = vpop.f32.mrb[0].mxu0
        %v4270 = vadd.f32 0.0, %v4269
        %v4271 = vpop.f32.mrb[0].mxu0
        %v4272 = vadd.f32 0.0, %v4271
        %4273 = vmatprep.mubr.bf16.mxu0 0
        %4274 = vmatmul.mubr.bf16.gmra.mrb[0].mxu0 %v2402
        %v4275 = vpop.f32.mrb[0].mxu0
        %v4276 = vadd.f32 0.0, %v4275
        %v4277 = vpop.f32.mrb[0].mxu0
        %v4278 = vadd.f32 0.0, %v4277
        %v4279 = vpop.f32.mrb[0].mxu0
        %v4280 = vadd.f32 0.0, %v4279
        %v4281 = vpop.f32.mrb[0].mxu0
        %v4282 = vadd.f32 0.0, %v4281
        %4283 = vmatprep.mubr.bf16.mxu0 0
        %4284 = vmatmul.mubr.bf16.gmra.mrb[0].mxu0 %v2403
        %v4285 = vpop.f32.mrb[0].mxu0
        %v4286 = vadd.f32 0.0, %v4285
        %v4287 = vpop.f32.mrb[0].mxu0
        %v4288 = vadd.f32 0.0, %v4287
        %v4289 = vpop.f32.mrb[0].mxu0
        %v4290 = vadd.f32 0.0, %v4289
        %v4291 = vpop.f32.mrb[0].mxu0
        %v4292 = vadd.f32 0.0, %v4291
        %4293 = vmatprep.mubr.bf16.mxu0 0
        %4294 = vmatmul.mubr.bf16.gmra.mrb[0].mxu0 %v2404
        %v4295 = vpop.f32.mrb[0].mxu0
        %v4296 = vadd.f32 0.0, %v4295
        %v4297 = vpop.f32.mrb[0].mxu0
        %v4298 = vadd.f32 0.0, %v4297
        %v4299 = vpop.f32.mrb[0].mxu0
        %v4300 = vadd.f32 0.0, %v4299
        %v4301 = vpop.f32.mrb[0].mxu0
        %v4302 = vadd.f32 0.0, %v4301
        %4303 = vmatprep.mubr.bf16.mxu0 0
        %4304 = vmatmul.mubr.bf16.gmra.mrb[0].mxu0 %v2405
        %v4305 = vpop.f32.mrb[0].mxu0
        %v4306 = vadd.f32 0.0, %v4305
        %v4307 = vpop.f32.mrb[0].mxu0
        %v4308 = vadd.f32 0.0, %v4307
        %v4309 = vpop.f32.mrb[0].mxu0
        %v4310 = vadd.f32 0.0, %v4309
        %v4311 = vpop.f32.mrb[0].mxu0
        %v4312 = vadd.f32 0.0, %v4311
        %4313 = vmatprep.mubr.bf16.mxu0 0
        %4314 = vmatmul.mubr.bf16.gmra.mrb[0].mxu0 %v2406
        %v4315 = vpop.f32.mrb[0].mxu0
        %v4316 = vadd.f32 0.0, %v4315
        %v4317 = vpop.f32.mrb[0].mxu0
        %v4318 = vadd.f32 0.0, %v4317
        %v4319 = vpop.f32.mrb[0].mxu0
        %v4320 = vadd.f32 0.0, %v4319
        %v4321 = vpop.f32.mrb[0].mxu0
        %v4322 = vadd.f32 0.0, %v4321
        %4323 = vmatprep.mubr.bf16.mxu0 0
        %4324 = vmatmul.mubr.bf16.gmra.mrb[0].mxu0 %v2407
        %v4325 = vpop.f32.mrb[0].mxu0
        %v4326 = vadd.f32 0.0, %v4325
        %v4327 = vpop.f32.mrb[0].mxu0
        %v4328 = vadd.f32 0.0, %v4327
        %v4329 = vpop.f32.mrb[0].mxu0
        %v4330 = vadd.f32 0.0, %v4329
        %v4331 = vpop.f32.mrb[0].mxu0
        %v4332 = vadd.f32 0.0, %v4331
        %4333 = vmatprep.mubr.bf16.mxu0 0
        %4334 = vmatmul.mubr.bf16.gmra.mrb[0].mxu0 %v2408
        %v4335 = vpop.f32.mrb[0].mxu0
        %v4336 = vadd.f32 0.0, %v4335
        %v4337 = vpop.f32.mrb[0].mxu0
        %v4338 = vadd.f32 0.0, %v4337
        %v4339 = vpop.f32.mrb[0].mxu0
        %v4340 = vadd.f32 0.0, %v4339
        %v4341 = vpop.f32.mrb[0].mxu0
        %v4342 = vadd.f32 0.0, %v4341
        %4343 = vmatprep.mubr.bf16.mxu0 0
        %4344 = vmatmul.mubr.bf16.gmra.mrb[0].mxu0 %v2409
        %v4345 = vpop.f32.mrb[0].mxu0
        %v4346 = vadd.f32 0.0, %v4345
        %v4347 = vpop.f32.mrb[0].mxu0
        %v4348 = vadd.f32 0.0, %v4347
        %v4349 = vpop.f32.mrb[0].mxu0
        %v4350 = vadd.f32 0.0, %v4349
        %v4351 = vpop.f32.mrb[0].mxu0
        %v4352 = vadd.f32 0.0, %v4351
        %4353 = vmatprep.mubr.bf16.mxu0 0
        %4354 = vmatmul.mubr.bf16.gmra.mrb[0].mxu0 %v2410
        %v4355 = vpop.f32.mrb[0].mxu0
        %v4356 = vadd.f32 0.0, %v4355
        %v4357 = vpop.f32.mrb[0].mxu0
        %v4358 = vadd.f32 0.0, %v4357
        %v4359 = vpop.f32.mrb[0].mxu0
        %v4360 = vadd.f32 0.0, %v4359
        %v4361 = vpop.f32.mrb[0].mxu0
        %v4362 = vadd.f32 0.0, %v4361
        %4363 = vmatprep.mubr.bf16.mxu0 0
        %4364 = vmatmul.mubr.bf16.gmra.mrb[0].mxu0 %v2411
        %v4365 = vpop.f32.mrb[0].mxu0
        %v4366 = vadd.f32 0.0, %v4365
        %v4367 = vpop.f32.mrb[0].mxu0
        %v4368 = vadd.f32 0.0, %v4367
        %v4369 = vpop.f32.mrb[0].mxu0
        %v4370 = vadd.f32 0.0, %v4369
        %v4371 = vpop.f32.mrb[0].mxu0
        %v4372 = vadd.f32 0.0, %v4371
        %4373 = vmatprep.mubr.bf16.mxu0 0
        %4374 = vmatmul.mubr.bf16.gmra.mrb[0].mxu0 %v2412
        %v4375 = vpop.f32.mrb[0].mxu0
        %v4376 = vadd.f32 0.0, %v4375
        %v4377 = vpop.f32.mrb[0].mxu0
        %v4378 = vadd.f32 0.0, %v4377
        %v4379 = vpop.f32.mrb[0].mxu0
        %v4380 = vadd.f32 0.0, %v4379
        %v4381 = vpop.f32.mrb[0].mxu0
        %v4382 = vadd.f32 0.0, %v4381
        %4383 = vmatprep.mubr.bf16.mxu0 0
        %4384 = vmatmul.mubr.bf16.gmra.mrb[0].mxu0 %v2413
        %v4385 = vpop.f32.mrb[0].mxu0
        %v4386 = vadd.f32 0.0, %v4385
        %v4387 = vpop.f32.mrb[0].mxu0
        %v4388 = vadd.f32 0.0, %v4387
        %v4389 = vpop.f32.mrb[0].mxu0
        %v4390 = vadd.f32 0.0, %v4389
        %v4391 = vpop.f32.mrb[0].mxu0
        %v4392 = vadd.f32 0.0, %v4391
        %4393 = vmatprep.mubr.bf16.mxu0 0
        %4394 = vmatmul.mubr.bf16.gmra.mrb[0].mxu0 %v2414
        %v4395 = vpop.f32.mrb[0].mxu0
        %v4396 = vadd.f32 0.0, %v4395
        %v4397 = vpop.f32.mrb[0].mxu0
        %v4398 = vadd.f32 0.0, %v4397
        %v4399 = vpop.f32.mrb[0].mxu0
        %v4400 = vadd.f32 0.0, %v4399
        %v4401 = vpop.f32.mrb[0].mxu0
        %v4402 = vadd.f32 0.0, %v4401
        %4403 = vmatprep.mubr.bf16.mxu0 0
        %4404 = vmatmul.mubr.bf16.gmra.mrb[0].mxu0 %v2415
        %v4405 = vpop.f32.mrb[0].mxu0
        %v4406 = vadd.f32 0.0, %v4405
        %v4407 = vpop.f32.mrb[0].mxu0
        %v4408 = vadd.f32 0.0, %v4407
        %v4409 = vpop.f32.mrb[0].mxu0
        %v4410 = vadd.f32 0.0, %v4409
        %v4411 = vpop.f32.mrb[0].mxu0
        %v4412 = vadd.f32 0.0, %v4411
        %4413 = vmatprep.mubr.bf16.mxu0 0
        %4414 = vmatmul.mubr.bf16.gmra.mrb[0].mxu0 %v2416
        %v4415 = vpop.f32.mrb[0].mxu0
        %v4416 = vadd.f32 0.0, %v4415
        %v4417 = vpop.f32.mrb[0].mxu0
        %v4418 = vadd.f32 0.0, %v4417
        %v4419 = vpop.f32.mrb[0].mxu0
        %v4420 = vadd.f32 0.0, %v4419
        %v4421 = vpop.f32.mrb[0].mxu0
        %v4422 = vadd.f32 0.0, %v4421
        %4423 = vmatprep.mubr.bf16.mxu0 0
        %4424 = vmatmul.mubr.bf16.gmra.mrb[0].mxu0 %v2417
        %v4425 = vpop.f32.mrb[0].mxu0
        %v4426 = vadd.f32 0.0, %v4425
        %v4427 = vpop.f32.mrb[0].mxu0
        %v4428 = vadd.f32 0.0, %v4427
        %v4429 = vpop.f32.mrb[0].mxu0
        %v4430 = vadd.f32 0.0, %v4429
        %v4431 = vpop.f32.mrb[0].mxu0
        %v4432 = vadd.f32 0.0, %v4431
        %4433 = vmatprep.mubr.bf16.mxu0 0
        %4434 = vmatmul.mubr.bf16.gmra.mrb[0].mxu0 %v2418
        %v4435 = vpop.f32.mrb[0].mxu0
        %v4436 = vadd.f32 0.0, %v4435
        %v4437 = vpop.f32.mrb[0].mxu0
        %v4438 = vadd.f32 0.0, %v4437
        %v4439 = vpop.f32.mrb[0].mxu0
        %v4440 = vadd.f32 0.0, %v4439
        %v4441 = vpop.f32.mrb[0].mxu0
        %v4442 = vadd.f32 0.0, %v4441
        %4443 = vmatprep.mubr.bf16.mxu0 0
        %4444 = vmatmul.mubr.bf16.gmra.mrb[0].mxu0 %v2419
        %v4445 = vpop.f32.mrb[0].mxu0
        %v4446 = vadd.f32 0.0, %v4445
        %v4447 = vpop.f32.mrb[0].mxu0
        %v4448 = vadd.f32 0.0, %v4447
        %v4449 = vpop.f32.mrb[0].mxu0
        %v4450 = vadd.f32 0.0, %v4449
        %v4451 = vpop.f32.mrb[0].mxu0
        %v4452 = vadd.f32 0.0, %v4451
        %4453 = vmatprep.mubr.bf16.mxu0 0
        %4454 = vmatmul.mubr.bf16.gmra.mrb[0].mxu0 %v2420
        %v4455 = vpop.f32.mrb[0].mxu0
        %v4456 = vadd.f32 0.0, %v4455
        %v4457 = vpop.f32.mrb[0].mxu0
        %v4458 = vadd.f32 0.0, %v4457
        %v4459 = vpop.f32.mrb[0].mxu0
        %v4460 = vadd.f32 0.0, %v4459
        %v4461 = vpop.f32.mrb[0].mxu0
        %v4462 = vadd.f32 0.0, %v4461
        %4463 = vmatprep.mubr.bf16.mxu0 0
        %4464 = vmatmul.mubr.bf16.gmra.mrb[0].mxu0 %v2421
        %v4465 = vpop.f32.mrb[0].mxu0
        %v4466 = vadd.f32 0.0, %v4465
        %v4467 = vpop.f32.mrb[0].mxu0
        %v4468 = vadd.f32 0.0, %v4467
        %v4469 = vpop.f32.mrb[0].mxu0
        %v4470 = vadd.f32 0.0, %v4469
        %v4471 = vpop.f32.mrb[0].mxu0
        %v4472 = vadd.f32 0.0, %v4471
        %4473 = vmatprep.mubr.bf16.mxu0 0
        %4474 = vmatmul.mubr.bf16.gmra.mrb[0].mxu0 %v2422
        %v4475 = vpop.f32.mrb[0].mxu0
        %v4476 = vadd.f32 0.0, %v4475
        %v4477 = vpop.f32.mrb[0].mxu0
        %v4478 = vadd.f32 0.0, %v4477
        %v4479 = vpop.f32.mrb[0].mxu0
        %v4480 = vadd.f32 0.0, %v4479
        %v4481 = vpop.f32.mrb[0].mxu0
        %v4482 = vadd.f32 0.0, %v4481
        %4483 = vmatprep.mubr.bf16.mxu0 0
        %4484 = vmatmul.mubr.bf16.gmra.mrb[0].mxu0 %v2423
        %v4485 = vpop.f32.mrb[0].mxu0
        %v4486 = vadd.f32 0.0, %v4485
        %v4487 = vpop.f32.mrb[0].mxu0
        %v4488 = vadd.f32 0.0, %v4487
        %v4489 = vpop.f32.mrb[0].mxu0
        %v4490 = vadd.f32 0.0, %v4489
        %v4491 = vpop.f32.mrb[0].mxu0
        %v4492 = vadd.f32 0.0, %v4491
        %4493 = vmatprep.mubr.bf16.mxu0 0
        %4494 = vmatmul.mubr.bf16.gmra.mrb[0].mxu0 %v2424
        %v4495 = vpop.f32.mrb[0].mxu0
        %v4496 = vadd.f32 0.0, %v4495
        %v4497 = vpop.f32.mrb[0].mxu0
        %v4498 = vadd.f32 0.0, %v4497
        %v4499 = vpop.f32.mrb[0].mxu0
        %v4500 = vadd.f32 0.0, %v4499
        %v4501 = vpop.f32.mrb[0].mxu0
        %v4502 = vadd.f32 0.0, %v4501
        %4503 = vmatprep.mubr.bf16.mxu0 0
        %4504 = vmatmul.mubr.bf16.gmra.mrb[0].mxu0 %v2425
        %v4505 = vpop.f32.mrb[0].mxu0
        %v4506 = vadd.f32 0.0, %v4505
        %v4507 = vpop.f32.mrb[0].mxu0
        %v4508 = vadd.f32 0.0, %v4507
        %v4509 = vpop.f32.mrb[0].mxu0
        %v4510 = vadd.f32 0.0, %v4509
        %v4511 = vpop.f32.mrb[0].mxu0
        %v4512 = vadd.f32 0.0, %v4511
        %4513 = vmatprep.mubr.bf16.mxu0 0
        %4514 = vmatmul.mubr.bf16.gmra.mrb[0].mxu0 %v2426
        %v4515 = vpop.f32.mrb[0].mxu0
        %v4516 = vadd.f32 0.0, %v4515
        %v4517 = vpop.f32.mrb[0].mxu0
        %v4518 = vadd.f32 0.0, %v4517
        %v4519 = vpop.f32.mrb[0].mxu0
        %v4520 = vadd.f32 0.0, %v4519
        %v4521 = vpop.f32.mrb[0].mxu0
        %v4522 = vadd.f32 0.0, %v4521
        %4523 = vmatprep.mubr.bf16.mxu0 0
        %4524 = vmatmul.mubr.bf16.gmra.mrb[0].mxu0 %v2427
        %v4525 = vpop.f32.mrb[0].mxu0
        %v4526 = vadd.f32 0.0, %v4525
        %v4527 = vpop.f32.mrb[0].mxu0
        %v4528 = vadd.f32 0.0, %v4527
        %v4529 = vpop.f32.mrb[0].mxu0
        %v4530 = vadd.f32 0.0, %v4529
        %v4531 = vpop.f32.mrb[0].mxu0
        %v4532 = vadd.f32 0.0, %v4531
        %4533 = vmatprep.mubr.bf16.mxu0 0
        %4534 = vmatmul.mubr.bf16.gmra.mrb[0].mxu0 %v2428
        %v4535 = vpop.f32.mrb[0].mxu0
        %v4536 = vadd.f32 0.0, %v4535
        %v4537 = vpop.f32.mrb[0].mxu0
        %v4538 = vadd.f32 0.0, %v4537
        %v4539 = vpop.f32.mrb[0].mxu0
        %v4540 = vadd.f32 0.0, %v4539
        %v4541 = vpop.f32.mrb[0].mxu0
        %v4542 = vadd.f32 0.0, %v4541
        %4543 = vmatprep.mubr.bf16.mxu0 0
        %4544 = vmatmul.mubr.bf16.gmra.mrb[0].mxu0 %v2429
        %v4545 = vpop.f32.mrb[0].mxu0
        %v4546 = vadd.f32 0.0, %v4545
        %v4547 = vpop.f32.mrb[0].mxu0
        %v4548 = vadd.f32 0.0, %v4547
        %v4549 = vpop.f32.mrb[0].mxu0
        %v4550 = vadd.f32 0.0, %v4549
        %v4551 = vpop.f32.mrb[0].mxu0
        %v4552 = vadd.f32 0.0, %v4551
        %4553 = vmatprep.mubr.bf16.mxu0 0
        %4554 = vmatmul.mubr.bf16.gmra.mrb[0].mxu0 %v2430
        %v4555 = vpop.f32.mrb[0].mxu0
        %v4556 = vadd.f32 0.0, %v4555
        %v4557 = vpop.f32.mrb[0].mxu0
        %v4558 = vadd.f32 0.0, %v4557
        %v4559 = vpop.f32.mrb[0].mxu0
        %v4560 = vadd.f32 0.0, %v4559
        %v4561 = vpop.f32.mrb[0].mxu0
        %v4562 = vadd.f32 0.0, %v4561
        %4563 = vmatprep.mubr.bf16.mxu0 0
        %4564 = vmatmul.mubr.bf16.gmra.mrb[0].mxu0 %v2431
        %v4565 = vpop.f32.mrb[0].mxu0
        %v4566 = vadd.f32 0.0, %v4565
        %v4567 = vpop.f32.mrb[0].mxu0
        %v4568 = vadd.f32 0.0, %v4567
        %v4569 = vpop.f32.mrb[0].mxu0
        %v4570 = vadd.f32 0.0, %v4569
        %v4571 = vpop.f32.mrb[0].mxu0
        %v4572 = vadd.f32 0.0, %v4571
        %4573 = vmatprep.mubr.bf16.mxu0 0
        %4574 = vmatmul.mubr.bf16.gmra.mrb[0].mxu0 %v2432
        %v4575 = vpop.f32.mrb[0].mxu0
        %v4576 = vadd.f32 0.0, %v4575
        %v4577 = vpop.f32.mrb[0].mxu0
        %v4578 = vadd.f32 0.0, %v4577
        %v4579 = vpop.f32.mrb[0].mxu0
        %v4580 = vadd.f32 0.0, %v4579
        %v4581 = vpop.f32.mrb[0].mxu0
        %v4582 = vadd.f32 0.0, %v4581
        %4583 = vmatprep.mubr.bf16.mxu0 0
        %4584 = vmatmul.mubr.bf16.gmra.mrb[0].mxu0 %v2433
        %v4585 = vpop.f32.mrb[0].mxu0
        %v4586 = vadd.f32 0.0, %v4585
        %v4587 = vpop.f32.mrb[0].mxu0
        %v4588 = vadd.f32 0.0, %v4587
        %v4589 = vpop.f32.mrb[0].mxu0
        %v4590 = vadd.f32 0.0, %v4589
        %v4591 = vpop.f32.mrb[0].mxu0
        %v4592 = vadd.f32 0.0, %v4591
        %4593 = vmatprep.mubr.bf16.mxu0 0
        %4594 = vmatmul.mubr.bf16.gmra.mrb[0].mxu0 %v2434
        %v4595 = vpop.f32.mrb[0].mxu0
        %v4596 = vadd.f32 0.0, %v4595
        %v4597 = vpop.f32.mrb[0].mxu0
        %v4598 = vadd.f32 0.0, %v4597
        %v4599 = vpop.f32.mrb[0].mxu0
        %v4600 = vadd.f32 0.0, %v4599
        %v4601 = vpop.f32.mrb[0].mxu0
        %v4602 = vadd.f32 0.0, %v4601
        %4603 = vmatprep.mubr.bf16.mxu0 0
        %4604 = vmatmul.mubr.bf16.gmra.mrb[0].mxu0 %v2435
        %v4605 = vpop.f32.mrb[0].mxu0
        %v4606 = vadd.f32 0.0, %v4605
        %v4607 = vpop.f32.mrb[0].mxu0
        %v4608 = vadd.f32 0.0, %v4607
        %v4609 = vpop.f32.mrb[0].mxu0
        %v4610 = vadd.f32 0.0, %v4609
        %v4611 = vpop.f32.mrb[0].mxu0
        %v4612 = vadd.f32 0.0, %v4611
        %4613 = vmatprep.mubr.bf16.mxu0 0
        %4614 = vmatmul.mubr.bf16.gmra.mrb[0].mxu0 %v2436
        %v4615 = vpop.f32.mrb[0].mxu0
        %v4616 = vadd.f32 0.0, %v4615
        %v4617 = vpop.f32.mrb[0].mxu0
        %v4618 = vadd.f32 0.0, %v4617
        %v4619 = vpop.f32.mrb[0].mxu0
        %v4620 = vadd.f32 0.0, %v4619
        %v4621 = vpop.f32.mrb[0].mxu0
        %v4622 = vadd.f32 0.0, %v4621
        %4623 = vmatprep.mubr.bf16.mxu0 0
        %4624 = vmatmul.mubr.bf16.gmra.mrb[0].mxu0 %v2437
        %v4625 = vpop.f32.mrb[0].mxu0
        %v4626 = vadd.f32 0.0, %v4625
        %v4627 = vpop.f32.mrb[0].mxu0
        %v4628 = vadd.f32 0.0, %v4627
        %v4629 = vpop.f32.mrb[0].mxu0
        %v4630 = vadd.f32 0.0, %v4629
        %v4631 = vpop.f32.mrb[0].mxu0
        %v4632 = vadd.f32 0.0, %v4631
        %4633 = vmatprep.mubr.bf16.mxu0 0
        %4634 = vmatmul.mubr.bf16.gmra.mrb[0].mxu0 %v2438
        %v4635 = vpop.f32.mrb[0].mxu0
        %v4636 = vadd.f32 0.0, %v4635
        %v4637 = vpop.f32.mrb[0].mxu0
        %v4638 = vadd.f32 0.0, %v4637
        %v4639 = vpop.f32.mrb[0].mxu0
        %v4640 = vadd.f32 0.0, %v4639
        %v4641 = vpop.f32.mrb[0].mxu0
        %v4642 = vadd.f32 0.0, %v4641
        %4643 = vmatprep.mubr.bf16.mxu0 0
        %4644 = vmatmul.mubr.bf16.gmra.mrb[0].mxu0 %v2439
        %v4645 = vpop.f32.mrb[0].mxu0
        %v4646 = vadd.f32 0.0, %v4645
        %v4647 = vpop.f32.mrb[0].mxu0
        %v4648 = vadd.f32 0.0, %v4647
        %v4649 = vpop.f32.mrb[0].mxu0
        %v4650 = vadd.f32 0.0, %v4649
        %v4651 = vpop.f32.mrb[0].mxu0
        %v4652 = vadd.f32 0.0, %v4651
        %4653 = vmatprep.mubr.bf16.mxu0 0
        %4654 = vmatmul.mubr.bf16.gmra.mrb[0].mxu0 %v2440
        %v4655 = vpop.f32.mrb[0].mxu0
        %v4656 = vadd.f32 0.0, %v4655
        %v4657 = vpop.f32.mrb[0].mxu0
        %v4658 = vadd.f32 0.0, %v4657
        %v4659 = vpop.f32.mrb[0].mxu0
        %v4660 = vadd.f32 0.0, %v4659
        %v4661 = vpop.f32.mrb[0].mxu0
        %v4662 = vadd.f32 0.0, %v4661
        %4663 = vmatprep.mubr.bf16.mxu0 0
        %4664 = vmatmul.mubr.bf16.gmra.mrb[0].mxu0 %v2441
        %v4665 = vpop.f32.mrb[0].mxu0
        %v4666 = vadd.f32 0.0, %v4665
        %v4667 = vpop.f32.mrb[0].mxu0
        %v4668 = vadd.f32 0.0, %v4667
        %v4669 = vpop.f32.mrb[0].mxu0
        %v4670 = vadd.f32 0.0, %v4669
        %v4671 = vpop.f32.mrb[0].mxu0
        %v4672 = vadd.f32 0.0, %v4671
        %4673 = vmatprep.mubr.bf16.mxu0 0
        %4674 = vmatmul.mubr.bf16.gmra.mrb[0].mxu0 %v2442
        %v4675 = vpop.f32.mrb[0].mxu0
        %v4676 = vadd.f32 0.0, %v4675
        %v4677 = vpop.f32.mrb[0].mxu0
        %v4678 = vadd.f32 0.0, %v4677
        %v4679 = vpop.f32.mrb[0].mxu0
        %v4680 = vadd.f32 0.0, %v4679
        %v4681 = vpop.f32.mrb[0].mxu0
        %v4682 = vadd.f32 0.0, %v4681
        %4683 = vmatprep.mubr.bf16.mxu0 0
        %4684 = vmatmul.mubr.bf16.gmra.mrb[0].mxu0 %v2443
        %v4685 = vpop.f32.mrb[0].mxu0
        %v4686 = vadd.f32 0.0, %v4685
        %v4687 = vpop.f32.mrb[0].mxu0
        %v4688 = vadd.f32 0.0, %v4687
        %v4689 = vpop.f32.mrb[0].mxu0
        %v4690 = vadd.f32 0.0, %v4689
        %v4691 = vpop.f32.mrb[0].mxu0
        %v4692 = vadd.f32 0.0, %v4691
        %4693 = vmatprep.mubr.bf16.mxu0 0
        %4694 = vmatmul.mubr.bf16.gmra.mrb[0].mxu0 %v2444
        %v4695 = vpop.f32.mrb[0].mxu0
        %v4696 = vadd.f32 0.0, %v4695
        %v4697 = vpop.f32.mrb[0].mxu0
        %v4698 = vadd.f32 0.0, %v4697
        %v4699 = vpop.f32.mrb[0].mxu0
        %v4700 = vadd.f32 0.0, %v4699
        %v4701 = vpop.f32.mrb[0].mxu0
        %v4702 = vadd.f32 0.0, %v4701
        %4703 = vmatprep.mubr.bf16.mxu0 0
        %4704 = vmatmul.mubr.bf16.gmra.mrb[0].mxu0 %v2445
        %v4705 = vpop.f32.mrb[0].mxu0
        %v4706 = vadd.f32 0.0, %v4705
        %v4707 = vpop.f32.mrb[0].mxu0
        %v4708 = vadd.f32 0.0, %v4707
        %v4709 = vpop.f32.mrb[0].mxu0
        %v4710 = vadd.f32 0.0, %v4709
        %v4711 = vpop.f32.mrb[0].mxu0
        %v4712 = vadd.f32 0.0, %v4711
        %4713 = vmatprep.mubr.bf16.mxu0 0
        %4714 = vmatmul.mubr.bf16.gmra.mrb[0].mxu0 %v2446
        %v4715 = vpop.f32.mrb[0].mxu0
        %v4716 = vadd.f32 0.0, %v4715
        %v4717 = vpop.f32.mrb[0].mxu0
        %v4718 = vadd.f32 0.0, %v4717
        %v4719 = vpop.f32.mrb[0].mxu0
        %v4720 = vadd.f32 0.0, %v4719
        %v4721 = vpop.f32.mrb[0].mxu0
        %v4722 = vadd.f32 0.0, %v4721
        %4723 = vmatprep.mubr.bf16.mxu0 0
        %4724 = vmatmul.mubr.bf16.gmra.mrb[0].mxu0 %v2447
        %v4725 = vpop.f32.mrb[0].mxu0
        %v4726 = vadd.f32 0.0, %v4725
        %v4727 = vpop.f32.mrb[0].mxu0
        %v4728 = vadd.f32 0.0, %v4727
        %v4729 = vpop.f32.mrb[0].mxu0
        %v4730 = vadd.f32 0.0, %v4729
        %v4731 = vpop.f32.mrb[0].mxu0
        %v4732 = vadd.f32 0.0, %v4731
        %4733 = vmatprep.mubr.bf16.mxu0 0
        %4734 = vmatmul.mubr.bf16.gmra.mrb[0].mxu0 %v2448
        %v4735 = vpop.f32.mrb[0].mxu0
        %v4736 = vadd.f32 0.0, %v4735
        %v4737 = vpop.f32.mrb[0].mxu0
        %v4738 = vadd.f32 0.0, %v4737
        %v4739 = vpop.f32.mrb[0].mxu0
        %v4740 = vadd.f32 0.0, %v4739
        %v4741 = vpop.f32.mrb[0].mxu0
        %v4742 = vadd.f32 0.0, %v4741
        %4743 = vmatprep.mubr.bf16.mxu0 0
        %4744 = vmatmul.mubr.bf16.gmra.mrb[0].mxu0 %v2449
        %v4745 = vpop.f32.mrb[0].mxu0
        %v4746 = vadd.f32 0.0, %v4745
        %v4747 = vpop.f32.mrb[0].mxu0
        %v4748 = vadd.f32 0.0, %v4747
        %v4749 = vpop.f32.mrb[0].mxu0
        %v4750 = vadd.f32 0.0, %v4749
        %v4751 = vpop.f32.mrb[0].mxu0
        %v4752 = vadd.f32 0.0, %v4751
        %4753 = vmatprep.mubr.bf16.mxu0 0
        %4754 = vmatmul.mubr.bf16.gmra.mrb[0].mxu0 %v2450
        %v4755 = vpop.f32.mrb[0].mxu0
        %v4756 = vadd.f32 0.0, %v4755
        %v4757 = vpop.f32.mrb[0].mxu0
        %v4758 = vadd.f32 0.0, %v4757
        %v4759 = vpop.f32.mrb[0].mxu0
        %v4760 = vadd.f32 0.0, %v4759
        %v4761 = vpop.f32.mrb[0].mxu0
        %v4762 = vadd.f32 0.0, %v4761
        %4763 = vmatprep.mubr.bf16.mxu0 0
        %4764 = vmatmul.mubr.bf16.gmra.mrb[0].mxu0 %v2451
        %v4765 = vpop.f32.mrb[0].mxu0
        %v4766 = vadd.f32 0.0, %v4765
        %v4767 = vpop.f32.mrb[0].mxu0
        %v4768 = vadd.f32 0.0, %v4767
        %v4769 = vpop.f32.mrb[0].mxu0
        %v4770 = vadd.f32 0.0, %v4769
        %v4771 = vpop.f32.mrb[0].mxu0
        %v4772 = vadd.f32 0.0, %v4771
        %4773 = vmatprep.mubr.bf16.mxu0 0
        %4774 = vmatmul.mubr.bf16.gmra.mrb[0].mxu0 %v2452
        %v4775 = vpop.f32.mrb[0].mxu0
        %v4776 = vadd.f32 0.0, %v4775
        %v4777 = vpop.f32.mrb[0].mxu0
        %v4778 = vadd.f32 0.0, %v4777
        %v4779 = vpop.f32.mrb[0].mxu0
        %v4780 = vadd.f32 0.0, %v4779
        %v4781 = vpop.f32.mrb[0].mxu0
        %v4782 = vadd.f32 0.0, %v4781
        %4783 = vmatprep.mubr.bf16.mxu0 0
        %4784 = vmatmul.mubr.bf16.gmra.mrb[0].mxu0 %v2453
        %v4785 = vpop.f32.mrb[0].mxu0
        %v4786 = vadd.f32 0.0, %v4785
        %v4787 = vpop.f32.mrb[0].mxu0
        %v4788 = vadd.f32 0.0, %v4787
        %v4789 = vpop.f32.mrb[0].mxu0
        %v4790 = vadd.f32 0.0, %v4789
        %v4791 = vpop.f32.mrb[0].mxu0
        %v4792 = vadd.f32 0.0, %v4791
        %4793 = vmatprep.mubr.bf16.mxu0 0
        %4794 = vmatmul.mubr.bf16.gmra.mrb[0].mxu0 %v2454
        %v4795 = vpop.f32.mrb[0].mxu0
        %v4796 = vadd.f32 0.0, %v4795
        %v4797 = vpop.f32.mrb[0].mxu0
        %v4798 = vadd.f32 0.0, %v4797
        %v4799 = vpop.f32.mrb[0].mxu0
        %v4800 = vadd.f32 0.0, %v4799
        %v4801 = vpop.f32.mrb[0].mxu0
        %v4802 = vadd.f32 0.0, %v4801
        %4803 = vmatprep.mubr.bf16.mxu0 0
        %4804 = vmatmul.mubr.bf16.gmra.mrb[0].mxu0 %v2455
        %v4805 = vpop.f32.mrb[0].mxu0
        %v4806 = vadd.f32 0.0, %v4805
        %v4807 = vpop.f32.mrb[0].mxu0
        %v4808 = vadd.f32 0.0, %v4807
        %v4809 = vpop.f32.mrb[0].mxu0
        %v4810 = vadd.f32 0.0, %v4809
        %v4811 = vpop.f32.mrb[0].mxu0
        %v4812 = vadd.f32 0.0, %v4811
        %4813 = vmatprep.mubr.bf16.mxu0 0
        %4814 = vmatmul.mubr.bf16.gmra.mrb[0].mxu0 %v2456
        %v4815 = vpop.f32.mrb[0].mxu0
        %v4816 = vadd.f32 0.0, %v4815
        %v4817 = vpop.f32.mrb[0].mxu0
        %v4818 = vadd.f32 0.0, %v4817
        %v4819 = vpop.f32.mrb[0].mxu0
        %v4820 = vadd.f32 0.0, %v4819
        %v4821 = vpop.f32.mrb[0].mxu0
        %v4822 = vadd.f32 0.0, %v4821
        %4823 = vmatprep.mubr.bf16.mxu0 0
        %4824 = vmatmul.mubr.bf16.gmra.mrb[0].mxu0 %v2457
        %v4825 = vpop.f32.mrb[0].mxu0
        %v4826 = vadd.f32 0.0, %v4825
        %v4827 = vpop.f32.mrb[0].mxu0
        %v4828 = vadd.f32 0.0, %v4827
        %v4829 = vpop.f32.mrb[0].mxu0
        %v4830 = vadd.f32 0.0, %v4829
        %v4831 = vpop.f32.mrb[0].mxu0
        %v4832 = vadd.f32 0.0, %v4831
        %4833 = vmatprep.mubr.bf16.mxu0 0
        %4834 = vmatmul.mubr.bf16.gmra.mrb[0].mxu0 %v2458
        %v4835 = vpop.f32.mrb[0].mxu0
        %v4836 = vadd.f32 0.0, %v4835
        %v4837 = vpop.f32.mrb[0].mxu0
        %v4838 = vadd.f32 0.0, %v4837
        %v4839 = vpop.f32.mrb[0].mxu0
        %v4840 = vadd.f32 0.0, %v4839
        %v4841 = vpop.f32.mrb[0].mxu0
        %v4842 = vadd.f32 0.0, %v4841
        %4843 = vmatprep.mubr.bf16.mxu0 0
        %4844 = vmatmul.mubr.bf16.gmra.mrb[0].mxu0 %v2459
        %v4845 = vpop.f32.mrb[0].mxu0
        %v4846 = vadd.f32 0.0, %v4845
        %v4847 = vpop.f32.mrb[0].mxu0
        %v4848 = vadd.f32 0.0, %v4847
        %v4849 = vpop.f32.mrb[0].mxu0
        %v4850 = vadd.f32 0.0, %v4849
        %v4851 = vpop.f32.mrb[0].mxu0
        %v4852 = vadd.f32 0.0, %v4851
        %4853 = vmatprep.mubr.bf16.mxu0 0
        %4854 = vmatmul.mubr.bf16.gmra.mrb[0].mxu0 %v2460
        %v4855 = vpop.f32.mrb[0].mxu0
        %v4856 = vadd.f32 0.0, %v4855
        %v4857 = vpop.f32.mrb[0].mxu0
        %v4858 = vadd.f32 0.0, %v4857
        %v4859 = vpop.f32.mrb[0].mxu0
        %v4860 = vadd.f32 0.0, %v4859
        %v4861 = vpop.f32.mrb[0].mxu0
        %v4862 = vadd.f32 0.0, %v4861
        %4863 = vdwg.mxu0
        %4864 = vmatprep.subr.bf16.mxu0 %v2724
        %4865 = vmatpush1.bf16.msra.mxu0 %v2723
        %4866 = vmatprep.subr.bf16.mxu0 %v2732
        %4867 = vmatpush1.bf16.msra.mxu0 %v2731
        %4868 = vmatprep.subr.bf16.mxu0 %v2740
        %4869 = vmatpush1.bf16.msra.mxu0 %v2739
        %4870 = vmatprep.subr.bf16.mxu0 %v2748
        %4871 = vmatpush1.bf16.msra.mxu0 %v2747
        %4872 = vmatprep.subr.bf16.mxu0 %v2756
        %4873 = vmatpush1.bf16.msra.mxu0 %v2755
        %4874 = vmatprep.subr.bf16.mxu0 %v2764
        %4875 = vmatpush1.bf16.msra.mxu0 %v2763
        %4876 = vmatprep.subr.bf16.mxu0 %v2772
        %4877 = vmatpush1.bf16.msra.mxu0 %v2771
        %4878 = vmatprep.subr.bf16.mxu0 %v2780
        %4879 = vmatpush1.bf16.msra.mxu0 %v2779
        %4880 = vmatprep.subr.bf16.mxu0 0
        %4881 = vmatpush1.bf16.msra.mxu0 0
        %4882 = vmatprep.subr.bf16.mxu0 0
        %4883 = vmatpush1.bf16.msra.mxu0 0
        %4884 = vmatprep.subr.bf16.mxu0 0
        %4885 = vmatpush1.bf16.msra.mxu0 0
        %4886 = vmatprep.subr.bf16.mxu0 0
        %4887 = vmatpush1.bf16.msra.mxu0 0
        %4888 = vmatprep.subr.bf16.mxu0 0
        %4889 = vmatpush1.bf16.msra.mxu0 0
        %4890 = vmatprep.subr.bf16.mxu0 0
        %4891 = vmatpush1.bf16.msra.mxu0 0
        %4892 = vmatprep.subr.bf16.mxu0 0
        %4893 = vmatpush1.bf16.msra.mxu0 0
        %4894 = vmatprep.subr.bf16.mxu0 0
        %4895 = vmatpush1.bf16.msra.mxu0 0
        %4896 = vmatprep.mubr.bf16.mxu0 0
        %4897 = vmatmul.mubr.bf16.gmra.mrb[0].mxu0 %v2397
        %v4898 = vpop.f32.mrb[0].mxu0
        %v4899 = vadd.f32 0.0, %v4898
        %v4900 = vpop.f32.mrb[0].mxu0
        %v4901 = vadd.f32 0.0, %v4900
        %v4902 = vpop.f32.mrb[0].mxu0
        %v4903 = vadd.f32 0.0, %v4902
        %v4904 = vpop.f32.mrb[0].mxu0
        %v4905 = vadd.f32 0.0, %v4904
        %4906 = vmatprep.mubr.bf16.mxu0 0
        %4907 = vmatmul.mubr.bf16.gmra.mrb[0].mxu0 %v2398
        %v4908 = vpop.f32.mrb[0].mxu0
        %v4909 = vadd.f32 0.0, %v4908
        %v4910 = vpop.f32.mrb[0].mxu0
        %v4911 = vadd.f32 0.0, %v4910
        %v4912 = vpop.f32.mrb[0].mxu0
        %v4913 = vadd.f32 0.0, %v4912
        %v4914 = vpop.f32.mrb[0].mxu0
        %v4915 = vadd.f32 0.0, %v4914
        %4916 = vmatprep.mubr.bf16.mxu0 0
        %4917 = vmatmul.mubr.bf16.gmra.mrb[0].mxu0 %v2399
        %v4918 = vpop.f32.mrb[0].mxu0
        %v4919 = vadd.f32 0.0, %v4918
        %v4920 = vpop.f32.mrb[0].mxu0
        %v4921 = vadd.f32 0.0, %v4920
        %v4922 = vpop.f32.mrb[0].mxu0
        %v4923 = vadd.f32 0.0, %v4922
        %v4924 = vpop.f32.mrb[0].mxu0
        %v4925 = vadd.f32 0.0, %v4924
        %4926 = vmatprep.mubr.bf16.mxu0 0
        %4927 = vmatmul.mubr.bf16.gmra.mrb[0].mxu0 %v2400
        %v4928 = vpop.f32.mrb[0].mxu0
        %v4929 = vadd.f32 0.0, %v4928
        %v4930 = vpop.f32.mrb[0].mxu0
        %v4931 = vadd.f32 0.0, %v4930
        %v4932 = vpop.f32.mrb[0].mxu0
        %v4933 = vadd.f32 0.0, %v4932
        %v4934 = vpop.f32.mrb[0].mxu0
        %v4935 = vadd.f32 0.0, %v4934
        %4936 = vmatprep.mubr.bf16.mxu0 0
        %4937 = vmatmul.mubr.bf16.gmra.mrb[0].mxu0 %v2401
        %v4938 = vpop.f32.mrb[0].mxu0
        %v4939 = vadd.f32 0.0, %v4938
        %v4940 = vpop.f32.mrb[0].mxu0
        %v4941 = vadd.f32 0.0, %v4940
        %v4942 = vpop.f32.mrb[0].mxu0
        %v4943 = vadd.f32 0.0, %v4942
        %v4944 = vpop.f32.mrb[0].mxu0
        %v4945 = vadd.f32 0.0, %v4944
        %4946 = vmatprep.mubr.bf16.mxu0 0
        %4947 = vmatmul.mubr.bf16.gmra.mrb[0].mxu0 %v2402
        %v4948 = vpop.f32.mrb[0].mxu0
        %v4949 = vadd.f32 0.0, %v4948
        %v4950 = vpop.f32.mrb[0].mxu0
        %v4951 = vadd.f32 0.0, %v4950
        %v4952 = vpop.f32.mrb[0].mxu0
        %v4953 = vadd.f32 0.0, %v4952
        %v4954 = vpop.f32.mrb[0].mxu0
        %v4955 = vadd.f32 0.0, %v4954
        %4956 = vmatprep.mubr.bf16.mxu0 0
        %4957 = vmatmul.mubr.bf16.gmra.mrb[0].mxu0 %v2403
        %v4958 = vpop.f32.mrb[0].mxu0
        %v4959 = vadd.f32 0.0, %v4958
        %v4960 = vpop.f32.mrb[0].mxu0
        %v4961 = vadd.f32 0.0, %v4960
        %v4962 = vpop.f32.mrb[0].mxu0
        %v4963 = vadd.f32 0.0, %v4962
        %v4964 = vpop.f32.mrb[0].mxu0
        %v4965 = vadd.f32 0.0, %v4964
        %4966 = vmatprep.mubr.bf16.mxu0 0
        %4967 = vmatmul.mubr.bf16.gmra.mrb[0].mxu0 %v2404
        %v4968 = vpop.f32.mrb[0].mxu0
        %v4969 = vadd.f32 0.0, %v4968
        %v4970 = vpop.f32.mrb[0].mxu0
        %v4971 = vadd.f32 0.0, %v4970
        %v4972 = vpop.f32.mrb[0].mxu0
        %v4973 = vadd.f32 0.0, %v4972
        %v4974 = vpop.f32.mrb[0].mxu0
        %v4975 = vadd.f32 0.0, %v4974
        %4976 = vmatprep.mubr.bf16.mxu0 0
        %4977 = vmatmul.mubr.bf16.gmra.mrb[0].mxu0 %v2405
        %v4978 = vpop.f32.mrb[0].mxu0
        %v4979 = vadd.f32 0.0, %v4978
        %v4980 = vpop.f32.mrb[0].mxu0
        %v4981 = vadd.f32 0.0, %v4980
        %v4982 = vpop.f32.mrb[0].mxu0
        %v4983 = vadd.f32 0.0, %v4982
        %v4984 = vpop.f32.mrb[0].mxu0
        %v4985 = vadd.f32 0.0, %v4984
        %4986 = vmatprep.mubr.bf16.mxu0 0
        %4987 = vmatmul.mubr.bf16.gmra.mrb[0].mxu0 %v2406
        %v4988 = vpop.f32.mrb[0].mxu0
        %v4989 = vadd.f32 0.0, %v4988
        %v4990 = vpop.f32.mrb[0].mxu0
        %v4991 = vadd.f32 0.0, %v4990
        %v4992 = vpop.f32.mrb[0].mxu0
        %v4993 = vadd.f32 0.0, %v4992
        %v4994 = vpop.f32.mrb[0].mxu0
        %v4995 = vadd.f32 0.0, %v4994
        %4996 = vmatprep.mubr.bf16.mxu0 0
        %4997 = vmatmul.mubr.bf16.gmra.mrb[0].mxu0 %v2407
        %v4998 = vpop.f32.mrb[0].mxu0
        %v4999 = vadd.f32 0.0, %v4998
        %v5000 = vpop.f32.mrb[0].mxu0
        %v5001 = vadd.f32 0.0, %v5000
        %v5002 = vpop.f32.mrb[0].mxu0
        %v5003 = vadd.f32 0.0, %v5002
        %v5004 = vpop.f32.mrb[0].mxu0
        %v5005 = vadd.f32 0.0, %v5004
        %5006 = vmatprep.mubr.bf16.mxu0 0
        %5007 = vmatmul.mubr.bf16.gmra.mrb[0].mxu0 %v2408
        %v5008 = vpop.f32.mrb[0].mxu0
        %v5009 = vadd.f32 0.0, %v5008
        %v5010 = vpop.f32.mrb[0].mxu0
        %v5011 = vadd.f32 0.0, %v5010
        %v5012 = vpop.f32.mrb[0].mxu0
        %v5013 = vadd.f32 0.0, %v5012
        %v5014 = vpop.f32.mrb[0].mxu0
        %v5015 = vadd.f32 0.0, %v5014
        %5016 = vmatprep.mubr.bf16.mxu0 0
        %5017 = vmatmul.mubr.bf16.gmra.mrb[0].mxu0 %v2409
        %v5018 = vpop.f32.mrb[0].mxu0
        %v5019 = vadd.f32 0.0, %v5018
        %v5020 = vpop.f32.mrb[0].mxu0
        %v5021 = vadd.f32 0.0, %v5020
        %v5022 = vpop.f32.mrb[0].mxu0
        %v5023 = vadd.f32 0.0, %v5022
        %v5024 = vpop.f32.mrb[0].mxu0
        %v5025 = vadd.f32 0.0, %v5024
        %5026 = vmatprep.mubr.bf16.mxu0 0
        %5027 = vmatmul.mubr.bf16.gmra.mrb[0].mxu0 %v2410
        %v5028 = vpop.f32.mrb[0].mxu0
        %v5029 = vadd.f32 0.0, %v5028
        %v5030 = vpop.f32.mrb[0].mxu0
        %v5031 = vadd.f32 0.0, %v5030
        %v5032 = vpop.f32.mrb[0].mxu0
        %v5033 = vadd.f32 0.0, %v5032
        %v5034 = vpop.f32.mrb[0].mxu0
        %v5035 = vadd.f32 0.0, %v5034
        %5036 = vmatprep.mubr.bf16.mxu0 0
        %5037 = vmatmul.mubr.bf16.gmra.mrb[0].mxu0 %v2411
        %v5038 = vpop.f32.mrb[0].mxu0
        %v5039 = vadd.f32 0.0, %v5038
        %v5040 = vpop.f32.mrb[0].mxu0
        %v5041 = vadd.f32 0.0, %v5040
        %v5042 = vpop.f32.mrb[0].mxu0
        %v5043 = vadd.f32 0.0, %v5042
        %v5044 = vpop.f32.mrb[0].mxu0
        %v5045 = vadd.f32 0.0, %v5044
        %5046 = vmatprep.mubr.bf16.mxu0 0
        %5047 = vmatmul.mubr.bf16.gmra.mrb[0].mxu0 %v2412
        %v5048 = vpop.f32.mrb[0].mxu0
        %v5049 = vadd.f32 0.0, %v5048
        %v5050 = vpop.f32.mrb[0].mxu0
        %v5051 = vadd.f32 0.0, %v5050
        %v5052 = vpop.f32.mrb[0].mxu0
        %v5053 = vadd.f32 0.0, %v5052
        %v5054 = vpop.f32.mrb[0].mxu0
        %v5055 = vadd.f32 0.0, %v5054
        %5056 = vmatprep.mubr.bf16.mxu0 0
        %5057 = vmatmul.mubr.bf16.gmra.mrb[0].mxu0 %v2413
        %v5058 = vpop.f32.mrb[0].mxu0
        %v5059 = vadd.f32 0.0, %v5058
        %v5060 = vpop.f32.mrb[0].mxu0
        %v5061 = vadd.f32 0.0, %v5060
        %v5062 = vpop.f32.mrb[0].mxu0
        %v5063 = vadd.f32 0.0, %v5062
        %v5064 = vpop.f32.mrb[0].mxu0
        %v5065 = vadd.f32 0.0, %v5064
        %5066 = vmatprep.mubr.bf16.mxu0 0
        %5067 = vmatmul.mubr.bf16.gmra.mrb[0].mxu0 %v2414
        %v5068 = vpop.f32.mrb[0].mxu0
        %v5069 = vadd.f32 0.0, %v5068
        %v5070 = vpop.f32.mrb[0].mxu0
        %v5071 = vadd.f32 0.0, %v5070
        %v5072 = vpop.f32.mrb[0].mxu0
        %v5073 = vadd.f32 0.0, %v5072
        %v5074 = vpop.f32.mrb[0].mxu0
        %v5075 = vadd.f32 0.0, %v5074
        %5076 = vmatprep.mubr.bf16.mxu0 0
        %5077 = vmatmul.mubr.bf16.gmra.mrb[0].mxu0 %v2415
        %v5078 = vpop.f32.mrb[0].mxu0
        %v5079 = vadd.f32 0.0, %v5078
        %v5080 = vpop.f32.mrb[0].mxu0
        %v5081 = vadd.f32 0.0, %v5080
        %v5082 = vpop.f32.mrb[0].mxu0
        %v5083 = vadd.f32 0.0, %v5082
        %v5084 = vpop.f32.mrb[0].mxu0
        %v5085 = vadd.f32 0.0, %v5084
        %5086 = vmatprep.mubr.bf16.mxu0 0
        %5087 = vmatmul.mubr.bf16.gmra.mrb[0].mxu0 %v2416
        %v5088 = vpop.f32.mrb[0].mxu0
        %v5089 = vadd.f32 0.0, %v5088
        %v5090 = vpop.f32.mrb[0].mxu0
        %v5091 = vadd.f32 0.0, %v5090
        %v5092 = vpop.f32.mrb[0].mxu0
        %v5093 = vadd.f32 0.0, %v5092
        %v5094 = vpop.f32.mrb[0].mxu0
        %v5095 = vadd.f32 0.0, %v5094
        %5096 = vmatprep.mubr.bf16.mxu0 0
        %5097 = vmatmul.mubr.bf16.gmra.mrb[0].mxu0 %v2417
        %v5098 = vpop.f32.mrb[0].mxu0
        %v5099 = vadd.f32 0.0, %v5098
        %v5100 = vpop.f32.mrb[0].mxu0
        %v5101 = vadd.f32 0.0, %v5100
        %v5102 = vpop.f32.mrb[0].mxu0
        %v5103 = vadd.f32 0.0, %v5102
        %v5104 = vpop.f32.mrb[0].mxu0
        %v5105 = vadd.f32 0.0, %v5104
        %5106 = vmatprep.mubr.bf16.mxu0 0
        %5107 = vmatmul.mubr.bf16.gmra.mrb[0].mxu0 %v2418
        %v5108 = vpop.f32.mrb[0].mxu0
        %v5109 = vadd.f32 0.0, %v5108
        %v5110 = vpop.f32.mrb[0].mxu0
        %v5111 = vadd.f32 0.0, %v5110
        %v5112 = vpop.f32.mrb[0].mxu0
        %v5113 = vadd.f32 0.0, %v5112
        %v5114 = vpop.f32.mrb[0].mxu0
        %v5115 = vadd.f32 0.0, %v5114
        %5116 = vmatprep.mubr.bf16.mxu0 0
        %5117 = vmatmul.mubr.bf16.gmra.mrb[0].mxu0 %v2419
        %v5118 = vpop.f32.mrb[0].mxu0
        %v5119 = vadd.f32 0.0, %v5118
        %v5120 = vpop.f32.mrb[0].mxu0
        %v5121 = vadd.f32 0.0, %v5120
        %v5122 = vpop.f32.mrb[0].mxu0
        %v5123 = vadd.f32 0.0, %v5122
        %v5124 = vpop.f32.mrb[0].mxu0
        %v5125 = vadd.f32 0.0, %v5124
        %5126 = vmatprep.mubr.bf16.mxu0 0
        %5127 = vmatmul.mubr.bf16.gmra.mrb[0].mxu0 %v2420
        %v5128 = vpop.f32.mrb[0].mxu0
        %v5129 = vadd.f32 0.0, %v5128
        %v5130 = vpop.f32.mrb[0].mxu0
        %v5131 = vadd.f32 0.0, %v5130
        %v5132 = vpop.f32.mrb[0].mxu0
        %v5133 = vadd.f32 0.0, %v5132
        %v5134 = vpop.f32.mrb[0].mxu0
        %v5135 = vadd.f32 0.0, %v5134
        %5136 = vmatprep.mubr.bf16.mxu0 0
        %5137 = vmatmul.mubr.bf16.gmra.mrb[0].mxu0 %v2421
        %v5138 = vpop.f32.mrb[0].mxu0
        %v5139 = vadd.f32 0.0, %v5138
        %v5140 = vpop.f32.mrb[0].mxu0
        %v5141 = vadd.f32 0.0, %v5140
        %v5142 = vpop.f32.mrb[0].mxu0
        %v5143 = vadd.f32 0.0, %v5142
        %v5144 = vpop.f32.mrb[0].mxu0
        %v5145 = vadd.f32 0.0, %v5144
        %5146 = vmatprep.mubr.bf16.mxu0 0
        %5147 = vmatmul.mubr.bf16.gmra.mrb[0].mxu0 %v2422
        %v5148 = vpop.f32.mrb[0].mxu0
        %v5149 = vadd.f32 0.0, %v5148
        %v5150 = vpop.f32.mrb[0].mxu0
        %v5151 = vadd.f32 0.0, %v5150
        %v5152 = vpop.f32.mrb[0].mxu0
        %v5153 = vadd.f32 0.0, %v5152
        %v5154 = vpop.f32.mrb[0].mxu0
        %v5155 = vadd.f32 0.0, %v5154
        %5156 = vmatprep.mubr.bf16.mxu0 0
        %5157 = vmatmul.mubr.bf16.gmra.mrb[0].mxu0 %v2423
        %v5158 = vpop.f32.mrb[0].mxu0
        %v5159 = vadd.f32 0.0, %v5158
        %v5160 = vpop.f32.mrb[0].mxu0
        %v5161 = vadd.f32 0.0, %v5160
        %v5162 = vpop.f32.mrb[0].mxu0
        %v5163 = vadd.f32 0.0, %v5162
        %v5164 = vpop.f32.mrb[0].mxu0
        %v5165 = vadd.f32 0.0, %v5164
        %5166 = vmatprep.mubr.bf16.mxu0 0
        %5167 = vmatmul.mubr.bf16.gmra.mrb[0].mxu0 %v2424
        %v5168 = vpop.f32.mrb[0].mxu0
        %v5169 = vadd.f32 0.0, %v5168
        %v5170 = vpop.f32.mrb[0].mxu0
        %v5171 = vadd.f32 0.0, %v5170
        %v5172 = vpop.f32.mrb[0].mxu0
        %v5173 = vadd.f32 0.0, %v5172
        %v5174 = vpop.f32.mrb[0].mxu0
        %v5175 = vadd.f32 0.0, %v5174
        %5176 = vmatprep.mubr.bf16.mxu0 0
        %5177 = vmatmul.mubr.bf16.gmra.mrb[0].mxu0 %v2425
        %v5178 = vpop.f32.mrb[0].mxu0
        %v5179 = vadd.f32 0.0, %v5178
        %v5180 = vpop.f32.mrb[0].mxu0
        %v5181 = vadd.f32 0.0, %v5180
        %v5182 = vpop.f32.mrb[0].mxu0
        %v5183 = vadd.f32 0.0, %v5182
        %v5184 = vpop.f32.mrb[0].mxu0
        %v5185 = vadd.f32 0.0, %v5184
        %5186 = vmatprep.mubr.bf16.mxu0 0
        %5187 = vmatmul.mubr.bf16.gmra.mrb[0].mxu0 %v2426
        %v5188 = vpop.f32.mrb[0].mxu0
        %v5189 = vadd.f32 0.0, %v5188
        %v5190 = vpop.f32.mrb[0].mxu0
        %v5191 = vadd.f32 0.0, %v5190
        %v5192 = vpop.f32.mrb[0].mxu0
        %v5193 = vadd.f32 0.0, %v5192
        %v5194 = vpop.f32.mrb[0].mxu0
        %v5195 = vadd.f32 0.0, %v5194
        %5196 = vmatprep.mubr.bf16.mxu0 0
        %5197 = vmatmul.mubr.bf16.gmra.mrb[0].mxu0 %v2427
        %v5198 = vpop.f32.mrb[0].mxu0
        %v5199 = vadd.f32 0.0, %v5198
        %v5200 = vpop.f32.mrb[0].mxu0
        %v5201 = vadd.f32 0.0, %v5200
        %v5202 = vpop.f32.mrb[0].mxu0
        %v5203 = vadd.f32 0.0, %v5202
        %v5204 = vpop.f32.mrb[0].mxu0
        %v5205 = vadd.f32 0.0, %v5204
        %5206 = vmatprep.mubr.bf16.mxu0 0
        %5207 = vmatmul.mubr.bf16.gmra.mrb[0].mxu0 %v2428
        %v5208 = vpop.f32.mrb[0].mxu0
        %v5209 = vadd.f32 0.0, %v5208
        %v5210 = vpop.f32.mrb[0].mxu0
        %v5211 = vadd.f32 0.0, %v5210
        %v5212 = vpop.f32.mrb[0].mxu0
        %v5213 = vadd.f32 0.0, %v5212
        %v5214 = vpop.f32.mrb[0].mxu0
        %v5215 = vadd.f32 0.0, %v5214
        %5216 = vmatprep.mubr.bf16.mxu0 0
        %5217 = vmatmul.mubr.bf16.gmra.mrb[0].mxu0 %v2429
        %v5218 = vpop.f32.mrb[0].mxu0
        %v5219 = vadd.f32 0.0, %v5218
        %v5220 = vpop.f32.mrb[0].mxu0
        %v5221 = vadd.f32 0.0, %v5220
        %v5222 = vpop.f32.mrb[0].mxu0
        %v5223 = vadd.f32 0.0, %v5222
        %v5224 = vpop.f32.mrb[0].mxu0
        %v5225 = vadd.f32 0.0, %v5224
        %5226 = vmatprep.mubr.bf16.mxu0 0
        %5227 = vmatmul.mubr.bf16.gmra.mrb[0].mxu0 %v2430
        %v5228 = vpop.f32.mrb[0].mxu0
        %v5229 = vadd.f32 0.0, %v5228
        %v5230 = vpop.f32.mrb[0].mxu0
        %v5231 = vadd.f32 0.0, %v5230
        %v5232 = vpop.f32.mrb[0].mxu0
        %v5233 = vadd.f32 0.0, %v5232
        %v5234 = vpop.f32.mrb[0].mxu0
        %v5235 = vadd.f32 0.0, %v5234
        %5236 = vmatprep.mubr.bf16.mxu0 0
        %5237 = vmatmul.mubr.bf16.gmra.mrb[0].mxu0 %v2431
        %v5238 = vpop.f32.mrb[0].mxu0
        %v5239 = vadd.f32 0.0, %v5238
        %v5240 = vpop.f32.mrb[0].mxu0
        %v5241 = vadd.f32 0.0, %v5240
        %v5242 = vpop.f32.mrb[0].mxu0
        %v5243 = vadd.f32 0.0, %v5242
        %v5244 = vpop.f32.mrb[0].mxu0
        %v5245 = vadd.f32 0.0, %v5244
        %5246 = vmatprep.mubr.bf16.mxu0 0
        %5247 = vmatmul.mubr.bf16.gmra.mrb[0].mxu0 %v2432
        %v5248 = vpop.f32.mrb[0].mxu0
        %v5249 = vadd.f32 0.0, %v5248
        %v5250 = vpop.f32.mrb[0].mxu0
        %v5251 = vadd.f32 0.0, %v5250
        %v5252 = vpop.f32.mrb[0].mxu0
        %v5253 = vadd.f32 0.0, %v5252
        %v5254 = vpop.f32.mrb[0].mxu0
        %v5255 = vadd.f32 0.0, %v5254
        %5256 = vmatprep.mubr.bf16.mxu0 0
        %5257 = vmatmul.mubr.bf16.gmra.mrb[0].mxu0 %v2433
        %v5258 = vpop.f32.mrb[0].mxu0
        %v5259 = vadd.f32 0.0, %v5258
        %v5260 = vpop.f32.mrb[0].mxu0
        %v5261 = vadd.f32 0.0, %v5260
        %v5262 = vpop.f32.mrb[0].mxu0
        %v5263 = vadd.f32 0.0, %v5262
        %v5264 = vpop.f32.mrb[0].mxu0
        %v5265 = vadd.f32 0.0, %v5264
        %5266 = vmatprep.mubr.bf16.mxu0 0
        %5267 = vmatmul.mubr.bf16.gmra.mrb[0].mxu0 %v2434
        %v5268 = vpop.f32.mrb[0].mxu0
        %v5269 = vadd.f32 0.0, %v5268
        %v5270 = vpop.f32.mrb[0].mxu0
        %v5271 = vadd.f32 0.0, %v5270
        %v5272 = vpop.f32.mrb[0].mxu0
        %v5273 = vadd.f32 0.0, %v5272
        %v5274 = vpop.f32.mrb[0].mxu0
        %v5275 = vadd.f32 0.0, %v5274
        %5276 = vmatprep.mubr.bf16.mxu0 0
        %5277 = vmatmul.mubr.bf16.gmra.mrb[0].mxu0 %v2435
        %v5278 = vpop.f32.mrb[0].mxu0
        %v5279 = vadd.f32 0.0, %v5278
        %v5280 = vpop.f32.mrb[0].mxu0
        %v5281 = vadd.f32 0.0, %v5280
        %v5282 = vpop.f32.mrb[0].mxu0
        %v5283 = vadd.f32 0.0, %v5282
        %v5284 = vpop.f32.mrb[0].mxu0
        %v5285 = vadd.f32 0.0, %v5284
        %5286 = vmatprep.mubr.bf16.mxu0 0
        %5287 = vmatmul.mubr.bf16.gmra.mrb[0].mxu0 %v2436
        %v5288 = vpop.f32.mrb[0].mxu0
        %v5289 = vadd.f32 0.0, %v5288
        %v5290 = vpop.f32.mrb[0].mxu0
        %v5291 = vadd.f32 0.0, %v5290
        %v5292 = vpop.f32.mrb[0].mxu0
        %v5293 = vadd.f32 0.0, %v5292
        %v5294 = vpop.f32.mrb[0].mxu0
        %v5295 = vadd.f32 0.0, %v5294
        %5296 = vmatprep.mubr.bf16.mxu0 0
        %5297 = vmatmul.mubr.bf16.gmra.mrb[0].mxu0 %v2437
        %v5298 = vpop.f32.mrb[0].mxu0
        %v5299 = vadd.f32 0.0, %v5298
        %v5300 = vpop.f32.mrb[0].mxu0
        %v5301 = vadd.f32 0.0, %v5300
        %v5302 = vpop.f32.mrb[0].mxu0
        %v5303 = vadd.f32 0.0, %v5302
        %v5304 = vpop.f32.mrb[0].mxu0
        %v5305 = vadd.f32 0.0, %v5304
        %5306 = vmatprep.mubr.bf16.mxu0 0
        %5307 = vmatmul.mubr.bf16.gmra.mrb[0].mxu0 %v2438
        %v5308 = vpop.f32.mrb[0].mxu0
        %v5309 = vadd.f32 0.0, %v5308
        %v5310 = vpop.f32.mrb[0].mxu0
        %v5311 = vadd.f32 0.0, %v5310
        %v5312 = vpop.f32.mrb[0].mxu0
        %v5313 = vadd.f32 0.0, %v5312
        %v5314 = vpop.f32.mrb[0].mxu0
        %v5315 = vadd.f32 0.0, %v5314
        %5316 = vmatprep.mubr.bf16.mxu0 0
        %5317 = vmatmul.mubr.bf16.gmra.mrb[0].mxu0 %v2439
        %v5318 = vpop.f32.mrb[0].mxu0
        %v5319 = vadd.f32 0.0, %v5318
        %v5320 = vpop.f32.mrb[0].mxu0
        %v5321 = vadd.f32 0.0, %v5320
        %v5322 = vpop.f32.mrb[0].mxu0
        %v5323 = vadd.f32 0.0, %v5322
        %v5324 = vpop.f32.mrb[0].mxu0
        %v5325 = vadd.f32 0.0, %v5324
        %5326 = vmatprep.mubr.bf16.mxu0 0
        %5327 = vmatmul.mubr.bf16.gmra.mrb[0].mxu0 %v2440
        %v5328 = vpop.f32.mrb[0].mxu0
        %v5329 = vadd.f32 0.0, %v5328
        %v5330 = vpop.f32.mrb[0].mxu0
        %v5331 = vadd.f32 0.0, %v5330
        %v5332 = vpop.f32.mrb[0].mxu0
        %v5333 = vadd.f32 0.0, %v5332
        %v5334 = vpop.f32.mrb[0].mxu0
        %v5335 = vadd.f32 0.0, %v5334
        %5336 = vmatprep.mubr.bf16.mxu0 0
        %5337 = vmatmul.mubr.bf16.gmra.mrb[0].mxu0 %v2441
        %v5338 = vpop.f32.mrb[0].mxu0
        %v5339 = vadd.f32 0.0, %v5338
        %v5340 = vpop.f32.mrb[0].mxu0
        %v5341 = vadd.f32 0.0, %v5340
        %v5342 = vpop.f32.mrb[0].mxu0
        %v5343 = vadd.f32 0.0, %v5342
        %v5344 = vpop.f32.mrb[0].mxu0
        %v5345 = vadd.f32 0.0, %v5344
        %5346 = vmatprep.mubr.bf16.mxu0 0
        %5347 = vmatmul.mubr.bf16.gmra.mrb[0].mxu0 %v2442
        %v5348 = vpop.f32.mrb[0].mxu0
        %v5349 = vadd.f32 0.0, %v5348
        %v5350 = vpop.f32.mrb[0].mxu0
        %v5351 = vadd.f32 0.0, %v5350
        %v5352 = vpop.f32.mrb[0].mxu0
        %v5353 = vadd.f32 0.0, %v5352
        %v5354 = vpop.f32.mrb[0].mxu0
        %v5355 = vadd.f32 0.0, %v5354
        %5356 = vmatprep.mubr.bf16.mxu0 0
        %5357 = vmatmul.mubr.bf16.gmra.mrb[0].mxu0 %v2443
        %v5358 = vpop.f32.mrb[0].mxu0
        %v5359 = vadd.f32 0.0, %v5358
        %v5360 = vpop.f32.mrb[0].mxu0
        %v5361 = vadd.f32 0.0, %v5360
        %v5362 = vpop.f32.mrb[0].mxu0
        %v5363 = vadd.f32 0.0, %v5362
        %v5364 = vpop.f32.mrb[0].mxu0
        %v5365 = vadd.f32 0.0, %v5364
        %5366 = vmatprep.mubr.bf16.mxu0 0
        %5367 = vmatmul.mubr.bf16.gmra.mrb[0].mxu0 %v2444
        %v5368 = vpop.f32.mrb[0].mxu0
        %v5369 = vadd.f32 0.0, %v5368
        %v5370 = vpop.f32.mrb[0].mxu0
        %v5371 = vadd.f32 0.0, %v5370
        %v5372 = vpop.f32.mrb[0].mxu0
        %v5373 = vadd.f32 0.0, %v5372
        %v5374 = vpop.f32.mrb[0].mxu0
        %v5375 = vadd.f32 0.0, %v5374
        %5376 = vmatprep.mubr.bf16.mxu0 0
        %5377 = vmatmul.mubr.bf16.gmra.mrb[0].mxu0 %v2445
        %v5378 = vpop.f32.mrb[0].mxu0
        %v5379 = vadd.f32 0.0, %v5378
        %v5380 = vpop.f32.mrb[0].mxu0
        %v5381 = vadd.f32 0.0, %v5380
        %v5382 = vpop.f32.mrb[0].mxu0
        %v5383 = vadd.f32 0.0, %v5382
        %v5384 = vpop.f32.mrb[0].mxu0
        %v5385 = vadd.f32 0.0, %v5384
        %5386 = vmatprep.mubr.bf16.mxu0 0
        %5387 = vmatmul.mubr.bf16.gmra.mrb[0].mxu0 %v2446
        %v5388 = vpop.f32.mrb[0].mxu0
        %v5389 = vadd.f32 0.0, %v5388
        %v5390 = vpop.f32.mrb[0].mxu0
        %v5391 = vadd.f32 0.0, %v5390
        %v5392 = vpop.f32.mrb[0].mxu0
        %v5393 = vadd.f32 0.0, %v5392
        %v5394 = vpop.f32.mrb[0].mxu0
        %v5395 = vadd.f32 0.0, %v5394
        %5396 = vmatprep.mubr.bf16.mxu0 0
        %5397 = vmatmul.mubr.bf16.gmra.mrb[0].mxu0 %v2447
        %v5398 = vpop.f32.mrb[0].mxu0
        %v5399 = vadd.f32 0.0, %v5398
        %v5400 = vpop.f32.mrb[0].mxu0
        %v5401 = vadd.f32 0.0, %v5400
        %v5402 = vpop.f32.mrb[0].mxu0
        %v5403 = vadd.f32 0.0, %v5402
        %v5404 = vpop.f32.mrb[0].mxu0
        %v5405 = vadd.f32 0.0, %v5404
        %5406 = vmatprep.mubr.bf16.mxu0 0
        %5407 = vmatmul.mubr.bf16.gmra.mrb[0].mxu0 %v2448
        %v5408 = vpop.f32.mrb[0].mxu0
        %v5409 = vadd.f32 0.0, %v5408
        %v5410 = vpop.f32.mrb[0].mxu0
        %v5411 = vadd.f32 0.0, %v5410
        %v5412 = vpop.f32.mrb[0].mxu0
        %v5413 = vadd.f32 0.0, %v5412
        %v5414 = vpop.f32.mrb[0].mxu0
        %v5415 = vadd.f32 0.0, %v5414
        %5416 = vmatprep.mubr.bf16.mxu0 0
        %5417 = vmatmul.mubr.bf16.gmra.mrb[0].mxu0 %v2449
        %v5418 = vpop.f32.mrb[0].mxu0
        %v5419 = vadd.f32 0.0, %v5418
        %v5420 = vpop.f32.mrb[0].mxu0
        %v5421 = vadd.f32 0.0, %v5420
        %v5422 = vpop.f32.mrb[0].mxu0
        %v5423 = vadd.f32 0.0, %v5422
        %v5424 = vpop.f32.mrb[0].mxu0
        %v5425 = vadd.f32 0.0, %v5424
        %5426 = vmatprep.mubr.bf16.mxu0 0
        %5427 = vmatmul.mubr.bf16.gmra.mrb[0].mxu0 %v2450
        %v5428 = vpop.f32.mrb[0].mxu0
        %v5429 = vadd.f32 0.0, %v5428
        %v5430 = vpop.f32.mrb[0].mxu0
        %v5431 = vadd.f32 0.0, %v5430
        %v5432 = vpop.f32.mrb[0].mxu0
        %v5433 = vadd.f32 0.0, %v5432
        %v5434 = vpop.f32.mrb[0].mxu0
        %v5435 = vadd.f32 0.0, %v5434
        %5436 = vmatprep.mubr.bf16.mxu0 0
        %5437 = vmatmul.mubr.bf16.gmra.mrb[0].mxu0 %v2451
        %v5438 = vpop.f32.mrb[0].mxu0
        %v5439 = vadd.f32 0.0, %v5438
        %v5440 = vpop.f32.mrb[0].mxu0
        %v5441 = vadd.f32 0.0, %v5440
        %v5442 = vpop.f32.mrb[0].mxu0
        %v5443 = vadd.f32 0.0, %v5442
        %v5444 = vpop.f32.mrb[0].mxu0
        %v5445 = vadd.f32 0.0, %v5444
        %5446 = vmatprep.mubr.bf16.mxu0 0
        %5447 = vmatmul.mubr.bf16.gmra.mrb[0].mxu0 %v2452
        %v5448 = vpop.f32.mrb[0].mxu0
        %v5449 = vadd.f32 0.0, %v5448
        %v5450 = vpop.f32.mrb[0].mxu0
        %v5451 = vadd.f32 0.0, %v5450
        %v5452 = vpop.f32.mrb[0].mxu0
        %v5453 = vadd.f32 0.0, %v5452
        %v5454 = vpop.f32.mrb[0].mxu0
        %v5455 = vadd.f32 0.0, %v5454
        %5456 = vmatprep.mubr.bf16.mxu0 0
        %5457 = vmatmul.mubr.bf16.gmra.mrb[0].mxu0 %v2453
        %v5458 = vpop.f32.mrb[0].mxu0
        %v5459 = vadd.f32 0.0, %v5458
        %v5460 = vpop.f32.mrb[0].mxu0
        %v5461 = vadd.f32 0.0, %v5460
        %v5462 = vpop.f32.mrb[0].mxu0
        %v5463 = vadd.f32 0.0, %v5462
        %v5464 = vpop.f32.mrb[0].mxu0
        %v5465 = vadd.f32 0.0, %v5464
        %5466 = vmatprep.mubr.bf16.mxu0 0
        %5467 = vmatmul.mubr.bf16.gmra.mrb[0].mxu0 %v2454
        %v5468 = vpop.f32.mrb[0].mxu0
        %v5469 = vadd.f32 0.0, %v5468
        %v5470 = vpop.f32.mrb[0].mxu0
        %v5471 = vadd.f32 0.0, %v5470
        %v5472 = vpop.f32.mrb[0].mxu0
        %v5473 = vadd.f32 0.0, %v5472
        %v5474 = vpop.f32.mrb[0].mxu0
        %v5475 = vadd.f32 0.0, %v5474
        %5476 = vmatprep.mubr.bf16.mxu0 0
        %5477 = vmatmul.mubr.bf16.gmra.mrb[0].mxu0 %v2455
        %v5478 = vpop.f32.mrb[0].mxu0
        %v5479 = vadd.f32 0.0, %v5478
        %v5480 = vpop.f32.mrb[0].mxu0
        %v5481 = vadd.f32 0.0, %v5480
        %v5482 = vpop.f32.mrb[0].mxu0
        %v5483 = vadd.f32 0.0, %v5482
        %v5484 = vpop.f32.mrb[0].mxu0
        %v5485 = vadd.f32 0.0, %v5484
        %5486 = vmatprep.mubr.bf16.mxu0 0
        %5487 = vmatmul.mubr.bf16.gmra.mrb[0].mxu0 %v2456
        %v5488 = vpop.f32.mrb[0].mxu0
        %v5489 = vadd.f32 0.0, %v5488
        %v5490 = vpop.f32.mrb[0].mxu0
        %v5491 = vadd.f32 0.0, %v5490
        %v5492 = vpop.f32.mrb[0].mxu0
        %v5493 = vadd.f32 0.0, %v5492
        %v5494 = vpop.f32.mrb[0].mxu0
        %v5495 = vadd.f32 0.0, %v5494
        %5496 = vmatprep.mubr.bf16.mxu0 0
        %5497 = vmatmul.mubr.bf16.gmra.mrb[0].mxu0 %v2457
        %v5498 = vpop.f32.mrb[0].mxu0
        %v5499 = vadd.f32 0.0, %v5498
        %v5500 = vpop.f32.mrb[0].mxu0
        %v5501 = vadd.f32 0.0, %v5500
        %v5502 = vpop.f32.mrb[0].mxu0
        %v5503 = vadd.f32 0.0, %v5502
        %v5504 = vpop.f32.mrb[0].mxu0
        %v5505 = vadd.f32 0.0, %v5504
        %5506 = vmatprep.mubr.bf16.mxu0 0
        %5507 = vmatmul.mubr.bf16.gmra.mrb[0].mxu0 %v2458
        %v5508 = vpop.f32.mrb[0].mxu0
        %v5509 = vadd.f32 0.0, %v5508
        %v5510 = vpop.f32.mrb[0].mxu0
        %v5511 = vadd.f32 0.0, %v5510
        %v5512 = vpop.f32.mrb[0].mxu0
        %v5513 = vadd.f32 0.0, %v5512
        %v5514 = vpop.f32.mrb[0].mxu0
        %v5515 = vadd.f32 0.0, %v5514
        %5516 = vmatprep.mubr.bf16.mxu0 0
        %5517 = vmatmul.mubr.bf16.gmra.mrb[0].mxu0 %v2459
        %v5518 = vpop.f32.mrb[0].mxu0
        %v5519 = vadd.f32 0.0, %v5518
        %v5520 = vpop.f32.mrb[0].mxu0
        %v5521 = vadd.f32 0.0, %v5520
        %v5522 = vpop.f32.mrb[0].mxu0
        %v5523 = vadd.f32 0.0, %v5522
        %v5524 = vpop.f32.mrb[0].mxu0
        %v5525 = vadd.f32 0.0, %v5524
        %5526 = vmatprep.mubr.bf16.mxu0 0
        %5527 = vmatmul.mubr.bf16.gmra.mrb[0].mxu0 %v2460
        %v5528 = vpop.f32.mrb[0].mxu0
        %v5529 = vadd.f32 0.0, %v5528
        %v5530 = vpop.f32.mrb[0].mxu0
        %v5531 = vadd.f32 0.0, %v5530
        %v5532 = vpop.f32.mrb[0].mxu0
        %v5533 = vadd.f32 0.0, %v5532
        %v5534 = vpop.f32.mrb[0].mxu0
        %v5535 = vadd.f32 0.0, %v5534
        %5536 = vdwg.mxu0
        %v5537 = vmax.f32 %v2880, %v2884
        %v5538 = vmax.f32 %v5537, %v2890
        %v5539 = vmax.f32 %v5538, %v2894
        %v5540 = vmax.f32 %v5539, %v2900
        %v5541 = vmax.f32 %v5540, %v2904
        %v5542 = vmax.f32 %v5541, %v2910
        %v5543 = vmax.f32 %v5542, %v2914
        %v5544 = vmax.f32 %v5543, %v2920
        %v5545 = vmax.f32 %v5544, %v2924
        %v5546 = vmax.f32 %v5545, %v2930
        %v5547 = vmax.f32 %v5546, %v2934
        %v5548 = vmax.f32 %v5547, %v2940
        %v5549 = vmax.f32 %v5548, %v2944
        %v5550 = vmax.f32 %v5549, %v2950
        %v5551 = vmax.f32 %v5550, %v2954
        %v5552 = vmax.f32 %v5551, %v2960
        %v5553 = vmax.f32 %v5552, %v2964
        %v5554 = vmax.f32 %v5553, %v2970
        %v5555 = vmax.f32 %v5554, %v2974
        %v5556 = vmax.f32 %v5555, %v2980
        %v5557 = vmax.f32 %v5556, %v2984
        %v5558 = vmax.f32 %v5557, %v2990
        %v5559 = vmax.f32 %v5558, %v2994
        %v5560 = vmax.f32 %v5559, %v3000
        %v5561 = vmax.f32 %v5560, %v3004
        %v5562 = vmax.f32 %v5561, %v3010
        %v5563 = vmax.f32 %v5562, %v3014
        %v5564 = vmax.f32 %v5563, %v3020
        %v5565 = vmax.f32 %v5564, %v3024
        %v5566 = vmax.f32 %v5565, %v3030
        %v5567 = vmax.f32 %v5566, %v3034
        %v5568 = vmax.f32 %v5567, %v3040
        %v5569 = vmax.f32 %v5568, %v3044
        %v5570 = vmax.f32 %v5569, %v3050
        %v5571 = vmax.f32 %v5570, %v3054
        %v5572 = vmax.f32 %v5571, %v3060
        %v5573 = vmax.f32 %v5572, %v3064
        %v5574 = vmax.f32 %v5573, %v3070
        %v5575 = vmax.f32 %v5574, %v3074
        %v5576 = vmax.f32 %v5575, %v3080
        %v5577 = vmax.f32 %v5576, %v3084
        %v5578 = vmax.f32 %v5577, %v3090
        %v5579 = vmax.f32 %v5578, %v3094
        %v5580 = vmax.f32 %v5579, %v3100
        %v5581 = vmax.f32 %v5580, %v3104
        %v5582 = vmax.f32 %v5581, %v3110
        %v5583 = vmax.f32 %v5582, %v3114
        %v5584 = vmax.f32 %v5583, %v3120
        %v5585 = vmax.f32 %v5584, %v3124
        %v5586 = vmax.f32 %v5585, %v3130
        %v5587 = vmax.f32 %v5586, %v3134
        %v5588 = vmax.f32 %v5587, %v3140
        %v5589 = vmax.f32 %v5588, %v3144
        %v5590 = vmax.f32 %v5589, %v3150
        %v5591 = vmax.f32 %v5590, %v3154
        %v5592 = vmax.f32 %v5591, %v3160
        %v5593 = vmax.f32 %v5592, %v3164
        %v5594 = vmax.f32 %v5593, %v3170
        %v5595 = vmax.f32 %v5594, %v3174
        %v5596 = vmax.f32 %v5595, %v3180
        %v5597 = vmax.f32 %v5596, %v3184
        %v5598 = vmax.f32 %v5597, %v3190
        %v5599 = vmax.f32 %v5598, %v3194
        %v5600 = vmax.f32 %v5599, %v3200
        %v5601 = vmax.f32 %v5600, %v3204
        %v5602 = vmax.f32 %v5601, %v3210
        %v5603 = vmax.f32 %v5602, %v3214
        %v5604 = vmax.f32 %v5603, %v3220
        %v5605 = vmax.f32 %v5604, %v3224
        %v5606 = vmax.f32 %v5605, %v3230
        %v5607 = vmax.f32 %v5606, %v3234
        %v5608 = vmax.f32 %v5607, %v3240
        %v5609 = vmax.f32 %v5608, %v3244
        %v5610 = vmax.f32 %v5609, %v3250
        %v5611 = vmax.f32 %v5610, %v3254
        %v5612 = vmax.f32 %v5611, %v3260
        %v5613 = vmax.f32 %v5612, %v3264
        %v5614 = vmax.f32 %v5613, %v3270
        %v5615 = vmax.f32 %v5614, %v3274
        %v5616 = vmax.f32 %v5615, %v3280
        %v5617 = vmax.f32 %v5616, %v3284
        %v5618 = vmax.f32 %v5617, %v3290
        %v5619 = vmax.f32 %v5618, %v3294
        %v5620 = vmax.f32 %v5619, %v3300
        %v5621 = vmax.f32 %v5620, %v3304
        %v5622 = vmax.f32 %v5621, %v3310
        %v5623 = vmax.f32 %v5622, %v3314
        %v5624 = vmax.f32 %v5623, %v3320
        %v5625 = vmax.f32 %v5624, %v3324
        %v5626 = vmax.f32 %v5625, %v3330
        %v5627 = vmax.f32 %v5626, %v3334
        %v5628 = vmax.f32 %v5627, %v3340
        %v5629 = vmax.f32 %v5628, %v3344
        %v5630 = vmax.f32 %v5629, %v3350
        %v5631 = vmax.f32 %v5630, %v3354
        %v5632 = vmax.f32 %v5631, %v3360
        %v5633 = vmax.f32 %v5632, %v3364
        %v5634 = vmax.f32 %v5633, %v3370
        %v5635 = vmax.f32 %v5634, %v3374
        %v5636 = vmax.f32 %v5635, %v3380
        %v5637 = vmax.f32 %v5636, %v3384
        %v5638 = vmax.f32 %v5637, %v3390
        %v5639 = vmax.f32 %v5638, %v3394
        %v5640 = vmax.f32 %v5639, %v3400
        %v5641 = vmax.f32 %v5640, %v3404
        %v5642 = vmax.f32 %v5641, %v3410
        %v5643 = vmax.f32 %v5642, %v3414
        %v5644 = vmax.f32 %v5643, %v3420
        %v5645 = vmax.f32 %v5644, %v3424
        %v5646 = vmax.f32 %v5645, %v3430
        %v5647 = vmax.f32 %v5646, %v3434
        %v5648 = vmax.f32 %v5647, %v3440
        %v5649 = vmax.f32 %v5648, %v3444
        %v5650 = vmax.f32 %v5649, %v3450
        %v5651 = vmax.f32 %v5650, %v3454
        %v5652 = vmax.f32 %v5651, %v3460
        %v5653 = vmax.f32 %v5652, %v3464
        %v5654 = vmax.f32 %v5653, %v3470
        %v5655 = vmax.f32 %v5654, %v3474
        %v5656 = vmax.f32 %v5655, %v3480
        %v5657 = vmax.f32 %v5656, %v3484
        %v5658 = vmax.f32 %v5657, %v3490
        %v5659 = vmax.f32 %v5658, %v3494
        %v5660 = vmax.f32 %v5659, %v3500
        %v5661 = vmax.f32 %v5660, %v3504
        %v5662 = vmax.f32 %v5661, %v3510
        %v5663 = vmax.f32 %v5662, %v3514
        %v5664 = vmax.f32 %v2882, %v2886
        %v5665 = vmax.f32 %v5664, %v2892
        %v5666 = vmax.f32 %v5665, %v2896
        %v5667 = vmax.f32 %v5666, %v2902
        %v5668 = vmax.f32 %v5667, %v2906
        %v5669 = vmax.f32 %v5668, %v2912
        %v5670 = vmax.f32 %v5669, %v2916
        %v5671 = vmax.f32 %v5670, %v2922
        %v5672 = vmax.f32 %v5671, %v2926
        %v5673 = vmax.f32 %v5672, %v2932
        %v5674 = vmax.f32 %v5673, %v2936
        %v5675 = vmax.f32 %v5674, %v2942
        %v5676 = vmax.f32 %v5675, %v2946
        %v5677 = vmax.f32 %v5676, %v2952
        %v5678 = vmax.f32 %v5677, %v2956
        %v5679 = vmax.f32 %v5678, %v2962
        %v5680 = vmax.f32 %v5679, %v2966
        %v5681 = vmax.f32 %v5680, %v2972
        %v5682 = vmax.f32 %v5681, %v2976
        %v5683 = vmax.f32 %v5682, %v2982
        %v5684 = vmax.f32 %v5683, %v2986
        %v5685 = vmax.f32 %v5684, %v2992
        %v5686 = vmax.f32 %v5685, %v2996
        %v5687 = vmax.f32 %v5686, %v3002
        %v5688 = vmax.f32 %v5687, %v3006
        %v5689 = vmax.f32 %v5688, %v3012
        %v5690 = vmax.f32 %v5689, %v3016
        %v5691 = vmax.f32 %v5690, %v3022
        %v5692 = vmax.f32 %v5691, %v3026
        %v5693 = vmax.f32 %v5692, %v3032
        %v5694 = vmax.f32 %v5693, %v3036
        %v5695 = vmax.f32 %v5694, %v3042
        %v5696 = vmax.f32 %v5695, %v3046
        %v5697 = vmax.f32 %v5696, %v3052
        %v5698 = vmax.f32 %v5697, %v3056
        %v5699 = vmax.f32 %v5698, %v3062
        %v5700 = vmax.f32 %v5699, %v3066
        %v5701 = vmax.f32 %v5700, %v3072
        %v5702 = vmax.f32 %v5701, %v3076
        %v5703 = vmax.f32 %v5702, %v3082
        %v5704 = vmax.f32 %v5703, %v3086
        %v5705 = vmax.f32 %v5704, %v3092
        %v5706 = vmax.f32 %v5705, %v3096
        %v5707 = vmax.f32 %v5706, %v3102
        %v5708 = vmax.f32 %v5707, %v3106
        %v5709 = vmax.f32 %v5708, %v3112
        %v5710 = vmax.f32 %v5709, %v3116
        %v5711 = vmax.f32 %v5710, %v3122
        %v5712 = vmax.f32 %v5711, %v3126
        %v5713 = vmax.f32 %v5712, %v3132
        %v5714 = vmax.f32 %v5713, %v3136
        %v5715 = vmax.f32 %v5714, %v3142
        %v5716 = vmax.f32 %v5715, %v3146
        %v5717 = vmax.f32 %v5716, %v3152
        %v5718 = vmax.f32 %v5717, %v3156
        %v5719 = vmax.f32 %v5718, %v3162
        %v5720 = vmax.f32 %v5719, %v3166
        %v5721 = vmax.f32 %v5720, %v3172
        %v5722 = vmax.f32 %v5721, %v3176
        %v5723 = vmax.f32 %v5722, %v3182
        %v5724 = vmax.f32 %v5723, %v3186
        %v5725 = vmax.f32 %v5724, %v3192
        %v5726 = vmax.f32 %v5725, %v3196
        %v5727 = vmax.f32 %v5726, %v3202
        %v5728 = vmax.f32 %v5727, %v3206
        %v5729 = vmax.f32 %v5728, %v3212
        %v5730 = vmax.f32 %v5729, %v3216
        %v5731 = vmax.f32 %v5730, %v3222
        %v5732 = vmax.f32 %v5731, %v3226
        %v5733 = vmax.f32 %v5732, %v3232
        %v5734 = vmax.f32 %v5733, %v3236
        %v5735 = vmax.f32 %v5734, %v3242
        %v5736 = vmax.f32 %v5735, %v3246
        %v5737 = vmax.f32 %v5736, %v3252
        %v5738 = vmax.f32 %v5737, %v3256
        %v5739 = vmax.f32 %v5738, %v3262
        %v5740 = vmax.f32 %v5739, %v3266
        %v5741 = vmax.f32 %v5740, %v3272
        %v5742 = vmax.f32 %v5741, %v3276
        %v5743 = vmax.f32 %v5742, %v3282
        %v5744 = vmax.f32 %v5743, %v3286
        %v5745 = vmax.f32 %v5744, %v3292
        %v5746 = vmax.f32 %v5745, %v3296
        %v5747 = vmax.f32 %v5746, %v3302
        %v5748 = vmax.f32 %v5747, %v3306
        %v5749 = vmax.f32 %v5748, %v3312
        %v5750 = vmax.f32 %v5749, %v3316
        %v5751 = vmax.f32 %v5750, %v3322
        %v5752 = vmax.f32 %v5751, %v3326
        %v5753 = vmax.f32 %v5752, %v3332
        %v5754 = vmax.f32 %v5753, %v3336
        %v5755 = vmax.f32 %v5754, %v3342
        %v5756 = vmax.f32 %v5755, %v3346
        %v5757 = vmax.f32 %v5756, %v3352
        %v5758 = vmax.f32 %v5757, %v3356
        %v5759 = vmax.f32 %v5758, %v3362
        %v5760 = vmax.f32 %v5759, %v3366
        %v5761 = vmax.f32 %v5760, %v3372
        %v5762 = vmax.f32 %v5761, %v3376
        %v5763 = vmax.f32 %v5762, %v3382
        %v5764 = vmax.f32 %v5763, %v3386
        %v5765 = vmax.f32 %v5764, %v3392
        %v5766 = vmax.f32 %v5765, %v3396
        %v5767 = vmax.f32 %v5766, %v3402
        %v5768 = vmax.f32 %v5767, %v3406
        %v5769 = vmax.f32 %v5768, %v3412
        %v5770 = vmax.f32 %v5769, %v3416
        %v5771 = vmax.f32 %v5770, %v3422
        %v5772 = vmax.f32 %v5771, %v3426
        %v5773 = vmax.f32 %v5772, %v3432
        %v5774 = vmax.f32 %v5773, %v3436
        %v5775 = vmax.f32 %v5774, %v3442
        %v5776 = vmax.f32 %v5775, %v3446
        %v5777 = vmax.f32 %v5776, %v3452
        %v5778 = vmax.f32 %v5777, %v3456
        %v5779 = vmax.f32 %v5778, %v3462
        %v5780 = vmax.f32 %v5779, %v3466
        %v5781 = vmax.f32 %v5780, %v3472
        %v5782 = vmax.f32 %v5781, %v3476
        %v5783 = vmax.f32 %v5782, %v3482
        %v5784 = vmax.f32 %v5783, %v3486
        %v5785 = vmax.f32 %v5784, %v3492
        %v5786 = vmax.f32 %v5785, %v3496
        %v5787 = vmax.f32 %v5786, %v3502
        %v5788 = vmax.f32 %v5787, %v3506
        %v5789 = vmax.f32 %v5788, %v3512
        %v5790 = vmax.f32 %v5789, %v3516
        %v5791 = vmax.f32 %v3553, %v3557
        %v5792 = vmax.f32 %v5791, %v3563
        %v5793 = vmax.f32 %v5792, %v3567
        %v5794 = vmax.f32 %v5793, %v3573
        %v5795 = vmax.f32 %v5794, %v3577
        %v5796 = vmax.f32 %v5795, %v3583
        %v5797 = vmax.f32 %v5796, %v3587
        %v5798 = vmax.f32 %v5797, %v3593
        %v5799 = vmax.f32 %v5798, %v3597
        %v5800 = vmax.f32 %v5799, %v3603
        %v5801 = vmax.f32 %v5800, %v3607
        %v5802 = vmax.f32 %v5801, %v3613
        %v5803 = vmax.f32 %v5802, %v3617
        %v5804 = vmax.f32 %v5803, %v3623
        %v5805 = vmax.f32 %v5804, %v3627
        %v5806 = vmax.f32 %v5805, %v3633
        %v5807 = vmax.f32 %v5806, %v3637
        %v5808 = vmax.f32 %v5807, %v3643
        %v5809 = vmax.f32 %v5808, %v3647
        %v5810 = vmax.f32 %v5809, %v3653
        %v5811 = vmax.f32 %v5810, %v3657
        %v5812 = vmax.f32 %v5811, %v3663
        %v5813 = vmax.f32 %v5812, %v3667
        %v5814 = vmax.f32 %v5813, %v3673
        %v5815 = vmax.f32 %v5814, %v3677
        %v5816 = vmax.f32 %v5815, %v3683
        %v5817 = vmax.f32 %v5816, %v3687
        %v5818 = vmax.f32 %v5817, %v3693
        %v5819 = vmax.f32 %v5818, %v3697
        %v5820 = vmax.f32 %v5819, %v3703
        %v5821 = vmax.f32 %v5820, %v3707
        %v5822 = vmax.f32 %v5821, %v3713
        %v5823 = vmax.f32 %v5822, %v3717
        %v5824 = vmax.f32 %v5823, %v3723
        %v5825 = vmax.f32 %v5824, %v3727
        %v5826 = vmax.f32 %v5825, %v3733
        %v5827 = vmax.f32 %v5826, %v3737
        %v5828 = vmax.f32 %v5827, %v3743
        %v5829 = vmax.f32 %v5828, %v3747
        %v5830 = vmax.f32 %v5829, %v3753
        %v5831 = vmax.f32 %v5830, %v3757
        %v5832 = vmax.f32 %v5831, %v3763
        %v5833 = vmax.f32 %v5832, %v3767
        %v5834 = vmax.f32 %v5833, %v3773
        %v5835 = vmax.f32 %v5834, %v3777
        %v5836 = vmax.f32 %v5835, %v3783
        %v5837 = vmax.f32 %v5836, %v3787
        %v5838 = vmax.f32 %v5837, %v3793
        %v5839 = vmax.f32 %v5838, %v3797
        %v5840 = vmax.f32 %v5839, %v3803
        %v5841 = vmax.f32 %v5840, %v3807
        %v5842 = vmax.f32 %v5841, %v3813
        %v5843 = vmax.f32 %v5842, %v3817
        %v5844 = vmax.f32 %v5843, %v3823
        %v5845 = vmax.f32 %v5844, %v3827
        %v5846 = vmax.f32 %v5845, %v3833
        %v5847 = vmax.f32 %v5846, %v3837
        %v5848 = vmax.f32 %v5847, %v3843
        %v5849 = vmax.f32 %v5848, %v3847
        %v5850 = vmax.f32 %v5849, %v3853
        %v5851 = vmax.f32 %v5850, %v3857
        %v5852 = vmax.f32 %v5851, %v3863
        %v5853 = vmax.f32 %v5852, %v3867
        %v5854 = vmax.f32 %v5853, %v3873
        %v5855 = vmax.f32 %v5854, %v3877
        %v5856 = vmax.f32 %v5855, %v3883
        %v5857 = vmax.f32 %v5856, %v3887
        %v5858 = vmax.f32 %v5857, %v3893
        %v5859 = vmax.f32 %v5858, %v3897
        %v5860 = vmax.f32 %v5859, %v3903
        %v5861 = vmax.f32 %v5860, %v3907
        %v5862 = vmax.f32 %v5861, %v3913
        %v5863 = vmax.f32 %v5862, %v3917
        %v5864 = vmax.f32 %v5863, %v3923
        %v5865 = vmax.f32 %v5864, %v3927
        %v5866 = vmax.f32 %v5865, %v3933
        %v5867 = vmax.f32 %v5866, %v3937
        %v5868 = vmax.f32 %v5867, %v3943
        %v5869 = vmax.f32 %v5868, %v3947
        %v5870 = vmax.f32 %v5869, %v3953
        %v5871 = vmax.f32 %v5870, %v3957
        %v5872 = vmax.f32 %v5871, %v3963
        %v5873 = vmax.f32 %v5872, %v3967
        %v5874 = vmax.f32 %v5873, %v3973
        %v5875 = vmax.f32 %v5874, %v3977
        %v5876 = vmax.f32 %v5875, %v3983
        %v5877 = vmax.f32 %v5876, %v3987
        %v5878 = vmax.f32 %v5877, %v3993
        %v5879 = vmax.f32 %v5878, %v3997
        %v5880 = vmax.f32 %v5879, %v4003
        %v5881 = vmax.f32 %v5880, %v4007
        %v5882 = vmax.f32 %v5881, %v4013
        %v5883 = vmax.f32 %v5882, %v4017
        %v5884 = vmax.f32 %v5883, %v4023
        %v5885 = vmax.f32 %v5884, %v4027
        %v5886 = vmax.f32 %v5885, %v4033
        %v5887 = vmax.f32 %v5886, %v4037
        %v5888 = vmax.f32 %v5887, %v4043
        %v5889 = vmax.f32 %v5888, %v4047
        %v5890 = vmax.f32 %v5889, %v4053
        %v5891 = vmax.f32 %v5890, %v4057
        %v5892 = vmax.f32 %v5891, %v4063
        %v5893 = vmax.f32 %v5892, %v4067
        %v5894 = vmax.f32 %v5893, %v4073
        %v5895 = vmax.f32 %v5894, %v4077
        %v5896 = vmax.f32 %v5895, %v4083
        %v5897 = vmax.f32 %v5896, %v4087
        %v5898 = vmax.f32 %v5897, %v4093
        %v5899 = vmax.f32 %v5898, %v4097
        %v5900 = vmax.f32 %v5899, %v4103
        %v5901 = vmax.f32 %v5900, %v4107
        %v5902 = vmax.f32 %v5901, %v4113
        %v5903 = vmax.f32 %v5902, %v4117
        %v5904 = vmax.f32 %v5903, %v4123
        %v5905 = vmax.f32 %v5904, %v4127
        %v5906 = vmax.f32 %v5905, %v4133
        %v5907 = vmax.f32 %v5906, %v4137
        %v5908 = vmax.f32 %v5907, %v4143
        %v5909 = vmax.f32 %v5908, %v4147
        %v5910 = vmax.f32 %v5909, %v4153
        %v5911 = vmax.f32 %v5910, %v4157
        %v5912 = vmax.f32 %v5911, %v4163
        %v5913 = vmax.f32 %v5912, %v4167
        %v5914 = vmax.f32 %v5913, %v4173
        %v5915 = vmax.f32 %v5914, %v4177
        %v5916 = vmax.f32 %v5915, %v4183
        %v5917 = vmax.f32 %v5916, %v4187
        %v5918 = vmax.f32 %v3555, %v3559
        %v5919 = vmax.f32 %v5918, %v3565
        %v5920 = vmax.f32 %v5919, %v3569
        %v5921 = vmax.f32 %v5920, %v3575
        %v5922 = vmax.f32 %v5921, %v3579
        %v5923 = vmax.f32 %v5922, %v3585
        %v5924 = vmax.f32 %v5923, %v3589
        %v5925 = vmax.f32 %v5924, %v3595
        %v5926 = vmax.f32 %v5925, %v3599
        %v5927 = vmax.f32 %v5926, %v3605
        %v5928 = vmax.f32 %v5927, %v3609
        %v5929 = vmax.f32 %v5928, %v3615
        %v5930 = vmax.f32 %v5929, %v3619
        %v5931 = vmax.f32 %v5930, %v3625
        %v5932 = vmax.f32 %v5931, %v3629
        %v5933 = vmax.f32 %v5932, %v3635
        %v5934 = vmax.f32 %v5933, %v3639
        %v5935 = vmax.f32 %v5934, %v3645
        %v5936 = vmax.f32 %v5935, %v3649
        %v5937 = vmax.f32 %v5936, %v3655
        %v5938 = vmax.f32 %v5937, %v3659
        %v5939 = vmax.f32 %v5938, %v3665
        %v5940 = vmax.f32 %v5939, %v3669
        %v5941 = vmax.f32 %v5940, %v3675
        %v5942 = vmax.f32 %v5941, %v3679
        %v5943 = vmax.f32 %v5942, %v3685
        %v5944 = vmax.f32 %v5943, %v3689
        %v5945 = vmax.f32 %v5944, %v3695
        %v5946 = vmax.f32 %v5945, %v3699
        %v5947 = vmax.f32 %v5946, %v3705
        %v5948 = vmax.f32 %v5947, %v3709
        %v5949 = vmax.f32 %v5948, %v3715
        %v5950 = vmax.f32 %v5949, %v3719
        %v5951 = vmax.f32 %v5950, %v3725
        %v5952 = vmax.f32 %v5951, %v3729
        %v5953 = vmax.f32 %v5952, %v3735
        %v5954 = vmax.f32 %v5953, %v3739
        %v5955 = vmax.f32 %v5954, %v3745
        %v5956 = vmax.f32 %v5955, %v3749
        %v5957 = vmax.f32 %v5956, %v3755
        %v5958 = vmax.f32 %v5957, %v3759
        %v5959 = vmax.f32 %v5958, %v3765
        %v5960 = vmax.f32 %v5959, %v3769
        %v5961 = vmax.f32 %v5960, %v3775
        %v5962 = vmax.f32 %v5961, %v3779
        %v5963 = vmax.f32 %v5962, %v3785
        %v5964 = vmax.f32 %v5963, %v3789
        %v5965 = vmax.f32 %v5964, %v3795
        %v5966 = vmax.f32 %v5965, %v3799
        %v5967 = vmax.f32 %v5966, %v3805
        %v5968 = vmax.f32 %v5967, %v3809
        %v5969 = vmax.f32 %v5968, %v3815
        %v5970 = vmax.f32 %v5969, %v3819
        %v5971 = vmax.f32 %v5970, %v3825
        %v5972 = vmax.f32 %v5971, %v3829
        %v5973 = vmax.f32 %v5972, %v3835
        %v5974 = vmax.f32 %v5973, %v3839
        %v5975 = vmax.f32 %v5974, %v3845
        %v5976 = vmax.f32 %v5975, %v3849
        %v5977 = vmax.f32 %v5976, %v3855
        %v5978 = vmax.f32 %v5977, %v3859
        %v5979 = vmax.f32 %v5978, %v3865
        %v5980 = vmax.f32 %v5979, %v3869
        %v5981 = vmax.f32 %v5980, %v3875
        %v5982 = vmax.f32 %v5981, %v3879
        %v5983 = vmax.f32 %v5982, %v3885
        %v5984 = vmax.f32 %v5983, %v3889
        %v5985 = vmax.f32 %v5984, %v3895
        %v5986 = vmax.f32 %v5985, %v3899
        %v5987 = vmax.f32 %v5986, %v3905
        %v5988 = vmax.f32 %v5987, %v3909
        %v5989 = vmax.f32 %v5988, %v3915
        %v5990 = vmax.f32 %v5989, %v3919
        %v5991 = vmax.f32 %v5990, %v3925
        %v5992 = vmax.f32 %v5991, %v3929
        %v5993 = vmax.f32 %v5992, %v3935
        %v5994 = vmax.f32 %v5993, %v3939
        %v5995 = vmax.f32 %v5994, %v3945
        %v5996 = vmax.f32 %v5995, %v3949
        %v5997 = vmax.f32 %v5996, %v3955
        %v5998 = vmax.f32 %v5997, %v3959
        %v5999 = vmax.f32 %v5998, %v3965
        %v6000 = vmax.f32 %v5999, %v3969
        %v6001 = vmax.f32 %v6000, %v3975
        %v6002 = vmax.f32 %v6001, %v3979
        %v6003 = vmax.f32 %v6002, %v3985
        %v6004 = vmax.f32 %v6003, %v3989
        %v6005 = vmax.f32 %v6004, %v3995
        %v6006 = vmax.f32 %v6005, %v3999
        %v6007 = vmax.f32 %v6006, %v4005
        %v6008 = vmax.f32 %v6007, %v4009
        %v6009 = vmax.f32 %v6008, %v4015
        %v6010 = vmax.f32 %v6009, %v4019
        %v6011 = vmax.f32 %v6010, %v4025
        %v6012 = vmax.f32 %v6011, %v4029
        %v6013 = vmax.f32 %v6012, %v4035
        %v6014 = vmax.f32 %v6013, %v4039
        %v6015 = vmax.f32 %v6014, %v4045
        %v6016 = vmax.f32 %v6015, %v4049
        %v6017 = vmax.f32 %v6016, %v4055
        %v6018 = vmax.f32 %v6017, %v4059
        %v6019 = vmax.f32 %v6018, %v4065
        %v6020 = vmax.f32 %v6019, %v4069
        %v6021 = vmax.f32 %v6020, %v4075
        %v6022 = vmax.f32 %v6021, %v4079
        %v6023 = vmax.f32 %v6022, %v4085
        %v6024 = vmax.f32 %v6023, %v4089
        %v6025 = vmax.f32 %v6024, %v4095
        %v6026 = vmax.f32 %v6025, %v4099
        %v6027 = vmax.f32 %v6026, %v4105
        %v6028 = vmax.f32 %v6027, %v4109
        %v6029 = vmax.f32 %v6028, %v4115
        %v6030 = vmax.f32 %v6029, %v4119
        %v6031 = vmax.f32 %v6030, %v4125
        %v6032 = vmax.f32 %v6031, %v4129
        %v6033 = vmax.f32 %v6032, %v4135
        %v6034 = vmax.f32 %v6033, %v4139
        %v6035 = vmax.f32 %v6034, %v4145
        %v6036 = vmax.f32 %v6035, %v4149
        %v6037 = vmax.f32 %v6036, %v4155
        %v6038 = vmax.f32 %v6037, %v4159
        %v6039 = vmax.f32 %v6038, %v4165
        %v6040 = vmax.f32 %v6039, %v4169
        %v6041 = vmax.f32 %v6040, %v4175
        %v6042 = vmax.f32 %v6041, %v4179
        %v6043 = vmax.f32 %v6042, %v4185
        %v6044 = vmax.f32 %v6043, %v4189
        %v6045 = vmax.f32 %v4226, %v4230
        %v6046 = vmax.f32 %v6045, %v4236
        %v6047 = vmax.f32 %v6046, %v4240
        %v6048 = vmax.f32 %v6047, %v4246
        %v6049 = vmax.f32 %v6048, %v4250
        %v6050 = vmax.f32 %v6049, %v4256
        %v6051 = vmax.f32 %v6050, %v4260
        %v6052 = vmax.f32 %v6051, %v4266
        %v6053 = vmax.f32 %v6052, %v4270
        %v6054 = vmax.f32 %v6053, %v4276
        %v6055 = vmax.f32 %v6054, %v4280
        %v6056 = vmax.f32 %v6055, %v4286
        %v6057 = vmax.f32 %v6056, %v4290
        %v6058 = vmax.f32 %v6057, %v4296
        %v6059 = vmax.f32 %v6058, %v4300
        %v6060 = vmax.f32 %v6059, %v4306
        %v6061 = vmax.f32 %v6060, %v4310
        %v6062 = vmax.f32 %v6061, %v4316
        %v6063 = vmax.f32 %v6062, %v4320
        %v6064 = vmax.f32 %v6063, %v4326
        %v6065 = vmax.f32 %v6064, %v4330
        %v6066 = vmax.f32 %v6065, %v4336
        %v6067 = vmax.f32 %v6066, %v4340
        %v6068 = vmax.f32 %v6067, %v4346
        %v6069 = vmax.f32 %v6068, %v4350
        %v6070 = vmax.f32 %v6069, %v4356
        %v6071 = vmax.f32 %v6070, %v4360
        %v6072 = vmax.f32 %v6071, %v4366
        %v6073 = vmax.f32 %v6072, %v4370
        %v6074 = vmax.f32 %v6073, %v4376
        %v6075 = vmax.f32 %v6074, %v4380
        %v6076 = vmax.f32 %v6075, %v4386
        %v6077 = vmax.f32 %v6076, %v4390
        %v6078 = vmax.f32 %v6077, %v4396
        %v6079 = vmax.f32 %v6078, %v4400
        %v6080 = vmax.f32 %v6079, %v4406
        %v6081 = vmax.f32 %v6080, %v4410
        %v6082 = vmax.f32 %v6081, %v4416
        %v6083 = vmax.f32 %v6082, %v4420
        %v6084 = vmax.f32 %v6083, %v4426
        %v6085 = vmax.f32 %v6084, %v4430
        %v6086 = vmax.f32 %v6085, %v4436
        %v6087 = vmax.f32 %v6086, %v4440
        %v6088 = vmax.f32 %v6087, %v4446
        %v6089 = vmax.f32 %v6088, %v4450
        %v6090 = vmax.f32 %v6089, %v4456
        %v6091 = vmax.f32 %v6090, %v4460
        %v6092 = vmax.f32 %v6091, %v4466
        %v6093 = vmax.f32 %v6092, %v4470
        %v6094 = vmax.f32 %v6093, %v4476
        %v6095 = vmax.f32 %v6094, %v4480
        %v6096 = vmax.f32 %v6095, %v4486
        %v6097 = vmax.f32 %v6096, %v4490
        %v6098 = vmax.f32 %v6097, %v4496
        %v6099 = vmax.f32 %v6098, %v4500
        %v6100 = vmax.f32 %v6099, %v4506
        %v6101 = vmax.f32 %v6100, %v4510
        %v6102 = vmax.f32 %v6101, %v4516
        %v6103 = vmax.f32 %v6102, %v4520
        %v6104 = vmax.f32 %v6103, %v4526
        %v6105 = vmax.f32 %v6104, %v4530
        %v6106 = vmax.f32 %v6105, %v4536
        %v6107 = vmax.f32 %v6106, %v4540
        %v6108 = vmax.f32 %v6107, %v4546
        %v6109 = vmax.f32 %v6108, %v4550
        %v6110 = vmax.f32 %v6109, %v4556
        %v6111 = vmax.f32 %v6110, %v4560
        %v6112 = vmax.f32 %v6111, %v4566
        %v6113 = vmax.f32 %v6112, %v4570
        %v6114 = vmax.f32 %v6113, %v4576
        %v6115 = vmax.f32 %v6114, %v4580
        %v6116 = vmax.f32 %v6115, %v4586
        %v6117 = vmax.f32 %v6116, %v4590
        %v6118 = vmax.f32 %v6117, %v4596
        %v6119 = vmax.f32 %v6118, %v4600
        %v6120 = vmax.f32 %v6119, %v4606
        %v6121 = vmax.f32 %v6120, %v4610
        %v6122 = vmax.f32 %v6121, %v4616
        %v6123 = vmax.f32 %v6122, %v4620
        %v6124 = vmax.f32 %v6123, %v4626
        %v6125 = vmax.f32 %v6124, %v4630
        %v6126 = vmax.f32 %v6125, %v4636
        %v6127 = vmax.f32 %v6126, %v4640
        %v6128 = vmax.f32 %v6127, %v4646
        %v6129 = vmax.f32 %v6128, %v4650
        %v6130 = vmax.f32 %v6129, %v4656
        %v6131 = vmax.f32 %v6130, %v4660
        %v6132 = vmax.f32 %v6131, %v4666
        %v6133 = vmax.f32 %v6132, %v4670
        %v6134 = vmax.f32 %v6133, %v4676
        %v6135 = vmax.f32 %v6134, %v4680
        %v6136 = vmax.f32 %v6135, %v4686
        %v6137 = vmax.f32 %v6136, %v4690
        %v6138 = vmax.f32 %v6137, %v4696
        %v6139 = vmax.f32 %v6138, %v4700
        %v6140 = vmax.f32 %v6139, %v4706
        %v6141 = vmax.f32 %v6140, %v4710
        %v6142 = vmax.f32 %v6141, %v4716
        %v6143 = vmax.f32 %v6142, %v4720
        %v6144 = vmax.f32 %v6143, %v4726
        %v6145 = vmax.f32 %v6144, %v4730
        %v6146 = vmax.f32 %v6145, %v4736
        %v6147 = vmax.f32 %v6146, %v4740
        %v6148 = vmax.f32 %v6147, %v4746
        %v6149 = vmax.f32 %v6148, %v4750
        %v6150 = vmax.f32 %v6149, %v4756
        %v6151 = vmax.f32 %v6150, %v4760
        %v6152 = vmax.f32 %v6151, %v4766
        %v6153 = vmax.f32 %v6152, %v4770
        %v6154 = vmax.f32 %v6153, %v4776
        %v6155 = vmax.f32 %v6154, %v4780
        %v6156 = vmax.f32 %v6155, %v4786
        %v6157 = vmax.f32 %v6156, %v4790
        %v6158 = vmax.f32 %v6157, %v4796
        %v6159 = vmax.f32 %v6158, %v4800
        %v6160 = vmax.f32 %v6159, %v4806
        %v6161 = vmax.f32 %v6160, %v4810
        %v6162 = vmax.f32 %v6161, %v4816
        %v6163 = vmax.f32 %v6162, %v4820
        %v6164 = vmax.f32 %v6163, %v4826
        %v6165 = vmax.f32 %v6164, %v4830
        %v6166 = vmax.f32 %v6165, %v4836
        %v6167 = vmax.f32 %v6166, %v4840
        %v6168 = vmax.f32 %v6167, %v4846
        %v6169 = vmax.f32 %v6168, %v4850
        %v6170 = vmax.f32 %v6169, %v4856
        %v6171 = vmax.f32 %v6170, %v4860
        %v6172 = vmax.f32 %v4228, %v4232
        %v6173 = vmax.f32 %v6172, %v4238
        %v6174 = vmax.f32 %v6173, %v4242
        %v6175 = vmax.f32 %v6174, %v4248
        %v6176 = vmax.f32 %v6175, %v4252
        %v6177 = vmax.f32 %v6176, %v4258
        %v6178 = vmax.f32 %v6177, %v4262
        %v6179 = vmax.f32 %v6178, %v4268
        %v6180 = vmax.f32 %v6179, %v4272
        %v6181 = vmax.f32 %v6180, %v4278
        %v6182 = vmax.f32 %v6181, %v4282
        %v6183 = vmax.f32 %v6182, %v4288
        %v6184 = vmax.f32 %v6183, %v4292
        %v6185 = vmax.f32 %v6184, %v4298
        %v6186 = vmax.f32 %v6185, %v4302
        %v6187 = vmax.f32 %v6186, %v4308
        %v6188 = vmax.f32 %v6187, %v4312
        %v6189 = vmax.f32 %v6188, %v4318
        %v6190 = vmax.f32 %v6189, %v4322
        %v6191 = vmax.f32 %v6190, %v4328
        %v6192 = vmax.f32 %v6191, %v4332
        %v6193 = vmax.f32 %v6192, %v4338
        %v6194 = vmax.f32 %v6193, %v4342
        %v6195 = vmax.f32 %v6194, %v4348
        %v6196 = vmax.f32 %v6195, %v4352
        %v6197 = vmax.f32 %v6196, %v4358
        %v6198 = vmax.f32 %v6197, %v4362
        %v6199 = vmax.f32 %v6198, %v4368
        %v6200 = vmax.f32 %v6199, %v4372
        %v6201 = vmax.f32 %v6200, %v4378
        %v6202 = vmax.f32 %v6201, %v4382
        %v6203 = vmax.f32 %v6202, %v4388
        %v6204 = vmax.f32 %v6203, %v4392
        %v6205 = vmax.f32 %v6204, %v4398
        %v6206 = vmax.f32 %v6205, %v4402
        %v6207 = vmax.f32 %v6206, %v4408
        %v6208 = vmax.f32 %v6207, %v4412
        %v6209 = vmax.f32 %v6208, %v4418
        %v6210 = vmax.f32 %v6209, %v4422
        %v6211 = vmax.f32 %v6210, %v4428
        %v6212 = vmax.f32 %v6211, %v4432
        %v6213 = vmax.f32 %v6212, %v4438
        %v6214 = vmax.f32 %v6213, %v4442
        %v6215 = vmax.f32 %v6214, %v4448
        %v6216 = vmax.f32 %v6215, %v4452
        %v6217 = vmax.f32 %v6216, %v4458
        %v6218 = vmax.f32 %v6217, %v4462
        %v6219 = vmax.f32 %v6218, %v4468
        %v6220 = vmax.f32 %v6219, %v4472
        %v6221 = vmax.f32 %v6220, %v4478
        %v6222 = vmax.f32 %v6221, %v4482
        %v6223 = vmax.f32 %v6222, %v4488
        %v6224 = vmax.f32 %v6223, %v4492
        %v6225 = vmax.f32 %v6224, %v4498
        %v6226 = vmax.f32 %v6225, %v4502
        %v6227 = vmax.f32 %v6226, %v4508
        %v6228 = vmax.f32 %v6227, %v4512
        %v6229 = vmax.f32 %v6228, %v4518
        %v6230 = vmax.f32 %v6229, %v4522
        %v6231 = vmax.f32 %v6230, %v4528
        %v6232 = vmax.f32 %v6231, %v4532
        %v6233 = vmax.f32 %v6232, %v4538
        %v6234 = vmax.f32 %v6233, %v4542
        %v6235 = vmax.f32 %v6234, %v4548
        %v6236 = vmax.f32 %v6235, %v4552
        %v6237 = vmax.f32 %v6236, %v4558
        %v6238 = vmax.f32 %v6237, %v4562
        %v6239 = vmax.f32 %v6238, %v4568
        %v6240 = vmax.f32 %v6239, %v4572
        %v6241 = vmax.f32 %v6240, %v4578
        %v6242 = vmax.f32 %v6241, %v4582
        %v6243 = vmax.f32 %v6242, %v4588
        %v6244 = vmax.f32 %v6243, %v4592
        %v6245 = vmax.f32 %v6244, %v4598
        %v6246 = vmax.f32 %v6245, %v4602
        %v6247 = vmax.f32 %v6246, %v4608
        %v6248 = vmax.f32 %v6247, %v4612
        %v6249 = vmax.f32 %v6248, %v4618
        %v6250 = vmax.f32 %v6249, %v4622
        %v6251 = vmax.f32 %v6250, %v4628
        %v6252 = vmax.f32 %v6251, %v4632
        %v6253 = vmax.f32 %v6252, %v4638
        %v6254 = vmax.f32 %v6253, %v4642
        %v6255 = vmax.f32 %v6254, %v4648
        %v6256 = vmax.f32 %v6255, %v4652
        %v6257 = vmax.f32 %v6256, %v4658
        %v6258 = vmax.f32 %v6257, %v4662
        %v6259 = vmax.f32 %v6258, %v4668
        %v6260 = vmax.f32 %v6259, %v4672
        %v6261 = vmax.f32 %v6260, %v4678
        %v6262 = vmax.f32 %v6261, %v4682
        %v6263 = vmax.f32 %v6262, %v4688
        %v6264 = vmax.f32 %v6263, %v4692
        %v6265 = vmax.f32 %v6264, %v4698
        %v6266 = vmax.f32 %v6265, %v4702
        %v6267 = vmax.f32 %v6266, %v4708
        %v6268 = vmax.f32 %v6267, %v4712
        %v6269 = vmax.f32 %v6268, %v4718
        %v6270 = vmax.f32 %v6269, %v4722
        %v6271 = vmax.f32 %v6270, %v4728
        %v6272 = vmax.f32 %v6271, %v4732
        %v6273 = vmax.f32 %v6272, %v4738
        %v6274 = vmax.f32 %v6273, %v4742
        %v6275 = vmax.f32 %v6274, %v4748
        %v6276 = vmax.f32 %v6275, %v4752
        %v6277 = vmax.f32 %v6276, %v4758
        %v6278 = vmax.f32 %v6277, %v4762
        %v6279 = vmax.f32 %v6278, %v4768
        %v6280 = vmax.f32 %v6279, %v4772
        %v6281 = vmax.f32 %v6280, %v4778
        %v6282 = vmax.f32 %v6281, %v4782
        %v6283 = vmax.f32 %v6282, %v4788
        %v6284 = vmax.f32 %v6283, %v4792
        %v6285 = vmax.f32 %v6284, %v4798
        %v6286 = vmax.f32 %v6285, %v4802
        %v6287 = vmax.f32 %v6286, %v4808
        %v6288 = vmax.f32 %v6287, %v4812
        %v6289 = vmax.f32 %v6288, %v4818
        %v6290 = vmax.f32 %v6289, %v4822
        %v6291 = vmax.f32 %v6290, %v4828
        %v6292 = vmax.f32 %v6291, %v4832
        %v6293 = vmax.f32 %v6292, %v4838
        %v6294 = vmax.f32 %v6293, %v4842
        %v6295 = vmax.f32 %v6294, %v4848
        %v6296 = vmax.f32 %v6295, %v4852
        %v6297 = vmax.f32 %v6296, %v4858
        %v6298 = vmax.f32 %v6297, %v4862
        %v6299 = vmax.f32 %v4899, %v4903
        %v6300 = vmax.f32 %v6299, %v4909
        %v6301 = vmax.f32 %v6300, %v4913
        %v6302 = vmax.f32 %v6301, %v4919
        %v6303 = vmax.f32 %v6302, %v4923
        %v6304 = vmax.f32 %v6303, %v4929
        %v6305 = vmax.f32 %v6304, %v4933
        %v6306 = vmax.f32 %v6305, %v4939
        %v6307 = vmax.f32 %v6306, %v4943
        %v6308 = vmax.f32 %v6307, %v4949
        %v6309 = vmax.f32 %v6308, %v4953
        %v6310 = vmax.f32 %v6309, %v4959
        %v6311 = vmax.f32 %v6310, %v4963
        %v6312 = vmax.f32 %v6311, %v4969
        %v6313 = vmax.f32 %v6312, %v4973
        %v6314 = vmax.f32 %v6313, %v4979
        %v6315 = vmax.f32 %v6314, %v4983
        %v6316 = vmax.f32 %v6315, %v4989
        %v6317 = vmax.f32 %v6316, %v4993
        %v6318 = vmax.f32 %v6317, %v4999
        %v6319 = vmax.f32 %v6318, %v5003
        %v6320 = vmax.f32 %v6319, %v5009
        %v6321 = vmax.f32 %v6320, %v5013
        %v6322 = vmax.f32 %v6321, %v5019
        %v6323 = vmax.f32 %v6322, %v5023
        %v6324 = vmax.f32 %v6323, %v5029
        %v6325 = vmax.f32 %v6324, %v5033
        %v6326 = vmax.f32 %v6325, %v5039
        %v6327 = vmax.f32 %v6326, %v5043
        %v6328 = vmax.f32 %v6327, %v5049
        %v6329 = vmax.f32 %v6328, %v5053
        %v6330 = vmax.f32 %v6329, %v5059
        %v6331 = vmax.f32 %v6330, %v5063
        %v6332 = vmax.f32 %v6331, %v5069
        %v6333 = vmax.f32 %v6332, %v5073
        %v6334 = vmax.f32 %v6333, %v5079
        %v6335 = vmax.f32 %v6334, %v5083
        %v6336 = vmax.f32 %v6335, %v5089
        %v6337 = vmax.f32 %v6336, %v5093
        %v6338 = vmax.f32 %v6337, %v5099
        %v6339 = vmax.f32 %v6338, %v5103
        %v6340 = vmax.f32 %v6339, %v5109
        %v6341 = vmax.f32 %v6340, %v5113
        %v6342 = vmax.f32 %v6341, %v5119
        %v6343 = vmax.f32 %v6342, %v5123
        %v6344 = vmax.f32 %v6343, %v5129
        %v6345 = vmax.f32 %v6344, %v5133
        %v6346 = vmax.f32 %v6345, %v5139
        %v6347 = vmax.f32 %v6346, %v5143
        %v6348 = vmax.f32 %v6347, %v5149
        %v6349 = vmax.f32 %v6348, %v5153
        %v6350 = vmax.f32 %v6349, %v5159
        %v6351 = vmax.f32 %v6350, %v5163
        %v6352 = vmax.f32 %v6351, %v5169
        %v6353 = vmax.f32 %v6352, %v5173
        %v6354 = vmax.f32 %v6353, %v5179
        %v6355 = vmax.f32 %v6354, %v5183
        %v6356 = vmax.f32 %v6355, %v5189
        %v6357 = vmax.f32 %v6356, %v5193
        %v6358 = vmax.f32 %v6357, %v5199
        %v6359 = vmax.f32 %v6358, %v5203
        %v6360 = vmax.f32 %v6359, %v5209
        %v6361 = vmax.f32 %v6360, %v5213
        %v6362 = vmax.f32 %v6361, %v5219
        %v6363 = vmax.f32 %v6362, %v5223
        %v6364 = vmax.f32 %v6363, %v5229
        %v6365 = vmax.f32 %v6364, %v5233
        %v6366 = vmax.f32 %v6365, %v5239
        %v6367 = vmax.f32 %v6366, %v5243
        %v6368 = vmax.f32 %v6367, %v5249
        %v6369 = vmax.f32 %v6368, %v5253
        %v6370 = vmax.f32 %v6369, %v5259
        %v6371 = vmax.f32 %v6370, %v5263
        %v6372 = vmax.f32 %v6371, %v5269
        %v6373 = vmax.f32 %v6372, %v5273
        %v6374 = vmax.f32 %v6373, %v5279
        %v6375 = vmax.f32 %v6374, %v5283
        %v6376 = vmax.f32 %v6375, %v5289
        %v6377 = vmax.f32 %v6376, %v5293
        %v6378 = vmax.f32 %v6377, %v5299
        %v6379 = vmax.f32 %v6378, %v5303
        %v6380 = vmax.f32 %v6379, %v5309
        %v6381 = vmax.f32 %v6380, %v5313
        %v6382 = vmax.f32 %v6381, %v5319
        %v6383 = vmax.f32 %v6382, %v5323
        %v6384 = vmax.f32 %v6383, %v5329
        %v6385 = vmax.f32 %v6384, %v5333
        %v6386 = vmax.f32 %v6385, %v5339
        %v6387 = vmax.f32 %v6386, %v5343
        %v6388 = vmax.f32 %v6387, %v5349
        %v6389 = vmax.f32 %v6388, %v5353
        %v6390 = vmax.f32 %v6389, %v5359
        %v6391 = vmax.f32 %v6390, %v5363
        %v6392 = vmax.f32 %v6391, %v5369
        %v6393 = vmax.f32 %v6392, %v5373
        %v6394 = vmax.f32 %v6393, %v5379
        %v6395 = vmax.f32 %v6394, %v5383
        %v6396 = vmax.f32 %v6395, %v5389
        %v6397 = vmax.f32 %v6396, %v5393
        %v6398 = vmax.f32 %v6397, %v5399
        %v6399 = vmax.f32 %v6398, %v5403
        %v6400 = vmax.f32 %v6399, %v5409
        %v6401 = vmax.f32 %v6400, %v5413
        %v6402 = vmax.f32 %v6401, %v5419
        %v6403 = vmax.f32 %v6402, %v5423
        %v6404 = vmax.f32 %v6403, %v5429
        %v6405 = vmax.f32 %v6404, %v5433
        %v6406 = vmax.f32 %v6405, %v5439
        %v6407 = vmax.f32 %v6406, %v5443
        %v6408 = vmax.f32 %v6407, %v5449
        %v6409 = vmax.f32 %v6408, %v5453
        %v6410 = vmax.f32 %v6409, %v5459
        %v6411 = vmax.f32 %v6410, %v5463
        %v6412 = vmax.f32 %v6411, %v5469
        %v6413 = vmax.f32 %v6412, %v5473
        %v6414 = vmax.f32 %v6413, %v5479
        %v6415 = vmax.f32 %v6414, %v5483
        %v6416 = vmax.f32 %v6415, %v5489
        %v6417 = vmax.f32 %v6416, %v5493
        %v6418 = vmax.f32 %v6417, %v5499
        %v6419 = vmax.f32 %v6418, %v5503
        %v6420 = vmax.f32 %v6419, %v5509
        %v6421 = vmax.f32 %v6420, %v5513
        %v6422 = vmax.f32 %v6421, %v5519
        %v6423 = vmax.f32 %v6422, %v5523
        %v6424 = vmax.f32 %v6423, %v5529
        %v6425 = vmax.f32 %v6424, %v5533
        %v6426 = vmax.f32 %v4901, %v4905
        %v6427 = vmax.f32 %v6426, %v4911
        %v6428 = vmax.f32 %v6427, %v4915
        %v6429 = vmax.f32 %v6428, %v4921
        %v6430 = vmax.f32 %v6429, %v4925
        %v6431 = vmax.f32 %v6430, %v4931
        %v6432 = vmax.f32 %v6431, %v4935
        %v6433 = vmax.f32 %v6432, %v4941
        %v6434 = vmax.f32 %v6433, %v4945
        %v6435 = vmax.f32 %v6434, %v4951
        %v6436 = vmax.f32 %v6435, %v4955
        %v6437 = vmax.f32 %v6436, %v4961
        %v6438 = vmax.f32 %v6437, %v4965
        %v6439 = vmax.f32 %v6438, %v4971
        %v6440 = vmax.f32 %v6439, %v4975
        %v6441 = vmax.f32 %v6440, %v4981
        %v6442 = vmax.f32 %v6441, %v4985
        %v6443 = vmax.f32 %v6442, %v4991
        %v6444 = vmax.f32 %v6443, %v4995
        %v6445 = vmax.f32 %v6444, %v5001
        %v6446 = vmax.f32 %v6445, %v5005
        %v6447 = vmax.f32 %v6446, %v5011
        %v6448 = vmax.f32 %v6447, %v5015
        %v6449 = vmax.f32 %v6448, %v5021
        %v6450 = vmax.f32 %v6449, %v5025
        %v6451 = vmax.f32 %v6450, %v5031
        %v6452 = vmax.f32 %v6451, %v5035
        %v6453 = vmax.f32 %v6452, %v5041
        %v6454 = vmax.f32 %v6453, %v5045
        %v6455 = vmax.f32 %v6454, %v5051
        %v6456 = vmax.f32 %v6455, %v5055
        %v6457 = vmax.f32 %v6456, %v5061
        %v6458 = vmax.f32 %v6457, %v5065
        %v6459 = vmax.f32 %v6458, %v5071
        %v6460 = vmax.f32 %v6459, %v5075
        %v6461 = vmax.f32 %v6460, %v5081
        %v6462 = vmax.f32 %v6461, %v5085
        %v6463 = vmax.f32 %v6462, %v5091
        %v6464 = vmax.f32 %v6463, %v5095
        %v6465 = vmax.f32 %v6464, %v5101
        %v6466 = vmax.f32 %v6465, %v5105
        %v6467 = vmax.f32 %v6466, %v5111
        %v6468 = vmax.f32 %v6467, %v5115
        %v6469 = vmax.f32 %v6468, %v5121
        %v6470 = vmax.f32 %v6469, %v5125
        %v6471 = vmax.f32 %v6470, %v5131
        %v6472 = vmax.f32 %v6471, %v5135
        %v6473 = vmax.f32 %v6472, %v5141
        %v6474 = vmax.f32 %v6473, %v5145
        %v6475 = vmax.f32 %v6474, %v5151
        %v6476 = vmax.f32 %v6475, %v5155
        %v6477 = vmax.f32 %v6476, %v5161
        %v6478 = vmax.f32 %v6477, %v5165
        %v6479 = vmax.f32 %v6478, %v5171
        %v6480 = vmax.f32 %v6479, %v5175
        %v6481 = vmax.f32 %v6480, %v5181
        %v6482 = vmax.f32 %v6481, %v5185
        %v6483 = vmax.f32 %v6482, %v5191
        %v6484 = vmax.f32 %v6483, %v5195
        %v6485 = vmax.f32 %v6484, %v5201
        %v6486 = vmax.f32 %v6485, %v5205
        %v6487 = vmax.f32 %v6486, %v5211
        %v6488 = vmax.f32 %v6487, %v5215
        %v6489 = vmax.f32 %v6488, %v5221
        %v6490 = vmax.f32 %v6489, %v5225
        %v6491 = vmax.f32 %v6490, %v5231
        %v6492 = vmax.f32 %v6491, %v5235
        %v6493 = vmax.f32 %v6492, %v5241
        %v6494 = vmax.f32 %v6493, %v5245
        %v6495 = vmax.f32 %v6494, %v5251
        %v6496 = vmax.f32 %v6495, %v5255
        %v6497 = vmax.f32 %v6496, %v5261
        %v6498 = vmax.f32 %v6497, %v5265
        %v6499 = vmax.f32 %v6498, %v5271
        %v6500 = vmax.f32 %v6499, %v5275
        %v6501 = vmax.f32 %v6500, %v5281
        %v6502 = vmax.f32 %v6501, %v5285
        %v6503 = vmax.f32 %v6502, %v5291
        %v6504 = vmax.f32 %v6503, %v5295
        %v6505 = vmax.f32 %v6504, %v5301
        %v6506 = vmax.f32 %v6505, %v5305
        %v6507 = vmax.f32 %v6506, %v5311
        %v6508 = vmax.f32 %v6507, %v5315
        %v6509 = vmax.f32 %v6508, %v5321
        %v6510 = vmax.f32 %v6509, %v5325
        %v6511 = vmax.f32 %v6510, %v5331
        %v6512 = vmax.f32 %v6511, %v5335
        %v6513 = vmax.f32 %v6512, %v5341
        %v6514 = vmax.f32 %v6513, %v5345
        %v6515 = vmax.f32 %v6514, %v5351
        %v6516 = vmax.f32 %v6515, %v5355
        %v6517 = vmax.f32 %v6516, %v5361
        %v6518 = vmax.f32 %v6517, %v5365
        %v6519 = vmax.f32 %v6518, %v5371
        %v6520 = vmax.f32 %v6519, %v5375
        %v6521 = vmax.f32 %v6520, %v5381
        %v6522 = vmax.f32 %v6521, %v5385
        %v6523 = vmax.f32 %v6522, %v5391
        %v6524 = vmax.f32 %v6523, %v5395
        %v6525 = vmax.f32 %v6524, %v5401
        %v6526 = vmax.f32 %v6525, %v5405
        %v6527 = vmax.f32 %v6526, %v5411
        %v6528 = vmax.f32 %v6527, %v5415
        %v6529 = vmax.f32 %v6528, %v5421
        %v6530 = vmax.f32 %v6529, %v5425
        %v6531 = vmax.f32 %v6530, %v5431
        %v6532 = vmax.f32 %v6531, %v5435
        %v6533 = vmax.f32 %v6532, %v5441
        %v6534 = vmax.f32 %v6533, %v5445
        %v6535 = vmax.f32 %v6534, %v5451
        %v6536 = vmax.f32 %v6535, %v5455
        %v6537 = vmax.f32 %v6536, %v5461
        %v6538 = vmax.f32 %v6537, %v5465
        %v6539 = vmax.f32 %v6538, %v5471
        %v6540 = vmax.f32 %v6539, %v5475
        %v6541 = vmax.f32 %v6540, %v5481
        %v6542 = vmax.f32 %v6541, %v5485
        %v6543 = vmax.f32 %v6542, %v5491
        %v6544 = vmax.f32 %v6543, %v5495
        %v6545 = vmax.f32 %v6544, %v5501
        %v6546 = vmax.f32 %v6545, %v5505
        %v6547 = vmax.f32 %v6546, %v5511
        %v6548 = vmax.f32 %v6547, %v5515
        %v6549 = vmax.f32 %v6548, %v5521
        %v6550 = vmax.f32 %v6549, %v5525
        %v6551 = vmax.f32 %v6550, %v5531
        %v6552 = vmax.f32 %v6551, %v5535
        %v6553 = vld [vmem:[#allocation2] sm:$0xff]
        %v6554 = vld [vmem:[#allocation2 + $0x8] sm:$0xff]
        %v6555 = vld [vmem:[#allocation2 + $0x10] sm:$0xff]
        %v6556 = vld [vmem:[#allocation2 + $0x18] sm:$0xff]
        %v6557 = vld [vmem:[#allocation2 + $0x20] sm:$0xff]
        %v6558 = vld [vmem:[#allocation2 + $0x28] sm:$0xff]
        %v6559 = vld [vmem:[#allocation2 + $0x30] sm:$0xff]
        %v6560 = vld [vmem:[#allocation2 + $0x38] sm:$0xff]
        %v6561 = vmax.f32 %v6553, %v5663
        %v6562 = vmax.f32 %v6554, %v5790
        %v6563 = vmax.f32 %v6555, %v5917
        %v6564 = vmax.f32 %v6556, %v6044
        %v6565 = vmax.f32 %v6557, %v6171
        %v6566 = vmax.f32 %v6558, %v6298
        %v6567 = vmax.f32 %v6559, %v6425
        %v6568 = vmax.f32 %v6560, %v6552
        %6569 = vst [vmem:[#allocation2] sm:$0xff] %v6561
        %6570 = vst [vmem:[#allocation2 + $0x8] sm:$0xff] %v6562
        %6571 = vst [vmem:[#allocation2 + $0x10] sm:$0xff] %v6563
        %6572 = vst [vmem:[#allocation2 + $0x18] sm:$0xff] %v6564
        %6573 = vst [vmem:[#allocation2 + $0x20] sm:$0xff] %v6565
        %6574 = vst [vmem:[#allocation2 + $0x28] sm:$0xff] %v6566
        %6575 = vst [vmem:[#allocation2 + $0x30] sm:$0xff] %v6567
        %6576 = vst [vmem:[#allocation2 + $0x38] sm:$0xff] %v6568
        // Predicated region
        $region69: #{tpu_custom_call.1} parent=47 // pred_check
          %p6577 = pneg %p359
        $region70: #{tpu_custom_call.1} parent=47 // pred_check_branch
          %6579 = sbr.rel (%p6577) target = $region72
        $region71: #{tpu_custom_call.1} parent=47 // pred_region
          %v6580 = vld [vmem:[#allocation2] sm:$0xff]
          %v6581 = vld [vmem:[#allocation2 + $0x8] sm:$0xff]
          %v6582 = vld [vmem:[#allocation2 + $0x10] sm:$0xff]
          %v6583 = vld [vmem:[#allocation2 + $0x18] sm:$0xff]
          %v6584 = vld [vmem:[#allocation2 + $0x20] sm:$0xff]
          %v6585 = vld [vmem:[#allocation2 + $0x28] sm:$0xff]
          %v6586 = vld [vmem:[#allocation2 + $0x30] sm:$0xff]
          %v6587 = vld [vmem:[#allocation2 + $0x38] sm:$0xff]
          %v6588 = vrot.slane %v6580, 4
          %v6589 = vmax.f32 %v6580, %v6588
          %v6590 = vrot.slane %v6589, 2
          %v6591 = vmax.f32 %v6589, %v6590
          %v6592 = vrot.slane %v6591, 1
          %v6593 = vmax.f32 %v6591, %v6592
          %v6594 = vrot.slane %v6581, 4
          %v6595 = vmax.f32 %v6581, %v6594
          %v6596 = vrot.slane %v6595, 2
          %v6597 = vmax.f32 %v6595, %v6596
          %v6598 = vrot.slane %v6597, 1
          %v6599 = vmax.f32 %v6597, %v6598
          %v6600 = vrot.slane %v6582, 4
          %v6601 = vmax.f32 %v6582, %v6600
          %v6602 = vrot.slane %v6601, 2
          %v6603 = vmax.f32 %v6601, %v6602
          %v6604 = vrot.slane %v6603, 1
          %v6605 = vmax.f32 %v6603, %v6604
          %v6606 = vrot.slane %v6583, 4
          %v6607 = vmax.f32 %v6583, %v6606
          %v6608 = vrot.slane %v6607, 2
          %v6609 = vmax.f32 %v6607, %v6608
          %v6610 = vrot.slane %v6609, 1
          %v6611 = vmax.f32 %v6609, %v6610
          %v6612 = vrot.slane %v6584, 4
          %v6613 = vmax.f32 %v6584, %v6612
          %v6614 = vrot.slane %v6613, 2
          %v6615 = vmax.f32 %v6613, %v6614
          %v6616 = vrot.slane %v6615, 1
          %v6617 = vmax.f32 %v6615, %v6616
          %v6618 = vrot.slane %v6585, 4
          %v6619 = vmax.f32 %v6585, %v6618
          %v6620 = vrot.slane %v6619, 2
          %v6621 = vmax.f32 %v6619, %v6620
          %v6622 = vrot.slane %v6621, 1
          %v6623 = vmax.f32 %v6621, %v6622
          %v6624 = vrot.slane %v6586, 4
          %v6625 = vmax.f32 %v6586, %v6624
          %v6626 = vrot.slane %v6625, 2
          %v6627 = vmax.f32 %v6625, %v6626
          %v6628 = vrot.slane %v6627, 1
          %v6629 = vmax.f32 %v6627, %v6628
          %v6630 = vrot.slane %v6587, 4
          %v6631 = vmax.f32 %v6587, %v6630
          %v6632 = vrot.slane %v6631, 2
          %v6633 = vmax.f32 %v6631, %v6632
          %v6634 = vrot.slane %v6633, 1
          %v6635 = vmax.f32 %v6633, %v6634
          %v6636 = vld [vmem:[%s6] sm:$0xff]
          %v6638 = vlaneseq
          %v6639 = vshrl.u32 %v6638, 7
          %v6640 = vsub.s32 0, %v6639
          %v6641 = vrot.slane %v6636, %v6640
          %v6642 = vlaneseq
          %v6643 = vshrl.u32 %v6642, 7
          %v6644 = vsub.s32 1, %v6643
          %v6645 = vrot.slane %v6636, %v6644
          %v6646 = vlaneseq
          %v6647 = vshrl.u32 %v6646, 7
          %v6648 = vsub.s32 2, %v6647
          %v6649 = vrot.slane %v6636, %v6648
          %v6650 = vlaneseq
          %v6651 = vshrl.u32 %v6650, 7
          %v6652 = vsub.s32 3, %v6651
          %v6653 = vrot.slane %v6636, %v6652
          %v6654 = vlaneseq
          %v6655 = vshrl.u32 %v6654, 7
          %v6656 = vsub.s32 4, %v6655
          %v6657 = vrot.slane %v6636, %v6656
          %v6658 = vlaneseq
          %v6659 = vshrl.u32 %v6658, 7
          %v6660 = vsub.s32 5, %v6659
          %v6661 = vrot.slane %v6636, %v6660
          %v6662 = vlaneseq
          %v6663 = vshrl.u32 %v6662, 7
          %v6664 = vsub.s32 6, %v6663
          %v6665 = vrot.slane %v6636, %v6664
          %v6666 = vlaneseq
          %v6667 = vshrl.u32 %v6666, 7
          %v6668 = vsub.s32 7, %v6667
          %v6669 = vrot.slane %v6636, %v6668
          %v6678 = vadd.f32 %v6593, %v6641
          %v6679 = vadd.f32 %v6599, %v6645
          %v6680 = vadd.f32 %v6605, %v6649
          %v6681 = vadd.f32 %v6611, %v6653
          %v6682 = vadd.f32 %v6617, %v6657
          %v6683 = vadd.f32 %v6623, %v6661
          %v6684 = vadd.f32 %v6629, %v6665
          %v6685 = vadd.f32 %v6635, %v6669
          %v6686 = vmax.f32 %v6678, 0.0
          %v6687 = vmax.f32 %v6679, 0.0
          %v6688 = vmax.f32 %v6680, 0.0
          %v6689 = vmax.f32 %v6681, 0.0
          %v6690 = vmax.f32 %v6682, 0.0
          %v6691 = vmax.f32 %v6683, 0.0
          %v6692 = vmax.f32 %v6684, 0.0
          %v6693 = vmax.f32 %v6685, 0.0
          %v6702 = vcombine.low %v6686, %v6687
          %v6703 = vcombine.low %v6688, %v6689
          %v6704 = vcombine.low %v6690, %v6691
          %v6705 = vcombine.low %v6692, %v6693
          %v6707 = vunpack.c.l.s4 1966171168
          %v6708 = vunpack.c.0.s8 %v6707
          %v6709 = vlaneseq
          %v6710 = vshrl.u32 %v6709, 7
          %v6711 = vsub.s32 %v6708, %v6710
          %v6712 = vrot.slane %v6702, %v6711
          %v6714 = vunpack.c.l.s4 1966171168
          %v6715 = vunpack.c.0.s8 %v6714
          %v6716 = vlaneseq
          %v6717 = vshrl.u32 %v6716, 7
          %v6718 = vsub.s32 %v6715, %v6717
          %v6719 = vrot.slane %v6703, %v6718
          %v6721 = vunpack.c.l.s4 1966171168
          %v6722 = vunpack.c.0.s8 %v6721
          %v6723 = vlaneseq
          %v6724 = vshrl.u32 %v6723, 7
          %v6725 = vsub.s32 %v6722, %v6724
          %v6726 = vrot.slane %v6704, %v6725
          %v6728 = vunpack.c.l.s4 1966171168
          %v6729 = vunpack.c.0.s8 %v6728
          %v6730 = vlaneseq
          %v6731 = vshrl.u32 %v6730, 7
          %v6732 = vsub.s32 %v6729, %v6731
          %v6733 = vrot.slane %v6705, %v6732
          %v6734 = vcombine.low %v6712, %v6719
          %v6735 = vcombine.low %v6726, %v6733
          %v6737 = vunpack.c.l.s4 1966171168
          %v6738 = vunpack.c.0.s8 %v6737
          %v6739 = vlaneseq
          %v6740 = vshrl.u32 %v6739, 7
          %v6741 = vsub.s32 %v6738, %v6740
          %v6742 = vrot.slane %v6734, %v6741
          %v6744 = vunpack.c.l.s4 1966171168
          %v6745 = vunpack.c.0.s8 %v6744
          %v6746 = vlaneseq
          %v6747 = vshrl.u32 %v6746, 7
          %v6748 = vsub.s32 %v6745, %v6747
          %v6749 = vrot.slane %v6735, %v6748
          %v6750 = vcombine.low %v6742, %v6749
          %6752 = vst [vmem:[%s356] sm:$0xff] %v6750
        $region72: #{tpu_custom_call.1} parent=47 // pred_fallthru
          _
        %s6753 = sand.u32 %s200, 1
        %s6754 = scalar_lea.sflag [#allocation5], %s6753
        %s6755 = sand.u32 %s200, 1
        %s6756 = smul.addr %s6755, 8
        %s6757 = scalar_lea.vmem [#allocation11], %s6756
        // Predicated region
        $region73: #{tpu_custom_call.1} parent=47 // pred_check
          %p6758 = pneg %p210
        $region74: #{tpu_custom_call.1} parent=47 // pred_check_branch
          %6760 = sbr.rel (%p6758) target = $region76
        $region75: #{tpu_custom_call.1} parent=47 // pred_region
          %s6762 = ssub.s32 128, 128
          %6763 = vsyncadd %s6754, %s6762
          %s6764 = smul.addr %s30, 8
          %s6765 = smul.addr %s6764, 16
          %s6766 = scalar_lea.hbm %s7, %s6765
          %s6768 = sshll.u32 %s6757, 4
          %s6769 = int_to_ptr.vmem [resolvable:$true] %s6768
          %6771 = dma.vmem_to_hbm [thread:$0]  %s6769, 128, %s6766, %s6754
        $region76: #{tpu_custom_call.1} parent=47 // pred_fallthru
          _
      $region48: #{tpu_custom_call.1} parent=5 // pred_fallthru
        _
      %p6772 = scmp.le.s32.totalorder 2, %s21
      // Predicated region
      $region77: #{tpu_custom_call.1} parent=5 // pred_check
        %p6773 = pneg %p6772
      $region78: #{tpu_custom_call.1} parent=5 // pred_check_branch
        %6775 = sbr.rel (%p6773) target = $region80
      $region79: #{tpu_custom_call.1} parent=5 // pred_region
        %s6776 = ssub.s32 %s21, 2
        // Predicated region
        $region81: #{tpu_custom_call.1} parent=79 // pred_check
          %p6777 = pneg %p216
        $region82: #{tpu_custom_call.1} parent=79 // pred_check_branch
          %6779 = sbr.rel (%p6777) target = $region84
        $region83: #{tpu_custom_call.1} parent=79 // pred_region
          %s6780 = sand.u32 %s201, 1
          %s6781 = scalar_lea.sflag [#allocation5], %s6780
          %s6782 = sand.u32 %s201, 1
          %s6783 = smul.addr %s6782, 8
          %s6784 = scalar_lea.vmem [#allocation11], %s6783
          %6785 = dma.done %s6781, 128
        $region84: #{tpu_custom_call.1} parent=79 // pred_fallthru
          _
      $region80: #{tpu_custom_call.1} parent=5 // pred_fallthru
        _
    $region6: #{tpu_custom_call.1} parent=1 // loop_footer
      %s25 = sadd.s32 1, %s21
    $region7: #{tpu_custom_call.1} parent=1 // loop_footer_branch
      %20 = sbr.rel target = $region3
    $region8: #{tpu_custom_call.1} parent=1 // loop_exit
      _
    %6786 = vsyncpa [#allocation4], 1
    %s6787 = scalar_lea.sflag [#allocation4], 1
    %6788 = vsyncpa %s6787, 1
    %6789 = vsyncpa [#allocation7], 1
    %6790 = vsyncpa [#allocation10], 1
    %6791 = vsyncpa [#allocation5], 1
    %s6792 = scalar_lea.sflag [#allocation5], 1
    %6793 = vsyncpa %s6792, 1

</llo_original>
